<compile_context>
chip_gen: v5e
topology: v5e:2x2
jax: 0.10.0
libtpu: 0.0.40
codegen_flags: <defaults>
</compile_context>

<pallas_src>
import functools
import math

import jax
import jax.numpy as jnp
from jax.experimental import pallas as pl
from jax.experimental.pallas import tpu as pltpu

NEG_INF = -1e9


def _pick_q_tile(seq_len):
    for t in (256, 128, 64, 32, 16, 8):
        if seq_len >= t and seq_len % t == 0:
            return t
    return seq_len


# ----------------------------- fused decoder-layer kernel -----------------------------

def _decoder_layer_kernel(*refs, num_heads, eps, self_mask_mode, has_cross_mask, q_tile):
    it = iter(refs)
    x_ref = next(it)                                    # (1, S, D) encoder output, bf16
    y_ref = next(it)                                    # (1, S, D) decoder activations, bf16
    self_mask_ref = next(it) if self_mask_mode == "tensor" else None
    cross_mask_ref = next(it) if has_cross_mask else None
    (qkv_w, qkv_b, so_w, so_b, kv_w, kv_b, q_w, q_b, co_w, co_b,
     f1_w, f1_b, f2_w, f2_b, g1, be1, g2, be2, g3, be3, o_ref) = it

    S, D = y_ref.shape[1], y_ref.shape[2]
    H = num_heads
    dh = D // H
    scale = 1.0 / math.sqrt(dh)
    TQ = q_tile

    x = x_ref[0]                                        # (S, D) bf16
    y = y_ref[0]                                        # (S, D) bf16

    def linear_f32(a_bf16, w_ref2, b_ref2):
        # a: (M, K) bf16, w: (K, N) bf16 (pre-transposed on host), b: (1, N) f32 -> (M, N) f32
        acc = jax.lax.dot_general(a_bf16, w_ref2[...], (((1,), (0,)), ((), ())),
                                  preferred_element_type=jnp.float32)
        return acc + b_ref2[...]

    def linear(a_bf16, w_ref2, b_ref2):
        return linear_f32(a_bf16, w_ref2, b_ref2).astype(jnp.bfloat16)

    def layer_norm(s_f32, g_ref2, b_ref2):
        mean = jnp.mean(s_f32, axis=-1, keepdims=True)
        var = jnp.mean(jnp.square(s_f32 - mean), axis=-1, keepdims=True)  # biased, matches ref
        out = g_ref2[...] * ((s_f32 - mean) * jax.lax.rsqrt(var + eps)) + b_ref2[...]
        return out.astype(jnp.bfloat16)

    def split_heads(slab):
        # (M, D) bf16 -> (H, M, dh): lane-aligned static slices + leading-axis stack
        return jnp.stack([slab[:, h * dh:(h + 1) * dh] for h in range(H)], axis=0)

    def attend(q_h, k_h, v_h, neg_mask=None, add_bias=None):
        # q_h: (H, TQ, dh), k_h / v_h: (H, S, dh), all bf16. Head-batched MXU matmuls.
        s = jnp.einsum("hqd,hkd->hqk", q_h, k_h,
                       preferred_element_type=jnp.float32) * scale
        if add_bias is not None:
            s = s + add_bias[None, :, :]
        if neg_mask is not None:
            s = jnp.where(neg_mask[None, :, :], jnp.float32(NEG_INF), s)
        s = s - jnp.max(s, axis=-1, keepdims=True)
        p = jnp.exp(s)
        p = p * pl.reciprocal(jnp.sum(p, axis=-1, keepdims=True), approx=True)
        ctx = jnp.einsum("hqk,hkd->hqd", p.astype(jnp.bfloat16), v_h,
                         preferred_element_type=jnp.float32)
        # head-major, lane-dense merge -> (TQ, D); identical to permute(0,2,1,3).reshape(B,S,D)
        return jnp.concatenate([ctx[h].astype(jnp.bfloat16) for h in range(H)], axis=-1)

    # ---- full-sequence projections (keys/values needed by every query tile) ----
    qkv = linear(y, qkv_w, qkv_b)                       # (S, 3D) bf16, head-major [Q|K|V]
    k_self = split_heads(qkv[:, D:2 * D])
    v_self = split_heads(qkv[:, 2 * D:3 * D])
    kv = linear(x, kv_w, kv_b)                          # (S, 2D) bf16, head-major [K|V]
    k_cross = split_heads(kv[:, 0:D])
    v_cross = split_heads(kv[:, D:2 * D])

    # ---- row-wise part of the layer, processed in query tiles ----
    # TODO(synk): at large S this static tile loop should become a fori_loop / extra grid axis
    #             and the FFN / projection weights streamed (K-tiling via pltpu.emit_pipeline).
    for q0 in range(0, S, TQ):
        y_t = y[q0:q0 + TQ, :]                          # (TQ, D) bf16

        # self attention (causal / tensor mask) + residual + LayerNorm
        q_self = split_heads(qkv[q0:q0 + TQ, 0:D])
        if self_mask_mode == "causal":
            rows = q0 + jax.lax.broadcasted_iota(jnp.int32, (TQ, S), 0)
            cols = jax.lax.broadcasted_iota(jnp.int32, (TQ, S), 1)
            vals = attend(q_self, k_self, v_self, neg_mask=cols > rows)
        elif self_mask_mode == "tensor":
            vals = attend(q_self, k_self, v_self,
                          add_bias=self_mask_ref[0, q0:q0 + TQ, :])
        else:
            vals = attend(q_self, k_self, v_self)
        y1 = layer_norm(linear_f32(vals, so_w, so_b) + y_t.astype(jnp.float32), g1, be1)

        # encoder-decoder (cross) attention + residual + LayerNorm
        q_c = split_heads(linear(y1, q_w, q_b))
        if has_cross_mask:
            cvals = attend(q_c, k_cross, v_cross,
                           add_bias=cross_mask_ref[0, q0:q0 + TQ, :])
        else:
            cvals = attend(q_c, k_cross, v_cross)
        y2 = layer_norm(linear_f32(cvals, co_w, co_b) + y1.astype(jnp.float32), g2, be2)

        # positionwise FFN + residual + LayerNorm
        hidden = jnp.maximum(linear(y2, f1_w, f1_b), 0.0)
        y3 = layer_norm(linear_f32(hidden, f2_w, f2_b) + y2.astype(jnp.float32), g3, be3)

        o_ref[0, q0:q0 + TQ, :] = y3


def decoder_layer_forward(p, x, y, num_heads, self_mask=None, cross_mask=None, eps=1e-5):
    """One fused decoder layer. self_mask=None -> causal mask generated in-kernel;
    cross_mask=None -> no mask (reference usage passes an all-zeros additive mask)."""
    B, S, D = y.shape
    x = x.astype(jnp.bfloat16)
    y = y.astype(jnp.bfloat16)
    act_spec = pl.BlockSpec((1, S, D), lambda b: (b, 0, 0))

    inputs = [x, y]
    in_specs = [act_spec, act_spec]

    self_mask_mode = "causal" if self_mask is None else "tensor"
    if self_mask is not None:
        inputs.append(self_mask.astype(jnp.float32))
        in_specs.append(pl.BlockSpec((1, S, S), lambda b: (b, 0, 0)))
    has_cross_mask = cross_mask is not None
    if has_cross_mask:
        inputs.append(cross_mask.astype(jnp.float32))
        in_specs.append(pl.BlockSpec((1, S, S), lambda b: (b, 0, 0)))

    weights = [p["qkv_w"], p["qkv_b"], p["self_o_w"], p["self_o_b"],
               p["kv_w"], p["kv_b"], p["q_w"], p["q_b"],
               p["cross_o_w"], p["cross_o_b"],
               p["ffn1_w"], p["ffn1_b"], p["ffn2_w"], p["ffn2_b"],
               p["gamma1"], p["beta1"], p["gamma2"], p["beta2"], p["gamma3"], p["beta3"]]
    inputs += weights
    # Weights / LN params never change across the batch grid -> single-buffer them
    # (halves their resident VMEM footprint; matters on v7x's 64 MiB VMEM).
    in_specs += [pl.BlockSpec(w.shape, lambda b: (0, 0), pipeline_mode=pl.Buffered(1))
                 for w in weights]

    F = p["ffn1_w"].shape[1]
    flops = B * (2 * S * D * (3 * D) + 2 * S * D * (2 * D) + 4 * (2 * S * D * D)
                 + 2 * (2 * S * D * F) + 8 * S * S * D)
    cost = pl.CostEstimate(
        flops=int(flops),
        transcendentals=int(2 * B * num_heads * S * S),
        bytes_accessed=int(sum(w.size * w.dtype.itemsize for w in weights) + 3 * B * S * D * 2),
    )

    return pl.pallas_call(
        functools.partial(_decoder_layer_kernel, num_heads=num_heads, eps=eps,
                          self_mask_mode=self_mask_mode, has_cross_mask=has_cross_mask,
                          q_tile=_pick_q_tile(S)),
        out_shape=jax.ShapeDtypeStruct((B, S, D), jnp.bfloat16),
        grid=(B,),
        in_specs=in_specs,
        out_specs=act_spec,
        compiler_params=pltpu.CompilerParams(
            dimension_semantics=("parallel",),
            vmem_limit_bytes=64 * 1024 * 1024),
        cost_estimate=cost,
    )(*inputs)


# ----------------------------- parameter setup -----------------------------

def _head_major_perm(d_model, num_heads, n_chunks):
    # reference (PyTorch) packing: column = h*(n_chunks*dh) + which*dh + d
    # kernel packing:              column = which*d_model + h*dh + d
    dh = d_model // num_heads
    which = jnp.arange(n_chunks)[:, None, None]
    h = jnp.arange(num_heads)[None, :, None]
    d = jnp.arange(dh)[None, None, :]
    return (h * (n_chunks * dh) + which * dh + d).reshape(-1)


def _init_linear_pt(key, out_f, in_f):
    # matches torch.nn.Linear default init; PyTorch (out_features, in_features) layout
    k1, k2 = jax.random.split(key)
    bound = 1.0 / math.sqrt(in_f)
    w = jax.random.uniform(k1, (out_f, in_f), jnp.float32, -bound, bound)
    b = jax.random.uniform(k2, (out_f,), jnp.float32, -bound, bound)
    return w, b


def _prep_linear(w_pt, b_pt, perm=None):
    # optional head-major repack of output features, then transpose to (in, out) and cast bf16;
    # do the same when importing a PyTorch checkpoint.
    if perm is not None:
        w_pt = w_pt[perm, :]
        b_pt = b_pt[perm]
    return jnp.asarray(w_pt.T, jnp.bfloat16), b_pt.reshape(1, -1).astype(jnp.float32)


def init_decoder_layer_params(key, d_model, ffn_hidden, num_heads):
    keys = jax.random.split(key, 7)
    perm3 = _head_major_perm(d_model, num_heads, 3)
    perm2 = _head_major_perm(d_model, num_heads, 2)
    p = {}
    p["qkv_w"], p["qkv_b"] = _prep_linear(*_init_linear_pt(keys[0], 3 * d_model, d_model), perm=perm3)
    p["self_o_w"], p["self_o_b"] = _prep_linear(*_init_linear_pt(keys[1], d_model, d_model))
    p["kv_w"], p["kv_b"] = _prep_linear(*_init_linear_pt(keys[2], 2 * d_model, d_model), perm=perm2)
    p["q_w"], p["q_b"] = _prep_linear(*_init_linear_pt(keys[3], d_model, d_model))
    p["cross_o_w"], p["cross_o_b"] = _prep_linear(*_init_linear_pt(keys[4], d_model, d_model))
    p["ffn1_w"], p["ffn1_b"] = _prep_linear(*_init_linear_pt(keys[5], ffn_hidden, d_model))
    p["ffn2_w"], p["ffn2_b"] = _prep_linear(*_init_linear_pt(keys[6], d_model, ffn_hidden))
    for i in (1, 2, 3):
        p[f"gamma{i}"] = jnp.ones((1, d_model), jnp.float32)
        p[f"beta{i}"] = jnp.zeros((1, d_model), jnp.float32)
    return p


def positional_encoding(max_seq, d_model):
    even_i = jnp.arange(0, d_model, 2, dtype=jnp.float32)
    denom = jnp.power(10000.0, even_i / d_model)
    pos = jnp.arange(max_seq, dtype=jnp.float32).reshape(max_seq, 1)
    even_pe = jnp.sin(pos / denom)
    odd_pe = jnp.cos(pos / denom)
    stacked = jnp.stack([even_pe, odd_pe], axis=2)
    return stacked.reshape(max_seq, d_model)


# ----------------------------- decoder forward -----------------------------

def decoder_forward(params, x, y_tokens, num_heads, self_mask=None, cross_mask=None):
    # sentence embedding: token lookup + sinusoidal positional encoding (eval mode)
    # TODO(synk): string batch_tokenize / START-END-PADDING token insertion and dropout (train
    #             mode) have no Pallas equivalent; inputs are token ids and dropout = identity.
    emb = jnp.take(params["embedding"], y_tokens, axis=0)          # (B, S, D)
    y = (emb + params["pos_encoding"][None, :, :]).astype(jnp.bfloat16)
    x = x.astype(jnp.bfloat16)
    for layer_p in params["layers"]:
        y = decoder_layer_forward(layer_p, x, y, num_heads,
                                  self_mask=self_mask, cross_mask=cross_mask)
    return y


# ----------------------------- main -----------------------------

if __name__ == "__main__":
    # small demo config; head_dim = d_model / num_heads = 128 keeps per-head slices lane-aligned
    d_model = 256
    ffn_hidden = 512
    num_heads = 2
    num_layers = 2
    max_seq = 8
    batch = 2
    vocab_size = 12   # small synthetic language_to_index

    root = jax.random.PRNGKey(0)
    k_emb, k_layers, k_x, k_tok = jax.random.split(root, 4)

    params = {
        "embedding": jax.random.normal(k_emb, (vocab_size, d_model), jnp.float32),
        "pos_encoding": positional_encoding(max_seq, d_model),
        "layers": [init_decoder_layer_params(k, d_model, ffn_hidden, num_heads)
                   for k in jax.random.split(k_layers, num_layers)],
    }

    # inputs: x = encoder output (B, S, D); y = decoder token ids (B, S)
    x = jax.random.normal(k_x, (batch, max_seq, d_model), jnp.float32)
    y_tokens = jax.random.randint(k_tok, (batch, max_seq), 0, vocab_size)

    # self-attention: causal (look-ahead) mask applied in-kernel via where (self_mask=None);
    # cross-attention: no mask (reference passes an all-zeros additive mask).
    fwd = jax.jit(functools.partial(decoder_forward, num_heads=num_heads))
    out = jax.block_until_ready(fwd(params, x, y_tokens))

    assert out.shape == (batch, max_seq, d_model)
    assert bool(jnp.all(jnp.isfinite(out.astype(jnp.float32))))
    print("KERNEL_OK")
</pallas_src>

<mosaic_0001>
module attributes {stable_mosaic.version = 11 : i64} {
  func.func @_decoder_layer_kernel(%arg0: i32, %arg1: memref<1x8x256xbf16, #tpu.memory_space<vmem>>, %arg2: memref<1x8x256xbf16, #tpu.memory_space<vmem>>, %arg3: memref<256x768xbf16, #tpu.memory_space<vmem>>, %arg4: memref<1x768xf32, #tpu.memory_space<vmem>>, %arg5: memref<256x256xbf16, #tpu.memory_space<vmem>>, %arg6: memref<1x256xf32, #tpu.memory_space<vmem>>, %arg7: memref<256x512xbf16, #tpu.memory_space<vmem>>, %arg8: memref<1x512xf32, #tpu.memory_space<vmem>>, %arg9: memref<256x256xbf16, #tpu.memory_space<vmem>>, %arg10: memref<1x256xf32, #tpu.memory_space<vmem>>, %arg11: memref<256x256xbf16, #tpu.memory_space<vmem>>, %arg12: memref<1x256xf32, #tpu.memory_space<vmem>>, %arg13: memref<256x512xbf16, #tpu.memory_space<vmem>>, %arg14: memref<1x512xf32, #tpu.memory_space<vmem>>, %arg15: memref<512x256xbf16, #tpu.memory_space<vmem>>, %arg16: memref<1x256xf32, #tpu.memory_space<vmem>>, %arg17: memref<1x256xf32, #tpu.memory_space<vmem>>, %arg18: memref<1x256xf32, #tpu.memory_space<vmem>>, %arg19: memref<1x256xf32, #tpu.memory_space<vmem>>, %arg20: memref<1x256xf32, #tpu.memory_space<vmem>>, %arg21: memref<1x256xf32, #tpu.memory_space<vmem>>, %arg22: memref<1x256xf32, #tpu.memory_space<vmem>>, %arg23: memref<1x8x256xbf16, #tpu.memory_space<vmem>>) attributes {dimension_semantics = [#tpu.dimension_semantics<parallel>], iteration_bounds = array<i64: 2>, scalar_prefetch = 0 : i64, scratch_operands = 0 : i64, tpu.core_type = #tpu.core_type<tc>, window_params = [{transform_indices = @transform_0, window_bounds = array<i64: 1, 8, 256>}, {transform_indices = @transform_1, window_bounds = array<i64: 1, 8, 256>}, {pipeline_mode = #tpu.pipeline_mode<synchronous>, transform_indices = @transform_2, window_bounds = array<i64: 256, 768>}, {pipeline_mode = #tpu.pipeline_mode<synchronous>, transform_indices = @transform_3, window_bounds = array<i64: 1, 768>}, {pipeline_mode = #tpu.pipeline_mode<synchronous>, transform_indices = @transform_4, window_bounds = array<i64: 256, 256>}, {pipeline_mode = #tpu.pipeline_mode<synchronous>, transform_indices = @transform_5, window_bounds = array<i64: 1, 256>}, {pipeline_mode = #tpu.pipeline_mode<synchronous>, transform_indices = @transform_6, window_bounds = array<i64: 256, 512>}, {pipeline_mode = #tpu.pipeline_mode<synchronous>, transform_indices = @transform_7, window_bounds = array<i64: 1, 512>}, {pipeline_mode = #tpu.pipeline_mode<synchronous>, transform_indices = @transform_8, window_bounds = array<i64: 256, 256>}, {pipeline_mode = #tpu.pipeline_mode<synchronous>, transform_indices = @transform_9, window_bounds = array<i64: 1, 256>}, {pipeline_mode = #tpu.pipeline_mode<synchronous>, transform_indices = @transform_10, window_bounds = array<i64: 256, 256>}, {pipeline_mode = #tpu.pipeline_mode<synchronous>, transform_indices = @transform_11, window_bounds = array<i64: 1, 256>}, {pipeline_mode = #tpu.pipeline_mode<synchronous>, transform_indices = @transform_12, window_bounds = array<i64: 256, 512>}, {pipeline_mode = #tpu.pipeline_mode<synchronous>, transform_indices = @transform_13, window_bounds = array<i64: 1, 512>}, {pipeline_mode = #tpu.pipeline_mode<synchronous>, transform_indices = @transform_14, window_bounds = array<i64: 512, 256>}, {pipeline_mode = #tpu.pipeline_mode<synchronous>, transform_indices = @transform_15, window_bounds = array<i64: 1, 256>}, {pipeline_mode = #tpu.pipeline_mode<synchronous>, transform_indices = @transform_16, window_bounds = array<i64: 1, 256>}, {pipeline_mode = #tpu.pipeline_mode<synchronous>, transform_indices = @transform_17, window_bounds = array<i64: 1, 256>}, {pipeline_mode = #tpu.pipeline_mode<synchronous>, transform_indices = @transform_18, window_bounds = array<i64: 1, 256>}, {pipeline_mode = #tpu.pipeline_mode<synchronous>, transform_indices = @transform_19, window_bounds = array<i64: 1, 256>}, {pipeline_mode = #tpu.pipeline_mode<synchronous>, transform_indices = @transform_20, window_bounds = array<i64: 1, 256>}, {pipeline_mode = #tpu.pipeline_mode<synchronous>, transform_indices = @transform_21, window_bounds = array<i64: 1, 256>}, {transform_indices = @transform_22, window_bounds = array<i64: 1, 8, 256>}]} {
    %c0 = arith.constant 0 : index
    %c0_0 = arith.constant 0 : index
    %c0_1 = arith.constant 0 : index
    %0 = vector.load %arg1[%c0, %c0_0, %c0_1] : memref<1x8x256xbf16, #tpu.memory_space<vmem>>, vector<1x8x256xbf16>
    %1 = vector.shape_cast %0 : vector<1x8x256xbf16> to vector<8x256xbf16>
    %c0_2 = arith.constant 0 : index
    %c0_3 = arith.constant 0 : index
    %c0_4 = arith.constant 0 : index
    %2 = vector.load %arg2[%c0_2, %c0_3, %c0_4] : memref<1x8x256xbf16, #tpu.memory_space<vmem>>, vector<1x8x256xbf16>
    %3 = vector.shape_cast %2 : vector<1x8x256xbf16> to vector<8x256xbf16>
    %c0_5 = arith.constant 0 : index
    %c0_6 = arith.constant 0 : index
    %4 = vector.load %arg3[%c0_5, %c0_6] : memref<256x768xbf16, #tpu.memory_space<vmem>>, vector<256x768xbf16>
    %cst = arith.constant dense<0.000000e+00> : vector<8x768xf32>
    %5 = tpu.matmul %3, %4, %cst {dimension_numbers = #tpu.dot_dimension_numbers<[1], [0], [0], [1], [0, 0, 1, 1], [], []>} : vector<8x256xbf16>, vector<256x768xbf16>, vector<8x768xf32> -> vector<8x768xf32>
    %c0_7 = arith.constant 0 : index
    %c0_8 = arith.constant 0 : index
    %6 = vector.load %arg4[%c0_7, %c0_8] : memref<1x768xf32, #tpu.memory_space<vmem>>, vector<1x768xf32>
    %7 = vector.broadcast %6 : vector<1x768xf32> to vector<8x768xf32>
    %8 = arith.addf %5, %7 : vector<8x768xf32>
    %9 = arith.truncf %8 : vector<8x768xf32> to vector<8x768xbf16>
    %10 = vector.extract_strided_slice %9 {offsets = [0, 256], sizes = [8, 256], strides = [1, 1]} : vector<8x768xbf16> to vector<8x256xbf16>
    %11 = vector.extract_strided_slice %10 {offsets = [0, 0], sizes = [8, 128], strides = [1, 1]} : vector<8x256xbf16> to vector<8x128xbf16>
    %12 = vector.extract_strided_slice %10 {offsets = [0, 128], sizes = [8, 128], strides = [1, 1]} : vector<8x256xbf16> to vector<8x128xbf16>
    %13 = vector.shape_cast %11 : vector<8x128xbf16> to vector<1x8x128xbf16>
    %14 = vector.shape_cast %12 : vector<8x128xbf16> to vector<1x8x128xbf16>
    %15 = tpu.concatenate %13, %14 in 0 : vector<1x8x128xbf16>, vector<1x8x128xbf16> -> vector<2x8x128xbf16>
    %16 = vector.extract_strided_slice %9 {offsets = [0, 512], sizes = [8, 256], strides = [1, 1]} : vector<8x768xbf16> to vector<8x256xbf16>
    %17 = vector.extract_strided_slice %16 {offsets = [0, 0], sizes = [8, 128], strides = [1, 1]} : vector<8x256xbf16> to vector<8x128xbf16>
    %18 = vector.extract_strided_slice %16 {offsets = [0, 128], sizes = [8, 128], strides = [1, 1]} : vector<8x256xbf16> to vector<8x128xbf16>
    %19 = vector.shape_cast %17 : vector<8x128xbf16> to vector<1x8x128xbf16>
    %20 = vector.shape_cast %18 : vector<8x128xbf16> to vector<1x8x128xbf16>
    %21 = tpu.concatenate %19, %20 in 0 : vector<1x8x128xbf16>, vector<1x8x128xbf16> -> vector<2x8x128xbf16>
    %c0_9 = arith.constant 0 : index
    %c0_10 = arith.constant 0 : index
    %22 = vector.load %arg7[%c0_9, %c0_10] : memref<256x512xbf16, #tpu.memory_space<vmem>>, vector<256x512xbf16>
    %cst_11 = arith.constant dense<0.000000e+00> : vector<8x512xf32>
    %23 = tpu.matmul %1, %22, %cst_11 {dimension_numbers = #tpu.dot_dimension_numbers<[1], [0], [0], [1], [0, 0, 1, 1], [], []>} : vector<8x256xbf16>, vector<256x512xbf16>, vector<8x512xf32> -> vector<8x512xf32>
    %c0_12 = arith.constant 0 : index
    %c0_13 = arith.constant 0 : index
    %24 = vector.load %arg8[%c0_12, %c0_13] : memref<1x512xf32, #tpu.memory_space<vmem>>, vector<1x512xf32>
    %25 = vector.broadcast %24 : vector<1x512xf32> to vector<8x512xf32>
    %26 = arith.addf %23, %25 : vector<8x512xf32>
    %27 = arith.truncf %26 : vector<8x512xf32> to vector<8x512xbf16>
    %28 = vector.extract_strided_slice %27 {offsets = [0, 0], sizes = [8, 256], strides = [1, 1]} : vector<8x512xbf16> to vector<8x256xbf16>
    %29 = vector.extract_strided_slice %28 {offsets = [0, 0], sizes = [8, 128], strides = [1, 1]} : vector<8x256xbf16> to vector<8x128xbf16>
    %30 = vector.extract_strided_slice %28 {offsets = [0, 128], sizes = [8, 128], strides = [1, 1]} : vector<8x256xbf16> to vector<8x128xbf16>
    %31 = vector.shape_cast %29 : vector<8x128xbf16> to vector<1x8x128xbf16>
    %32 = vector.shape_cast %30 : vector<8x128xbf16> to vector<1x8x128xbf16>
    %33 = tpu.concatenate %31, %32 in 0 : vector<1x8x128xbf16>, vector<1x8x128xbf16> -> vector<2x8x128xbf16>
    %34 = vector.extract_strided_slice %27 {offsets = [0, 256], sizes = [8, 256], strides = [1, 1]} : vector<8x512xbf16> to vector<8x256xbf16>
    %35 = vector.extract_strided_slice %34 {offsets = [0, 0], sizes = [8, 128], strides = [1, 1]} : vector<8x256xbf16> to vector<8x128xbf16>
    %36 = vector.extract_strided_slice %34 {offsets = [0, 128], sizes = [8, 128], strides = [1, 1]} : vector<8x256xbf16> to vector<8x128xbf16>
    %37 = vector.shape_cast %35 : vector<8x128xbf16> to vector<1x8x128xbf16>
    %38 = vector.shape_cast %36 : vector<8x128xbf16> to vector<1x8x128xbf16>
    %39 = tpu.concatenate %37, %38 in 0 : vector<1x8x128xbf16>, vector<1x8x128xbf16> -> vector<2x8x128xbf16>
    %40 = vector.extract_strided_slice %9 {offsets = [0, 0], sizes = [8, 256], strides = [1, 1]} : vector<8x768xbf16> to vector<8x256xbf16>
    %41 = vector.extract_strided_slice %40 {offsets = [0, 0], sizes = [8, 128], strides = [1, 1]} : vector<8x256xbf16> to vector<8x128xbf16>
    %42 = vector.extract_strided_slice %40 {offsets = [0, 128], sizes = [8, 128], strides = [1, 1]} : vector<8x256xbf16> to vector<8x128xbf16>
    %43 = vector.shape_cast %41 : vector<8x128xbf16> to vector<1x8x128xbf16>
    %44 = vector.shape_cast %42 : vector<8x128xbf16> to vector<1x8x128xbf16>
    %45 = tpu.concatenate %43, %44 in 0 : vector<1x8x128xbf16>, vector<1x8x128xbf16> -> vector<2x8x128xbf16>
    %46 = tpu.iota {dimensions = array<i32: 0>} : vector<8x8xi32>
    %c0_i32 = arith.constant 0 : i32
    %47 = vector.broadcast %c0_i32 : i32 to vector<8x8xi32>
    %48 = arith.addi %47, %46 : vector<8x8xi32>
    %49 = tpu.iota {dimensions = array<i32: 1>} : vector<8x8xi32>
    %50 = arith.cmpi sgt, %49, %48 : vector<8x8xi32>
    "tpu.trace_start"() <{level = 10 : i32, message = "hqd,hkd->hqk"}> : () -> ()
    %cst_14 = arith.constant dense<0.000000e+00> : vector<2x8x8xf32>
    %51 = tpu.matmul %45, %15, %cst_14 {dimension_numbers = #tpu.dot_dimension_numbers<[2], [2], [1], [1], [0, 0, 0, 1, 1, 1], [0], [0]>} : vector<2x8x128xbf16>, vector<2x8x128xbf16>, vector<2x8x8xf32> -> vector<2x8x8xf32>
    "tpu.trace_stop"() : () -> ()
    %cst_15 = arith.constant 0.0883883461 : f32
    %52 = vector.broadcast %cst_15 : f32 to vector<2x8x8xf32>
    %53 = arith.mulf %51, %52 : vector<2x8x8xf32>
    %54 = vector.shape_cast %50 : vector<8x8xi1> to vector<1x8x8xi1>
    %cst_16 = arith.constant -1.000000e+09 : f32
    %55 = vector.shape_cast %54 : vector<1x8x8xi1> to vector<1x8x8xi1>
    %56 = vector.broadcast %55 : vector<1x8x8xi1> to vector<2x8x8xi1>
    %57 = vector.broadcast %cst_16 : f32 to vector<2x8x8xf32>
    %58 = arith.select %56, %57, %53 : vector<2x8x8xi1>, vector<2x8x8xf32>
    %cst_17 = arith.constant dense<0xFF800000> : vector<2x8xf32>
    %59 = vector.multi_reduction <maximumf>, %58, %cst_17 [2] : vector<2x8x8xf32> to vector<2x8xf32>
    %60 = vector.shape_cast %59 : vector<2x8xf32> to vector<2x8x1xf32>
    %61 = vector.broadcast %60 : vector<2x8x1xf32> to vector<2x8x8xf32>
    %62 = arith.subf %58, %61 : vector<2x8x8xf32>
    %63 = math.exp %62 : vector<2x8x8xf32>
    %cst_18 = arith.constant dense<0.000000e+00> : vector<2x8xf32>
    %64 = vector.multi_reduction <add>, %63, %cst_18 [2] : vector<2x8x8xf32> to vector<2x8xf32>
    %65 = vector.shape_cast %64 : vector<2x8xf32> to vector<2x8x1xf32>
    %66 = tpu.reciprocal %65 {approx = true} : vector<2x8x1xf32> -> vector<2x8x1xf32>
    %67 = vector.broadcast %66 : vector<2x8x1xf32> to vector<2x8x8xf32>
    %68 = arith.mulf %63, %67 : vector<2x8x8xf32>
    %69 = arith.truncf %68 : vector<2x8x8xf32> to vector<2x8x8xbf16>
    "tpu.trace_start"() <{level = 10 : i32, message = "hqk,hkd->hqd"}> : () -> ()
    %cst_19 = arith.constant dense<0.000000e+00> : vector<2x8x128xf32>
    %70 = tpu.matmul %69, %21, %cst_19 {dimension_numbers = #tpu.dot_dimension_numbers<[2], [1], [1], [2], [0, 0, 0, 1, 1, 2], [0], [0]>} : vector<2x8x8xbf16>, vector<2x8x128xbf16>, vector<2x8x128xf32> -> vector<2x8x128xf32>
    "tpu.trace_stop"() : () -> ()
    %71 = vector.extract_strided_slice %70 {offsets = [0, 0, 0], sizes = [1, 8, 128], strides = [1, 1, 1]} : vector<2x8x128xf32> to vector<1x8x128xf32>
    %72 = vector.shape_cast %71 : vector<1x8x128xf32> to vector<8x128xf32>
    %73 = arith.truncf %72 : vector<8x128xf32> to vector<8x128xbf16>
    %74 = vector.extract_strided_slice %70 {offsets = [1, 0, 0], sizes = [1, 8, 128], strides = [1, 1, 1]} : vector<2x8x128xf32> to vector<1x8x128xf32>
    %75 = vector.shape_cast %74 : vector<1x8x128xf32> to vector<8x128xf32>
    %76 = arith.truncf %75 : vector<8x128xf32> to vector<8x128xbf16>
    %77 = tpu.concatenate %73, %76 in 1 : vector<8x128xbf16>, vector<8x128xbf16> -> vector<8x256xbf16>
    %c0_20 = arith.constant 0 : index
    %c0_21 = arith.constant 0 : index
    %78 = vector.load %arg5[%c0_20, %c0_21] : memref<256x256xbf16, #tpu.memory_space<vmem>>, vector<256x256xbf16>
    %cst_22 = arith.constant dense<0.000000e+00> : vector<8x256xf32>
    %79 = tpu.matmul %77, %78, %cst_22 {dimension_numbers = #tpu.dot_dimension_numbers<[1], [0], [0], [1], [0, 0, 1, 1], [], []>} : vector<8x256xbf16>, vector<256x256xbf16>, vector<8x256xf32> -> vector<8x256xf32>
    %c0_23 = arith.constant 0 : index
    %c0_24 = arith.constant 0 : index
    %80 = vector.load %arg6[%c0_23, %c0_24] : memref<1x256xf32, #tpu.memory_space<vmem>>, vector<1x256xf32>
    %81 = vector.broadcast %80 : vector<1x256xf32> to vector<8x256xf32>
    %82 = arith.addf %79, %81 : vector<8x256xf32>
    %83 = arith.extf %3 : vector<8x256xbf16> to vector<8x256xf32>
    %84 = arith.addf %82, %83 : vector<8x256xf32>
    %cst_25 = arith.constant dense<0.000000e+00> : vector<8xf32>
    %85 = vector.multi_reduction <add>, %84, %cst_25 [1] : vector<8x256xf32> to vector<8xf32>
    %86 = vector.shape_cast %85 : vector<8xf32> to vector<8x1xf32>
    %cst_26 = arith.constant 2.560000e+02 : f32
    %87 = vector.broadcast %cst_26 : f32 to vector<8x1xf32>
    %88 = arith.divf %86, %87 : vector<8x1xf32>
    %89 = vector.broadcast %88 : vector<8x1xf32> to vector<8x256xf32>
    %90 = arith.subf %84, %89 : vector<8x256xf32>
    %91 = arith.mulf %90, %90 : vector<8x256xf32>
    %cst_27 = arith.constant dense<0.000000e+00> : vector<8xf32>
    %92 = vector.multi_reduction <add>, %91, %cst_27 [1] : vector<8x256xf32> to vector<8xf32>
    %93 = vector.shape_cast %92 : vector<8xf32> to vector<8x1xf32>
    %cst_28 = arith.constant 2.560000e+02 : f32
    %94 = vector.broadcast %cst_28 : f32 to vector<8x1xf32>
    %95 = arith.divf %93, %94 : vector<8x1xf32>
    %c0_29 = arith.constant 0 : index
    %c0_30 = arith.constant 0 : index
    %96 = vector.load %arg17[%c0_29, %c0_30] : memref<1x256xf32, #tpu.memory_space<vmem>>, vector<1x256xf32>
    %97 = vector.broadcast %88 : vector<8x1xf32> to vector<8x256xf32>
    %98 = arith.subf %84, %97 : vector<8x256xf32>
    %cst_31 = arith.constant 9.99999974E-6 : f32
    %99 = vector.broadcast %cst_31 : f32 to vector<8x1xf32>
    %100 = arith.addf %95, %99 : vector<8x1xf32>
    %101 = math.rsqrt %100 : vector<8x1xf32>
    %102 = vector.broadcast %101 : vector<8x1xf32> to vector<8x256xf32>
    %103 = arith.mulf %98, %102 : vector<8x256xf32>
    %104 = vector.broadcast %96 : vector<1x256xf32> to vector<8x256xf32>
    %105 = arith.mulf %104, %103 : vector<8x256xf32>
    %c0_32 = arith.constant 0 : index
    %c0_33 = arith.constant 0 : index
    %106 = vector.load %arg18[%c0_32, %c0_33] : memref<1x256xf32, #tpu.memory_space<vmem>>, vector<1x256xf32>
    %107 = vector.broadcast %106 : vector<1x256xf32> to vector<8x256xf32>
    %108 = arith.addf %105, %107 : vector<8x256xf32>
    %109 = arith.truncf %108 : vector<8x256xf32> to vector<8x256xbf16>
    %c0_34 = arith.constant 0 : index
    %c0_35 = arith.constant 0 : index
    %110 = vector.load %arg9[%c0_34, %c0_35] : memref<256x256xbf16, #tpu.memory_space<vmem>>, vector<256x256xbf16>
    %cst_36 = arith.constant dense<0.000000e+00> : vector<8x256xf32>
    %111 = tpu.matmul %109, %110, %cst_36 {dimension_numbers = #tpu.dot_dimension_numbers<[1], [0], [0], [1], [0, 0, 1, 1], [], []>} : vector<8x256xbf16>, vector<256x256xbf16>, vector<8x256xf32> -> vector<8x256xf32>
    %c0_37 = arith.constant 0 : index
    %c0_38 = arith.constant 0 : index
    %112 = vector.load %arg10[%c0_37, %c0_38] : memref<1x256xf32, #tpu.memory_space<vmem>>, vector<1x256xf32>
    %113 = vector.broadcast %112 : vector<1x256xf32> to vector<8x256xf32>
    %114 = arith.addf %111, %113 : vector<8x256xf32>
    %115 = arith.truncf %114 : vector<8x256xf32> to vector<8x256xbf16>
    %116 = vector.extract_strided_slice %115 {offsets = [0, 0], sizes = [8, 128], strides = [1, 1]} : vector<8x256xbf16> to vector<8x128xbf16>
    %117 = vector.extract_strided_slice %115 {offsets = [0, 128], sizes = [8, 128], strides = [1, 1]} : vector<8x256xbf16> to vector<8x128xbf16>
    %118 = vector.shape_cast %116 : vector<8x128xbf16> to vector<1x8x128xbf16>
    %119 = vector.shape_cast %117 : vector<8x128xbf16> to vector<1x8x128xbf16>
    %120 = tpu.concatenate %118, %119 in 0 : vector<1x8x128xbf16>, vector<1x8x128xbf16> -> vector<2x8x128xbf16>
    "tpu.trace_start"() <{level = 10 : i32, message = "hqd,hkd->hqk"}> : () -> ()
    %cst_39 = arith.constant dense<0.000000e+00> : vector<2x8x8xf32>
    %121 = tpu.matmul %120, %33, %cst_39 {dimension_numbers = #tpu.dot_dimension_numbers<[2], [2], [1], [1], [0, 0, 0, 1, 1, 1], [0], [0]>} : vector<2x8x128xbf16>, vector<2x8x128xbf16>, vector<2x8x8xf32> -> vector<2x8x8xf32>
    "tpu.trace_stop"() : () -> ()
    %cst_40 = arith.constant 0.0883883461 : f32
    %122 = vector.broadcast %cst_40 : f32 to vector<2x8x8xf32>
    %123 = arith.mulf %121, %122 : vector<2x8x8xf32>
    %cst_41 = arith.constant dense<0xFF800000> : vector<2x8xf32>
    %124 = vector.multi_reduction <maximumf>, %123, %cst_41 [2] : vector<2x8x8xf32> to vector<2x8xf32>
    %125 = vector.shape_cast %124 : vector<2x8xf32> to vector<2x8x1xf32>
    %126 = vector.broadcast %125 : vector<2x8x1xf32> to vector<2x8x8xf32>
    %127 = arith.subf %123, %126 : vector<2x8x8xf32>
    %128 = math.exp %127 : vector<2x8x8xf32>
    %cst_42 = arith.constant dense<0.000000e+00> : vector<2x8xf32>
    %129 = vector.multi_reduction <add>, %128, %cst_42 [2] : vector<2x8x8xf32> to vector<2x8xf32>
    %130 = vector.shape_cast %129 : vector<2x8xf32> to vector<2x8x1xf32>
    %131 = tpu.reciprocal %130 {approx = true} : vector<2x8x1xf32> -> vector<2x8x1xf32>
    %132 = vector.broadcast %131 : vector<2x8x1xf32> to vector<2x8x8xf32>
    %133 = arith.mulf %128, %132 : vector<2x8x8xf32>
    %134 = arith.truncf %133 : vector<2x8x8xf32> to vector<2x8x8xbf16>
    "tpu.trace_start"() <{level = 10 : i32, message = "hqk,hkd->hqd"}> : () -> ()
    %cst_43 = arith.constant dense<0.000000e+00> : vector<2x8x128xf32>
    %135 = tpu.matmul %134, %39, %cst_43 {dimension_numbers = #tpu.dot_dimension_numbers<[2], [1], [1], [2], [0, 0, 0, 1, 1, 2], [0], [0]>} : vector<2x8x8xbf16>, vector<2x8x128xbf16>, vector<2x8x128xf32> -> vector<2x8x128xf32>
    "tpu.trace_stop"() : () -> ()
    %136 = vector.extract_strided_slice %135 {offsets = [0, 0, 0], sizes = [1, 8, 128], strides = [1, 1, 1]} : vector<2x8x128xf32> to vector<1x8x128xf32>
    %137 = vector.shape_cast %136 : vector<1x8x128xf32> to vector<8x128xf32>
    %138 = arith.truncf %137 : vector<8x128xf32> to vector<8x128xbf16>
    %139 = vector.extract_strided_slice %135 {offsets = [1, 0, 0], sizes = [1, 8, 128], strides = [1, 1, 1]} : vector<2x8x128xf32> to vector<1x8x128xf32>
    %140 = vector.shape_cast %139 : vector<1x8x128xf32> to vector<8x128xf32>
    %141 = arith.truncf %140 : vector<8x128xf32> to vector<8x128xbf16>
    %142 = tpu.concatenate %138, %141 in 1 : vector<8x128xbf16>, vector<8x128xbf16> -> vector<8x256xbf16>
    %c0_44 = arith.constant 0 : index
    %c0_45 = arith.constant 0 : index
    %143 = vector.load %arg11[%c0_44, %c0_45] : memref<256x256xbf16, #tpu.memory_space<vmem>>, vector<256x256xbf16>
    %cst_46 = arith.constant dense<0.000000e+00> : vector<8x256xf32>
    %144 = tpu.matmul %142, %143, %cst_46 {dimension_numbers = #tpu.dot_dimension_numbers<[1], [0], [0], [1], [0, 0, 1, 1], [], []>} : vector<8x256xbf16>, vector<256x256xbf16>, vector<8x256xf32> -> vector<8x256xf32>
    %c0_47 = arith.constant 0 : index
    %c0_48 = arith.constant 0 : index
    %145 = vector.load %arg12[%c0_47, %c0_48] : memref<1x256xf32, #tpu.memory_space<vmem>>, vector<1x256xf32>
    %146 = vector.broadcast %145 : vector<1x256xf32> to vector<8x256xf32>
    %147 = arith.addf %144, %146 : vector<8x256xf32>
    %148 = arith.extf %109 : vector<8x256xbf16> to vector<8x256xf32>
    %149 = arith.addf %147, %148 : vector<8x256xf32>
    %cst_49 = arith.constant dense<0.000000e+00> : vector<8xf32>
    %150 = vector.multi_reduction <add>, %149, %cst_49 [1] : vector<8x256xf32> to vector<8xf32>
    %151 = vector.shape_cast %150 : vector<8xf32> to vector<8x1xf32>
    %cst_50 = arith.constant 2.560000e+02 : f32
    %152 = vector.broadcast %cst_50 : f32 to vector<8x1xf32>
    %153 = arith.divf %151, %152 : vector<8x1xf32>
    %154 = vector.broadcast %153 : vector<8x1xf32> to vector<8x256xf32>
    %155 = arith.subf %149, %154 : vector<8x256xf32>
    %156 = arith.mulf %155, %155 : vector<8x256xf32>
    %cst_51 = arith.constant dense<0.000000e+00> : vector<8xf32>
    %157 = vector.multi_reduction <add>, %156, %cst_51 [1] : vector<8x256xf32> to vector<8xf32>
    %158 = vector.shape_cast %157 : vector<8xf32> to vector<8x1xf32>
    %cst_52 = arith.constant 2.560000e+02 : f32
    %159 = vector.broadcast %cst_52 : f32 to vector<8x1xf32>
    %160 = arith.divf %158, %159 : vector<8x1xf32>
    %c0_53 = arith.constant 0 : index
    %c0_54 = arith.constant 0 : index
    %161 = vector.load %arg19[%c0_53, %c0_54] : memref<1x256xf32, #tpu.memory_space<vmem>>, vector<1x256xf32>
    %162 = vector.broadcast %153 : vector<8x1xf32> to vector<8x256xf32>
    %163 = arith.subf %149, %162 : vector<8x256xf32>
    %cst_55 = arith.constant 9.99999974E-6 : f32
    %164 = vector.broadcast %cst_55 : f32 to vector<8x1xf32>
    %165 = arith.addf %160, %164 : vector<8x1xf32>
    %166 = math.rsqrt %165 : vector<8x1xf32>
    %167 = vector.broadcast %166 : vector<8x1xf32> to vector<8x256xf32>
    %168 = arith.mulf %163, %167 : vector<8x256xf32>
    %169 = vector.broadcast %161 : vector<1x256xf32> to vector<8x256xf32>
    %170 = arith.mulf %169, %168 : vector<8x256xf32>
    %c0_56 = arith.constant 0 : index
    %c0_57 = arith.constant 0 : index
    %171 = vector.load %arg20[%c0_56, %c0_57] : memref<1x256xf32, #tpu.memory_space<vmem>>, vector<1x256xf32>
    %172 = vector.broadcast %171 : vector<1x256xf32> to vector<8x256xf32>
    %173 = arith.addf %170, %172 : vector<8x256xf32>
    %174 = arith.truncf %173 : vector<8x256xf32> to vector<8x256xbf16>
    %c0_58 = arith.constant 0 : index
    %c0_59 = arith.constant 0 : index
    %175 = vector.load %arg13[%c0_58, %c0_59] : memref<256x512xbf16, #tpu.memory_space<vmem>>, vector<256x512xbf16>
    %cst_60 = arith.constant dense<0.000000e+00> : vector<8x512xf32>
    %176 = tpu.matmul %174, %175, %cst_60 {dimension_numbers = #tpu.dot_dimension_numbers<[1], [0], [0], [1], [0, 0, 1, 1], [], []>} : vector<8x256xbf16>, vector<256x512xbf16>, vector<8x512xf32> -> vector<8x512xf32>
    %c0_61 = arith.constant 0 : index
    %c0_62 = arith.constant 0 : index
    %177 = vector.load %arg14[%c0_61, %c0_62] : memref<1x512xf32, #tpu.memory_space<vmem>>, vector<1x512xf32>
    %178 = vector.broadcast %177 : vector<1x512xf32> to vector<8x512xf32>
    %179 = arith.addf %176, %178 : vector<8x512xf32>
    %180 = arith.truncf %179 : vector<8x512xf32> to vector<8x512xbf16>
    %cst_63 = arith.constant 0.000000e+00 : bf16
    %181 = vector.broadcast %cst_63 : bf16 to vector<8x512xbf16>
    %182 = arith.maximumf %180, %181 : vector<8x512xbf16>
    %c0_64 = arith.constant 0 : index
    %c0_65 = arith.constant 0 : index
    %183 = vector.load %arg15[%c0_64, %c0_65] : memref<512x256xbf16, #tpu.memory_space<vmem>>, vector<512x256xbf16>
    %cst_66 = arith.constant dense<0.000000e+00> : vector<8x256xf32>
    %184 = tpu.matmul %182, %183, %cst_66 {dimension_numbers = #tpu.dot_dimension_numbers<[1], [0], [0], [1], [0, 0, 1, 1], [], []>} : vector<8x512xbf16>, vector<512x256xbf16>, vector<8x256xf32> -> vector<8x256xf32>
    %c0_67 = arith.constant 0 : index
    %c0_68 = arith.constant 0 : index
    %185 = vector.load %arg16[%c0_67, %c0_68] : memref<1x256xf32, #tpu.memory_space<vmem>>, vector<1x256xf32>
    %186 = vector.broadcast %185 : vector<1x256xf32> to vector<8x256xf32>
    %187 = arith.addf %184, %186 : vector<8x256xf32>
    %188 = arith.extf %174 : vector<8x256xbf16> to vector<8x256xf32>
    %189 = arith.addf %187, %188 : vector<8x256xf32>
    %cst_69 = arith.constant dense<0.000000e+00> : vector<8xf32>
    %190 = vector.multi_reduction <add>, %189, %cst_69 [1] : vector<8x256xf32> to vector<8xf32>
    %191 = vector.shape_cast %190 : vector<8xf32> to vector<8x1xf32>
    %cst_70 = arith.constant 2.560000e+02 : f32
    %192 = vector.broadcast %cst_70 : f32 to vector<8x1xf32>
    %193 = arith.divf %191, %192 : vector<8x1xf32>
    %194 = vector.broadcast %193 : vector<8x1xf32> to vector<8x256xf32>
    %195 = arith.subf %189, %194 : vector<8x256xf32>
    %196 = arith.mulf %195, %195 : vector<8x256xf32>
    %cst_71 = arith.constant dense<0.000000e+00> : vector<8xf32>
    %197 = vector.multi_reduction <add>, %196, %cst_71 [1] : vector<8x256xf32> to vector<8xf32>
    %198 = vector.shape_cast %197 : vector<8xf32> to vector<8x1xf32>
    %cst_72 = arith.constant 2.560000e+02 : f32
    %199 = vector.broadcast %cst_72 : f32 to vector<8x1xf32>
    %200 = arith.divf %198, %199 : vector<8x1xf32>
    %c0_73 = arith.constant 0 : index
    %c0_74 = arith.constant 0 : index
    %201 = vector.load %arg21[%c0_73, %c0_74] : memref<1x256xf32, #tpu.memory_space<vmem>>, vector<1x256xf32>
    %202 = vector.broadcast %193 : vector<8x1xf32> to vector<8x256xf32>
    %203 = arith.subf %189, %202 : vector<8x256xf32>
    %cst_75 = arith.constant 9.99999974E-6 : f32
    %204 = vector.broadcast %cst_75 : f32 to vector<8x1xf32>
    %205 = arith.addf %200, %204 : vector<8x1xf32>
    %206 = math.rsqrt %205 : vector<8x1xf32>
    %207 = vector.broadcast %206 : vector<8x1xf32> to vector<8x256xf32>
    %208 = arith.mulf %203, %207 : vector<8x256xf32>
    %209 = vector.broadcast %201 : vector<1x256xf32> to vector<8x256xf32>
    %210 = arith.mulf %209, %208 : vector<8x256xf32>
    %c0_76 = arith.constant 0 : index
    %c0_77 = arith.constant 0 : index
    %211 = vector.load %arg22[%c0_76, %c0_77] : memref<1x256xf32, #tpu.memory_space<vmem>>, vector<1x256xf32>
    %212 = vector.broadcast %211 : vector<1x256xf32> to vector<8x256xf32>
    %213 = arith.addf %210, %212 : vector<8x256xf32>
    %214 = arith.truncf %213 : vector<8x256xf32> to vector<8x256xbf16>
    %c0_78 = arith.constant 0 : index
    %c0_79 = arith.constant 0 : index
    %c0_80 = arith.constant 0 : index
    %215 = vector.load %arg23[%c0_78, %c0_79, %c0_80] : memref<1x8x256xbf16, #tpu.memory_space<vmem>>, vector<1x8x256xbf16>
    %216 = vector.shape_cast %215 : vector<1x8x256xbf16> to vector<8x256xbf16>
    %217 = vector.shape_cast %214 : vector<8x256xbf16> to vector<1x8x256xbf16>
    tpu.vector_store %arg23[%c0_78, %c0_79, %c0_80], %217 {strides = array<i32>} : memref<1x8x256xbf16, #tpu.memory_space<vmem>>, vector<1x8x256xbf16>,
    return
  }
  func.func @transform_0(%arg0: i32) -> (i32, i32, i32) {
    %c0_i32 = arith.constant 0 : i32
    %c0_i32_0 = arith.constant 0 : i32
    %c0_i32_1 = arith.constant 0 : i32
    return %arg0, %c0_i32, %c0_i32_0 : i32, i32, i32
  }
  func.func @transform_1(%arg0: i32) -> (i32, i32, i32) {
    %c0_i32 = arith.constant 0 : i32
    %c0_i32_0 = arith.constant 0 : i32
    %c0_i32_1 = arith.constant 0 : i32
    return %arg0, %c0_i32, %c0_i32_0 : i32, i32, i32
  }
  func.func @transform_2(%arg0: i32) -> (i32, i32) {
    %c0_i32 = arith.constant 0 : i32
    %c0_i32_0 = arith.constant 0 : i32
    %c0_i32_1 = arith.constant 0 : i32
    return %c0_i32, %c0_i32_0 : i32, i32
  }
  func.func @transform_3(%arg0: i32) -> (i32, i32) {
    %c0_i32 = arith.constant 0 : i32
    %c0_i32_0 = arith.constant 0 : i32
    %c0_i32_1 = arith.constant 0 : i32
    return %c0_i32, %c0_i32_0 : i32, i32
  }
  func.func @transform_4(%arg0: i32) -> (i32, i32) {
    %c0_i32 = arith.constant 0 : i32
    %c0_i32_0 = arith.constant 0 : i32
    %c0_i32_1 = arith.constant 0 : i32
    return %c0_i32, %c0_i32_0 : i32, i32
  }
  func.func @transform_5(%arg0: i32) -> (i32, i32) {
    %c0_i32 = arith.constant 0 : i32
    %c0_i32_0 = arith.constant 0 : i32
    %c0_i32_1 = arith.constant 0 : i32
    return %c0_i32, %c0_i32_0 : i32, i32
  }
  func.func @transform_6(%arg0: i32) -> (i32, i32) {
    %c0_i32 = arith.constant 0 : i32
    %c0_i32_0 = arith.constant 0 : i32
    %c0_i32_1 = arith.constant 0 : i32
    return %c0_i32, %c0_i32_0 : i32, i32
  }
  func.func @transform_7(%arg0: i32) -> (i32, i32) {
    %c0_i32 = arith.constant 0 : i32
    %c0_i32_0 = arith.constant 0 : i32
    %c0_i32_1 = arith.constant 0 : i32
    return %c0_i32, %c0_i32_0 : i32, i32
  }
  func.func @transform_8(%arg0: i32) -> (i32, i32) {
    %c0_i32 = arith.constant 0 : i32
    %c0_i32_0 = arith.constant 0 : i32
    %c0_i32_1 = arith.constant 0 : i32
    return %c0_i32, %c0_i32_0 : i32, i32
  }
  func.func @transform_9(%arg0: i32) -> (i32, i32) {
    %c0_i32 = arith.constant 0 : i32
    %c0_i32_0 = arith.constant 0 : i32
    %c0_i32_1 = arith.constant 0 : i32
    return %c0_i32, %c0_i32_0 : i32, i32
  }
  func.func @transform_10(%arg0: i32) -> (i32, i32) {
    %c0_i32 = arith.constant 0 : i32
    %c0_i32_0 = arith.constant 0 : i32
    %c0_i32_1 = arith.constant 0 : i32
    return %c0_i32, %c0_i32_0 : i32, i32
  }
  func.func @transform_11(%arg0: i32) -> (i32, i32) {
    %c0_i32 = arith.constant 0 : i32
    %c0_i32_0 = arith.constant 0 : i32
    %c0_i32_1 = arith.constant 0 : i32
    return %c0_i32, %c0_i32_0 : i32, i32
  }
  func.func @transform_12(%arg0: i32) -> (i32, i32) {
    %c0_i32 = arith.constant 0 : i32
    %c0_i32_0 = arith.constant 0 : i32
    %c0_i32_1 = arith.constant 0 : i32
    return %c0_i32, %c0_i32_0 : i32, i32
  }
  func.func @transform_13(%arg0: i32) -> (i32, i32) {
    %c0_i32 = arith.constant 0 : i32
    %c0_i32_0 = arith.constant 0 : i32
    %c0_i32_1 = arith.constant 0 : i32
    return %c0_i32, %c0_i32_0 : i32, i32
  }
  func.func @transform_14(%arg0: i32) -> (i32, i32) {
    %c0_i32 = arith.constant 0 : i32
    %c0_i32_0 = arith.constant 0 : i32
    %c0_i32_1 = arith.constant 0 : i32
    return %c0_i32, %c0_i32_0 : i32, i32
  }
  func.func @transform_15(%arg0: i32) -> (i32, i32) {
    %c0_i32 = arith.constant 0 : i32
    %c0_i32_0 = arith.constant 0 : i32
    %c0_i32_1 = arith.constant 0 : i32
    return %c0_i32, %c0_i32_0 : i32, i32
  }
  func.func @transform_16(%arg0: i32) -> (i32, i32) {
    %c0_i32 = arith.constant 0 : i32
    %c0_i32_0 = arith.constant 0 : i32
    %c0_i32_1 = arith.constant 0 : i32
    return %c0_i32, %c0_i32_0 : i32, i32
  }
  func.func @transform_17(%arg0: i32) -> (i32, i32) {
    %c0_i32 = arith.constant 0 : i32
    %c0_i32_0 = arith.constant 0 : i32
    %c0_i32_1 = arith.constant 0 : i32
    return %c0_i32, %c0_i32_0 : i32, i32
  }
  func.func @transform_18(%arg0: i32) -> (i32, i32) {
    %c0_i32 = arith.constant 0 : i32
    %c0_i32_0 = arith.constant 0 : i32
    %c0_i32_1 = arith.constant 0 : i32
    return %c0_i32, %c0_i32_0 : i32, i32
  }
  func.func @transform_19(%arg0: i32) -> (i32, i32) {
    %c0_i32 = arith.constant 0 : i32
    %c0_i32_0 = arith.constant 0 : i32
    %c0_i32_1 = arith.constant 0 : i32
    return %c0_i32, %c0_i32_0 : i32, i32
  }
  func.func @transform_20(%arg0: i32) -> (i32, i32) {
    %c0_i32 = arith.constant 0 : i32
    %c0_i32_0 = arith.constant 0 : i32
    %c0_i32_1 = arith.constant 0 : i32
    return %c0_i32, %c0_i32_0 : i32, i32
  }
  func.func @transform_21(%arg0: i32) -> (i32, i32) {
    %c0_i32 = arith.constant 0 : i32
    %c0_i32_0 = arith.constant 0 : i32
    %c0_i32_1 = arith.constant 0 : i32
    return %c0_i32, %c0_i32_0 : i32, i32
  }
  func.func @transform_22(%arg0: i32) -> (i32, i32, i32) {
    %c0_i32 = arith.constant 0 : i32
    %c0_i32_0 = arith.constant 0 : i32
    %c0_i32_1 = arith.constant 0 : i32
    return %arg0, %c0_i32, %c0_i32_0 : i32, i32, i32
  }
}

module attributes {stable_mosaic.version = 11 : i64} {
  func.func @_decoder_layer_kernel(%arg0: i32, %arg1: memref<1x8x256xbf16, #tpu.memory_space<vmem>>, %arg2: memref<1x8x256xbf16, #tpu.memory_space<vmem>>, %arg3: memref<256x768xbf16, #tpu.memory_space<vmem>>, %arg4: memref<1x768xf32, #tpu.memory_space<vmem>>, %arg5: memref<256x256xbf16, #tpu.memory_space<vmem>>, %arg6: memref<1x256xf32, #tpu.memory_space<vmem>>, %arg7: memref<256x512xbf16, #tpu.memory_space<vmem>>, %arg8: memref<1x512xf32, #tpu.memory_space<vmem>>, %arg9: memref<256x256xbf16, #tpu.memory_space<vmem>>, %arg10: memref<1x256xf32, #tpu.memory_space<vmem>>, %arg11: memref<256x256xbf16, #tpu.memory_space<vmem>>, %arg12: memref<1x256xf32, #tpu.memory_space<vmem>>, %arg13: memref<256x512xbf16, #tpu.memory_space<vmem>>, %arg14: memref<1x512xf32, #tpu.memory_space<vmem>>, %arg15: memref<512x256xbf16, #tpu.memory_space<vmem>>, %arg16: memref<1x256xf32, #tpu.memory_space<vmem>>, %arg17: memref<1x256xf32, #tpu.memory_space<vmem>>, %arg18: memref<1x256xf32, #tpu.memory_space<vmem>>, %arg19: memref<1x256xf32, #tpu.memory_space<vmem>>, %arg20: memref<1x256xf32, #tpu.memory_space<vmem>>, %arg21: memref<1x256xf32, #tpu.memory_space<vmem>>, %arg22: memref<1x256xf32, #tpu.memory_space<vmem>>, %arg23: memref<1x8x256xbf16, #tpu.memory_space<vmem>>) attributes {dimension_semantics = [#tpu.dimension_semantics<parallel>], iteration_bounds = array<i64: 2>, scalar_prefetch = 0 : i64, scratch_operands = 0 : i64, tpu.core_type = #tpu.core_type<tc>, window_params = [{transform_indices = @transform_0, window_bounds = array<i64: 1, 8, 256>}, {transform_indices = @transform_1, window_bounds = array<i64: 1, 8, 256>}, {pipeline_mode = #tpu.pipeline_mode<synchronous>, transform_indices = @transform_2, window_bounds = array<i64: 256, 768>}, {pipeline_mode = #tpu.pipeline_mode<synchronous>, transform_indices = @transform_3, window_bounds = array<i64: 1, 768>}, {pipeline_mode = #tpu.pipeline_mode<synchronous>, transform_indices = @transform_4, window_bounds = array<i64: 256, 256>}, {pipeline_mode = #tpu.pipeline_mode<synchronous>, transform_indices = @transform_5, window_bounds = array<i64: 1, 256>}, {pipeline_mode = #tpu.pipeline_mode<synchronous>, transform_indices = @transform_6, window_bounds = array<i64: 256, 512>}, {pipeline_mode = #tpu.pipeline_mode<synchronous>, transform_indices = @transform_7, window_bounds = array<i64: 1, 512>}, {pipeline_mode = #tpu.pipeline_mode<synchronous>, transform_indices = @transform_8, window_bounds = array<i64: 256, 256>}, {pipeline_mode = #tpu.pipeline_mode<synchronous>, transform_indices = @transform_9, window_bounds = array<i64: 1, 256>}, {pipeline_mode = #tpu.pipeline_mode<synchronous>, transform_indices = @transform_10, window_bounds = array<i64: 256, 256>}, {pipeline_mode = #tpu.pipeline_mode<synchronous>, transform_indices = @transform_11, window_bounds = array<i64: 1, 256>}, {pipeline_mode = #tpu.pipeline_mode<synchronous>, transform_indices = @transform_12, window_bounds = array<i64: 256, 512>}, {pipeline_mode = #tpu.pipeline_mode<synchronous>, transform_indices = @transform_13, window_bounds = array<i64: 1, 512>}, {pipeline_mode = #tpu.pipeline_mode<synchronous>, transform_indices = @transform_14, window_bounds = array<i64: 512, 256>}, {pipeline_mode = #tpu.pipeline_mode<synchronous>, transform_indices = @transform_15, window_bounds = array<i64: 1, 256>}, {pipeline_mode = #tpu.pipeline_mode<synchronous>, transform_indices = @transform_16, window_bounds = array<i64: 1, 256>}, {pipeline_mode = #tpu.pipeline_mode<synchronous>, transform_indices = @transform_17, window_bounds = array<i64: 1, 256>}, {pipeline_mode = #tpu.pipeline_mode<synchronous>, transform_indices = @transform_18, window_bounds = array<i64: 1, 256>}, {pipeline_mode = #tpu.pipeline_mode<synchronous>, transform_indices = @transform_19, window_bounds = array<i64: 1, 256>}, {pipeline_mode = #tpu.pipeline_mode<synchronous>, transform_indices = @transform_20, window_bounds = array<i64: 1, 256>}, {pipeline_mode = #tpu.pipeline_mode<synchronous>, transform_indices = @transform_21, window_bounds = array<i64: 1, 256>}, {transform_indices = @transform_22, window_bounds = array<i64: 1, 8, 256>}]} {
    %c0 = arith.constant 0 : index
    %c0_0 = arith.constant 0 : index
    %c0_1 = arith.constant 0 : index
    %0 = vector.load %arg1[%c0, %c0_0, %c0_1] : memref<1x8x256xbf16, #tpu.memory_space<vmem>>, vector<1x8x256xbf16>
    %1 = vector.shape_cast %0 : vector<1x8x256xbf16> to vector<8x256xbf16>
    %c0_2 = arith.constant 0 : index
    %c0_3 = arith.constant 0 : index
    %c0_4 = arith.constant 0 : index
    %2 = vector.load %arg2[%c0_2, %c0_3, %c0_4] : memref<1x8x256xbf16, #tpu.memory_space<vmem>>, vector<1x8x256xbf16>
    %3 = vector.shape_cast %2 : vector<1x8x256xbf16> to vector<8x256xbf16>
    %c0_5 = arith.constant 0 : index
    %c0_6 = arith.constant 0 : index
    %4 = vector.load %arg3[%c0_5, %c0_6] : memref<256x768xbf16, #tpu.memory_space<vmem>>, vector<256x768xbf16>
    %cst = arith.constant dense<0.000000e+00> : vector<8x768xf32>
    %5 = tpu.matmul %3, %4, %cst {dimension_numbers = #tpu.dot_dimension_numbers<[1], [0], [0], [1], [0, 0, 1, 1], [], []>} : vector<8x256xbf16>, vector<256x768xbf16>, vector<8x768xf32> -> vector<8x768xf32>
    %c0_7 = arith.constant 0 : index
    %c0_8 = arith.constant 0 : index
    %6 = vector.load %arg4[%c0_7, %c0_8] : memref<1x768xf32, #tpu.memory_space<vmem>>, vector<1x768xf32>
    %7 = vector.broadcast %6 : vector<1x768xf32> to vector<8x768xf32>
    %8 = arith.addf %5, %7 : vector<8x768xf32>
    %9 = arith.truncf %8 : vector<8x768xf32> to vector<8x768xbf16>
    %10 = vector.extract_strided_slice %9 {offsets = [0, 256], sizes = [8, 256], strides = [1, 1]} : vector<8x768xbf16> to vector<8x256xbf16>
    %11 = vector.extract_strided_slice %10 {offsets = [0, 0], sizes = [8, 128], strides = [1, 1]} : vector<8x256xbf16> to vector<8x128xbf16>
    %12 = vector.extract_strided_slice %10 {offsets = [0, 128], sizes = [8, 128], strides = [1, 1]} : vector<8x256xbf16> to vector<8x128xbf16>
    %13 = vector.shape_cast %11 : vector<8x128xbf16> to vector<1x8x128xbf16>
    %14 = vector.shape_cast %12 : vector<8x128xbf16> to vector<1x8x128xbf16>
    %15 = tpu.concatenate %13, %14 in 0 : vector<1x8x128xbf16>, vector<1x8x128xbf16> -> vector<2x8x128xbf16>
    %16 = vector.extract_strided_slice %9 {offsets = [0, 512], sizes = [8, 256], strides = [1, 1]} : vector<8x768xbf16> to vector<8x256xbf16>
    %17 = vector.extract_strided_slice %16 {offsets = [0, 0], sizes = [8, 128], strides = [1, 1]} : vector<8x256xbf16> to vector<8x128xbf16>
    %18 = vector.extract_strided_slice %16 {offsets = [0, 128], sizes = [8, 128], strides = [1, 1]} : vector<8x256xbf16> to vector<8x128xbf16>
    %19 = vector.shape_cast %17 : vector<8x128xbf16> to vector<1x8x128xbf16>
    %20 = vector.shape_cast %18 : vector<8x128xbf16> to vector<1x8x128xbf16>
    %21 = tpu.concatenate %19, %20 in 0 : vector<1x8x128xbf16>, vector<1x8x128xbf16> -> vector<2x8x128xbf16>
    %c0_9 = arith.constant 0 : index
    %c0_10 = arith.constant 0 : index
    %22 = vector.load %arg7[%c0_9, %c0_10] : memref<256x512xbf16, #tpu.memory_space<vmem>>, vector<256x512xbf16>
    %cst_11 = arith.constant dense<0.000000e+00> : vector<8x512xf32>
    %23 = tpu.matmul %1, %22, %cst_11 {dimension_numbers = #tpu.dot_dimension_numbers<[1], [0], [0], [1], [0, 0, 1, 1], [], []>} : vector<8x256xbf16>, vector<256x512xbf16>, vector<8x512xf32> -> vector<8x512xf32>
    %c0_12 = arith.constant 0 : index
    %c0_13 = arith.constant 0 : index
    %24 = vector.load %arg8[%c0_12, %c0_13] : memref<1x512xf32, #tpu.memory_space<vmem>>, vector<1x512xf32>
    %25 = vector.broadcast %24 : vector<1x512xf32> to vector<8x512xf32>
    %26 = arith.addf %23, %25 : vector<8x512xf32>
    %27 = arith.truncf %26 : vector<8x512xf32> to vector<8x512xbf16>
    %28 = vector.extract_strided_slice %27 {offsets = [0, 0], sizes = [8, 256], strides = [1, 1]} : vector<8x512xbf16> to vector<8x256xbf16>
    %29 = vector.extract_strided_slice %28 {offsets = [0, 0], sizes = [8, 128], strides = [1, 1]} : vector<8x256xbf16> to vector<8x128xbf16>
    %30 = vector.extract_strided_slice %28 {offsets = [0, 128], sizes = [8, 128], strides = [1, 1]} : vector<8x256xbf16> to vector<8x128xbf16>
    %31 = vector.shape_cast %29 : vector<8x128xbf16> to vector<1x8x128xbf16>
    %32 = vector.shape_cast %30 : vector<8x128xbf16> to vector<1x8x128xbf16>
    %33 = tpu.concatenate %31, %32 in 0 : vector<1x8x128xbf16>, vector<1x8x128xbf16> -> vector<2x8x128xbf16>
    %34 = vector.extract_strided_slice %27 {offsets = [0, 256], sizes = [8, 256], strides = [1, 1]} : vector<8x512xbf16> to vector<8x256xbf16>
    %35 = vector.extract_strided_slice %34 {offsets = [0, 0], sizes = [8, 128], strides = [1, 1]} : vector<8x256xbf16> to vector<8x128xbf16>
    %36 = vector.extract_strided_slice %34 {offsets = [0, 128], sizes = [8, 128], strides = [1, 1]} : vector<8x256xbf16> to vector<8x128xbf16>
    %37 = vector.shape_cast %35 : vector<8x128xbf16> to vector<1x8x128xbf16>
    %38 = vector.shape_cast %36 : vector<8x128xbf16> to vector<1x8x128xbf16>
    %39 = tpu.concatenate %37, %38 in 0 : vector<1x8x128xbf16>, vector<1x8x128xbf16> -> vector<2x8x128xbf16>
    %40 = vector.extract_strided_slice %9 {offsets = [0, 0], sizes = [8, 256], strides = [1, 1]} : vector<8x768xbf16> to vector<8x256xbf16>
    %41 = vector.extract_strided_slice %40 {offsets = [0, 0], sizes = [8, 128], strides = [1, 1]} : vector<8x256xbf16> to vector<8x128xbf16>
    %42 = vector.extract_strided_slice %40 {offsets = [0, 128], sizes = [8, 128], strides = [1, 1]} : vector<8x256xbf16> to vector<8x128xbf16>
    %43 = vector.shape_cast %41 : vector<8x128xbf16> to vector<1x8x128xbf16>
    %44 = vector.shape_cast %42 : vector<8x128xbf16> to vector<1x8x128xbf16>
    %45 = tpu.concatenate %43, %44 in 0 : vector<1x8x128xbf16>, vector<1x8x128xbf16> -> vector<2x8x128xbf16>
    %46 = tpu.iota {dimensions = array<i32: 0>} : vector<8x8xi32>
    %c0_i32 = arith.constant 0 : i32
    %47 = vector.broadcast %c0_i32 : i32 to vector<8x8xi32>
    %48 = arith.addi %47, %46 : vector<8x8xi32>
    %49 = tpu.iota {dimensions = array<i32: 1>} : vector<8x8xi32>
    %50 = arith.cmpi sgt, %49, %48 : vector<8x8xi32>
    "tpu.trace_start"() <{level = 10 : i32, message = "hqd,hkd->hqk"}> : () -> ()
    %cst_14 = arith.constant dense<0.000000e+00> : vector<2x8x8xf32>
    %51 = tpu.matmul %45, %15, %cst_14 {dimension_numbers = #tpu.dot_dimension_numbers<[2], [2], [1], [1], [0, 0, 0, 1, 1, 1], [0], [0]>} : vector<2x8x128xbf16>, vector<2x8x128xbf16>, vector<2x8x8xf32> -> vector<2x8x8xf32>
    "tpu.trace_stop"() : () -> ()
    %cst_15 = arith.constant 0.0883883461 : f32
    %52 = vector.broadcast %cst_15 : f32 to vector<2x8x8xf32>
    %53 = arith.mulf %51, %52 : vector<2x8x8xf32>
    %54 = vector.shape_cast %50 : vector<8x8xi1> to vector<1x8x8xi1>
    %cst_16 = arith.constant -1.000000e+09 : f32
    %55 = vector.shape_cast %54 : vector<1x8x8xi1> to vector<1x8x8xi1>
    %56 = vector.broadcast %55 : vector<1x8x8xi1> to vector<2x8x8xi1>
    %57 = vector.broadcast %cst_16 : f32 to vector<2x8x8xf32>
    %58 = arith.select %56, %57, %53 : vector<2x8x8xi1>, vector<2x8x8xf32>
    %cst_17 = arith.constant dense<0xFF800000> : vector<2x8xf32>
    %59 = vector.multi_reduction <maximumf>, %58, %cst_17 [2] : vector<2x8x8xf32> to vector<2x8xf32>
    %60 = vector.shape_cast %59 : vector<2x8xf32> to vector<2x8x1xf32>
    %61 = vector.broadcast %60 : vector<2x8x1xf32> to vector<2x8x8xf32>
    %62 = arith.subf %58, %61 : vector<2x8x8xf32>
    %63 = math.exp %62 : vector<2x8x8xf32>
    %cst_18 = arith.constant dense<0.000000e+00> : vector<2x8xf32>
    %64 = vector.multi_reduction <add>, %63, %cst_18 [2] : vector<2x8x8xf32> to vector<2x8xf32>
    %65 = vector.shape_cast %64 : vector<2x8xf32> to vector<2x8x1xf32>
    %66 = tpu.reciprocal %65 {approx = true} : vector<2x8x1xf32> -> vector<2x8x1xf32>
    %67 = vector.broadcast %66 : vector<2x8x1xf32> to vector<2x8x8xf32>
    %68 = arith.mulf %63, %67 : vector<2x8x8xf32>
    %69 = arith.truncf %68 : vector<2x8x8xf32> to vector<2x8x8xbf16>
    "tpu.trace_start"() <{level = 10 : i32, message = "hqk,hkd->hqd"}> : () -> ()
    %cst_19 = arith.constant dense<0.000000e+00> : vector<2x8x128xf32>
    %70 = tpu.matmul %69, %21, %cst_19 {dimension_numbers = #tpu.dot_dimension_numbers<[2], [1], [1], [2], [0, 0, 0, 1, 1, 2], [0], [0]>} : vector<2x8x8xbf16>, vector<2x8x128xbf16>, vector<2x8x128xf32> -> vector<2x8x128xf32>
    "tpu.trace_stop"() : () -> ()
    %71 = vector.extract_strided_slice %70 {offsets = [0, 0, 0], sizes = [1, 8, 128], strides = [1, 1, 1]} : vector<2x8x128xf32> to vector<1x8x128xf32>
    %72 = vector.shape_cast %71 : vector<1x8x128xf32> to vector<8x128xf32>
    %73 = arith.truncf %72 : vector<8x128xf32> to vector<8x128xbf16>
    %74 = vector.extract_strided_slice %70 {offsets = [1, 0, 0], sizes = [1, 8, 128], strides = [1, 1, 1]} : vector<2x8x128xf32> to vector<1x8x128xf32>
    %75 = vector.shape_cast %74 : vector<1x8x128xf32> to vector<8x128xf32>
    %76 = arith.truncf %75 : vector<8x128xf32> to vector<8x128xbf16>
    %77 = tpu.concatenate %73, %76 in 1 : vector<8x128xbf16>, vector<8x128xbf16> -> vector<8x256xbf16>
    %c0_20 = arith.constant 0 : index
    %c0_21 = arith.constant 0 : index
    %78 = vector.load %arg5[%c0_20, %c0_21] : memref<256x256xbf16, #tpu.memory_space<vmem>>, vector<256x256xbf16>
    %cst_22 = arith.constant dense<0.000000e+00> : vector<8x256xf32>
    %79 = tpu.matmul %77, %78, %cst_22 {dimension_numbers = #tpu.dot_dimension_numbers<[1], [0], [0], [1], [0, 0, 1, 1], [], []>} : vector<8x256xbf16>, vector<256x256xbf16>, vector<8x256xf32> -> vector<8x256xf32>
    %c0_23 = arith.constant 0 : index
    %c0_24 = arith.constant 0 : index
    %80 = vector.load %arg6[%c0_23, %c0_24] : memref<1x256xf32, #tpu.memory_space<vmem>>, vector<1x256xf32>
    %81 = vector.broadcast %80 : vector<1x256xf32> to vector<8x256xf32>
    %82 = arith.addf %79, %81 : vector<8x256xf32>
    %83 = arith.extf %3 : vector<8x256xbf16> to vector<8x256xf32>
    %84 = arith.addf %82, %83 : vector<8x256xf32>
    %cst_25 = arith.constant dense<0.000000e+00> : vector<8xf32>
    %85 = vector.multi_reduction <add>, %84, %cst_25 [1] : vector<8x256xf32> to vector<8xf32>
    %86 = vector.shape_cast %85 : vector<8xf32> to vector<8x1xf32>
    %cst_26 = arith.constant 2.560000e+02 : f32
    %87 = vector.broadcast %cst_26 : f32 to vector<8x1xf32>
    %88 = arith.divf %86, %87 : vector<8x1xf32>
    %89 = vector.broadcast %88 : vector<8x1xf32> to vector<8x256xf32>
    %90 = arith.subf %84, %89 : vector<8x256xf32>
    %91 = arith.mulf %90, %90 : vector<8x256xf32>
    %cst_27 = arith.constant dense<0.000000e+00> : vector<8xf32>
    %92 = vector.multi_reduction <add>, %91, %cst_27 [1] : vector<8x256xf32> to vector<8xf32>
    %93 = vector.shape_cast %92 : vector<8xf32> to vector<8x1xf32>
    %cst_28 = arith.constant 2.560000e+02 : f32
    %94 = vector.broadcast %cst_28 : f32 to vector<8x1xf32>
    %95 = arith.divf %93, %94 : vector<8x1xf32>
    %c0_29 = arith.constant 0 : index
    %c0_30 = arith.constant 0 : index
    %96 = vector.load %arg17[%c0_29, %c0_30] : memref<1x256xf32, #tpu.memory_space<vmem>>, vector<1x256xf32>
    %97 = vector.broadcast %88 : vector<8x1xf32> to vector<8x256xf32>
    %98 = arith.subf %84, %97 : vector<8x256xf32>
    %cst_31 = arith.constant 9.99999974E-6 : f32
    %99 = vector.broadcast %cst_31 : f32 to vector<8x1xf32>
    %100 = arith.addf %95, %99 : vector<8x1xf32>
    %101 = math.rsqrt %100 : vector<8x1xf32>
    %102 = vector.broadcast %101 : vector<8x1xf32> to vector<8x256xf32>
    %103 = arith.mulf %98, %102 : vector<8x256xf32>
    %104 = vector.broadcast %96 : vector<1x256xf32> to vector<8x256xf32>
    %105 = arith.mulf %104, %103 : vector<8x256xf32>
    %c0_32 = arith.constant 0 : index
    %c0_33 = arith.constant 0 : index
    %106 = vector.load %arg18[%c0_32, %c0_33] : memref<1x256xf32, #tpu.memory_space<vmem>>, vector<1x256xf32>
    %107 = vector.broadcast %106 : vector<1x256xf32> to vector<8x256xf32>
    %108 = arith.addf %105, %107 : vector<8x256xf32>
    %109 = arith.truncf %108 : vector<8x256xf32> to vector<8x256xbf16>
    %c0_34 = arith.constant 0 : index
    %c0_35 = arith.constant 0 : index
    %110 = vector.load %arg9[%c0_34, %c0_35] : memref<256x256xbf16, #tpu.memory_space<vmem>>, vector<256x256xbf16>
    %cst_36 = arith.constant dense<0.000000e+00> : vector<8x256xf32>
    %111 = tpu.matmul %109, %110, %cst_36 {dimension_numbers = #tpu.dot_dimension_numbers<[1], [0], [0], [1], [0, 0, 1, 1], [], []>} : vector<8x256xbf16>, vector<256x256xbf16>, vector<8x256xf32> -> vector<8x256xf32>
    %c0_37 = arith.constant 0 : index
    %c0_38 = arith.constant 0 : index
    %112 = vector.load %arg10[%c0_37, %c0_38] : memref<1x256xf32, #tpu.memory_space<vmem>>, vector<1x256xf32>
    %113 = vector.broadcast %112 : vector<1x256xf32> to vector<8x256xf32>
    %114 = arith.addf %111, %113 : vector<8x256xf32>
    %115 = arith.truncf %114 : vector<8x256xf32> to vector<8x256xbf16>
    %116 = vector.extract_strided_slice %115 {offsets = [0, 0], sizes = [8, 128], strides = [1, 1]} : vector<8x256xbf16> to vector<8x128xbf16>
    %117 = vector.extract_strided_slice %115 {offsets = [0, 128], sizes = [8, 128], strides = [1, 1]} : vector<8x256xbf16> to vector<8x128xbf16>
    %118 = vector.shape_cast %116 : vector<8x128xbf16> to vector<1x8x128xbf16>
    %119 = vector.shape_cast %117 : vector<8x128xbf16> to vector<1x8x128xbf16>
    %120 = tpu.concatenate %118, %119 in 0 : vector<1x8x128xbf16>, vector<1x8x128xbf16> -> vector<2x8x128xbf16>
    "tpu.trace_start"() <{level = 10 : i32, message = "hqd,hkd->hqk"}> : () -> ()
    %cst_39 = arith.constant dense<0.000000e+00> : vector<2x8x8xf32>
    %121 = tpu.matmul %120, %33, %cst_39 {dimension_numbers = #tpu.dot_dimension_numbers<[2], [2], [1], [1], [0, 0, 0, 1, 1, 1], [0], [0]>} : vector<2x8x128xbf16>, vector<2x8x128xbf16>, vector<2x8x8xf32> -> vector<2x8x8xf32>
    "tpu.trace_stop"() : () -> ()
    %cst_40 = arith.constant 0.0883883461 : f32
    %122 = vector.broadcast %cst_40 : f32 to vector<2x8x8xf32>
    %123 = arith.mulf %121, %122 : vector<2x8x8xf32>
    %cst_41 = arith.constant dense<0xFF800000> : vector<2x8xf32>
    %124 = vector.multi_reduction <maximumf>, %123, %cst_41 [2] : vector<2x8x8xf32> to vector<2x8xf32>
    %125 = vector.shape_cast %124 : vector<2x8xf32> to vector<2x8x1xf32>
    %126 = vector.broadcast %125 : vector<2x8x1xf32> to vector<2x8x8xf32>
    %127 = arith.subf %123, %126 : vector<2x8x8xf32>
    %128 = math.exp %127 : vector<2x8x8xf32>
    %cst_42 = arith.constant dense<0.000000e+00> : vector<2x8xf32>
    %129 = vector.multi_reduction <add>, %128, %cst_42 [2] : vector<2x8x8xf32> to vector<2x8xf32>
    %130 = vector.shape_cast %129 : vector<2x8xf32> to vector<2x8x1xf32>
    %131 = tpu.reciprocal %130 {approx = true} : vector<2x8x1xf32> -> vector<2x8x1xf32>
    %132 = vector.broadcast %131 : vector<2x8x1xf32> to vector<2x8x8xf32>
    %133 = arith.mulf %128, %132 : vector<2x8x8xf32>
    %134 = arith.truncf %133 : vector<2x8x8xf32> to vector<2x8x8xbf16>
    "tpu.trace_start"() <{level = 10 : i32, message = "hqk,hkd->hqd"}> : () -> ()
    %cst_43 = arith.constant dense<0.000000e+00> : vector<2x8x128xf32>
    %135 = tpu.matmul %134, %39, %cst_43 {dimension_numbers = #tpu.dot_dimension_numbers<[2], [1], [1], [2], [0, 0, 0, 1, 1, 2], [0], [0]>} : vector<2x8x8xbf16>, vector<2x8x128xbf16>, vector<2x8x128xf32> -> vector<2x8x128xf32>
    "tpu.trace_stop"() : () -> ()
    %136 = vector.extract_strided_slice %135 {offsets = [0, 0, 0], sizes = [1, 8, 128], strides = [1, 1, 1]} : vector<2x8x128xf32> to vector<1x8x128xf32>
    %137 = vector.shape_cast %136 : vector<1x8x128xf32> to vector<8x128xf32>
    %138 = arith.truncf %137 : vector<8x128xf32> to vector<8x128xbf16>
    %139 = vector.extract_strided_slice %135 {offsets = [1, 0, 0], sizes = [1, 8, 128], strides = [1, 1, 1]} : vector<2x8x128xf32> to vector<1x8x128xf32>
    %140 = vector.shape_cast %139 : vector<1x8x128xf32> to vector<8x128xf32>
    %141 = arith.truncf %140 : vector<8x128xf32> to vector<8x128xbf16>
    %142 = tpu.concatenate %138, %141 in 1 : vector<8x128xbf16>, vector<8x128xbf16> -> vector<8x256xbf16>
    %c0_44 = arith.constant 0 : index
    %c0_45 = arith.constant 0 : index
    %143 = vector.load %arg11[%c0_44, %c0_45] : memref<256x256xbf16, #tpu.memory_space<vmem>>, vector<256x256xbf16>
    %cst_46 = arith.constant dense<0.000000e+00> : vector<8x256xf32>
    %144 = tpu.matmul %142, %143, %cst_46 {dimension_numbers = #tpu.dot_dimension_numbers<[1], [0], [0], [1], [0, 0, 1, 1], [], []>} : vector<8x256xbf16>, vector<256x256xbf16>, vector<8x256xf32> -> vector<8x256xf32>
    %c0_47 = arith.constant 0 : index
    %c0_48 = arith.constant 0 : index
    %145 = vector.load %arg12[%c0_47, %c0_48] : memref<1x256xf32, #tpu.memory_space<vmem>>, vector<1x256xf32>
    %146 = vector.broadcast %145 : vector<1x256xf32> to vector<8x256xf32>
    %147 = arith.addf %144, %146 : vector<8x256xf32>
    %148 = arith.extf %109 : vector<8x256xbf16> to vector<8x256xf32>
    %149 = arith.addf %147, %148 : vector<8x256xf32>
    %cst_49 = arith.constant dense<0.000000e+00> : vector<8xf32>
    %150 = vector.multi_reduction <add>, %149, %cst_49 [1] : vector<8x256xf32> to vector<8xf32>
    %151 = vector.shape_cast %150 : vector<8xf32> to vector<8x1xf32>
    %cst_50 = arith.constant 2.560000e+02 : f32
    %152 = vector.broadcast %cst_50 : f32 to vector<8x1xf32>
    %153 = arith.divf %151, %152 : vector<8x1xf32>
    %154 = vector.broadcast %153 : vector<8x1xf32> to vector<8x256xf32>
    %155 = arith.subf %149, %154 : vector<8x256xf32>
    %156 = arith.mulf %155, %155 : vector<8x256xf32>
    %cst_51 = arith.constant dense<0.000000e+00> : vector<8xf32>
    %157 = vector.multi_reduction <add>, %156, %cst_51 [1] : vector<8x256xf32> to vector<8xf32>
    %158 = vector.shape_cast %157 : vector<8xf32> to vector<8x1xf32>
    %cst_52 = arith.constant 2.560000e+02 : f32
    %159 = vector.broadcast %cst_52 : f32 to vector<8x1xf32>
    %160 = arith.divf %158, %159 : vector<8x1xf32>
    %c0_53 = arith.constant 0 : index
    %c0_54 = arith.constant 0 : index
    %161 = vector.load %arg19[%c0_53, %c0_54] : memref<1x256xf32, #tpu.memory_space<vmem>>, vector<1x256xf32>
    %162 = vector.broadcast %153 : vector<8x1xf32> to vector<8x256xf32>
    %163 = arith.subf %149, %162 : vector<8x256xf32>
    %cst_55 = arith.constant 9.99999974E-6 : f32
    %164 = vector.broadcast %cst_55 : f32 to vector<8x1xf32>
    %165 = arith.addf %160, %164 : vector<8x1xf32>
    %166 = math.rsqrt %165 : vector<8x1xf32>
    %167 = vector.broadcast %166 : vector<8x1xf32> to vector<8x256xf32>
    %168 = arith.mulf %163, %167 : vector<8x256xf32>
    %169 = vector.broadcast %161 : vector<1x256xf32> to vector<8x256xf32>
    %170 = arith.mulf %169, %168 : vector<8x256xf32>
    %c0_56 = arith.constant 0 : index
    %c0_57 = arith.constant 0 : index
    %171 = vector.load %arg20[%c0_56, %c0_57] : memref<1x256xf32, #tpu.memory_space<vmem>>, vector<1x256xf32>
    %172 = vector.broadcast %171 : vector<1x256xf32> to vector<8x256xf32>
    %173 = arith.addf %170, %172 : vector<8x256xf32>
    %174 = arith.truncf %173 : vector<8x256xf32> to vector<8x256xbf16>
    %c0_58 = arith.constant 0 : index
    %c0_59 = arith.constant 0 : index
    %175 = vector.load %arg13[%c0_58, %c0_59] : memref<256x512xbf16, #tpu.memory_space<vmem>>, vector<256x512xbf16>
    %cst_60 = arith.constant dense<0.000000e+00> : vector<8x512xf32>
    %176 = tpu.matmul %174, %175, %cst_60 {dimension_numbers = #tpu.dot_dimension_numbers<[1], [0], [0], [1], [0, 0, 1, 1], [], []>} : vector<8x256xbf16>, vector<256x512xbf16>, vector<8x512xf32> -> vector<8x512xf32>
    %c0_61 = arith.constant 0 : index
    %c0_62 = arith.constant 0 : index
    %177 = vector.load %arg14[%c0_61, %c0_62] : memref<1x512xf32, #tpu.memory_space<vmem>>, vector<1x512xf32>
    %178 = vector.broadcast %177 : vector<1x512xf32> to vector<8x512xf32>
    %179 = arith.addf %176, %178 : vector<8x512xf32>
    %180 = arith.truncf %179 : vector<8x512xf32> to vector<8x512xbf16>
    %cst_63 = arith.constant 0.000000e+00 : bf16
    %181 = vector.broadcast %cst_63 : bf16 to vector<8x512xbf16>
    %182 = arith.maximumf %180, %181 : vector<8x512xbf16>
    %c0_64 = arith.constant 0 : index
    %c0_65 = arith.constant 0 : index
    %183 = vector.load %arg15[%c0_64, %c0_65] : memref<512x256xbf16, #tpu.memory_space<vmem>>, vector<512x256xbf16>
    %cst_66 = arith.constant dense<0.000000e+00> : vector<8x256xf32>
    %184 = tpu.matmul %182, %183, %cst_66 {dimension_numbers = #tpu.dot_dimension_numbers<[1], [0], [0], [1], [0, 0, 1, 1], [], []>} : vector<8x512xbf16>, vector<512x256xbf16>, vector<8x256xf32> -> vector<8x256xf32>
    %c0_67 = arith.constant 0 : index
    %c0_68 = arith.constant 0 : index
    %185 = vector.load %arg16[%c0_67, %c0_68] : memref<1x256xf32, #tpu.memory_space<vmem>>, vector<1x256xf32>
    %186 = vector.broadcast %185 : vector<1x256xf32> to vector<8x256xf32>
    %187 = arith.addf %184, %186 : vector<8x256xf32>
    %188 = arith.extf %174 : vector<8x256xbf16> to vector<8x256xf32>
    %189 = arith.addf %187, %188 : vector<8x256xf32>
    %cst_69 = arith.constant dense<0.000000e+00> : vector<8xf32>
    %190 = vector.multi_reduction <add>, %189, %cst_69 [1] : vector<8x256xf32> to vector<8xf32>
    %191 = vector.shape_cast %190 : vector<8xf32> to vector<8x1xf32>
    %cst_70 = arith.constant 2.560000e+02 : f32
    %192 = vector.broadcast %cst_70 : f32 to vector<8x1xf32>
    %193 = arith.divf %191, %192 : vector<8x1xf32>
    %194 = vector.broadcast %193 : vector<8x1xf32> to vector<8x256xf32>
    %195 = arith.subf %189, %194 : vector<8x256xf32>
    %196 = arith.mulf %195, %195 : vector<8x256xf32>
    %cst_71 = arith.constant dense<0.000000e+00> : vector<8xf32>
    %197 = vector.multi_reduction <add>, %196, %cst_71 [1] : vector<8x256xf32> to vector<8xf32>
    %198 = vector.shape_cast %197 : vector<8xf32> to vector<8x1xf32>
    %cst_72 = arith.constant 2.560000e+02 : f32
    %199 = vector.broadcast %cst_72 : f32 to vector<8x1xf32>
    %200 = arith.divf %198, %199 : vector<8x1xf32>
    %c0_73 = arith.constant 0 : index
    %c0_74 = arith.constant 0 : index
    %201 = vector.load %arg21[%c0_73, %c0_74] : memref<1x256xf32, #tpu.memory_space<vmem>>, vector<1x256xf32>
    %202 = vector.broadcast %193 : vector<8x1xf32> to vector<8x256xf32>
    %203 = arith.subf %189, %202 : vector<8x256xf32>
    %cst_75 = arith.constant 9.99999974E-6 : f32
    %204 = vector.broadcast %cst_75 : f32 to vector<8x1xf32>
    %205 = arith.addf %200, %204 : vector<8x1xf32>
    %206 = math.rsqrt %205 : vector<8x1xf32>
    %207 = vector.broadcast %206 : vector<8x1xf32> to vector<8x256xf32>
    %208 = arith.mulf %203, %207 : vector<8x256xf32>
    %209 = vector.broadcast %201 : vector<1x256xf32> to vector<8x256xf32>
    %210 = arith.mulf %209, %208 : vector<8x256xf32>
    %c0_76 = arith.constant 0 : index
    %c0_77 = arith.constant 0 : index
    %211 = vector.load %arg22[%c0_76, %c0_77] : memref<1x256xf32, #tpu.memory_space<vmem>>, vector<1x256xf32>
    %212 = vector.broadcast %211 : vector<1x256xf32> to vector<8x256xf32>
    %213 = arith.addf %210, %212 : vector<8x256xf32>
    %214 = arith.truncf %213 : vector<8x256xf32> to vector<8x256xbf16>
    %c0_78 = arith.constant 0 : index
    %c0_79 = arith.constant 0 : index
    %c0_80 = arith.constant 0 : index
    %215 = vector.load %arg23[%c0_78, %c0_79, %c0_80] : memref<1x8x256xbf16, #tpu.memory_space<vmem>>, vector<1x8x256xbf16>
    %216 = vector.shape_cast %215 : vector<1x8x256xbf16> to vector<8x256xbf16>
    %217 = vector.shape_cast %214 : vector<8x256xbf16> to vector<1x8x256xbf16>
    tpu.vector_store %arg23[%c0_78, %c0_79, %c0_80], %217 {strides = array<i32>} : memref<1x8x256xbf16, #tpu.memory_space<vmem>>, vector<1x8x256xbf16>,
    return
  }
  func.func @transform_0(%arg0: i32) -> (i32, i32, i32) {
    %c0_i32 = arith.constant 0 : i32
    %c0_i32_0 = arith.constant 0 : i32
    %c0_i32_1 = arith.constant 0 : i32
    return %arg0, %c0_i32, %c0_i32_0 : i32, i32, i32
  }
  func.func @transform_1(%arg0: i32) -> (i32, i32, i32) {
    %c0_i32 = arith.constant 0 : i32
    %c0_i32_0 = arith.constant 0 : i32
    %c0_i32_1 = arith.constant 0 : i32
    return %arg0, %c0_i32, %c0_i32_0 : i32, i32, i32
  }
  func.func @transform_2(%arg0: i32) -> (i32, i32) {
    %c0_i32 = arith.constant 0 : i32
    %c0_i32_0 = arith.constant 0 : i32
    %c0_i32_1 = arith.constant 0 : i32
    return %c0_i32, %c0_i32_0 : i32, i32
  }
  func.func @transform_3(%arg0: i32) -> (i32, i32) {
    %c0_i32 = arith.constant 0 : i32
    %c0_i32_0 = arith.constant 0 : i32
    %c0_i32_1 = arith.constant 0 : i32
    return %c0_i32, %c0_i32_0 : i32, i32
  }
  func.func @transform_4(%arg0: i32) -> (i32, i32) {
    %c0_i32 = arith.constant 0 : i32
    %c0_i32_0 = arith.constant 0 : i32
    %c0_i32_1 = arith.constant 0 : i32
    return %c0_i32, %c0_i32_0 : i32, i32
  }
  func.func @transform_5(%arg0: i32) -> (i32, i32) {
    %c0_i32 = arith.constant 0 : i32
    %c0_i32_0 = arith.constant 0 : i32
    %c0_i32_1 = arith.constant 0 : i32
    return %c0_i32, %c0_i32_0 : i32, i32
  }
  func.func @transform_6(%arg0: i32) -> (i32, i32) {
    %c0_i32 = arith.constant 0 : i32
    %c0_i32_0 = arith.constant 0 : i32
    %c0_i32_1 = arith.constant 0 : i32
    return %c0_i32, %c0_i32_0 : i32, i32
  }
  func.func @transform_7(%arg0: i32) -> (i32, i32) {
    %c0_i32 = arith.constant 0 : i32
    %c0_i32_0 = arith.constant 0 : i32
    %c0_i32_1 = arith.constant 0 : i32
    return %c0_i32, %c0_i32_0 : i32, i32
  }
  func.func @transform_8(%arg0: i32) -> (i32, i32) {
    %c0_i32 = arith.constant 0 : i32
    %c0_i32_0 = arith.constant 0 : i32
    %c0_i32_1 = arith.constant 0 : i32
    return %c0_i32, %c0_i32_0 : i32, i32
  }
  func.func @transform_9(%arg0: i32) -> (i32, i32) {
    %c0_i32 = arith.constant 0 : i32
    %c0_i32_0 = arith.constant 0 : i32
    %c0_i32_1 = arith.constant 0 : i32
    return %c0_i32, %c0_i32_0 : i32, i32
  }
  func.func @transform_10(%arg0: i32) -> (i32, i32) {
    %c0_i32 = arith.constant 0 : i32
    %c0_i32_0 = arith.constant 0 : i32
    %c0_i32_1 = arith.constant 0 : i32
    return %c0_i32, %c0_i32_0 : i32, i32
  }
  func.func @transform_11(%arg0: i32) -> (i32, i32) {
    %c0_i32 = arith.constant 0 : i32
    %c0_i32_0 = arith.constant 0 : i32
    %c0_i32_1 = arith.constant 0 : i32
    return %c0_i32, %c0_i32_0 : i32, i32
  }
  func.func @transform_12(%arg0: i32) -> (i32, i32) {
    %c0_i32 = arith.constant 0 : i32
    %c0_i32_0 = arith.constant 0 : i32
    %c0_i32_1 = arith.constant 0 : i32
    return %c0_i32, %c0_i32_0 : i32, i32
  }
  func.func @transform_13(%arg0: i32) -> (i32, i32) {
    %c0_i32 = arith.constant 0 : i32
    %c0_i32_0 = arith.constant 0 : i32
    %c0_i32_1 = arith.constant 0 : i32
    return %c0_i32, %c0_i32_0 : i32, i32
  }
  func.func @transform_14(%arg0: i32) -> (i32, i32) {
    %c0_i32 = arith.constant 0 : i32
    %c0_i32_0 = arith.constant 0 : i32
    %c0_i32_1 = arith.constant 0 : i32
    return %c0_i32, %c0_i32_0 : i32, i32
  }
  func.func @transform_15(%arg0: i32) -> (i32, i32) {
    %c0_i32 = arith.constant 0 : i32
    %c0_i32_0 = arith.constant 0 : i32
    %c0_i32_1 = arith.constant 0 : i32
    return %c0_i32, %c0_i32_0 : i32, i32
  }
  func.func @transform_16(%arg0: i32) -> (i32, i32) {
    %c0_i32 = arith.constant 0 : i32
    %c0_i32_0 = arith.constant 0 : i32
    %c0_i32_1 = arith.constant 0 : i32
    return %c0_i32, %c0_i32_0 : i32, i32
  }
  func.func @transform_17(%arg0: i32) -> (i32, i32) {
    %c0_i32 = arith.constant 0 : i32
    %c0_i32_0 = arith.constant 0 : i32
    %c0_i32_1 = arith.constant 0 : i32
    return %c0_i32, %c0_i32_0 : i32, i32
  }
  func.func @transform_18(%arg0: i32) -> (i32, i32) {
    %c0_i32 = arith.constant 0 : i32
    %c0_i32_0 = arith.constant 0 : i32
    %c0_i32_1 = arith.constant 0 : i32
    return %c0_i32, %c0_i32_0 : i32, i32
  }
  func.func @transform_19(%arg0: i32) -> (i32, i32) {
    %c0_i32 = arith.constant 0 : i32
    %c0_i32_0 = arith.constant 0 : i32
    %c0_i32_1 = arith.constant 0 : i32
    return %c0_i32, %c0_i32_0 : i32, i32
  }
  func.func @transform_20(%arg0: i32) -> (i32, i32) {
    %c0_i32 = arith.constant 0 : i32
    %c0_i32_0 = arith.constant 0 : i32
    %c0_i32_1 = arith.constant 0 : i32
    return %c0_i32, %c0_i32_0 : i32, i32
  }
  func.func @transform_21(%arg0: i32) -> (i32, i32) {
    %c0_i32 = arith.constant 0 : i32
    %c0_i32_0 = arith.constant 0 : i32
    %c0_i32_1 = arith.constant 0 : i32
    return %c0_i32, %c0_i32_0 : i32, i32
  }
  func.func @transform_22(%arg0: i32) -> (i32, i32, i32) {
    %c0_i32 = arith.constant 0 : i32
    %c0_i32_0 = arith.constant 0 : i32
    %c0_i32_1 = arith.constant 0 : i32
    return %arg0, %c0_i32, %c0_i32_0 : i32, i32, i32
  }
}

</mosaic_0001>

<llo_original>
// kernel: decoder_forward.2
$region0: #{decoder_forward.2}
  #allocation0 [shape = 'u32[]', space=smem, size = 0x4, offset = 0x4, fixed_abs, tag = 'smem constant byte address 0x4 - core index']
  #allocation1 [shape = 'u32[72,128]{1,0:T(1,128)}', space=vmem, size = 0x9000, scoped, tag = 'internal scratch']
  %s0 = inlined_call_operand.vmem [shape: bf16[2,8,256], index: 0, kind: input, shape index: {}]
  %s1 = inlined_call_operand.vmem [shape: bf16[2,8,256], index: 1, kind: input, shape index: {}]
  %s2 = inlined_call_operand.hbm [shape: bf16[256,768], index: 2, kind: input, shape index: {}]
  %s3 = inlined_call_operand.vmem [shape: f32[1,768], index: 3, kind: input, shape index: {}]
  %s4 = inlined_call_operand.vmem [shape: bf16[256,256], index: 4, kind: input, shape index: {}]
  %s5 = inlined_call_operand.vmem [shape: f32[1,256], index: 5, kind: input, shape index: {}]
  %s6 = inlined_call_operand.hbm [shape: bf16[256,512], index: 6, kind: input, shape index: {}]
  %s7 = inlined_call_operand.vmem [shape: f32[1,512], index: 7, kind: input, shape index: {}]
  %s8 = inlined_call_operand.hbm [shape: bf16[256,256], index: 8, kind: input, shape index: {}]
  %s9 = inlined_call_operand.vmem [shape: f32[1,256], index: 9, kind: input, shape index: {}]
  %s10 = inlined_call_operand.hbm [shape: bf16[256,256], index: 10, kind: input, shape index: {}]
  %s11 = inlined_call_operand.vmem [shape: f32[1,256], index: 11, kind: input, shape index: {}]
  %s12 = inlined_call_operand.hbm [shape: bf16[256,512], index: 12, kind: input, shape index: {}]
  %s13 = inlined_call_operand.vmem [shape: f32[1,512], index: 13, kind: input, shape index: {}]
  %s14 = inlined_call_operand.hbm [shape: bf16[512,256], index: 14, kind: input, shape index: {}]
  %s15 = inlined_call_operand.vmem [shape: f32[1,256], index: 15, kind: input, shape index: {}]
  %s16 = inlined_call_operand.vmem [shape: f32[1,256], index: 16, kind: input, shape index: {}]
  %s17 = inlined_call_operand.vmem [shape: f32[1,256], index: 17, kind: input, shape index: {}]
  %s18 = inlined_call_operand.vmem [shape: f32[1,256], index: 18, kind: input, shape index: {}]
  %s19 = inlined_call_operand.vmem [shape: f32[1,256], index: 19, kind: input, shape index: {}]
  %s20 = inlined_call_operand.vmem [shape: f32[1,256], index: 20, kind: input, shape index: {}]
  %s21 = inlined_call_operand.vmem [shape: f32[1,256], index: 21, kind: input, shape index: {}]
  %s22 = inlined_call_operand.vmem [shape: bf16[2,8,256], index: 22, kind: output, shape index: {}]
  %s23 = sld [smem:[#allocation0]]
  $region145: #{decoder_forward.2} parent=0
    _
  %s25 = ssub.s32 1, %s23
  %s26 = scalar_select 0, %s25, %s23
  $region1: #{decoder_forward.2} parent=0
    #allocation2 [shape = 'u8[393216]{0}', space=vmem, size = 0x60000, scoped, tag = 'input window, operand 2, single buffered']
    #allocation3 [shape = 's32[2]{0}', space=sflag, size = 0x8, scoped, tag = 'scoped memory for decoder_forward.2']
    #allocation4 [shape = 'u8[262144]{0}', space=vmem, size = 0x40000, scoped, tag = 'input window, operand 6, single buffered']
    #allocation5 [shape = 's32[1]{0}', space=sflag, size = 0x4, scoped, tag = 'scoped memory for decoder_forward.2']
    #allocation6 [shape = 'u8[131072]{0}', space=vmem, size = 0x20000, scoped, tag = 'input window, operand 8, single buffered']
    #allocation7 [shape = 'u8[131072]{0}', space=vmem, size = 0x20000, scoped, tag = 'input window, operand 10, single buffered']
    #allocation8 [shape = 's32[1]{0}', space=sflag, size = 0x4, scoped, tag = 'scoped memory for decoder_forward.2']
    #allocation9 [shape = 'u8[262144]{0}', space=vmem, size = 0x40000, scoped, tag = 'input window, operand 12, single buffered']
    #allocation10 [shape = 'u8[262144]{0}', space=vmem, size = 0x40000, scoped, tag = 'input window, operand 14, single buffered']
    #allocation11 [shape = 's32[1]{0}', space=sflag, size = 0x4, scoped, tag = 'scoped memory for decoder_forward.2']
    %27 = vsyncpa [#allocation3], 0
    %28 = vsyncpa [#allocation5], 0
    %29 = vsyncpa [#allocation8], 0
    %30 = vsyncpa [#allocation11], 0
    loop: start=0, step=1, limit=4
    $region2: #{decoder_forward.2} parent=1 // loop_pre_header
      _
    $region3: #{decoder_forward.2} parent=1 // loop_header
      %s32 = sphi 0, %s36
      %p33 = scmp.ge.s32.totalorder %s32, 4
      %s42 = sphi 0, %s44
      %s45 = sphi 0, %s42
      %s46 = sphi 0, %s45
      %s62 = sphi 0, %s46
      %s68 = sphi 0, %s70
      %s71 = sphi 0, %s68
      %s72 = sphi 0, %s71
      %s88 = sphi 0, %s72
      %s92 = sphi 0, %s92
      %s94 = sphi 0, %s92
      %s95 = sphi 0, %s94
      %s109 = sphi 0, %s95
      %s113 = sphi 0, %s113
      %s115 = sphi 0, %s113
      %s116 = sphi 0, %s115
      %s130 = sphi 0, %s116
      %s134 = sphi 0, %s134
      %s136 = sphi 0, %s134
      %s137 = sphi 0, %s136
      %s151 = sphi 0, %s137
      %s155 = sphi 0, %s155
      %s157 = sphi 0, %s155
      %s158 = sphi 0, %s157
      %s172 = sphi 0, %s158
      %s176 = sphi 0, %s176
      %s178 = sphi 0, %s176
      %s179 = sphi 0, %s178
      %s193 = sphi 0, %s179
      %s197 = sphi 0, %s197
      %s199 = sphi 0, %s197
      %s200 = sphi 0, %s199
      %s214 = sphi 0, %s200
      %s218 = sphi 0, %s218
      %s220 = sphi 0, %s218
      %s221 = sphi 0, %s220
      %s235 = sphi 0, %s221
      %s239 = sphi 0, %s239
      %s241 = sphi 0, %s239
      %s242 = sphi 0, %s241
      %s256 = sphi 0, %s242
      %s260 = sphi 0, %s260
      %s262 = sphi 0, %s260
      %s263 = sphi 0, %s262
      %s277 = sphi 0, %s263
      %s281 = sphi 0, %s281
      %s283 = sphi 0, %s281
      %s284 = sphi 0, %s283
      %s298 = sphi 0, %s284
      %s302 = sphi 0, %s302
      %s304 = sphi 0, %s302
      %s305 = sphi 0, %s304
      %s319 = sphi 0, %s305
      %s323 = sphi 0, %s323
      %s325 = sphi 0, %s323
      %s326 = sphi 0, %s325
      %s340 = sphi 0, %s326
      %s344 = sphi 0, %s344
      %s346 = sphi 0, %s344
      %s347 = sphi 0, %s346
      %s361 = sphi 0, %s347
      %s365 = sphi 0, %s365
      %s367 = sphi 0, %s365
      %s368 = sphi 0, %s367
      %s382 = sphi 0, %s368
      %s386 = sphi 0, %s386
      %s388 = sphi 0, %s386
      %s389 = sphi 0, %s388
      %s403 = sphi 0, %s389
      %s407 = sphi 0, %s407
      %s409 = sphi 0, %s407
      %s410 = sphi 0, %s409
      %s424 = sphi 0, %s410
      %s428 = sphi 0, %s428
      %s430 = sphi 0, %s428
      %s431 = sphi 0, %s430
      %s445 = sphi 0, %s431
      %s449 = sphi 0, %s449
      %s451 = sphi 0, %s449
      %s452 = sphi 0, %s451
      %s466 = sphi 0, %s452
      %s470 = sphi 0, %s470
      %s472 = sphi 0, %s470
      %s473 = sphi 0, %s472
      %s487 = sphi 0, %s473
      %s491 = sphi 0, %s491
      %s493 = sphi 0, %s491
      %s494 = sphi 0, %s493
      %s508 = sphi 0, %s494
      %s514 = sphi 0, %s516
      %s517 = sphi 0, %s514
      %s518 = sphi 0, %s517
      %s534 = sphi 0, %s518
    $region4: #{decoder_forward.2} parent=1 // loop_header_branch
      %35 = sbr.rel (%p33) target = $region8
    $region5: #{decoder_forward.2} parent=1 // loop_body
      %s37 = ssub.s32 %s32, 1
      %s38 = ssub.s32 %s32, 2
      %s39 = sadd.s32 %s32, 1
      %s40 = ssub.s32 %s32, %s39
      %p41 = scmp.eq.s32.totalorder %s40, 0
      %s43 = sadd.s32 %s42, 1
      %s44 = scalar_select %p41, %s42, %s43
      %p47 = pneg %p41
      %p48 = scmp.eq.s32.totalorder %s32, 1
      %p49 = por %p47, %p48
      %p50 = scmp.ne.s32.totalorder %s42, %s45
      %p51 = scmp.eq.s32.totalorder %s32, 0
      %p52 = por %p50, %p51
      %p53 = scmp.ne.s32.totalorder %s42, %s45
      %p54 = scmp.eq.s32.totalorder %s37, 1
      %p55 = por %p53, %p54
      %p56 = scmp.ne.s32.totalorder %s45, %s46
      %p57 = scmp.eq.s32.totalorder %s37, 0
      %p58 = por %p56, %p57
      %p59 = scmp.ne.s32.totalorder %s45, %s46
      %p60 = scmp.eq.s32.totalorder %s38, 1
      %p61 = por %p59, %p60
      %p63 = scmp.ne.s32.totalorder %s46, %s62
      %p64 = scmp.eq.s32.totalorder %s38, 0
      %p65 = por %p63, %p64
      %s66 = ssub.s32 %s32, %s39
      %p67 = scmp.eq.s32.totalorder %s66, 0
      %s69 = sadd.s32 %s68, 1
      %s70 = scalar_select %p67, %s68, %s69
      %p73 = pneg %p67
      %p74 = scmp.eq.s32.totalorder %s32, 1
      %p75 = por %p73, %p74
      %p76 = scmp.ne.s32.totalorder %s68, %s71
      %p77 = scmp.eq.s32.totalorder %s32, 0
      %p78 = por %p76, %p77
      %p79 = scmp.ne.s32.totalorder %s68, %s71
      %p80 = scmp.eq.s32.totalorder %s37, 1
      %p81 = por %p79, %p80
      %p82 = scmp.ne.s32.totalorder %s71, %s72
      %p83 = scmp.eq.s32.totalorder %s37, 0
      %p84 = por %p82, %p83
      %p85 = scmp.ne.s32.totalorder %s71, %s72
      %p86 = scmp.eq.s32.totalorder %s38, 1
      %p87 = por %p85, %p86
      %p89 = scmp.ne.s32.totalorder %s72, %s88
      %p90 = scmp.eq.s32.totalorder %s38, 0
      %p91 = por %p89, %p90
      %s93 = sadd.s32 %s92, 1
      %p96 = scmp.eq.s32.totalorder %s32, 1
      %p97 = scmp.ne.s32.totalorder %s92, %s94
      %p98 = scmp.eq.s32.totalorder %s32, 0
      %p99 = por %p97, %p98
      %p100 = scmp.ne.s32.totalorder %s92, %s94
      %p101 = scmp.eq.s32.totalorder %s37, 1
      %p102 = por %p100, %p101
      %p103 = scmp.ne.s32.totalorder %s94, %s95
      %p104 = scmp.eq.s32.totalorder %s37, 0
      %p105 = por %p103, %p104
      %p106 = scmp.ne.s32.totalorder %s94, %s95
      %p107 = scmp.eq.s32.totalorder %s38, 1
      %p108 = por %p106, %p107
      %p110 = scmp.ne.s32.totalorder %s95, %s109
      %p111 = scmp.eq.s32.totalorder %s38, 0
      %p112 = por %p110, %p111
      %s114 = sadd.s32 %s113, 1
      %p117 = scmp.eq.s32.totalorder %s32, 1
      %p118 = scmp.ne.s32.totalorder %s113, %s115
      %p119 = scmp.eq.s32.totalorder %s32, 0
      %p120 = por %p118, %p119
      %p121 = scmp.ne.s32.totalorder %s113, %s115
      %p122 = scmp.eq.s32.totalorder %s37, 1
      %p123 = por %p121, %p122
      %p124 = scmp.ne.s32.totalorder %s115, %s116
      %p125 = scmp.eq.s32.totalorder %s37, 0
      %p126 = por %p124, %p125
      %p127 = scmp.ne.s32.totalorder %s115, %s116
      %p128 = scmp.eq.s32.totalorder %s38, 1
      %p129 = por %p127, %p128
      %p131 = scmp.ne.s32.totalorder %s116, %s130
      %p132 = scmp.eq.s32.totalorder %s38, 0
      %p133 = por %p131, %p132
      %s135 = sadd.s32 %s134, 1
      %p138 = scmp.eq.s32.totalorder %s32, 1
      %p139 = scmp.ne.s32.totalorder %s134, %s136
      %p140 = scmp.eq.s32.totalorder %s32, 0
      %p141 = por %p139, %p140
      %p142 = scmp.ne.s32.totalorder %s134, %s136
      %p143 = scmp.eq.s32.totalorder %s37, 1
      %p144 = por %p142, %p143
      %p145 = scmp.ne.s32.totalorder %s136, %s137
      %p146 = scmp.eq.s32.totalorder %s37, 0
      %p147 = por %p145, %p146
      %p148 = scmp.ne.s32.totalorder %s136, %s137
      %p149 = scmp.eq.s32.totalorder %s38, 1
      %p150 = por %p148, %p149
      %p152 = scmp.ne.s32.totalorder %s137, %s151
      %p153 = scmp.eq.s32.totalorder %s38, 0
      %p154 = por %p152, %p153
      %s156 = sadd.s32 %s155, 1
      %p159 = scmp.eq.s32.totalorder %s32, 1
      %p160 = scmp.ne.s32.totalorder %s155, %s157
      %p161 = scmp.eq.s32.totalorder %s32, 0
      %p162 = por %p160, %p161
      %p163 = scmp.ne.s32.totalorder %s155, %s157
      %p164 = scmp.eq.s32.totalorder %s37, 1
      %p165 = por %p163, %p164
      %p166 = scmp.ne.s32.totalorder %s157, %s158
      %p167 = scmp.eq.s32.totalorder %s37, 0
      %p168 = por %p166, %p167
      %p169 = scmp.ne.s32.totalorder %s157, %s158
      %p170 = scmp.eq.s32.totalorder %s38, 1
      %p171 = por %p169, %p170
      %p173 = scmp.ne.s32.totalorder %s158, %s172
      %p174 = scmp.eq.s32.totalorder %s38, 0
      %p175 = por %p173, %p174
      %s177 = sadd.s32 %s176, 1
      %p180 = scmp.eq.s32.totalorder %s32, 1
      %p181 = scmp.ne.s32.totalorder %s176, %s178
      %p182 = scmp.eq.s32.totalorder %s32, 0
      %p183 = por %p181, %p182
      %p184 = scmp.ne.s32.totalorder %s176, %s178
      %p185 = scmp.eq.s32.totalorder %s37, 1
      %p186 = por %p184, %p185
      %p187 = scmp.ne.s32.totalorder %s178, %s179
      %p188 = scmp.eq.s32.totalorder %s37, 0
      %p189 = por %p187, %p188
      %p190 = scmp.ne.s32.totalorder %s178, %s179
      %p191 = scmp.eq.s32.totalorder %s38, 1
      %p192 = por %p190, %p191
      %p194 = scmp.ne.s32.totalorder %s179, %s193
      %p195 = scmp.eq.s32.totalorder %s38, 0
      %p196 = por %p194, %p195
      %s198 = sadd.s32 %s197, 1
      %p201 = scmp.eq.s32.totalorder %s32, 1
      %p202 = scmp.ne.s32.totalorder %s197, %s199
      %p203 = scmp.eq.s32.totalorder %s32, 0
      %p204 = por %p202, %p203
      %p205 = scmp.ne.s32.totalorder %s197, %s199
      %p206 = scmp.eq.s32.totalorder %s37, 1
      %p207 = por %p205, %p206
      %p208 = scmp.ne.s32.totalorder %s199, %s200
      %p209 = scmp.eq.s32.totalorder %s37, 0
      %p210 = por %p208, %p209
      %p211 = scmp.ne.s32.totalorder %s199, %s200
      %p212 = scmp.eq.s32.totalorder %s38, 1
      %p213 = por %p211, %p212
      %p215 = scmp.ne.s32.totalorder %s200, %s214
      %p216 = scmp.eq.s32.totalorder %s38, 0
      %p217 = por %p215, %p216
      %s219 = sadd.s32 %s218, 1
      %p222 = scmp.eq.s32.totalorder %s32, 1
      %p223 = scmp.ne.s32.totalorder %s218, %s220
      %p224 = scmp.eq.s32.totalorder %s32, 0
      %p225 = por %p223, %p224
      %p226 = scmp.ne.s32.totalorder %s218, %s220
      %p227 = scmp.eq.s32.totalorder %s37, 1
      %p228 = por %p226, %p227
      %p229 = scmp.ne.s32.totalorder %s220, %s221
      %p230 = scmp.eq.s32.totalorder %s37, 0
      %p231 = por %p229, %p230
      %p232 = scmp.ne.s32.totalorder %s220, %s221
      %p233 = scmp.eq.s32.totalorder %s38, 1
      %p234 = por %p232, %p233
      %p236 = scmp.ne.s32.totalorder %s221, %s235
      %p237 = scmp.eq.s32.totalorder %s38, 0
      %p238 = por %p236, %p237
      %s240 = sadd.s32 %s239, 1
      %p243 = scmp.eq.s32.totalorder %s32, 1
      %p244 = scmp.ne.s32.totalorder %s239, %s241
      %p245 = scmp.eq.s32.totalorder %s32, 0
      %p246 = por %p244, %p245
      %p247 = scmp.ne.s32.totalorder %s239, %s241
      %p248 = scmp.eq.s32.totalorder %s37, 1
      %p249 = por %p247, %p248
      %p250 = scmp.ne.s32.totalorder %s241, %s242
      %p251 = scmp.eq.s32.totalorder %s37, 0
      %p252 = por %p250, %p251
      %p253 = scmp.ne.s32.totalorder %s241, %s242
      %p254 = scmp.eq.s32.totalorder %s38, 1
      %p255 = por %p253, %p254
      %p257 = scmp.ne.s32.totalorder %s242, %s256
      %p258 = scmp.eq.s32.totalorder %s38, 0
      %p259 = por %p257, %p258
      %s261 = sadd.s32 %s260, 1
      %p264 = scmp.eq.s32.totalorder %s32, 1
      %p265 = scmp.ne.s32.totalorder %s260, %s262
      %p266 = scmp.eq.s32.totalorder %s32, 0
      %p267 = por %p265, %p266
      %p268 = scmp.ne.s32.totalorder %s260, %s262
      %p269 = scmp.eq.s32.totalorder %s37, 1
      %p270 = por %p268, %p269
      %p271 = scmp.ne.s32.totalorder %s262, %s263
      %p272 = scmp.eq.s32.totalorder %s37, 0
      %p273 = por %p271, %p272
      %p274 = scmp.ne.s32.totalorder %s262, %s263
      %p275 = scmp.eq.s32.totalorder %s38, 1
      %p276 = por %p274, %p275
      %p278 = scmp.ne.s32.totalorder %s263, %s277
      %p279 = scmp.eq.s32.totalorder %s38, 0
      %p280 = por %p278, %p279
      %s282 = sadd.s32 %s281, 1
      %p285 = scmp.eq.s32.totalorder %s32, 1
      %p286 = scmp.ne.s32.totalorder %s281, %s283
      %p287 = scmp.eq.s32.totalorder %s32, 0
      %p288 = por %p286, %p287
      %p289 = scmp.ne.s32.totalorder %s281, %s283
      %p290 = scmp.eq.s32.totalorder %s37, 1
      %p291 = por %p289, %p290
      %p292 = scmp.ne.s32.totalorder %s283, %s284
      %p293 = scmp.eq.s32.totalorder %s37, 0
      %p294 = por %p292, %p293
      %p295 = scmp.ne.s32.totalorder %s283, %s284
      %p296 = scmp.eq.s32.totalorder %s38, 1
      %p297 = por %p295, %p296
      %p299 = scmp.ne.s32.totalorder %s284, %s298
      %p300 = scmp.eq.s32.totalorder %s38, 0
      %p301 = por %p299, %p300
      %s303 = sadd.s32 %s302, 1
      %p306 = scmp.eq.s32.totalorder %s32, 1
      %p307 = scmp.ne.s32.totalorder %s302, %s304
      %p308 = scmp.eq.s32.totalorder %s32, 0
      %p309 = por %p307, %p308
      %p310 = scmp.ne.s32.totalorder %s302, %s304
      %p311 = scmp.eq.s32.totalorder %s37, 1
      %p312 = por %p310, %p311
      %p313 = scmp.ne.s32.totalorder %s304, %s305
      %p314 = scmp.eq.s32.totalorder %s37, 0
      %p315 = por %p313, %p314
      %p316 = scmp.ne.s32.totalorder %s304, %s305
      %p317 = scmp.eq.s32.totalorder %s38, 1
      %p318 = por %p316, %p317
      %p320 = scmp.ne.s32.totalorder %s305, %s319
      %p321 = scmp.eq.s32.totalorder %s38, 0
      %p322 = por %p320, %p321
      %s324 = sadd.s32 %s323, 1
      %p327 = scmp.eq.s32.totalorder %s32, 1
      %p328 = scmp.ne.s32.totalorder %s323, %s325
      %p329 = scmp.eq.s32.totalorder %s32, 0
      %p330 = por %p328, %p329
      %p331 = scmp.ne.s32.totalorder %s323, %s325
      %p332 = scmp.eq.s32.totalorder %s37, 1
      %p333 = por %p331, %p332
      %p334 = scmp.ne.s32.totalorder %s325, %s326
      %p335 = scmp.eq.s32.totalorder %s37, 0
      %p336 = por %p334, %p335
      %p337 = scmp.ne.s32.totalorder %s325, %s326
      %p338 = scmp.eq.s32.totalorder %s38, 1
      %p339 = por %p337, %p338
      %p341 = scmp.ne.s32.totalorder %s326, %s340
      %p342 = scmp.eq.s32.totalorder %s38, 0
      %p343 = por %p341, %p342
      %s345 = sadd.s32 %s344, 1
      %p348 = scmp.eq.s32.totalorder %s32, 1
      %p349 = scmp.ne.s32.totalorder %s344, %s346
      %p350 = scmp.eq.s32.totalorder %s32, 0
      %p351 = por %p349, %p350
      %p352 = scmp.ne.s32.totalorder %s344, %s346
      %p353 = scmp.eq.s32.totalorder %s37, 1
      %p354 = por %p352, %p353
      %p355 = scmp.ne.s32.totalorder %s346, %s347
      %p356 = scmp.eq.s32.totalorder %s37, 0
      %p357 = por %p355, %p356
      %p358 = scmp.ne.s32.totalorder %s346, %s347
      %p359 = scmp.eq.s32.totalorder %s38, 1
      %p360 = por %p358, %p359
      %p362 = scmp.ne.s32.totalorder %s347, %s361
      %p363 = scmp.eq.s32.totalorder %s38, 0
      %p364 = por %p362, %p363
      %s366 = sadd.s32 %s365, 1
      %p369 = scmp.eq.s32.totalorder %s32, 1
      %p370 = scmp.ne.s32.totalorder %s365, %s367
      %p371 = scmp.eq.s32.totalorder %s32, 0
      %p372 = por %p370, %p371
      %p373 = scmp.ne.s32.totalorder %s365, %s367
      %p374 = scmp.eq.s32.totalorder %s37, 1
      %p375 = por %p373, %p374
      %p376 = scmp.ne.s32.totalorder %s367, %s368
      %p377 = scmp.eq.s32.totalorder %s37, 0
      %p378 = por %p376, %p377
      %p379 = scmp.ne.s32.totalorder %s367, %s368
      %p380 = scmp.eq.s32.totalorder %s38, 1
      %p381 = por %p379, %p380
      %p383 = scmp.ne.s32.totalorder %s368, %s382
      %p384 = scmp.eq.s32.totalorder %s38, 0
      %p385 = por %p383, %p384
      %s387 = sadd.s32 %s386, 1
      %p390 = scmp.eq.s32.totalorder %s32, 1
      %p391 = scmp.ne.s32.totalorder %s386, %s388
      %p392 = scmp.eq.s32.totalorder %s32, 0
      %p393 = por %p391, %p392
      %p394 = scmp.ne.s32.totalorder %s386, %s388
      %p395 = scmp.eq.s32.totalorder %s37, 1
      %p396 = por %p394, %p395
      %p397 = scmp.ne.s32.totalorder %s388, %s389
      %p398 = scmp.eq.s32.totalorder %s37, 0
      %p399 = por %p397, %p398
      %p400 = scmp.ne.s32.totalorder %s388, %s389
      %p401 = scmp.eq.s32.totalorder %s38, 1
      %p402 = por %p400, %p401
      %p404 = scmp.ne.s32.totalorder %s389, %s403
      %p405 = scmp.eq.s32.totalorder %s38, 0
      %p406 = por %p404, %p405
      %s408 = sadd.s32 %s407, 1
      %p411 = scmp.eq.s32.totalorder %s32, 1
      %p412 = scmp.ne.s32.totalorder %s407, %s409
      %p413 = scmp.eq.s32.totalorder %s32, 0
      %p414 = por %p412, %p413
      %p415 = scmp.ne.s32.totalorder %s407, %s409
      %p416 = scmp.eq.s32.totalorder %s37, 1
      %p417 = por %p415, %p416
      %p418 = scmp.ne.s32.totalorder %s409, %s410
      %p419 = scmp.eq.s32.totalorder %s37, 0
      %p420 = por %p418, %p419
      %p421 = scmp.ne.s32.totalorder %s409, %s410
      %p422 = scmp.eq.s32.totalorder %s38, 1
      %p423 = por %p421, %p422
      %p425 = scmp.ne.s32.totalorder %s410, %s424
      %p426 = scmp.eq.s32.totalorder %s38, 0
      %p427 = por %p425, %p426
      %s429 = sadd.s32 %s428, 1
      %p432 = scmp.eq.s32.totalorder %s32, 1
      %p433 = scmp.ne.s32.totalorder %s428, %s430
      %p434 = scmp.eq.s32.totalorder %s32, 0
      %p435 = por %p433, %p434
      %p436 = scmp.ne.s32.totalorder %s428, %s430
      %p437 = scmp.eq.s32.totalorder %s37, 1
      %p438 = por %p436, %p437
      %p439 = scmp.ne.s32.totalorder %s430, %s431
      %p440 = scmp.eq.s32.totalorder %s37, 0
      %p441 = por %p439, %p440
      %p442 = scmp.ne.s32.totalorder %s430, %s431
      %p443 = scmp.eq.s32.totalorder %s38, 1
      %p444 = por %p442, %p443
      %p446 = scmp.ne.s32.totalorder %s431, %s445
      %p447 = scmp.eq.s32.totalorder %s38, 0
      %p448 = por %p446, %p447
      %s450 = sadd.s32 %s449, 1
      %p453 = scmp.eq.s32.totalorder %s32, 1
      %p454 = scmp.ne.s32.totalorder %s449, %s451
      %p455 = scmp.eq.s32.totalorder %s32, 0
      %p456 = por %p454, %p455
      %p457 = scmp.ne.s32.totalorder %s449, %s451
      %p458 = scmp.eq.s32.totalorder %s37, 1
      %p459 = por %p457, %p458
      %p460 = scmp.ne.s32.totalorder %s451, %s452
      %p461 = scmp.eq.s32.totalorder %s37, 0
      %p462 = por %p460, %p461
      %p463 = scmp.ne.s32.totalorder %s451, %s452
      %p464 = scmp.eq.s32.totalorder %s38, 1
      %p465 = por %p463, %p464
      %p467 = scmp.ne.s32.totalorder %s452, %s466
      %p468 = scmp.eq.s32.totalorder %s38, 0
      %p469 = por %p467, %p468
      %s471 = sadd.s32 %s470, 1
      %p474 = scmp.eq.s32.totalorder %s32, 1
      %p475 = scmp.ne.s32.totalorder %s470, %s472
      %p476 = scmp.eq.s32.totalorder %s32, 0
      %p477 = por %p475, %p476
      %p478 = scmp.ne.s32.totalorder %s470, %s472
      %p479 = scmp.eq.s32.totalorder %s37, 1
      %p480 = por %p478, %p479
      %p481 = scmp.ne.s32.totalorder %s472, %s473
      %p482 = scmp.eq.s32.totalorder %s37, 0
      %p483 = por %p481, %p482
      %p484 = scmp.ne.s32.totalorder %s472, %s473
      %p485 = scmp.eq.s32.totalorder %s38, 1
      %p486 = por %p484, %p485
      %p488 = scmp.ne.s32.totalorder %s473, %s487
      %p489 = scmp.eq.s32.totalorder %s38, 0
      %p490 = por %p488, %p489
      %s492 = sadd.s32 %s491, 1
      %p495 = scmp.eq.s32.totalorder %s32, 1
      %p496 = scmp.ne.s32.totalorder %s491, %s493
      %p497 = scmp.eq.s32.totalorder %s32, 0
      %p498 = por %p496, %p497
      %p499 = scmp.ne.s32.totalorder %s491, %s493
      %p500 = scmp.eq.s32.totalorder %s37, 1
      %p501 = por %p499, %p500
      %p502 = scmp.ne.s32.totalorder %s493, %s494
      %p503 = scmp.eq.s32.totalorder %s37, 0
      %p504 = por %p502, %p503
      %p505 = scmp.ne.s32.totalorder %s493, %s494
      %p506 = scmp.eq.s32.totalorder %s38, 1
      %p507 = por %p505, %p506
      %p509 = scmp.ne.s32.totalorder %s494, %s508
      %p510 = scmp.eq.s32.totalorder %s38, 0
      %p511 = por %p509, %p510
      %s512 = ssub.s32 %s32, %s39
      %p513 = scmp.eq.s32.totalorder %s512, 0
      %s515 = sadd.s32 %s514, 1
      %s516 = scalar_select %p513, %s514, %s515
      %p519 = pneg %p513
      %p520 = scmp.eq.s32.totalorder %s32, 1
      %p521 = por %p519, %p520
      %p522 = scmp.ne.s32.totalorder %s514, %s517
      %p523 = scmp.eq.s32.totalorder %s32, 0
      %p524 = por %p522, %p523
      %p525 = scmp.ne.s32.totalorder %s514, %s517
      %p526 = scmp.eq.s32.totalorder %s37, 1
      %p527 = por %p525, %p526
      %p528 = scmp.ne.s32.totalorder %s517, %s518
      %p529 = scmp.eq.s32.totalorder %s37, 0
      %p530 = por %p528, %p529
      %p531 = scmp.ne.s32.totalorder %s517, %s518
      %p532 = scmp.eq.s32.totalorder %s38, 1
      %p533 = por %p531, %p532
      %p535 = scmp.ne.s32.totalorder %s518, %s534
      %p536 = scmp.eq.s32.totalorder %s38, 0
      %p537 = por %p535, %p536
      %p538 = scmp.le.s32.totalorder 1, %s32
      %p539 = scmp.lt.s32.totalorder %s32, 3
      %p540 = pnand %p538, %p539
      %p541 = pneg %p540
      // Predicated region
      $region9: #{decoder_forward.2} parent=5 // pred_check
        _
      $region10: #{decoder_forward.2} parent=5 // pred_check_branch
        %543 = sbr.rel (%p540) target = $region12
      $region11: #{decoder_forward.2} parent=5 // pred_region
        %s544 = ssub.s32 %s32, 1
        // Predicated region
        $region13: #{decoder_forward.2} parent=11 // pred_check
          %p545 = pneg %p105
        $region14: #{decoder_forward.2} parent=11 // pred_check_branch
          %547 = sbr.rel (%p545) target = $region16
        $region15: #{decoder_forward.2} parent=11 // pred_region
          %549 = vsyncadd [#allocation3], 0
          %s550 = sshll.u32 %s2, 4
          %s551 = int_to_ptr.hbm [resolvable:$true] %s550
          %s552 = sshll.u32 [#allocation2], 4
          %s553 = int_to_ptr.vmem [resolvable:$true] %s552
          %558 = dma.hbm_to_vmem [thread:$0]  %s551, 12288, %s553, [#allocation3], 384, 384, 24
        $region16: #{decoder_forward.2} parent=11 // pred_fallthru
          _
        // Predicated region
        $region17: #{decoder_forward.2} parent=11 // pred_check
          %p559 = pneg %p126
        $region18: #{decoder_forward.2} parent=11 // pred_check_branch
          %561 = sbr.rel (%p559) target = $region20
        $region19: #{decoder_forward.2} parent=11 // pred_region
          _
        $region20: #{decoder_forward.2} parent=11 // pred_fallthru
          _
        // Predicated region
        $region21: #{decoder_forward.2} parent=11 // pred_check
          %p562 = pneg %p147
        $region22: #{decoder_forward.2} parent=11 // pred_check_branch
          %564 = sbr.rel (%p562) target = $region24
        $region23: #{decoder_forward.2} parent=11 // pred_region
          _
        $region24: #{decoder_forward.2} parent=11 // pred_fallthru
          _
        // Predicated region
        $region25: #{decoder_forward.2} parent=11 // pred_check
          %p565 = pneg %p168
        $region26: #{decoder_forward.2} parent=11 // pred_check_branch
          %567 = sbr.rel (%p565) target = $region28
        $region27: #{decoder_forward.2} parent=11 // pred_region
          _
        $region28: #{decoder_forward.2} parent=11 // pred_fallthru
          _
        // Predicated region
        $region29: #{decoder_forward.2} parent=11 // pred_check
          %p568 = pneg %p189
        $region30: #{decoder_forward.2} parent=11 // pred_check_branch
          %570 = sbr.rel (%p568) target = $region32
        $region31: #{decoder_forward.2} parent=11 // pred_region
          %572 = vsyncadd [#allocation5], 0
          %s573 = sshll.u32 %s6, 4
          %s574 = int_to_ptr.hbm [resolvable:$true] %s573
          %s575 = sshll.u32 [#allocation4], 4
          %s576 = int_to_ptr.vmem [resolvable:$true] %s575
          %581 = dma.hbm_to_vmem [thread:$0]  %s574, 8192, %s576, [#allocation5], 256, 256, 16
        $region32: #{decoder_forward.2} parent=11 // pred_fallthru
          _
        // Predicated region
        $region33: #{decoder_forward.2} parent=11 // pred_check
          %p582 = pneg %p210
        $region34: #{decoder_forward.2} parent=11 // pred_check_branch
          %584 = sbr.rel (%p582) target = $region36
        $region35: #{decoder_forward.2} parent=11 // pred_region
          _
        $region36: #{decoder_forward.2} parent=11 // pred_fallthru
          _
        // Predicated region
        $region37: #{decoder_forward.2} parent=11 // pred_check
          %p585 = pneg %p231
        $region38: #{decoder_forward.2} parent=11 // pred_check_branch
          %587 = sbr.rel (%p585) target = $region40
        $region39: #{decoder_forward.2} parent=11 // pred_region
          %589 = vsyncadd [#allocation5], 0
          %s590 = sshll.u32 %s8, 4
          %s591 = int_to_ptr.hbm [resolvable:$true] %s590
          %s592 = sshll.u32 [#allocation6], 4
          %s593 = int_to_ptr.vmem [resolvable:$true] %s592
          %598 = dma.hbm_to_vmem [thread:$0]  %s591, 4096, %s593, [#allocation5], 128, 128, 8
        $region40: #{decoder_forward.2} parent=11 // pred_fallthru
          _
        // Predicated region
        $region41: #{decoder_forward.2} parent=11 // pred_check
          %p599 = pneg %p252
        $region42: #{decoder_forward.2} parent=11 // pred_check_branch
          %601 = sbr.rel (%p599) target = $region44
        $region43: #{decoder_forward.2} parent=11 // pred_region
          _
        $region44: #{decoder_forward.2} parent=11 // pred_fallthru
          _
        // Predicated region
        $region45: #{decoder_forward.2} parent=11 // pred_check
          %p602 = pneg %p273
        $region46: #{decoder_forward.2} parent=11 // pred_check_branch
          %604 = sbr.rel (%p602) target = $region48
        $region47: #{decoder_forward.2} parent=11 // pred_region
          %606 = vsyncadd [#allocation8], 0
          %s607 = sshll.u32 %s10, 4
          %s608 = int_to_ptr.hbm [resolvable:$true] %s607
          %s609 = sshll.u32 [#allocation7], 4
          %s610 = int_to_ptr.vmem [resolvable:$true] %s609
          %615 = dma.hbm_to_vmem [thread:$0]  %s608, 4096, %s610, [#allocation8], 128, 128, 8
        $region48: #{decoder_forward.2} parent=11 // pred_fallthru
          _
        // Predicated region
        $region49: #{decoder_forward.2} parent=11 // pred_check
          %p616 = pneg %p294
        $region50: #{decoder_forward.2} parent=11 // pred_check_branch
          %618 = sbr.rel (%p616) target = $region52
        $region51: #{decoder_forward.2} parent=11 // pred_region
          _
        $region52: #{decoder_forward.2} parent=11 // pred_fallthru
          _
        // Predicated region
        $region53: #{decoder_forward.2} parent=11 // pred_check
          %p619 = pneg %p315
        $region54: #{decoder_forward.2} parent=11 // pred_check_branch
          %621 = sbr.rel (%p619) target = $region56
        $region55: #{decoder_forward.2} parent=11 // pred_region
          %623 = vsyncadd [#allocation8], 0
          %s624 = sshll.u32 %s12, 4
          %s625 = int_to_ptr.hbm [resolvable:$true] %s624
          %s626 = sshll.u32 [#allocation9], 4
          %s627 = int_to_ptr.vmem [resolvable:$true] %s626
          %632 = dma.hbm_to_vmem [thread:$0]  %s625, 8192, %s627, [#allocation8], 256, 256, 16
        $region56: #{decoder_forward.2} parent=11 // pred_fallthru
          _
        // Predicated region
        $region57: #{decoder_forward.2} parent=11 // pred_check
          %p633 = pneg %p336
        $region58: #{decoder_forward.2} parent=11 // pred_check_branch
          %635 = sbr.rel (%p633) target = $region60
        $region59: #{decoder_forward.2} parent=11 // pred_region
          _
        $region60: #{decoder_forward.2} parent=11 // pred_fallthru
          _
        // Predicated region
        $region61: #{decoder_forward.2} parent=11 // pred_check
          %p636 = pneg %p357
        $region62: #{decoder_forward.2} parent=11 // pred_check_branch
          %638 = sbr.rel (%p636) target = $region64
        $region63: #{decoder_forward.2} parent=11 // pred_region
          %640 = vsyncadd [#allocation11], 0
          %s641 = sshll.u32 %s14, 4
          %s642 = int_to_ptr.hbm [resolvable:$true] %s641
          %s643 = sshll.u32 [#allocation10], 4
          %s644 = int_to_ptr.vmem [resolvable:$true] %s643
          %649 = dma.hbm_to_vmem [thread:$0]  %s642, 8192, %s644, [#allocation11], 128, 128, 8
        $region64: #{decoder_forward.2} parent=11 // pred_fallthru
          _
        // Predicated region
        $region65: #{decoder_forward.2} parent=11 // pred_check
          %p650 = pneg %p378
        $region66: #{decoder_forward.2} parent=11 // pred_check_branch
          %652 = sbr.rel (%p650) target = $region68
        $region67: #{decoder_forward.2} parent=11 // pred_region
          _
        $region68: #{decoder_forward.2} parent=11 // pred_fallthru
          _
        // Predicated region
        $region69: #{decoder_forward.2} parent=11 // pred_check
          %p653 = pneg %p399
        $region70: #{decoder_forward.2} parent=11 // pred_check_branch
          %655 = sbr.rel (%p653) target = $region72
        $region71: #{decoder_forward.2} parent=11 // pred_region
          _
        $region72: #{decoder_forward.2} parent=11 // pred_fallthru
          _
        // Predicated region
        $region73: #{decoder_forward.2} parent=11 // pred_check
          %p656 = pneg %p420
        $region74: #{decoder_forward.2} parent=11 // pred_check_branch
          %658 = sbr.rel (%p656) target = $region76
        $region75: #{decoder_forward.2} parent=11 // pred_region
          _
        $region76: #{decoder_forward.2} parent=11 // pred_fallthru
          _
        // Predicated region
        $region77: #{decoder_forward.2} parent=11 // pred_check
          %p659 = pneg %p441
        $region78: #{decoder_forward.2} parent=11 // pred_check_branch
          %661 = sbr.rel (%p659) target = $region80
        $region79: #{decoder_forward.2} parent=11 // pred_region
          _
        $region80: #{decoder_forward.2} parent=11 // pred_fallthru
          _
        // Predicated region
        $region81: #{decoder_forward.2} parent=11 // pred_check
          %p662 = pneg %p462
        $region82: #{decoder_forward.2} parent=11 // pred_check_branch
          %664 = sbr.rel (%p662) target = $region84
        $region83: #{decoder_forward.2} parent=11 // pred_region
          _
        $region84: #{decoder_forward.2} parent=11 // pred_fallthru
          _
        // Predicated region
        $region85: #{decoder_forward.2} parent=11 // pred_check
          %p665 = pneg %p483
        $region86: #{decoder_forward.2} parent=11 // pred_check_branch
          %667 = sbr.rel (%p665) target = $region88
        $region87: #{decoder_forward.2} parent=11 // pred_region
          _
        $region88: #{decoder_forward.2} parent=11 // pred_fallthru
          _
        // Predicated region
        $region89: #{decoder_forward.2} parent=11 // pred_check
          %p668 = pneg %p504
        $region90: #{decoder_forward.2} parent=11 // pred_check_branch
          %670 = sbr.rel (%p668) target = $region92
        $region91: #{decoder_forward.2} parent=11 // pred_region
          _
        $region92: #{decoder_forward.2} parent=11 // pred_fallthru
          _
      $region12: #{decoder_forward.2} parent=5 // pred_fallthru
        _
      %p671 = scmp.lt.s32.totalorder %s32, 2
      // Predicated region
      $region93: #{decoder_forward.2} parent=5 // pred_check
        %p672 = pneg %p671
      $region94: #{decoder_forward.2} parent=5 // pred_check_branch
        %674 = sbr.rel (%p672) target = $region96
      $region95: #{decoder_forward.2} parent=5 // pred_region
        // Predicated region
        $region97: #{decoder_forward.2} parent=95 // pred_check
          %p675 = pneg %p52
        $region98: #{decoder_forward.2} parent=95 // pred_check_branch
          %677 = sbr.rel (%p675) target = $region100
        $region99: #{decoder_forward.2} parent=95 // pred_region
          %p678 = scmp.lt.s32.totalorder %s32, 1
          %s679 = scalar_select %p678, %s32, 1
          %s680 = smul.addr %s679, 2
          %s681 = smul.addr %s680, 4
          %s682 = scalar_lea.vmem %s0, %s681
        $region100: #{decoder_forward.2} parent=95 // pred_fallthru
          _
        // Predicated region
        $region101: #{decoder_forward.2} parent=95 // pred_check
          %p683 = pneg %p78
        $region102: #{decoder_forward.2} parent=95 // pred_check_branch
          %685 = sbr.rel (%p683) target = $region104
        $region103: #{decoder_forward.2} parent=95 // pred_region
          %p686 = scmp.lt.s32.totalorder %s32, 1
          %s687 = scalar_select %p686, %s32, 1
          %s688 = smul.addr %s687, 2
          %s689 = smul.addr %s688, 4
          %s690 = scalar_lea.vmem %s1, %s689
        $region104: #{decoder_forward.2} parent=95 // pred_fallthru
          _
      $region96: #{decoder_forward.2} parent=5 // pred_fallthru
        _
      %p691 = scmp.le.s32.totalorder 1, %s32
      %p692 = scmp.lt.s32.totalorder %s32, 3
      %p693 = pnand %p691, %p692
      %p694 = pneg %p693
      // Predicated region
      $region105: #{decoder_forward.2} parent=5 // pred_check
        _
      $region106: #{decoder_forward.2} parent=5 // pred_check_branch
        %696 = sbr.rel (%p693) target = $region108
      $region107: #{decoder_forward.2} parent=5 // pred_region
        %s697 = ssub.s32 %s32, 1
        // Predicated region
        $region109: #{decoder_forward.2} parent=107 // pred_check
          %p698 = pneg %p105
        $region110: #{decoder_forward.2} parent=107 // pred_check_branch
          %700 = sbr.rel (%p698) target = $region112
        $region111: #{decoder_forward.2} parent=107 // pred_region
          %702 = dma.done [#allocation3], 12288
        $region112: #{decoder_forward.2} parent=107 // pred_fallthru
          _
        // Predicated region
        $region113: #{decoder_forward.2} parent=107 // pred_check
          %p703 = pneg %p189
        $region114: #{decoder_forward.2} parent=107 // pred_check_branch
          %705 = sbr.rel (%p703) target = $region116
        $region115: #{decoder_forward.2} parent=107 // pred_region
          %707 = dma.done [#allocation5], 8192
        $region116: #{decoder_forward.2} parent=107 // pred_fallthru
          _
        // Predicated region
        $region117: #{decoder_forward.2} parent=107 // pred_check
          %p708 = pneg %p231
        $region118: #{decoder_forward.2} parent=107 // pred_check_branch
          %710 = sbr.rel (%p708) target = $region120
        $region119: #{decoder_forward.2} parent=107 // pred_region
          %712 = dma.done [#allocation5], 4096
        $region120: #{decoder_forward.2} parent=107 // pred_fallthru
          _
        // Predicated region
        $region121: #{decoder_forward.2} parent=107 // pred_check
          %p713 = pneg %p273
        $region122: #{decoder_forward.2} parent=107 // pred_check_branch
          %715 = sbr.rel (%p713) target = $region124
        $region123: #{decoder_forward.2} parent=107 // pred_region
          %717 = dma.done [#allocation8], 4096
        $region124: #{decoder_forward.2} parent=107 // pred_fallthru
          _
        // Predicated region
        $region125: #{decoder_forward.2} parent=107 // pred_check
          %p718 = pneg %p315
        $region126: #{decoder_forward.2} parent=107 // pred_check_branch
          %720 = sbr.rel (%p718) target = $region128
        $region127: #{decoder_forward.2} parent=107 // pred_region
          %722 = dma.done [#allocation8], 8192
        $region128: #{decoder_forward.2} parent=107 // pred_fallthru
          _
        // Predicated region
        $region129: #{decoder_forward.2} parent=107 // pred_check
          %p723 = pneg %p357
        $region130: #{decoder_forward.2} parent=107 // pred_check_branch
          %725 = sbr.rel (%p723) target = $region132
        $region131: #{decoder_forward.2} parent=107 // pred_region
          %727 = dma.done [#allocation11], 8192
        $region132: #{decoder_forward.2} parent=107 // pred_fallthru
          _
        %p728 = scmp.lt.s32.totalorder %s37, 1
        %s729 = scalar_select %p728, %s37, 1
        %s730 = smul.addr %s729, 2
        %s731 = smul.addr %s730, 4
        %s732 = scalar_lea.vmem %s0, %s731
        %p733 = pneg %p58
        %p734 = pneg %p55
        %p735 = scmp.lt.s32.totalorder %s37, 1
        %s736 = scalar_select %p735, %s37, 1
        %s737 = smul.addr %s736, 2
        %s738 = smul.addr %s737, 4
        %s739 = scalar_lea.vmem %s1, %s738
        %p740 = pneg %p84
        %p741 = pneg %p81
        %p742 = pneg %p105
        %p743 = pneg %p102
        %p744 = pneg %p126
        %p745 = pneg %p123
        %p746 = pneg %p147
        %p747 = pneg %p144
        %p748 = pneg %p168
        %p749 = pneg %p165
        %p750 = pneg %p189
        %p751 = pneg %p186
        %p752 = pneg %p210
        %p753 = pneg %p207
        %p754 = pneg %p231
        %p755 = pneg %p228
        %p756 = pneg %p252
        %p757 = pneg %p249
        %p758 = pneg %p273
        %p759 = pneg %p270
        %p760 = pneg %p294
        %p761 = pneg %p291
        %p762 = pneg %p315
        %p763 = pneg %p312
        %p764 = pneg %p336
        %p765 = pneg %p333
        %p766 = pneg %p357
        %p767 = pneg %p354
        %p768 = pneg %p378
        %p769 = pneg %p375
        %p770 = pneg %p399
        %p771 = pneg %p396
        %p772 = pneg %p420
        %p773 = pneg %p417
        %p774 = pneg %p441
        %p775 = pneg %p438
        %p776 = pneg %p462
        %p777 = pneg %p459
        %p778 = pneg %p483
        %p779 = pneg %p480
        %p780 = pneg %p504
        %p781 = pneg %p501
        %p782 = pneg %p530
        %p783 = pneg %p527
        %p784 = scmp.lt.s32.totalorder %s37, 1
        %s785 = scalar_select %p784, %s37, 1
        %s786 = smul.addr %s785, 2
        %s787 = smul.addr %s786, 4
        %s788 = scalar_lea.vmem %s22, %s787
        %p789 = scmp.lt.s32.totalorder %s37, 1
        %s790 = scalar_select %p789, %s37, 1
        %s791 = smul.addr %s790, 2
        %s792 = smul.addr %s791, 4
        %s793 = scalar_lea.vmem %s0, %s792
        %p794 = scmp.lt.s32.totalorder %s37, 1
        %s795 = scalar_select %p794, %s37, 1
        %s796 = smul.addr %s795, 2
        %s797 = smul.addr %s796, 4
        %s798 = scalar_lea.vmem %s1, %s797
        %p799 = scmp.lt.s32.totalorder %s37, 1
        %s800 = scalar_select %p799, %s37, 1
        %s801 = smul.addr %s800, 2
        %s802 = smul.addr %s801, 4
        %s803 = scalar_lea.vmem %s22, %s802
        %v805 = vld [vmem:[%s793] sm:$0xff]
        %v806 = vld [vmem:[%s798] sm:$0xff]
        %v807 = vld [vmem:[#allocation2] sm:$0xff]
        %v808 = vld [vmem:[#allocation2 + $0x8] sm:$0xff]
        %v809 = vld [vmem:[#allocation2 + $0x10] sm:$0xff]
        %v810 = vld [vmem:[#allocation2 + $0x18] sm:$0xff]
        %v811 = vld [vmem:[#allocation2 + $0x20] sm:$0xff]
        %v812 = vld [vmem:[#allocation2 + $0x28] sm:$0xff]
        %v813 = vld [vmem:[#allocation2 + $0x30] sm:$0xff]
        %v814 = vld [vmem:[#allocation2 + $0x38] sm:$0xff]
        %v815 = vld [vmem:[#allocation2 + $0x40] sm:$0xff]
        %v816 = vld [vmem:[#allocation2 + $0x48] sm:$0xff]
        %v817 = vld [vmem:[#allocation2 + $0x50] sm:$0xff]
        %v818 = vld [vmem:[#allocation2 + $0x58] sm:$0xff]
        %v819 = vld [vmem:[#allocation2 + $0x60] sm:$0xff]
        %v820 = vld [vmem:[#allocation2 + $0x68] sm:$0xff]
        %v821 = vld [vmem:[#allocation2 + $0x70] sm:$0xff]
        %v822 = vld [vmem:[#allocation2 + $0x78] sm:$0xff]
        %v823 = vld [vmem:[#allocation2 + $0x80] sm:$0xff]
        %v824 = vld [vmem:[#allocation2 + $0x88] sm:$0xff]
        %v825 = vld [vmem:[#allocation2 + $0x90] sm:$0xff]
        %v826 = vld [vmem:[#allocation2 + $0x98] sm:$0xff]
        %v827 = vld [vmem:[#allocation2 + $0xa0] sm:$0xff]
        %v828 = vld [vmem:[#allocation2 + $0xa8] sm:$0xff]
        %v829 = vld [vmem:[#allocation2 + $0xb0] sm:$0xff]
        %v830 = vld [vmem:[#allocation2 + $0xb8] sm:$0xff]
        %v831 = vld [vmem:[#allocation2 + $0xc0] sm:$0xff]
        %v832 = vld [vmem:[#allocation2 + $0xc8] sm:$0xff]
        %v833 = vld [vmem:[#allocation2 + $0xd0] sm:$0xff]
        %v834 = vld [vmem:[#allocation2 + $0xd8] sm:$0xff]
        %v835 = vld [vmem:[#allocation2 + $0xe0] sm:$0xff]
        %v836 = vld [vmem:[#allocation2 + $0xe8] sm:$0xff]
        %v837 = vld [vmem:[#allocation2 + $0xf0] sm:$0xff]
        %v838 = vld [vmem:[#allocation2 + $0xf8] sm:$0xff]
        %v839 = vld [vmem:[#allocation2 + $0x100] sm:$0xff]
        %v840 = vld [vmem:[#allocation2 + $0x108] sm:$0xff]
        %v841 = vld [vmem:[#allocation2 + $0x110] sm:$0xff]
        %v842 = vld [vmem:[#allocation2 + $0x118] sm:$0xff]
        %v843 = vld [vmem:[#allocation2 + $0x120] sm:$0xff]
        %v844 = vld [vmem:[#allocation2 + $0x128] sm:$0xff]
        %v845 = vld [vmem:[#allocation2 + $0x130] sm:$0xff]
        %v846 = vld [vmem:[#allocation2 + $0x138] sm:$0xff]
        %v847 = vld [vmem:[#allocation2 + $0x140] sm:$0xff]
        %v848 = vld [vmem:[#allocation2 + $0x148] sm:$0xff]
        %v849 = vld [vmem:[#allocation2 + $0x150] sm:$0xff]
        %v850 = vld [vmem:[#allocation2 + $0x158] sm:$0xff]
        %v851 = vld [vmem:[#allocation2 + $0x160] sm:$0xff]
        %v852 = vld [vmem:[#allocation2 + $0x168] sm:$0xff]
        %v853 = vld [vmem:[#allocation2 + $0x170] sm:$0xff]
        %v854 = vld [vmem:[#allocation2 + $0x178] sm:$0xff]
        %v855 = vld [vmem:[#allocation2 + $0x180] sm:$0xff]
        %v856 = vld [vmem:[#allocation2 + $0x188] sm:$0xff]
        %v857 = vld [vmem:[#allocation2 + $0x190] sm:$0xff]
        %v858 = vld [vmem:[#allocation2 + $0x198] sm:$0xff]
        %v859 = vld [vmem:[#allocation2 + $0x1a0] sm:$0xff]
        %v860 = vld [vmem:[#allocation2 + $0x1a8] sm:$0xff]
        %v861 = vld [vmem:[#allocation2 + $0x1b0] sm:$0xff]
        %v862 = vld [vmem:[#allocation2 + $0x1b8] sm:$0xff]
        %v863 = vld [vmem:[#allocation2 + $0x1c0] sm:$0xff]
        %v864 = vld [vmem:[#allocation2 + $0x1c8] sm:$0xff]
        %v865 = vld [vmem:[#allocation2 + $0x1d0] sm:$0xff]
        %v866 = vld [vmem:[#allocation2 + $0x1d8] sm:$0xff]
        %v867 = vld [vmem:[#allocation2 + $0x1e0] sm:$0xff]
        %v868 = vld [vmem:[#allocation2 + $0x1e8] sm:$0xff]
        %v869 = vld [vmem:[#allocation2 + $0x1f0] sm:$0xff]
        %v870 = vld [vmem:[#allocation2 + $0x1f8] sm:$0xff]
        %v871 = vld [vmem:[#allocation2 + $0x200] sm:$0xff]
        %v872 = vld [vmem:[#allocation2 + $0x208] sm:$0xff]
        %v873 = vld [vmem:[#allocation2 + $0x210] sm:$0xff]
        %v874 = vld [vmem:[#allocation2 + $0x218] sm:$0xff]
        %v875 = vld [vmem:[#allocation2 + $0x220] sm:$0xff]
        %v876 = vld [vmem:[#allocation2 + $0x228] sm:$0xff]
        %v877 = vld [vmem:[#allocation2 + $0x230] sm:$0xff]
        %v878 = vld [vmem:[#allocation2 + $0x238] sm:$0xff]
        %v879 = vld [vmem:[#allocation2 + $0x240] sm:$0xff]
        %v880 = vld [vmem:[#allocation2 + $0x248] sm:$0xff]
        %v881 = vld [vmem:[#allocation2 + $0x250] sm:$0xff]
        %v882 = vld [vmem:[#allocation2 + $0x258] sm:$0xff]
        %v883 = vld [vmem:[#allocation2 + $0x260] sm:$0xff]
        %v884 = vld [vmem:[#allocation2 + $0x268] sm:$0xff]
        %v885 = vld [vmem:[#allocation2 + $0x270] sm:$0xff]
        %v886 = vld [vmem:[#allocation2 + $0x278] sm:$0xff]
        %v887 = vld [vmem:[#allocation2 + $0x280] sm:$0xff]
        %v888 = vld [vmem:[#allocation2 + $0x288] sm:$0xff]
        %v889 = vld [vmem:[#allocation2 + $0x290] sm:$0xff]
        %v890 = vld [vmem:[#allocation2 + $0x298] sm:$0xff]
        %v891 = vld [vmem:[#allocation2 + $0x2a0] sm:$0xff]
        %v892 = vld [vmem:[#allocation2 + $0x2a8] sm:$0xff]
        %v893 = vld [vmem:[#allocation2 + $0x2b0] sm:$0xff]
        %v894 = vld [vmem:[#allocation2 + $0x2b8] sm:$0xff]
        %v895 = vld [vmem:[#allocation2 + $0x2c0] sm:$0xff]
        %v896 = vld [vmem:[#allocation2 + $0x2c8] sm:$0xff]
        %v897 = vld [vmem:[#allocation2 + $0x2d0] sm:$0xff]
        %v898 = vld [vmem:[#allocation2 + $0x2d8] sm:$0xff]
        %v899 = vld [vmem:[#allocation2 + $0x2e0] sm:$0xff]
        %v900 = vld [vmem:[#allocation2 + $0x2e8] sm:$0xff]
        %v901 = vld [vmem:[#allocation2 + $0x2f0] sm:$0xff]
        %v902 = vld [vmem:[#allocation2 + $0x2f8] sm:$0xff]
        %v903 = vld [vmem:[%s3] sm:$0x3f]
        %v905 = vperm.slane %v903, 0
        %v906 = vperm.slane %v903, 1
        %v907 = vperm.slane %v903, 2
        %v908 = vperm.slane %v903, 3
        %v909 = vperm.slane %v903, 4
        %v910 = vperm.slane %v903, 5
        %v918 = vunpack.c.l.b16 %v806
        %v919 = vunpack.c.h.b16 %v806
        %v920 = vpack.c.b16 %v918, %v918
        %v921 = vpack.c.b16 %v919, %v919
        %v1020 = vunpack.c.l.b16 %v807
        %v1021 = vunpack.c.h.b16 %v807
        %v1022 = vunpack.c.l.b16 %v808
        %v1023 = vunpack.c.h.b16 %v808
        %v1024 = vunpack.c.l.b16 %v809
        %v1025 = vunpack.c.h.b16 %v809
        %v1026 = vunpack.c.l.b16 %v810
        %v1027 = vunpack.c.h.b16 %v810
        %v1028 = vunpack.c.l.b16 %v811
        %v1029 = vunpack.c.h.b16 %v811
        %v1030 = vunpack.c.l.b16 %v812
        %v1031 = vunpack.c.h.b16 %v812
        %v1032 = vunpack.c.l.b16 %v813
        %v1033 = vunpack.c.h.b16 %v813
        %v1034 = vunpack.c.l.b16 %v814
        %v1035 = vunpack.c.h.b16 %v814
        %v1036 = vunpack.c.l.b16 %v815
        %v1037 = vunpack.c.h.b16 %v815
        %v1038 = vunpack.c.l.b16 %v816
        %v1039 = vunpack.c.h.b16 %v816
        %v1040 = vunpack.c.l.b16 %v817
        %v1041 = vunpack.c.h.b16 %v817
        %v1042 = vunpack.c.l.b16 %v818
        %v1043 = vunpack.c.h.b16 %v818
        %v1044 = vunpack.c.l.b16 %v819
        %v1045 = vunpack.c.h.b16 %v819
        %v1046 = vunpack.c.l.b16 %v820
        %v1047 = vunpack.c.h.b16 %v820
        %v1048 = vunpack.c.l.b16 %v821
        %v1049 = vunpack.c.h.b16 %v821
        %v1050 = vunpack.c.l.b16 %v822
        %v1051 = vunpack.c.h.b16 %v822
        %v1052 = vunpack.c.l.b16 %v823
        %v1053 = vunpack.c.h.b16 %v823
        %v1054 = vunpack.c.l.b16 %v824
        %v1055 = vunpack.c.h.b16 %v824
        %v1056 = vunpack.c.l.b16 %v825
        %v1057 = vunpack.c.h.b16 %v825
        %v1058 = vunpack.c.l.b16 %v826
        %v1059 = vunpack.c.h.b16 %v826
        %v1060 = vunpack.c.l.b16 %v827
        %v1061 = vunpack.c.h.b16 %v827
        %v1062 = vunpack.c.l.b16 %v828
        %v1063 = vunpack.c.h.b16 %v828
        %v1064 = vunpack.c.l.b16 %v829
        %v1065 = vunpack.c.h.b16 %v829
        %v1066 = vunpack.c.l.b16 %v830
        %v1067 = vunpack.c.h.b16 %v830
        %v1068 = vunpack.c.l.b16 %v831
        %v1069 = vunpack.c.h.b16 %v831
        %v1070 = vunpack.c.l.b16 %v832
        %v1071 = vunpack.c.h.b16 %v832
        %v1072 = vunpack.c.l.b16 %v833
        %v1073 = vunpack.c.h.b16 %v833
        %v1074 = vunpack.c.l.b16 %v834
        %v1075 = vunpack.c.h.b16 %v834
        %v1076 = vunpack.c.l.b16 %v835
        %v1077 = vunpack.c.h.b16 %v835
        %v1078 = vunpack.c.l.b16 %v836
        %v1079 = vunpack.c.h.b16 %v836
        %v1080 = vunpack.c.l.b16 %v837
        %v1081 = vunpack.c.h.b16 %v837
        %v1082 = vunpack.c.l.b16 %v838
        %v1083 = vunpack.c.h.b16 %v838
        %v1084 = vunpack.c.l.b16 %v839
        %v1085 = vunpack.c.h.b16 %v839
        %v1086 = vunpack.c.l.b16 %v840
        %v1087 = vunpack.c.h.b16 %v840
        %v1088 = vunpack.c.l.b16 %v841
        %v1089 = vunpack.c.h.b16 %v841
        %v1090 = vunpack.c.l.b16 %v842
        %v1091 = vunpack.c.h.b16 %v842
        %v1092 = vunpack.c.l.b16 %v843
        %v1093 = vunpack.c.h.b16 %v843
        %v1094 = vunpack.c.l.b16 %v844
        %v1095 = vunpack.c.h.b16 %v844
        %v1096 = vunpack.c.l.b16 %v845
        %v1097 = vunpack.c.h.b16 %v845
        %v1098 = vunpack.c.l.b16 %v846
        %v1099 = vunpack.c.h.b16 %v846
        %v1100 = vunpack.c.l.b16 %v847
        %v1101 = vunpack.c.h.b16 %v847
        %v1102 = vunpack.c.l.b16 %v848
        %v1103 = vunpack.c.h.b16 %v848
        %v1104 = vunpack.c.l.b16 %v849
        %v1105 = vunpack.c.h.b16 %v849
        %v1106 = vunpack.c.l.b16 %v850
        %v1107 = vunpack.c.h.b16 %v850
        %v1108 = vunpack.c.l.b16 %v851
        %v1109 = vunpack.c.h.b16 %v851
        %v1110 = vunpack.c.l.b16 %v852
        %v1111 = vunpack.c.h.b16 %v852
        %v1112 = vunpack.c.l.b16 %v853
        %v1113 = vunpack.c.h.b16 %v853
        %v1114 = vunpack.c.l.b16 %v854
        %v1115 = vunpack.c.h.b16 %v854
        %v1116 = vunpack.c.l.b16 %v855
        %v1117 = vunpack.c.h.b16 %v855
        %v1118 = vunpack.c.l.b16 %v856
        %v1119 = vunpack.c.h.b16 %v856
        %v1120 = vunpack.c.l.b16 %v857
        %v1121 = vunpack.c.h.b16 %v857
        %v1122 = vunpack.c.l.b16 %v858
        %v1123 = vunpack.c.h.b16 %v858
        %v1124 = vunpack.c.l.b16 %v859
        %v1125 = vunpack.c.h.b16 %v859
        %v1126 = vunpack.c.l.b16 %v860
        %v1127 = vunpack.c.h.b16 %v860
        %v1128 = vunpack.c.l.b16 %v861
        %v1129 = vunpack.c.h.b16 %v861
        %v1130 = vunpack.c.l.b16 %v862
        %v1131 = vunpack.c.h.b16 %v862
        %v1132 = vunpack.c.l.b16 %v863
        %v1133 = vunpack.c.h.b16 %v863
        %v1134 = vunpack.c.l.b16 %v864
        %v1135 = vunpack.c.h.b16 %v864
        %v1136 = vunpack.c.l.b16 %v865
        %v1137 = vunpack.c.h.b16 %v865
        %v1138 = vunpack.c.l.b16 %v866
        %v1139 = vunpack.c.h.b16 %v866
        %v1140 = vunpack.c.l.b16 %v867
        %v1141 = vunpack.c.h.b16 %v867
        %v1142 = vunpack.c.l.b16 %v868
        %v1143 = vunpack.c.h.b16 %v868
        %v1144 = vunpack.c.l.b16 %v869
        %v1145 = vunpack.c.h.b16 %v869
        %v1146 = vunpack.c.l.b16 %v870
        %v1147 = vunpack.c.h.b16 %v870
        %v1148 = vunpack.c.l.b16 %v871
        %v1149 = vunpack.c.h.b16 %v871
        %v1150 = vunpack.c.l.b16 %v872
        %v1151 = vunpack.c.h.b16 %v872
        %v1152 = vunpack.c.l.b16 %v873
        %v1153 = vunpack.c.h.b16 %v873
        %v1154 = vunpack.c.l.b16 %v874
        %v1155 = vunpack.c.h.b16 %v874
        %v1156 = vunpack.c.l.b16 %v875
        %v1157 = vunpack.c.h.b16 %v875
        %v1158 = vunpack.c.l.b16 %v876
        %v1159 = vunpack.c.h.b16 %v876
        %v1160 = vunpack.c.l.b16 %v877
        %v1161 = vunpack.c.h.b16 %v877
        %v1162 = vunpack.c.l.b16 %v878
        %v1163 = vunpack.c.h.b16 %v878
        %v1164 = vunpack.c.l.b16 %v879
        %v1165 = vunpack.c.h.b16 %v879
        %v1166 = vunpack.c.l.b16 %v880
        %v1167 = vunpack.c.h.b16 %v880
        %v1168 = vunpack.c.l.b16 %v881
        %v1169 = vunpack.c.h.b16 %v881
        %v1170 = vunpack.c.l.b16 %v882
        %v1171 = vunpack.c.h.b16 %v882
        %v1172 = vunpack.c.l.b16 %v883
        %v1173 = vunpack.c.h.b16 %v883
        %v1174 = vunpack.c.l.b16 %v884
        %v1175 = vunpack.c.h.b16 %v884
        %v1176 = vunpack.c.l.b16 %v885
        %v1177 = vunpack.c.h.b16 %v885
        %v1178 = vunpack.c.l.b16 %v886
        %v1179 = vunpack.c.h.b16 %v886
        %v1180 = vunpack.c.l.b16 %v887
        %v1181 = vunpack.c.h.b16 %v887
        %v1182 = vunpack.c.l.b16 %v888
        %v1183 = vunpack.c.h.b16 %v888
        %v1184 = vunpack.c.l.b16 %v889
        %v1185 = vunpack.c.h.b16 %v889
        %v1186 = vunpack.c.l.b16 %v890
        %v1187 = vunpack.c.h.b16 %v890
        %v1188 = vunpack.c.l.b16 %v891
        %v1189 = vunpack.c.h.b16 %v891
        %v1190 = vunpack.c.l.b16 %v892
        %v1191 = vunpack.c.h.b16 %v892
        %v1192 = vunpack.c.l.b16 %v893
        %v1193 = vunpack.c.h.b16 %v893
        %v1194 = vunpack.c.l.b16 %v894
        %v1195 = vunpack.c.h.b16 %v894
        %v1196 = vunpack.c.l.b16 %v895
        %v1197 = vunpack.c.h.b16 %v895
        %v1198 = vunpack.c.l.b16 %v896
        %v1199 = vunpack.c.h.b16 %v896
        %v1200 = vunpack.c.l.b16 %v897
        %v1201 = vunpack.c.h.b16 %v897
        %v1202 = vunpack.c.l.b16 %v898
        %v1203 = vunpack.c.h.b16 %v898
        %v1204 = vunpack.c.l.b16 %v899
        %v1205 = vunpack.c.h.b16 %v899
        %v1206 = vunpack.c.l.b16 %v900
        %v1207 = vunpack.c.h.b16 %v900
        %v1208 = vunpack.c.l.b16 %v901
        %v1209 = vunpack.c.h.b16 %v901
        %v1210 = vunpack.c.l.b16 %v902
        %v1211 = vunpack.c.h.b16 %v902
        %v1212 = vpack.c.b16 %v1026, %v1020
        %v1213 = vpack.c.b16 %v1027, %v1021
        %v1214 = vpack.c.b16 %v1028, %v1022
        %v1215 = vpack.c.b16 %v1029, %v1023
        %v1216 = vpack.c.b16 %v1030, %v1024
        %v1217 = vpack.c.b16 %v1031, %v1025
        %v1218 = vpack.c.b16 %v1038, %v1032
        %v1219 = vpack.c.b16 %v1039, %v1033
        %v1220 = vpack.c.b16 %v1040, %v1034
        %v1221 = vpack.c.b16 %v1041, %v1035
        %v1222 = vpack.c.b16 %v1042, %v1036
        %v1223 = vpack.c.b16 %v1043, %v1037
        %v1224 = vpack.c.b16 %v1050, %v1044
        %v1225 = vpack.c.b16 %v1051, %v1045
        %v1226 = vpack.c.b16 %v1052, %v1046
        %v1227 = vpack.c.b16 %v1053, %v1047
        %v1228 = vpack.c.b16 %v1054, %v1048
        %v1229 = vpack.c.b16 %v1055, %v1049
        %v1230 = vpack.c.b16 %v1062, %v1056
        %v1231 = vpack.c.b16 %v1063, %v1057
        %v1232 = vpack.c.b16 %v1064, %v1058
        %v1233 = vpack.c.b16 %v1065, %v1059
        %v1234 = vpack.c.b16 %v1066, %v1060
        %v1235 = vpack.c.b16 %v1067, %v1061
        %v1236 = vpack.c.b16 %v1074, %v1068
        %v1237 = vpack.c.b16 %v1075, %v1069
        %v1238 = vpack.c.b16 %v1076, %v1070
        %v1239 = vpack.c.b16 %v1077, %v1071
        %v1240 = vpack.c.b16 %v1078, %v1072
        %v1241 = vpack.c.b16 %v1079, %v1073
        %v1242 = vpack.c.b16 %v1086, %v1080
        %v1243 = vpack.c.b16 %v1087, %v1081
        %v1244 = vpack.c.b16 %v1088, %v1082
        %v1245 = vpack.c.b16 %v1089, %v1083
        %v1246 = vpack.c.b16 %v1090, %v1084
        %v1247 = vpack.c.b16 %v1091, %v1085
        %v1248 = vpack.c.b16 %v1098, %v1092
        %v1249 = vpack.c.b16 %v1099, %v1093
        %v1250 = vpack.c.b16 %v1100, %v1094
        %v1251 = vpack.c.b16 %v1101, %v1095
        %v1252 = vpack.c.b16 %v1102, %v1096
        %v1253 = vpack.c.b16 %v1103, %v1097
        %v1254 = vpack.c.b16 %v1110, %v1104
        %v1255 = vpack.c.b16 %v1111, %v1105
        %v1256 = vpack.c.b16 %v1112, %v1106
        %v1257 = vpack.c.b16 %v1113, %v1107
        %v1258 = vpack.c.b16 %v1114, %v1108
        %v1259 = vpack.c.b16 %v1115, %v1109
        %v1260 = vpack.c.b16 %v1122, %v1116
        %v1261 = vpack.c.b16 %v1123, %v1117
        %v1262 = vpack.c.b16 %v1124, %v1118
        %v1263 = vpack.c.b16 %v1125, %v1119
        %v1264 = vpack.c.b16 %v1126, %v1120
        %v1265 = vpack.c.b16 %v1127, %v1121
        %v1266 = vpack.c.b16 %v1134, %v1128
        %v1267 = vpack.c.b16 %v1135, %v1129
        %v1268 = vpack.c.b16 %v1136, %v1130
        %v1269 = vpack.c.b16 %v1137, %v1131
        %v1270 = vpack.c.b16 %v1138, %v1132
        %v1271 = vpack.c.b16 %v1139, %v1133
        %v1272 = vpack.c.b16 %v1146, %v1140
        %v1273 = vpack.c.b16 %v1147, %v1141
        %v1274 = vpack.c.b16 %v1148, %v1142
        %v1275 = vpack.c.b16 %v1149, %v1143
        %v1276 = vpack.c.b16 %v1150, %v1144
        %v1277 = vpack.c.b16 %v1151, %v1145
        %v1278 = vpack.c.b16 %v1158, %v1152
        %v1279 = vpack.c.b16 %v1159, %v1153
        %v1280 = vpack.c.b16 %v1160, %v1154
        %v1281 = vpack.c.b16 %v1161, %v1155
        %v1282 = vpack.c.b16 %v1162, %v1156
        %v1283 = vpack.c.b16 %v1163, %v1157
        %v1284 = vpack.c.b16 %v1170, %v1164
        %v1285 = vpack.c.b16 %v1171, %v1165
        %v1286 = vpack.c.b16 %v1172, %v1166
        %v1287 = vpack.c.b16 %v1173, %v1167
        %v1288 = vpack.c.b16 %v1174, %v1168
        %v1289 = vpack.c.b16 %v1175, %v1169
        %v1290 = vpack.c.b16 %v1182, %v1176
        %v1291 = vpack.c.b16 %v1183, %v1177
        %v1292 = vpack.c.b16 %v1184, %v1178
        %v1293 = vpack.c.b16 %v1185, %v1179
        %v1294 = vpack.c.b16 %v1186, %v1180
        %v1295 = vpack.c.b16 %v1187, %v1181
        %v1296 = vpack.c.b16 %v1194, %v1188
        %v1297 = vpack.c.b16 %v1195, %v1189
        %v1298 = vpack.c.b16 %v1196, %v1190
        %v1299 = vpack.c.b16 %v1197, %v1191
        %v1300 = vpack.c.b16 %v1198, %v1192
        %v1301 = vpack.c.b16 %v1199, %v1193
        %v1302 = vpack.c.b16 %v1206, %v1200
        %v1303 = vpack.c.b16 %v1207, %v1201
        %v1304 = vpack.c.b16 %v1208, %v1202
        %v1305 = vpack.c.b16 %v1209, %v1203
        %v1306 = vpack.c.b16 %v1210, %v1204
        %v1307 = vpack.c.b16 %v1211, %v1205
        %1404 = vmatpush.bf16.msra.mxu0 %v1254
        %1405 = vmatpush.bf16.msra.mxu0 %v1248
        %1406 = vmatpush.bf16.msra.mxu0 %v1242
        %1407 = vmatpush.bf16.msra.mxu0 %v1236
        %1408 = vmatpush.bf16.msra.mxu0 %v1230
        %1409 = vmatpush.bf16.msra.mxu0 %v1224
        %1410 = vmatpush.bf16.msra.mxu0 %v1218
        %1411 = vmatpush.bf16.msra.mxu0 %v1212
        %1412 = vmatmul.bf16.gmra.mxu0 %v920
        %v1413 = vpop.f32.mrf.mxu0
        %v1414 = vadd.f32 %v905, %v1413
        %v1415 = vpop.f32.mrf.mxu0
        %1416 = vdwg.mxu0
        %1417 = vmatpush.bf16.msra.mxu0 %v1302
        %1418 = vmatpush.bf16.msra.mxu0 %v1296
        %1419 = vmatpush.bf16.msra.mxu0 %v1290
        %1420 = vmatpush.bf16.msra.mxu0 %v1284
        %1421 = vmatpush.bf16.msra.mxu0 %v1278
        %1422 = vmatpush.bf16.msra.mxu0 %v1272
        %1423 = vmatpush.bf16.msra.mxu0 %v1266
        %1424 = vmatpush.bf16.msra.mxu0 %v1260
        %1425 = vmatmul.bf16.gmra.mxu0 %v921
        %v1426 = vpop.f32.mrf.mxu0
        %v1427 = vadd.f32 %v1414, %v1426
        %v1428 = vpop.f32.mrf.mxu0
        %1429 = vdwg.mxu0
        %1430 = vmatpush.bf16.msra.mxu0 %v1255
        %1431 = vmatpush.bf16.msra.mxu0 %v1249
        %1432 = vmatpush.bf16.msra.mxu0 %v1243
        %1433 = vmatpush.bf16.msra.mxu0 %v1237
        %1434 = vmatpush.bf16.msra.mxu0 %v1231
        %1435 = vmatpush.bf16.msra.mxu0 %v1225
        %1436 = vmatpush.bf16.msra.mxu0 %v1219
        %1437 = vmatpush.bf16.msra.mxu0 %v1213
        %1438 = vmatmul.bf16.gmra.mxu0 %v920
        %v1439 = vpop.f32.mrf.mxu0
        %v1440 = vadd.f32 %v906, %v1439
        %v1441 = vpop.f32.mrf.mxu0
        %1442 = vdwg.mxu0
        %1443 = vmatpush.bf16.msra.mxu0 %v1303
        %1444 = vmatpush.bf16.msra.mxu0 %v1297
        %1445 = vmatpush.bf16.msra.mxu0 %v1291
        %1446 = vmatpush.bf16.msra.mxu0 %v1285
        %1447 = vmatpush.bf16.msra.mxu0 %v1279
        %1448 = vmatpush.bf16.msra.mxu0 %v1273
        %1449 = vmatpush.bf16.msra.mxu0 %v1267
        %1450 = vmatpush.bf16.msra.mxu0 %v1261
        %1451 = vmatmul.bf16.gmra.mxu0 %v921
        %v1452 = vpop.f32.mrf.mxu0
        %v1453 = vadd.f32 %v1440, %v1452
        %v1454 = vpop.f32.mrf.mxu0
        %1455 = vdwg.mxu0
        %1456 = vmatpush.bf16.msra.mxu0 %v1256
        %1457 = vmatpush.bf16.msra.mxu0 %v1250
        %1458 = vmatpush.bf16.msra.mxu0 %v1244
        %1459 = vmatpush.bf16.msra.mxu0 %v1238
        %1460 = vmatpush.bf16.msra.mxu0 %v1232
        %1461 = vmatpush.bf16.msra.mxu0 %v1226
        %1462 = vmatpush.bf16.msra.mxu0 %v1220
        %1463 = vmatpush.bf16.msra.mxu0 %v1214
        %1464 = vmatmul.bf16.gmra.mxu0 %v920
        %v1465 = vpop.f32.mrf.mxu0
        %v1466 = vadd.f32 %v907, %v1465
        %v1467 = vpop.f32.mrf.mxu0
        %1468 = vdwg.mxu0
        %1469 = vmatpush.bf16.msra.mxu0 %v1304
        %1470 = vmatpush.bf16.msra.mxu0 %v1298
        %1471 = vmatpush.bf16.msra.mxu0 %v1292
        %1472 = vmatpush.bf16.msra.mxu0 %v1286
        %1473 = vmatpush.bf16.msra.mxu0 %v1280
        %1474 = vmatpush.bf16.msra.mxu0 %v1274
        %1475 = vmatpush.bf16.msra.mxu0 %v1268
        %1476 = vmatpush.bf16.msra.mxu0 %v1262
        %1477 = vmatmul.bf16.gmra.mxu0 %v921
        %v1478 = vpop.f32.mrf.mxu0
        %v1479 = vadd.f32 %v1466, %v1478
        %v1480 = vpop.f32.mrf.mxu0
        %1481 = vdwg.mxu0
        %1482 = vmatpush.bf16.msra.mxu0 %v1257
        %1483 = vmatpush.bf16.msra.mxu0 %v1251
        %1484 = vmatpush.bf16.msra.mxu0 %v1245
        %1485 = vmatpush.bf16.msra.mxu0 %v1239
        %1486 = vmatpush.bf16.msra.mxu0 %v1233
        %1487 = vmatpush.bf16.msra.mxu0 %v1227
        %1488 = vmatpush.bf16.msra.mxu0 %v1221
        %1489 = vmatpush.bf16.msra.mxu0 %v1215
        %1490 = vmatmul.bf16.gmra.mxu0 %v920
        %v1491 = vpop.f32.mrf.mxu0
        %v1492 = vadd.f32 %v908, %v1491
        %v1493 = vpop.f32.mrf.mxu0
        %1494 = vdwg.mxu0
        %1495 = vmatpush.bf16.msra.mxu0 %v1305
        %1496 = vmatpush.bf16.msra.mxu0 %v1299
        %1497 = vmatpush.bf16.msra.mxu0 %v1293
        %1498 = vmatpush.bf16.msra.mxu0 %v1287
        %1499 = vmatpush.bf16.msra.mxu0 %v1281
        %1500 = vmatpush.bf16.msra.mxu0 %v1275
        %1501 = vmatpush.bf16.msra.mxu0 %v1269
        %1502 = vmatpush.bf16.msra.mxu0 %v1263
        %1503 = vmatmul.bf16.gmra.mxu0 %v921
        %v1504 = vpop.f32.mrf.mxu0
        %v1505 = vadd.f32 %v1492, %v1504
        %v1506 = vpop.f32.mrf.mxu0
        %1507 = vdwg.mxu0
        %1508 = vmatpush.bf16.msra.mxu0 %v1258
        %1509 = vmatpush.bf16.msra.mxu0 %v1252
        %1510 = vmatpush.bf16.msra.mxu0 %v1246
        %1511 = vmatpush.bf16.msra.mxu0 %v1240
        %1512 = vmatpush.bf16.msra.mxu0 %v1234
        %1513 = vmatpush.bf16.msra.mxu0 %v1228
        %1514 = vmatpush.bf16.msra.mxu0 %v1222
        %1515 = vmatpush.bf16.msra.mxu0 %v1216
        %1516 = vmatmul.bf16.gmra.mxu0 %v920
        %v1517 = vpop.f32.mrf.mxu0
        %v1518 = vadd.f32 %v909, %v1517
        %v1519 = vpop.f32.mrf.mxu0
        %1520 = vdwg.mxu0
        %1521 = vmatpush.bf16.msra.mxu0 %v1306
        %1522 = vmatpush.bf16.msra.mxu0 %v1300
        %1523 = vmatpush.bf16.msra.mxu0 %v1294
        %1524 = vmatpush.bf16.msra.mxu0 %v1288
        %1525 = vmatpush.bf16.msra.mxu0 %v1282
        %1526 = vmatpush.bf16.msra.mxu0 %v1276
        %1527 = vmatpush.bf16.msra.mxu0 %v1270
        %1528 = vmatpush.bf16.msra.mxu0 %v1264
        %1529 = vmatmul.bf16.gmra.mxu0 %v921
        %v1530 = vpop.f32.mrf.mxu0
        %v1531 = vadd.f32 %v1518, %v1530
        %v1532 = vpop.f32.mrf.mxu0
        %1533 = vdwg.mxu0
        %1534 = vmatpush.bf16.msra.mxu0 %v1259
        %1535 = vmatpush.bf16.msra.mxu0 %v1253
        %1536 = vmatpush.bf16.msra.mxu0 %v1247
        %1537 = vmatpush.bf16.msra.mxu0 %v1241
        %1538 = vmatpush.bf16.msra.mxu0 %v1235
        %1539 = vmatpush.bf16.msra.mxu0 %v1229
        %1540 = vmatpush.bf16.msra.mxu0 %v1223
        %1541 = vmatpush.bf16.msra.mxu0 %v1217
        %1542 = vmatmul.bf16.gmra.mxu0 %v920
        %v1543 = vpop.f32.mrf.mxu0
        %v1544 = vadd.f32 %v910, %v1543
        %v1545 = vpop.f32.mrf.mxu0
        %1546 = vdwg.mxu0
        %1547 = vmatpush.bf16.msra.mxu0 %v1307
        %1548 = vmatpush.bf16.msra.mxu0 %v1301
        %1549 = vmatpush.bf16.msra.mxu0 %v1295
        %1550 = vmatpush.bf16.msra.mxu0 %v1289
        %1551 = vmatpush.bf16.msra.mxu0 %v1283
        %1552 = vmatpush.bf16.msra.mxu0 %v1277
        %1553 = vmatpush.bf16.msra.mxu0 %v1271
        %1554 = vmatpush.bf16.msra.mxu0 %v1265
        %1555 = vmatmul.bf16.gmra.mxu0 %v921
        %v1556 = vpop.f32.mrf.mxu0
        %v1557 = vadd.f32 %v1544, %v1556
        %v1558 = vpop.f32.mrf.mxu0
        %1559 = vdwg.mxu0
        %v1560 = vpack.c.bf16 %v1453, %v1427
        %v1561 = vpack.c.bf16 %v1505, %v1479
        %v1562 = vpack.c.bf16 %v1557, %v1531
        %v1564 = vrot.slane %v1561, 4
        %v1567 = vrot.slane %v1562, 4
        %v1568 = vld [vmem:[#allocation4] sm:$0xff]
        %v1569 = vld [vmem:[#allocation4 + $0x8] sm:$0xff]
        %v1570 = vld [vmem:[#allocation4 + $0x10] sm:$0xff]
        %v1571 = vld [vmem:[#allocation4 + $0x18] sm:$0xff]
        %v1572 = vld [vmem:[#allocation4 + $0x20] sm:$0xff]
        %v1573 = vld [vmem:[#allocation4 + $0x28] sm:$0xff]
        %v1574 = vld [vmem:[#allocation4 + $0x30] sm:$0xff]
        %v1575 = vld [vmem:[#allocation4 + $0x38] sm:$0xff]
        %v1576 = vld [vmem:[#allocation4 + $0x40] sm:$0xff]
        %v1577 = vld [vmem:[#allocation4 + $0x48] sm:$0xff]
        %v1578 = vld [vmem:[#allocation4 + $0x50] sm:$0xff]
        %v1579 = vld [vmem:[#allocation4 + $0x58] sm:$0xff]
        %v1580 = vld [vmem:[#allocation4 + $0x60] sm:$0xff]
        %v1581 = vld [vmem:[#allocation4 + $0x68] sm:$0xff]
        %v1582 = vld [vmem:[#allocation4 + $0x70] sm:$0xff]
        %v1583 = vld [vmem:[#allocation4 + $0x78] sm:$0xff]
        %v1584 = vld [vmem:[#allocation4 + $0x80] sm:$0xff]
        %v1585 = vld [vmem:[#allocation4 + $0x88] sm:$0xff]
        %v1586 = vld [vmem:[#allocation4 + $0x90] sm:$0xff]
        %v1587 = vld [vmem:[#allocation4 + $0x98] sm:$0xff]
        %v1588 = vld [vmem:[#allocation4 + $0xa0] sm:$0xff]
        %v1589 = vld [vmem:[#allocation4 + $0xa8] sm:$0xff]
        %v1590 = vld [vmem:[#allocation4 + $0xb0] sm:$0xff]
        %v1591 = vld [vmem:[#allocation4 + $0xb8] sm:$0xff]
        %v1592 = vld [vmem:[#allocation4 + $0xc0] sm:$0xff]
        %v1593 = vld [vmem:[#allocation4 + $0xc8] sm:$0xff]
        %v1594 = vld [vmem:[#allocation4 + $0xd0] sm:$0xff]
        %v1595 = vld [vmem:[#allocation4 + $0xd8] sm:$0xff]
        %v1596 = vld [vmem:[#allocation4 + $0xe0] sm:$0xff]
        %v1597 = vld [vmem:[#allocation4 + $0xe8] sm:$0xff]
        %v1598 = vld [vmem:[#allocation4 + $0xf0] sm:$0xff]
        %v1599 = vld [vmem:[#allocation4 + $0xf8] sm:$0xff]
        %v1600 = vld [vmem:[#allocation4 + $0x100] sm:$0xff]
        %v1601 = vld [vmem:[#allocation4 + $0x108] sm:$0xff]
        %v1602 = vld [vmem:[#allocation4 + $0x110] sm:$0xff]
        %v1603 = vld [vmem:[#allocation4 + $0x118] sm:$0xff]
        %v1604 = vld [vmem:[#allocation4 + $0x120] sm:$0xff]
        %v1605 = vld [vmem:[#allocation4 + $0x128] sm:$0xff]
        %v1606 = vld [vmem:[#allocation4 + $0x130] sm:$0xff]
        %v1607 = vld [vmem:[#allocation4 + $0x138] sm:$0xff]
        %v1608 = vld [vmem:[#allocation4 + $0x140] sm:$0xff]
        %v1609 = vld [vmem:[#allocation4 + $0x148] sm:$0xff]
        %v1610 = vld [vmem:[#allocation4 + $0x150] sm:$0xff]
        %v1611 = vld [vmem:[#allocation4 + $0x158] sm:$0xff]
        %v1612 = vld [vmem:[#allocation4 + $0x160] sm:$0xff]
        %v1613 = vld [vmem:[#allocation4 + $0x168] sm:$0xff]
        %v1614 = vld [vmem:[#allocation4 + $0x170] sm:$0xff]
        %v1615 = vld [vmem:[#allocation4 + $0x178] sm:$0xff]
        %v1616 = vld [vmem:[#allocation4 + $0x180] sm:$0xff]
        %v1617 = vld [vmem:[#allocation4 + $0x188] sm:$0xff]
        %v1618 = vld [vmem:[#allocation4 + $0x190] sm:$0xff]
        %v1619 = vld [vmem:[#allocation4 + $0x198] sm:$0xff]
        %v1620 = vld [vmem:[#allocation4 + $0x1a0] sm:$0xff]
        %v1621 = vld [vmem:[#allocation4 + $0x1a8] sm:$0xff]
        %v1622 = vld [vmem:[#allocation4 + $0x1b0] sm:$0xff]
        %v1623 = vld [vmem:[#allocation4 + $0x1b8] sm:$0xff]
        %v1624 = vld [vmem:[#allocation4 + $0x1c0] sm:$0xff]
        %v1625 = vld [vmem:[#allocation4 + $0x1c8] sm:$0xff]
        %v1626 = vld [vmem:[#allocation4 + $0x1d0] sm:$0xff]
        %v1627 = vld [vmem:[#allocation4 + $0x1d8] sm:$0xff]
        %v1628 = vld [vmem:[#allocation4 + $0x1e0] sm:$0xff]
        %v1629 = vld [vmem:[#allocation4 + $0x1e8] sm:$0xff]
        %v1630 = vld [vmem:[#allocation4 + $0x1f0] sm:$0xff]
        %v1631 = vld [vmem:[#allocation4 + $0x1f8] sm:$0xff]
        %v1632 = vld [vmem:[%s7] sm:$0xf]
        %v1634 = vperm.slane %v1632, 0
        %v1635 = vperm.slane %v1632, 1
        %v1636 = vperm.slane %v1632, 2
        %v1637 = vperm.slane %v1632, 3
        %v1643 = vunpack.c.l.b16 %v805
        %v1644 = vunpack.c.h.b16 %v805
        %v1645 = vpack.c.b16 %v1643, %v1643
        %v1646 = vpack.c.b16 %v1644, %v1644
        %v1713 = vunpack.c.l.b16 %v1568
        %v1714 = vunpack.c.h.b16 %v1568
        %v1715 = vunpack.c.l.b16 %v1569
        %v1716 = vunpack.c.h.b16 %v1569
        %v1717 = vunpack.c.l.b16 %v1570
        %v1718 = vunpack.c.h.b16 %v1570
        %v1719 = vunpack.c.l.b16 %v1571
        %v1720 = vunpack.c.h.b16 %v1571
        %v1721 = vunpack.c.l.b16 %v1572
        %v1722 = vunpack.c.h.b16 %v1572
        %v1723 = vunpack.c.l.b16 %v1573
        %v1724 = vunpack.c.h.b16 %v1573
        %v1725 = vunpack.c.l.b16 %v1574
        %v1726 = vunpack.c.h.b16 %v1574
        %v1727 = vunpack.c.l.b16 %v1575
        %v1728 = vunpack.c.h.b16 %v1575
        %v1729 = vunpack.c.l.b16 %v1576
        %v1730 = vunpack.c.h.b16 %v1576
        %v1731 = vunpack.c.l.b16 %v1577
        %v1732 = vunpack.c.h.b16 %v1577
        %v1733 = vunpack.c.l.b16 %v1578
        %v1734 = vunpack.c.h.b16 %v1578
        %v1735 = vunpack.c.l.b16 %v1579
        %v1736 = vunpack.c.h.b16 %v1579
        %v1737 = vunpack.c.l.b16 %v1580
        %v1738 = vunpack.c.h.b16 %v1580
        %v1739 = vunpack.c.l.b16 %v1581
        %v1740 = vunpack.c.h.b16 %v1581
        %v1741 = vunpack.c.l.b16 %v1582
        %v1742 = vunpack.c.h.b16 %v1582
        %v1743 = vunpack.c.l.b16 %v1583
        %v1744 = vunpack.c.h.b16 %v1583
        %v1745 = vunpack.c.l.b16 %v1584
        %v1746 = vunpack.c.h.b16 %v1584
        %v1747 = vunpack.c.l.b16 %v1585
        %v1748 = vunpack.c.h.b16 %v1585
        %v1749 = vunpack.c.l.b16 %v1586
        %v1750 = vunpack.c.h.b16 %v1586
        %v1751 = vunpack.c.l.b16 %v1587
        %v1752 = vunpack.c.h.b16 %v1587
        %v1753 = vunpack.c.l.b16 %v1588
        %v1754 = vunpack.c.h.b16 %v1588
        %v1755 = vunpack.c.l.b16 %v1589
        %v1756 = vunpack.c.h.b16 %v1589
        %v1757 = vunpack.c.l.b16 %v1590
        %v1758 = vunpack.c.h.b16 %v1590
        %v1759 = vunpack.c.l.b16 %v1591
        %v1760 = vunpack.c.h.b16 %v1591
        %v1761 = vunpack.c.l.b16 %v1592
        %v1762 = vunpack.c.h.b16 %v1592
        %v1763 = vunpack.c.l.b16 %v1593
        %v1764 = vunpack.c.h.b16 %v1593
        %v1765 = vunpack.c.l.b16 %v1594
        %v1766 = vunpack.c.h.b16 %v1594
        %v1767 = vunpack.c.l.b16 %v1595
        %v1768 = vunpack.c.h.b16 %v1595
        %v1769 = vunpack.c.l.b16 %v1596
        %v1770 = vunpack.c.h.b16 %v1596
        %v1771 = vunpack.c.l.b16 %v1597
        %v1772 = vunpack.c.h.b16 %v1597
        %v1773 = vunpack.c.l.b16 %v1598
        %v1774 = vunpack.c.h.b16 %v1598
        %v1775 = vunpack.c.l.b16 %v1599
        %v1776 = vunpack.c.h.b16 %v1599
        %v1777 = vunpack.c.l.b16 %v1600
        %v1778 = vunpack.c.h.b16 %v1600
        %v1779 = vunpack.c.l.b16 %v1601
        %v1780 = vunpack.c.h.b16 %v1601
        %v1781 = vunpack.c.l.b16 %v1602
        %v1782 = vunpack.c.h.b16 %v1602
        %v1783 = vunpack.c.l.b16 %v1603
        %v1784 = vunpack.c.h.b16 %v1603
        %v1785 = vunpack.c.l.b16 %v1604
        %v1786 = vunpack.c.h.b16 %v1604
        %v1787 = vunpack.c.l.b16 %v1605
        %v1788 = vunpack.c.h.b16 %v1605
        %v1789 = vunpack.c.l.b16 %v1606
        %v1790 = vunpack.c.h.b16 %v1606
        %v1791 = vunpack.c.l.b16 %v1607
        %v1792 = vunpack.c.h.b16 %v1607
        %v1793 = vunpack.c.l.b16 %v1608
        %v1794 = vunpack.c.h.b16 %v1608
        %v1795 = vunpack.c.l.b16 %v1609
        %v1796 = vunpack.c.h.b16 %v1609
        %v1797 = vunpack.c.l.b16 %v1610
        %v1798 = vunpack.c.h.b16 %v1610
        %v1799 = vunpack.c.l.b16 %v1611
        %v1800 = vunpack.c.h.b16 %v1611
        %v1801 = vunpack.c.l.b16 %v1612
        %v1802 = vunpack.c.h.b16 %v1612
        %v1803 = vunpack.c.l.b16 %v1613
        %v1804 = vunpack.c.h.b16 %v1613
        %v1805 = vunpack.c.l.b16 %v1614
        %v1806 = vunpack.c.h.b16 %v1614
        %v1807 = vunpack.c.l.b16 %v1615
        %v1808 = vunpack.c.h.b16 %v1615
        %v1809 = vunpack.c.l.b16 %v1616
        %v1810 = vunpack.c.h.b16 %v1616
        %v1811 = vunpack.c.l.b16 %v1617
        %v1812 = vunpack.c.h.b16 %v1617
        %v1813 = vunpack.c.l.b16 %v1618
        %v1814 = vunpack.c.h.b16 %v1618
        %v1815 = vunpack.c.l.b16 %v1619
        %v1816 = vunpack.c.h.b16 %v1619
        %v1817 = vunpack.c.l.b16 %v1620
        %v1818 = vunpack.c.h.b16 %v1620
        %v1819 = vunpack.c.l.b16 %v1621
        %v1820 = vunpack.c.h.b16 %v1621
        %v1821 = vunpack.c.l.b16 %v1622
        %v1822 = vunpack.c.h.b16 %v1622
        %v1823 = vunpack.c.l.b16 %v1623
        %v1824 = vunpack.c.h.b16 %v1623
        %v1825 = vunpack.c.l.b16 %v1624
        %v1826 = vunpack.c.h.b16 %v1624
        %v1827 = vunpack.c.l.b16 %v1625
        %v1828 = vunpack.c.h.b16 %v1625
        %v1829 = vunpack.c.l.b16 %v1626
        %v1830 = vunpack.c.h.b16 %v1626
        %v1831 = vunpack.c.l.b16 %v1627
        %v1832 = vunpack.c.h.b16 %v1627
        %v1833 = vunpack.c.l.b16 %v1628
        %v1834 = vunpack.c.h.b16 %v1628
        %v1835 = vunpack.c.l.b16 %v1629
        %v1836 = vunpack.c.h.b16 %v1629
        %v1837 = vunpack.c.l.b16 %v1630
        %v1838 = vunpack.c.h.b16 %v1630
        %v1839 = vunpack.c.l.b16 %v1631
        %v1840 = vunpack.c.h.b16 %v1631
        %v1841 = vpack.c.b16 %v1717, %v1713
        %v1842 = vpack.c.b16 %v1718, %v1714
        %v1843 = vpack.c.b16 %v1719, %v1715
        %v1844 = vpack.c.b16 %v1720, %v1716
        %v1845 = vpack.c.b16 %v1725, %v1721
        %v1846 = vpack.c.b16 %v1726, %v1722
        %v1847 = vpack.c.b16 %v1727, %v1723
        %v1848 = vpack.c.b16 %v1728, %v1724
        %v1849 = vpack.c.b16 %v1733, %v1729
        %v1850 = vpack.c.b16 %v1734, %v1730
        %v1851 = vpack.c.b16 %v1735, %v1731
        %v1852 = vpack.c.b16 %v1736, %v1732
        %v1853 = vpack.c.b16 %v1741, %v1737
        %v1854 = vpack.c.b16 %v1742, %v1738
        %v1855 = vpack.c.b16 %v1743, %v1739
        %v1856 = vpack.c.b16 %v1744, %v1740
        %v1857 = vpack.c.b16 %v1749, %v1745
        %v1858 = vpack.c.b16 %v1750, %v1746
        %v1859 = vpack.c.b16 %v1751, %v1747
        %v1860 = vpack.c.b16 %v1752, %v1748
        %v1861 = vpack.c.b16 %v1757, %v1753
        %v1862 = vpack.c.b16 %v1758, %v1754
        %v1863 = vpack.c.b16 %v1759, %v1755
        %v1864 = vpack.c.b16 %v1760, %v1756
        %v1865 = vpack.c.b16 %v1765, %v1761
        %v1866 = vpack.c.b16 %v1766, %v1762
        %v1867 = vpack.c.b16 %v1767, %v1763
        %v1868 = vpack.c.b16 %v1768, %v1764
        %v1869 = vpack.c.b16 %v1773, %v1769
        %v1870 = vpack.c.b16 %v1774, %v1770
        %v1871 = vpack.c.b16 %v1775, %v1771
        %v1872 = vpack.c.b16 %v1776, %v1772
        %v1873 = vpack.c.b16 %v1781, %v1777
        %v1874 = vpack.c.b16 %v1782, %v1778
        %v1875 = vpack.c.b16 %v1783, %v1779
        %v1876 = vpack.c.b16 %v1784, %v1780
        %v1877 = vpack.c.b16 %v1789, %v1785
        %v1878 = vpack.c.b16 %v1790, %v1786
        %v1879 = vpack.c.b16 %v1791, %v1787
        %v1880 = vpack.c.b16 %v1792, %v1788
        %v1881 = vpack.c.b16 %v1797, %v1793
        %v1882 = vpack.c.b16 %v1798, %v1794
        %v1883 = vpack.c.b16 %v1799, %v1795
        %v1884 = vpack.c.b16 %v1800, %v1796
        %v1885 = vpack.c.b16 %v1805, %v1801
        %v1886 = vpack.c.b16 %v1806, %v1802
        %v1887 = vpack.c.b16 %v1807, %v1803
        %v1888 = vpack.c.b16 %v1808, %v1804
        %v1889 = vpack.c.b16 %v1813, %v1809
        %v1890 = vpack.c.b16 %v1814, %v1810
        %v1891 = vpack.c.b16 %v1815, %v1811
        %v1892 = vpack.c.b16 %v1816, %v1812
        %v1893 = vpack.c.b16 %v1821, %v1817
        %v1894 = vpack.c.b16 %v1822, %v1818
        %v1895 = vpack.c.b16 %v1823, %v1819
        %v1896 = vpack.c.b16 %v1824, %v1820
        %v1897 = vpack.c.b16 %v1829, %v1825
        %v1898 = vpack.c.b16 %v1830, %v1826
        %v1899 = vpack.c.b16 %v1831, %v1827
        %v1900 = vpack.c.b16 %v1832, %v1828
        %v1901 = vpack.c.b16 %v1837, %v1833
        %v1902 = vpack.c.b16 %v1838, %v1834
        %v1903 = vpack.c.b16 %v1839, %v1835
        %v1904 = vpack.c.b16 %v1840, %v1836
        %1969 = vmatpush.bf16.msra.mxu0 %v1869
        %1970 = vmatpush.bf16.msra.mxu0 %v1865
        %1971 = vmatpush.bf16.msra.mxu0 %v1861
        %1972 = vmatpush.bf16.msra.mxu0 %v1857
        %1973 = vmatpush.bf16.msra.mxu0 %v1853
        %1974 = vmatpush.bf16.msra.mxu0 %v1849
        %1975 = vmatpush.bf16.msra.mxu0 %v1845
        %1976 = vmatpush.bf16.msra.mxu0 %v1841
        %1977 = vmatmul.bf16.gmra.mxu0 %v1645
        %v1978 = vpop.f32.mrf.mxu0
        %v1979 = vadd.f32 %v1634, %v1978
        %v1980 = vpop.f32.mrf.mxu0
        %1981 = vdwg.mxu0
        %1982 = vmatpush.bf16.msra.mxu0 %v1901
        %1983 = vmatpush.bf16.msra.mxu0 %v1897
        %1984 = vmatpush.bf16.msra.mxu0 %v1893
        %1985 = vmatpush.bf16.msra.mxu0 %v1889
        %1986 = vmatpush.bf16.msra.mxu0 %v1885
        %1987 = vmatpush.bf16.msra.mxu0 %v1881
        %1988 = vmatpush.bf16.msra.mxu0 %v1877
        %1989 = vmatpush.bf16.msra.mxu0 %v1873
        %1990 = vmatmul.bf16.gmra.mxu0 %v1646
        %v1991 = vpop.f32.mrf.mxu0
        %v1992 = vadd.f32 %v1979, %v1991
        %v1993 = vpop.f32.mrf.mxu0
        %1994 = vdwg.mxu0
        %1995 = vmatpush.bf16.msra.mxu0 %v1870
        %1996 = vmatpush.bf16.msra.mxu0 %v1866
        %1997 = vmatpush.bf16.msra.mxu0 %v1862
        %1998 = vmatpush.bf16.msra.mxu0 %v1858
        %1999 = vmatpush.bf16.msra.mxu0 %v1854
        %2000 = vmatpush.bf16.msra.mxu0 %v1850
        %2001 = vmatpush.bf16.msra.mxu0 %v1846
        %2002 = vmatpush.bf16.msra.mxu0 %v1842
        %2003 = vmatmul.bf16.gmra.mxu0 %v1645
        %v2004 = vpop.f32.mrf.mxu0
        %v2005 = vadd.f32 %v1635, %v2004
        %v2006 = vpop.f32.mrf.mxu0
        %2007 = vdwg.mxu0
        %2008 = vmatpush.bf16.msra.mxu0 %v1902
        %2009 = vmatpush.bf16.msra.mxu0 %v1898
        %2010 = vmatpush.bf16.msra.mxu0 %v1894
        %2011 = vmatpush.bf16.msra.mxu0 %v1890
        %2012 = vmatpush.bf16.msra.mxu0 %v1886
        %2013 = vmatpush.bf16.msra.mxu0 %v1882
        %2014 = vmatpush.bf16.msra.mxu0 %v1878
        %2015 = vmatpush.bf16.msra.mxu0 %v1874
        %2016 = vmatmul.bf16.gmra.mxu0 %v1646
        %v2017 = vpop.f32.mrf.mxu0
        %v2018 = vadd.f32 %v2005, %v2017
        %v2019 = vpop.f32.mrf.mxu0
        %2020 = vdwg.mxu0
        %2021 = vmatpush.bf16.msra.mxu0 %v1871
        %2022 = vmatpush.bf16.msra.mxu0 %v1867
        %2023 = vmatpush.bf16.msra.mxu0 %v1863
        %2024 = vmatpush.bf16.msra.mxu0 %v1859
        %2025 = vmatpush.bf16.msra.mxu0 %v1855
        %2026 = vmatpush.bf16.msra.mxu0 %v1851
        %2027 = vmatpush.bf16.msra.mxu0 %v1847
        %2028 = vmatpush.bf16.msra.mxu0 %v1843
        %2029 = vmatmul.bf16.gmra.mxu0 %v1645
        %v2030 = vpop.f32.mrf.mxu0
        %v2031 = vadd.f32 %v1636, %v2030
        %v2032 = vpop.f32.mrf.mxu0
        %2033 = vdwg.mxu0
        %2034 = vmatpush.bf16.msra.mxu0 %v1903
        %2035 = vmatpush.bf16.msra.mxu0 %v1899
        %2036 = vmatpush.bf16.msra.mxu0 %v1895
        %2037 = vmatpush.bf16.msra.mxu0 %v1891
        %2038 = vmatpush.bf16.msra.mxu0 %v1887
        %2039 = vmatpush.bf16.msra.mxu0 %v1883
        %2040 = vmatpush.bf16.msra.mxu0 %v1879
        %2041 = vmatpush.bf16.msra.mxu0 %v1875
        %2042 = vmatmul.bf16.gmra.mxu0 %v1646
        %v2043 = vpop.f32.mrf.mxu0
        %v2044 = vadd.f32 %v2031, %v2043
        %v2045 = vpop.f32.mrf.mxu0
        %2046 = vdwg.mxu0
        %2047 = vmatpush.bf16.msra.mxu0 %v1872
        %2048 = vmatpush.bf16.msra.mxu0 %v1868
        %2049 = vmatpush.bf16.msra.mxu0 %v1864
        %2050 = vmatpush.bf16.msra.mxu0 %v1860
        %2051 = vmatpush.bf16.msra.mxu0 %v1856
        %2052 = vmatpush.bf16.msra.mxu0 %v1852
        %2053 = vmatpush.bf16.msra.mxu0 %v1848
        %2054 = vmatpush.bf16.msra.mxu0 %v1844
        %2055 = vmatmul.bf16.gmra.mxu0 %v1645
        %v2056 = vpop.f32.mrf.mxu0
        %v2057 = vadd.f32 %v1637, %v2056
        %v2058 = vpop.f32.mrf.mxu0
        %2059 = vdwg.mxu0
        %2060 = vmatpush.bf16.msra.mxu0 %v1904
        %2061 = vmatpush.bf16.msra.mxu0 %v1900
        %2062 = vmatpush.bf16.msra.mxu0 %v1896
        %2063 = vmatpush.bf16.msra.mxu0 %v1892
        %2064 = vmatpush.bf16.msra.mxu0 %v1888
        %2065 = vmatpush.bf16.msra.mxu0 %v1884
        %2066 = vmatpush.bf16.msra.mxu0 %v1880
        %2067 = vmatpush.bf16.msra.mxu0 %v1876
        %2068 = vmatmul.bf16.gmra.mxu0 %v1646
        %v2069 = vpop.f32.mrf.mxu0
        %v2070 = vadd.f32 %v2057, %v2069
        %v2071 = vpop.f32.mrf.mxu0
        %2072 = vdwg.mxu0
        %v2073 = vpack.c.bf16 %v2018, %v1992
        %v2074 = vpack.c.bf16 %v2070, %v2044
        %v2076 = vrot.slane %v2073, 4
        %v2079 = vrot.slane %v2074, 4
        %v2081 = vrot.slane %v1560, 4
        %v2083 = vlaneseq
        %v2084 = vshrl.u32 %v2083, 7
        %v2085 = vlaneseq
        %v2086 = vand.u32 %v2085, 127
        %vm2087 = vcmp.gt.s32.totalorder %v2086, %v2084
        %2088 = vmatpush.bf16.xpose.msra.mxu0 0
        %2089 = vmatpush.bf16.xpose.msra.mxu0 0
        %2090 = vmatpush.bf16.xpose.msra.mxu0 0
        %2091 = vmatpush.bf16.xpose.msra.mxu0 0
        %2092 = vmatpush.bf16.xpose.msra.mxu0 0
        %2093 = vmatpush.bf16.xpose.msra.mxu0 0
        %2094 = vmatpush.bf16.xpose.msra.mxu0 0
        %2095 = vmatpush.bf16.xpose.msra.mxu0 %v1561
        %2096 = vmatmul.bf16.gmra.mxu0 %v1560
        %v2097 = vpop.f32.mrf.mxu0
        %v2098 = vadd.f32 0.0, %v2097
        %v2099 = vpop.f32.mrf.mxu0
        %2100 = vdwg.mxu0
        %2101 = vmatpush.bf16.xpose.msra.mxu0 0
        %2102 = vmatpush.bf16.xpose.msra.mxu0 0
        %2103 = vmatpush.bf16.xpose.msra.mxu0 0
        %2104 = vmatpush.bf16.xpose.msra.mxu0 0
        %2105 = vmatpush.bf16.xpose.msra.mxu0 0
        %2106 = vmatpush.bf16.xpose.msra.mxu0 0
        %2107 = vmatpush.bf16.xpose.msra.mxu0 0
        %2108 = vmatpush.bf16.xpose.msra.mxu0 %v1564
        %2109 = vmatmul.bf16.gmra.mxu0 %v2081
        %v2110 = vpop.f32.mrf.mxu0
        %v2111 = vadd.f32 0.0, %v2110
        %v2112 = vpop.f32.mrf.mxu0
        %2113 = vdwg.mxu0
        %v2114 = vmul.f32 %v2098, 0.088388346
        %v2115 = vmul.f32 %v2111, 0.088388346
        %v2116 = vsel %vm2087, 1, 0
        %vm2117 = vcmp.eq.s32.totalorder %v2116, 1
        %v2118 = vsel %vm2117, -1e+09, %v2114
        %v2119 = vsel %vm2117, -1e+09, %v2115
        %vm2120 = vcmask 64512
        %v2121 = vsel %vm2120, %v2118, -inf
        %2122 = vmax.xlane.f32.xlu0 %v2121
        %v2123 = vpop.xlane.xlu0 %2122
        %v2124 = vsel %vm2120, %v2119, -inf
        %2125 = vmax.xlane.f32.xlu0 %v2124
        %v2126 = vpop.xlane.xlu0 %2125
        %v2127 = vsub.f32 %v2118, %v2123
        %v2128 = vsub.f32 %v2119, %v2126
        %v2129 = vmul.f32 %v2127, 1.442695
        %v2130 = vpow.pop %v2129
        %v2131 = vmul.f32 %v2128, 1.442695
        %v2132 = vpow.pop %v2131
        %v2133 = vsel %vm2120, %v2130, 0.0
        %2134 = vadd.xlane.f32.xlu0 %v2133
        %v2135 = vpop.xlane.xlu0 %2134
        %v2136 = vsel %vm2120, %v2132, 0.0
        %2137 = vadd.xlane.f32.xlu0 %v2136
        %v2138 = vpop.xlane.xlu0 %2137
        %v2139 = vrcp.pop %v2135
        %v2140 = vrcp.pop %v2138
        %v2141 = vmul.f32 %v2130, %v2139
        %v2142 = vmul.f32 %v2132, %v2140
        %v2143 = vpack.c.bf16 %v2141, %v2141
        %v2144 = vpack.c.bf16 %v2142, %v2142
        %v2146 = vsel %vm2120, %v2143, 0
        %vm2148 = vcmask 1043456
        %v2150 = vsel %vm2148, %v1562, 0
        %2152 = vmatpush.bf16.msra.mxu0 0
        %2153 = vmatpush.bf16.msra.mxu0 0
        %2154 = vmatpush.bf16.msra.mxu0 0
        %2155 = vmatpush.bf16.msra.mxu0 0
        %2156 = vmatpush.bf16.msra.mxu0 0
        %2157 = vmatpush.bf16.msra.mxu0 0
        %2158 = vmatpush.bf16.msra.mxu0 0
        %2159 = vmatpush.bf16.msra.mxu0 %v2150
        %2160 = vmatmul.bf16.gmra.mxu0 %v2146
        %v2161 = vpop.f32.mrf.mxu0
        %v2162 = vadd.f32 0.0, %v2161
        %v2163 = vpop.f32.mrf.mxu0
        %2164 = vdwg.mxu0
        %v2166 = vsel %vm2120, %v2144, 0
        %v2169 = vsel %vm2148, %v1567, 0
        %2171 = vmatpush.bf16.msra.mxu0 0
        %2172 = vmatpush.bf16.msra.mxu0 0
        %2173 = vmatpush.bf16.msra.mxu0 0
        %2174 = vmatpush.bf16.msra.mxu0 0
        %2175 = vmatpush.bf16.msra.mxu0 0
        %2176 = vmatpush.bf16.msra.mxu0 0
        %2177 = vmatpush.bf16.msra.mxu0 0
        %2178 = vmatpush.bf16.msra.mxu0 %v2169
        %2179 = vmatmul.bf16.gmra.mxu0 %v2166
        %v2180 = vpop.f32.mrf.mxu0
        %v2181 = vadd.f32 0.0, %v2180
        %v2182 = vpop.f32.mrf.mxu0
        %2183 = vdwg.mxu0
        %v2184 = vpack.c.bf16 %v2162, %v2162
        %v2185 = vpack.c.bf16 %v2181, %v2181
        %v2186 = vld [vmem:[%s4] sm:$0xff]
        %v2187 = vld [vmem:[%s4 + $0x8] sm:$0xff]
        %v2188 = vld [vmem:[%s4 + $0x10] sm:$0xff]
        %v2189 = vld [vmem:[%s4 + $0x18] sm:$0xff]
        %v2190 = vld [vmem:[%s4 + $0x20] sm:$0xff]
        %v2191 = vld [vmem:[%s4 + $0x28] sm:$0xff]
        %v2192 = vld [vmem:[%s4 + $0x30] sm:$0xff]
        %v2193 = vld [vmem:[%s4 + $0x38] sm:$0xff]
        %v2194 = vld [vmem:[%s4 + $0x40] sm:$0xff]
        %v2195 = vld [vmem:[%s4 + $0x48] sm:$0xff]
        %v2196 = vld [vmem:[%s4 + $0x50] sm:$0xff]
        %v2197 = vld [vmem:[%s4 + $0x58] sm:$0xff]
        %v2198 = vld [vmem:[%s4 + $0x60] sm:$0xff]
        %v2199 = vld [vmem:[%s4 + $0x68] sm:$0xff]
        %v2200 = vld [vmem:[%s4 + $0x70] sm:$0xff]
        %v2201 = vld [vmem:[%s4 + $0x78] sm:$0xff]
        %v2202 = vld [vmem:[%s4 + $0x80] sm:$0xff]
        %v2203 = vld [vmem:[%s4 + $0x88] sm:$0xff]
        %v2204 = vld [vmem:[%s4 + $0x90] sm:$0xff]
        %v2205 = vld [vmem:[%s4 + $0x98] sm:$0xff]
        %v2206 = vld [vmem:[%s4 + $0xa0] sm:$0xff]
        %v2207 = vld [vmem:[%s4 + $0xa8] sm:$0xff]
        %v2208 = vld [vmem:[%s4 + $0xb0] sm:$0xff]
        %v2209 = vld [vmem:[%s4 + $0xb8] sm:$0xff]
        %v2210 = vld [vmem:[%s4 + $0xc0] sm:$0xff]
        %v2211 = vld [vmem:[%s4 + $0xc8] sm:$0xff]
        %v2212 = vld [vmem:[%s4 + $0xd0] sm:$0xff]
        %v2213 = vld [vmem:[%s4 + $0xd8] sm:$0xff]
        %v2214 = vld [vmem:[%s4 + $0xe0] sm:$0xff]
        %v2215 = vld [vmem:[%s4 + $0xe8] sm:$0xff]
        %v2216 = vld [vmem:[%s4 + $0xf0] sm:$0xff]
        %v2217 = vld [vmem:[%s4 + $0xf8] sm:$0xff]
        %v2218 = vld [vmem:[%s5] sm:$0x3]
        %v2220 = vperm.slane %v2218, 0
        %v2221 = vperm.slane %v2218, 1
        %v2256 = vunpack.c.l.b16 %v2186
        %v2257 = vunpack.c.h.b16 %v2186
        %v2258 = vunpack.c.l.b16 %v2187
        %v2259 = vunpack.c.h.b16 %v2187
        %v2260 = vunpack.c.l.b16 %v2188
        %v2261 = vunpack.c.h.b16 %v2188
        %v2262 = vunpack.c.l.b16 %v2189
        %v2263 = vunpack.c.h.b16 %v2189
        %v2264 = vunpack.c.l.b16 %v2190
        %v2265 = vunpack.c.h.b16 %v2190
        %v2266 = vunpack.c.l.b16 %v2191
        %v2267 = vunpack.c.h.b16 %v2191
        %v2268 = vunpack.c.l.b16 %v2192
        %v2269 = vunpack.c.h.b16 %v2192
        %v2270 = vunpack.c.l.b16 %v2193
        %v2271 = vunpack.c.h.b16 %v2193
        %v2272 = vunpack.c.l.b16 %v2194
        %v2273 = vunpack.c.h.b16 %v2194
        %v2274 = vunpack.c.l.b16 %v2195
        %v2275 = vunpack.c.h.b16 %v2195
        %v2276 = vunpack.c.l.b16 %v2196
        %v2277 = vunpack.c.h.b16 %v2196
        %v2278 = vunpack.c.l.b16 %v2197
        %v2279 = vunpack.c.h.b16 %v2197
        %v2280 = vunpack.c.l.b16 %v2198
        %v2281 = vunpack.c.h.b16 %v2198
        %v2282 = vunpack.c.l.b16 %v2199
        %v2283 = vunpack.c.h.b16 %v2199
        %v2284 = vunpack.c.l.b16 %v2200
        %v2285 = vunpack.c.h.b16 %v2200
        %v2286 = vunpack.c.l.b16 %v2201
        %v2287 = vunpack.c.h.b16 %v2201
        %v2288 = vunpack.c.l.b16 %v2202
        %v2289 = vunpack.c.h.b16 %v2202
        %v2290 = vunpack.c.l.b16 %v2203
        %v2291 = vunpack.c.h.b16 %v2203
        %v2292 = vunpack.c.l.b16 %v2204
        %v2293 = vunpack.c.h.b16 %v2204
        %v2294 = vunpack.c.l.b16 %v2205
        %v2295 = vunpack.c.h.b16 %v2205
        %v2296 = vunpack.c.l.b16 %v2206
        %v2297 = vunpack.c.h.b16 %v2206
        %v2298 = vunpack.c.l.b16 %v2207
        %v2299 = vunpack.c.h.b16 %v2207
        %v2300 = vunpack.c.l.b16 %v2208
        %v2301 = vunpack.c.h.b16 %v2208
        %v2302 = vunpack.c.l.b16 %v2209
        %v2303 = vunpack.c.h.b16 %v2209
        %v2304 = vunpack.c.l.b16 %v2210
        %v2305 = vunpack.c.h.b16 %v2210
        %v2306 = vunpack.c.l.b16 %v2211
        %v2307 = vunpack.c.h.b16 %v2211
        %v2308 = vunpack.c.l.b16 %v2212
        %v2309 = vunpack.c.h.b16 %v2212
        %v2310 = vunpack.c.l.b16 %v2213
        %v2311 = vunpack.c.h.b16 %v2213
        %v2312 = vunpack.c.l.b16 %v2214
        %v2313 = vunpack.c.h.b16 %v2214
        %v2314 = vunpack.c.l.b16 %v2215
        %v2315 = vunpack.c.h.b16 %v2215
        %v2316 = vunpack.c.l.b16 %v2216
        %v2317 = vunpack.c.h.b16 %v2216
        %v2318 = vunpack.c.l.b16 %v2217
        %v2319 = vunpack.c.h.b16 %v2217
        %v2320 = vpack.c.b16 %v2258, %v2256
        %v2321 = vpack.c.b16 %v2259, %v2257
        %v2322 = vpack.c.b16 %v2262, %v2260
        %v2323 = vpack.c.b16 %v2263, %v2261
        %v2324 = vpack.c.b16 %v2266, %v2264
        %v2325 = vpack.c.b16 %v2267, %v2265
        %v2326 = vpack.c.b16 %v2270, %v2268
        %v2327 = vpack.c.b16 %v2271, %v2269
        %v2328 = vpack.c.b16 %v2274, %v2272
        %v2329 = vpack.c.b16 %v2275, %v2273
        %v2330 = vpack.c.b16 %v2278, %v2276
        %v2331 = vpack.c.b16 %v2279, %v2277
        %v2332 = vpack.c.b16 %v2282, %v2280
        %v2333 = vpack.c.b16 %v2283, %v2281
        %v2334 = vpack.c.b16 %v2286, %v2284
        %v2335 = vpack.c.b16 %v2287, %v2285
        %v2336 = vpack.c.b16 %v2290, %v2288
        %v2337 = vpack.c.b16 %v2291, %v2289
        %v2338 = vpack.c.b16 %v2294, %v2292
        %v2339 = vpack.c.b16 %v2295, %v2293
        %v2340 = vpack.c.b16 %v2298, %v2296
        %v2341 = vpack.c.b16 %v2299, %v2297
        %v2342 = vpack.c.b16 %v2302, %v2300
        %v2343 = vpack.c.b16 %v2303, %v2301
        %v2344 = vpack.c.b16 %v2306, %v2304
        %v2345 = vpack.c.b16 %v2307, %v2305
        %v2346 = vpack.c.b16 %v2310, %v2308
        %v2347 = vpack.c.b16 %v2311, %v2309
        %v2348 = vpack.c.b16 %v2314, %v2312
        %v2349 = vpack.c.b16 %v2315, %v2313
        %v2350 = vpack.c.b16 %v2318, %v2316
        %v2351 = vpack.c.b16 %v2319, %v2317
        %2384 = vmatpush.bf16.msra.mxu0 %v2334
        %2385 = vmatpush.bf16.msra.mxu0 %v2332
        %2386 = vmatpush.bf16.msra.mxu0 %v2330
        %2387 = vmatpush.bf16.msra.mxu0 %v2328
        %2388 = vmatpush.bf16.msra.mxu0 %v2326
        %2389 = vmatpush.bf16.msra.mxu0 %v2324
        %2390 = vmatpush.bf16.msra.mxu0 %v2322
        %2391 = vmatpush.bf16.msra.mxu0 %v2320
        %2392 = vmatmul.bf16.gmra.mxu0 %v2184
        %v2393 = vpop.f32.mrf.mxu0
        %v2394 = vadd.f32 %v2220, %v2393
        %v2395 = vpop.f32.mrf.mxu0
        %2396 = vdwg.mxu0
        %2397 = vmatpush.bf16.msra.mxu0 %v2350
        %2398 = vmatpush.bf16.msra.mxu0 %v2348
        %2399 = vmatpush.bf16.msra.mxu0 %v2346
        %2400 = vmatpush.bf16.msra.mxu0 %v2344
        %2401 = vmatpush.bf16.msra.mxu0 %v2342
        %2402 = vmatpush.bf16.msra.mxu0 %v2340
        %2403 = vmatpush.bf16.msra.mxu0 %v2338
        %2404 = vmatpush.bf16.msra.mxu0 %v2336
        %2405 = vmatmul.bf16.gmra.mxu0 %v2185
        %v2406 = vpop.f32.mrf.mxu0
        %v2407 = vadd.f32 %v2394, %v2406
        %v2408 = vpop.f32.mrf.mxu0
        %2409 = vdwg.mxu0
        %2410 = vmatpush.bf16.msra.mxu0 %v2335
        %2411 = vmatpush.bf16.msra.mxu0 %v2333
        %2412 = vmatpush.bf16.msra.mxu0 %v2331
        %2413 = vmatpush.bf16.msra.mxu0 %v2329
        %2414 = vmatpush.bf16.msra.mxu0 %v2327
        %2415 = vmatpush.bf16.msra.mxu0 %v2325
        %2416 = vmatpush.bf16.msra.mxu0 %v2323
        %2417 = vmatpush.bf16.msra.mxu0 %v2321
        %2418 = vmatmul.bf16.gmra.mxu0 %v2184
        %v2419 = vpop.f32.mrf.mxu0
        %v2420 = vadd.f32 %v2221, %v2419
        %v2421 = vpop.f32.mrf.mxu0
        %2422 = vdwg.mxu0
        %2423 = vmatpush.bf16.msra.mxu0 %v2351
        %2424 = vmatpush.bf16.msra.mxu0 %v2349
        %2425 = vmatpush.bf16.msra.mxu0 %v2347
        %2426 = vmatpush.bf16.msra.mxu0 %v2345
        %2427 = vmatpush.bf16.msra.mxu0 %v2343
        %2428 = vmatpush.bf16.msra.mxu0 %v2341
        %2429 = vmatpush.bf16.msra.mxu0 %v2339
        %2430 = vmatpush.bf16.msra.mxu0 %v2337
        %2431 = vmatmul.bf16.gmra.mxu0 %v2185
        %v2432 = vpop.f32.mrf.mxu0
        %v2433 = vadd.f32 %v2420, %v2432
        %v2434 = vpop.f32.mrf.mxu0
        %2435 = vdwg.mxu0
        %v2436 = vunpack.c.l.bf16 %v806
        %v2437 = vunpack.c.h.bf16 %v806
        %v2438 = vadd.f32 %v2407, %v2436
        %v2439 = vadd.f32 %v2433, %v2437
        %v2440 = vadd.f32 %v2438, %v2439
        %2441 = vadd.xlane.f32.xlu0 %v2440
        %v2442 = vpop.xlane.xlu0 %2441
        %v2443 = vrcp.pop 256.0
        %v2444 = vmul.f32 256.0, %v2443
        %v2445 = vsub.f32 1.0, %v2444
        %v2446 = vmul.f32 %v2443, %v2445
        %v2447 = vadd.f32 %v2443, %v2446
        %vm2448 = vweird.f32 %v2443
        %v2449 = vsel %vm2448, %v2443, %v2447
        %v2450 = vmul.f32 %v2442, %v2449
        %v2451 = vsub.f32 %v2438, %v2450
        %v2452 = vsub.f32 %v2439, %v2450
        %v2453 = vmul.f32 %v2451, %v2451
        %v2454 = vmul.f32 %v2452, %v2452
        %v2455 = vadd.f32 %v2453, %v2454
        %2456 = vadd.xlane.f32.xlu0 %v2455
        %v2457 = vpop.xlane.xlu0 %2456
        %v2458 = vmul.f32 %v2457, %v2449
        %v2459 = vld [vmem:[%s16] sm:$0x3]
        %v2460 = vadd.f32 %v2458, 1e-05
        %v2461 = vrsqrt.pop %v2460
        %v2462 = vmul.f32 %v2461, %v2460
        %v2463 = vmul.f32 %v2462, %v2461
        %v2464 = vmul.f32 0.5, %v2463
        %v2465 = vsub.f32 1.5, %v2464
        %v2466 = vmul.f32 %v2461, %v2465
        %vm2467 = vweird.f32 %v2460
        %vm2468 = vweird.f32 %v2461
        %vm2469 = vmor %vm2467, %vm2468
        %v2470 = vsel %vm2469, %v2461, %v2466
        %v2471 = vmul.f32 %v2451, %v2470
        %v2472 = vmul.f32 %v2452, %v2470
        %v2474 = vperm.slane %v2459, 0
        %v2475 = vperm.slane %v2459, 1
        %v2478 = vmul.f32 %v2474, %v2471
        %v2479 = vmul.f32 %v2475, %v2472
        %v2480 = vld [vmem:[%s17] sm:$0x3]
        %v2482 = vperm.slane %v2480, 0
        %v2483 = vperm.slane %v2480, 1
        %v2486 = vadd.f32 %v2478, %v2482
        %v2487 = vadd.f32 %v2479, %v2483
        %v2488 = vpack.c.bf16 %v2487, %v2486
        %v2489 = vld [vmem:[#allocation6] sm:$0xff]
        %v2490 = vld [vmem:[#allocation6 + $0x8] sm:$0xff]
        %v2491 = vld [vmem:[#allocation6 + $0x10] sm:$0xff]
        %v2492 = vld [vmem:[#allocation6 + $0x18] sm:$0xff]
        %v2493 = vld [vmem:[#allocation6 + $0x20] sm:$0xff]
        %v2494 = vld [vmem:[#allocation6 + $0x28] sm:$0xff]
        %v2495 = vld [vmem:[#allocation6 + $0x30] sm:$0xff]
        %v2496 = vld [vmem:[#allocation6 + $0x38] sm:$0xff]
        %v2497 = vld [vmem:[#allocation6 + $0x40] sm:$0xff]
        %v2498 = vld [vmem:[#allocation6 + $0x48] sm:$0xff]
        %v2499 = vld [vmem:[#allocation6 + $0x50] sm:$0xff]
        %v2500 = vld [vmem:[#allocation6 + $0x58] sm:$0xff]
        %v2501 = vld [vmem:[#allocation6 + $0x60] sm:$0xff]
        %v2502 = vld [vmem:[#allocation6 + $0x68] sm:$0xff]
        %v2503 = vld [vmem:[#allocation6 + $0x70] sm:$0xff]
        %v2504 = vld [vmem:[#allocation6 + $0x78] sm:$0xff]
        %v2505 = vld [vmem:[#allocation6 + $0x80] sm:$0xff]
        %v2506 = vld [vmem:[#allocation6 + $0x88] sm:$0xff]
        %v2507 = vld [vmem:[#allocation6 + $0x90] sm:$0xff]
        %v2508 = vld [vmem:[#allocation6 + $0x98] sm:$0xff]
        %v2509 = vld [vmem:[#allocation6 + $0xa0] sm:$0xff]
        %v2510 = vld [vmem:[#allocation6 + $0xa8] sm:$0xff]
        %v2511 = vld [vmem:[#allocation6 + $0xb0] sm:$0xff]
        %v2512 = vld [vmem:[#allocation6 + $0xb8] sm:$0xff]
        %v2513 = vld [vmem:[#allocation6 + $0xc0] sm:$0xff]
        %v2514 = vld [vmem:[#allocation6 + $0xc8] sm:$0xff]
        %v2515 = vld [vmem:[#allocation6 + $0xd0] sm:$0xff]
        %v2516 = vld [vmem:[#allocation6 + $0xd8] sm:$0xff]
        %v2517 = vld [vmem:[#allocation6 + $0xe0] sm:$0xff]
        %v2518 = vld [vmem:[#allocation6 + $0xe8] sm:$0xff]
        %v2519 = vld [vmem:[#allocation6 + $0xf0] sm:$0xff]
        %v2520 = vld [vmem:[#allocation6 + $0xf8] sm:$0xff]
        %v2521 = vld [vmem:[%s9] sm:$0x3]
        %v2523 = vperm.slane %v2521, 0
        %v2524 = vperm.slane %v2521, 1
        %v2528 = vunpack.c.l.b16 %v2488
        %v2529 = vunpack.c.h.b16 %v2488
        %v2530 = vpack.c.b16 %v2528, %v2528
        %v2531 = vpack.c.b16 %v2529, %v2529
        %v2566 = vunpack.c.l.b16 %v2489
        %v2567 = vunpack.c.h.b16 %v2489
        %v2568 = vunpack.c.l.b16 %v2490
        %v2569 = vunpack.c.h.b16 %v2490
        %v2570 = vunpack.c.l.b16 %v2491
        %v2571 = vunpack.c.h.b16 %v2491
        %v2572 = vunpack.c.l.b16 %v2492
        %v2573 = vunpack.c.h.b16 %v2492
        %v2574 = vunpack.c.l.b16 %v2493
        %v2575 = vunpack.c.h.b16 %v2493
        %v2576 = vunpack.c.l.b16 %v2494
        %v2577 = vunpack.c.h.b16 %v2494
        %v2578 = vunpack.c.l.b16 %v2495
        %v2579 = vunpack.c.h.b16 %v2495
        %v2580 = vunpack.c.l.b16 %v2496
        %v2581 = vunpack.c.h.b16 %v2496
        %v2582 = vunpack.c.l.b16 %v2497
        %v2583 = vunpack.c.h.b16 %v2497
        %v2584 = vunpack.c.l.b16 %v2498
        %v2585 = vunpack.c.h.b16 %v2498
        %v2586 = vunpack.c.l.b16 %v2499
        %v2587 = vunpack.c.h.b16 %v2499
        %v2588 = vunpack.c.l.b16 %v2500
        %v2589 = vunpack.c.h.b16 %v2500
        %v2590 = vunpack.c.l.b16 %v2501
        %v2591 = vunpack.c.h.b16 %v2501
        %v2592 = vunpack.c.l.b16 %v2502
        %v2593 = vunpack.c.h.b16 %v2502
        %v2594 = vunpack.c.l.b16 %v2503
        %v2595 = vunpack.c.h.b16 %v2503
        %v2596 = vunpack.c.l.b16 %v2504
        %v2597 = vunpack.c.h.b16 %v2504
        %v2598 = vunpack.c.l.b16 %v2505
        %v2599 = vunpack.c.h.b16 %v2505
        %v2600 = vunpack.c.l.b16 %v2506
        %v2601 = vunpack.c.h.b16 %v2506
        %v2602 = vunpack.c.l.b16 %v2507
        %v2603 = vunpack.c.h.b16 %v2507
        %v2604 = vunpack.c.l.b16 %v2508
        %v2605 = vunpack.c.h.b16 %v2508
        %v2606 = vunpack.c.l.b16 %v2509
        %v2607 = vunpack.c.h.b16 %v2509
        %v2608 = vunpack.c.l.b16 %v2510
        %v2609 = vunpack.c.h.b16 %v2510
        %v2610 = vunpack.c.l.b16 %v2511
        %v2611 = vunpack.c.h.b16 %v2511
        %v2612 = vunpack.c.l.b16 %v2512
        %v2613 = vunpack.c.h.b16 %v2512
        %v2614 = vunpack.c.l.b16 %v2513
        %v2615 = vunpack.c.h.b16 %v2513
        %v2616 = vunpack.c.l.b16 %v2514
        %v2617 = vunpack.c.h.b16 %v2514
        %v2618 = vunpack.c.l.b16 %v2515
        %v2619 = vunpack.c.h.b16 %v2515
        %v2620 = vunpack.c.l.b16 %v2516
        %v2621 = vunpack.c.h.b16 %v2516
        %v2622 = vunpack.c.l.b16 %v2517
        %v2623 = vunpack.c.h.b16 %v2517
        %v2624 = vunpack.c.l.b16 %v2518
        %v2625 = vunpack.c.h.b16 %v2518
        %v2626 = vunpack.c.l.b16 %v2519
        %v2627 = vunpack.c.h.b16 %v2519
        %v2628 = vunpack.c.l.b16 %v2520
        %v2629 = vunpack.c.h.b16 %v2520
        %v2630 = vpack.c.b16 %v2568, %v2566
        %v2631 = vpack.c.b16 %v2569, %v2567
        %v2632 = vpack.c.b16 %v2572, %v2570
        %v2633 = vpack.c.b16 %v2573, %v2571
        %v2634 = vpack.c.b16 %v2576, %v2574
        %v2635 = vpack.c.b16 %v2577, %v2575
        %v2636 = vpack.c.b16 %v2580, %v2578
        %v2637 = vpack.c.b16 %v2581, %v2579
        %v2638 = vpack.c.b16 %v2584, %v2582
        %v2639 = vpack.c.b16 %v2585, %v2583
        %v2640 = vpack.c.b16 %v2588, %v2586
        %v2641 = vpack.c.b16 %v2589, %v2587
        %v2642 = vpack.c.b16 %v2592, %v2590
        %v2643 = vpack.c.b16 %v2593, %v2591
        %v2644 = vpack.c.b16 %v2596, %v2594
        %v2645 = vpack.c.b16 %v2597, %v2595
        %v2646 = vpack.c.b16 %v2600, %v2598
        %v2647 = vpack.c.b16 %v2601, %v2599
        %v2648 = vpack.c.b16 %v2604, %v2602
        %v2649 = vpack.c.b16 %v2605, %v2603
        %v2650 = vpack.c.b16 %v2608, %v2606
        %v2651 = vpack.c.b16 %v2609, %v2607
        %v2652 = vpack.c.b16 %v2612, %v2610
        %v2653 = vpack.c.b16 %v2613, %v2611
        %v2654 = vpack.c.b16 %v2616, %v2614
        %v2655 = vpack.c.b16 %v2617, %v2615
        %v2656 = vpack.c.b16 %v2620, %v2618
        %v2657 = vpack.c.b16 %v2621, %v2619
        %v2658 = vpack.c.b16 %v2624, %v2622
        %v2659 = vpack.c.b16 %v2625, %v2623
        %v2660 = vpack.c.b16 %v2628, %v2626
        %v2661 = vpack.c.b16 %v2629, %v2627
        %2694 = vmatpush.bf16.msra.mxu0 %v2644
        %2695 = vmatpush.bf16.msra.mxu0 %v2642
        %2696 = vmatpush.bf16.msra.mxu0 %v2640
        %2697 = vmatpush.bf16.msra.mxu0 %v2638
        %2698 = vmatpush.bf16.msra.mxu0 %v2636
        %2699 = vmatpush.bf16.msra.mxu0 %v2634
        %2700 = vmatpush.bf16.msra.mxu0 %v2632
        %2701 = vmatpush.bf16.msra.mxu0 %v2630
        %2702 = vmatmul.bf16.gmra.mxu0 %v2530
        %v2703 = vpop.f32.mrf.mxu0
        %v2704 = vadd.f32 %v2523, %v2703
        %v2705 = vpop.f32.mrf.mxu0
        %2706 = vdwg.mxu0
        %2707 = vmatpush.bf16.msra.mxu0 %v2660
        %2708 = vmatpush.bf16.msra.mxu0 %v2658
        %2709 = vmatpush.bf16.msra.mxu0 %v2656
        %2710 = vmatpush.bf16.msra.mxu0 %v2654
        %2711 = vmatpush.bf16.msra.mxu0 %v2652
        %2712 = vmatpush.bf16.msra.mxu0 %v2650
        %2713 = vmatpush.bf16.msra.mxu0 %v2648
        %2714 = vmatpush.bf16.msra.mxu0 %v2646
        %2715 = vmatmul.bf16.gmra.mxu0 %v2531
        %v2716 = vpop.f32.mrf.mxu0
        %v2717 = vadd.f32 %v2704, %v2716
        %v2718 = vpop.f32.mrf.mxu0
        %2719 = vdwg.mxu0
        %2720 = vmatpush.bf16.msra.mxu0 %v2645
        %2721 = vmatpush.bf16.msra.mxu0 %v2643
        %2722 = vmatpush.bf16.msra.mxu0 %v2641
        %2723 = vmatpush.bf16.msra.mxu0 %v2639
        %2724 = vmatpush.bf16.msra.mxu0 %v2637
        %2725 = vmatpush.bf16.msra.mxu0 %v2635
        %2726 = vmatpush.bf16.msra.mxu0 %v2633
        %2727 = vmatpush.bf16.msra.mxu0 %v2631
        %2728 = vmatmul.bf16.gmra.mxu0 %v2530
        %v2729 = vpop.f32.mrf.mxu0
        %v2730 = vadd.f32 %v2524, %v2729
        %v2731 = vpop.f32.mrf.mxu0
        %2732 = vdwg.mxu0
        %2733 = vmatpush.bf16.msra.mxu0 %v2661
        %2734 = vmatpush.bf16.msra.mxu0 %v2659
        %2735 = vmatpush.bf16.msra.mxu0 %v2657
        %2736 = vmatpush.bf16.msra.mxu0 %v2655
        %2737 = vmatpush.bf16.msra.mxu0 %v2653
        %2738 = vmatpush.bf16.msra.mxu0 %v2651
        %2739 = vmatpush.bf16.msra.mxu0 %v2649
        %2740 = vmatpush.bf16.msra.mxu0 %v2647
        %2741 = vmatmul.bf16.gmra.mxu0 %v2531
        %v2742 = vpop.f32.mrf.mxu0
        %v2743 = vadd.f32 %v2730, %v2742
        %v2744 = vpop.f32.mrf.mxu0
        %2745 = vdwg.mxu0
        %v2746 = vpack.c.bf16 %v2743, %v2717
        %v2748 = vrot.slane %v2746, 4
        %2750 = vmatpush.bf16.xpose.msra.mxu0 0
        %2751 = vmatpush.bf16.xpose.msra.mxu0 0
        %2752 = vmatpush.bf16.xpose.msra.mxu0 0
        %2753 = vmatpush.bf16.xpose.msra.mxu0 0
        %2754 = vmatpush.bf16.xpose.msra.mxu0 0
        %2755 = vmatpush.bf16.xpose.msra.mxu0 0
        %2756 = vmatpush.bf16.xpose.msra.mxu0 0
        %2757 = vmatpush.bf16.xpose.msra.mxu0 %v2073
        %2758 = vmatmul.bf16.gmra.mxu0 %v2746
        %v2759 = vpop.f32.mrf.mxu0
        %v2760 = vadd.f32 0.0, %v2759
        %v2761 = vpop.f32.mrf.mxu0
        %2762 = vdwg.mxu0
        %2763 = vmatpush.bf16.xpose.msra.mxu0 0
        %2764 = vmatpush.bf16.xpose.msra.mxu0 0
        %2765 = vmatpush.bf16.xpose.msra.mxu0 0
        %2766 = vmatpush.bf16.xpose.msra.mxu0 0
        %2767 = vmatpush.bf16.xpose.msra.mxu0 0
        %2768 = vmatpush.bf16.xpose.msra.mxu0 0
        %2769 = vmatpush.bf16.xpose.msra.mxu0 0
        %2770 = vmatpush.bf16.xpose.msra.mxu0 %v2076
        %2771 = vmatmul.bf16.gmra.mxu0 %v2748
        %v2772 = vpop.f32.mrf.mxu0
        %v2773 = vadd.f32 0.0, %v2772
        %v2774 = vpop.f32.mrf.mxu0
        %2775 = vdwg.mxu0
        %v2776 = vmul.f32 %v2760, 0.088388346
        %v2777 = vmul.f32 %v2773, 0.088388346
        %v2778 = vsel %vm2120, %v2776, -inf
        %2779 = vmax.xlane.f32.xlu0 %v2778
        %v2780 = vpop.xlane.xlu0 %2779
        %v2781 = vsel %vm2120, %v2777, -inf
        %2782 = vmax.xlane.f32.xlu0 %v2781
        %v2783 = vpop.xlane.xlu0 %2782
        %v2784 = vsub.f32 %v2776, %v2780
        %v2785 = vsub.f32 %v2777, %v2783
        %v2786 = vmul.f32 %v2784, 1.442695
        %v2787 = vpow.pop %v2786
        %v2788 = vmul.f32 %v2785, 1.442695
        %v2789 = vpow.pop %v2788
        %v2790 = vsel %vm2120, %v2787, 0.0
        %2791 = vadd.xlane.f32.xlu0 %v2790
        %v2792 = vpop.xlane.xlu0 %2791
        %v2793 = vsel %vm2120, %v2789, 0.0
        %2794 = vadd.xlane.f32.xlu0 %v2793
        %v2795 = vpop.xlane.xlu0 %2794
        %v2796 = vrcp.pop %v2792
        %v2797 = vrcp.pop %v2795
        %v2798 = vmul.f32 %v2787, %v2796
        %v2799 = vmul.f32 %v2789, %v2797
        %v2800 = vpack.c.bf16 %v2798, %v2798
        %v2801 = vpack.c.bf16 %v2799, %v2799
        %v2803 = vsel %vm2120, %v2800, 0
        %v2806 = vsel %vm2148, %v2074, 0
        %2808 = vmatpush.bf16.msra.mxu0 0
        %2809 = vmatpush.bf16.msra.mxu0 0
        %2810 = vmatpush.bf16.msra.mxu0 0
        %2811 = vmatpush.bf16.msra.mxu0 0
        %2812 = vmatpush.bf16.msra.mxu0 0
        %2813 = vmatpush.bf16.msra.mxu0 0
        %2814 = vmatpush.bf16.msra.mxu0 0
        %2815 = vmatpush.bf16.msra.mxu0 %v2806
        %2816 = vmatmul.bf16.gmra.mxu0 %v2803
        %v2817 = vpop.f32.mrf.mxu0
        %v2818 = vadd.f32 0.0, %v2817
        %v2819 = vpop.f32.mrf.mxu0
        %2820 = vdwg.mxu0
        %v2822 = vsel %vm2120, %v2801, 0
        %v2825 = vsel %vm2148, %v2079, 0
        %2827 = vmatpush.bf16.msra.mxu0 0
        %2828 = vmatpush.bf16.msra.mxu0 0
        %2829 = vmatpush.bf16.msra.mxu0 0
        %2830 = vmatpush.bf16.msra.mxu0 0
        %2831 = vmatpush.bf16.msra.mxu0 0
        %2832 = vmatpush.bf16.msra.mxu0 0
        %2833 = vmatpush.bf16.msra.mxu0 0
        %2834 = vmatpush.bf16.msra.mxu0 %v2825
        %2835 = vmatmul.bf16.gmra.mxu0 %v2822
        %v2836 = vpop.f32.mrf.mxu0
        %v2837 = vadd.f32 0.0, %v2836
        %v2838 = vpop.f32.mrf.mxu0
        %2839 = vdwg.mxu0
        %v2840 = vpack.c.bf16 %v2818, %v2818
        %v2841 = vpack.c.bf16 %v2837, %v2837
        %v2842 = vld [vmem:[#allocation7] sm:$0xff]
        %v2843 = vld [vmem:[#allocation7 + $0x8] sm:$0xff]
        %v2844 = vld [vmem:[#allocation7 + $0x10] sm:$0xff]
        %v2845 = vld [vmem:[#allocation7 + $0x18] sm:$0xff]
        %v2846 = vld [vmem:[#allocation7 + $0x20] sm:$0xff]
        %v2847 = vld [vmem:[#allocation7 + $0x28] sm:$0xff]
        %v2848 = vld [vmem:[#allocation7 + $0x30] sm:$0xff]
        %v2849 = vld [vmem:[#allocation7 + $0x38] sm:$0xff]
        %v2850 = vld [vmem:[#allocation7 + $0x40] sm:$0xff]
        %v2851 = vld [vmem:[#allocation7 + $0x48] sm:$0xff]
        %v2852 = vld [vmem:[#allocation7 + $0x50] sm:$0xff]
        %v2853 = vld [vmem:[#allocation7 + $0x58] sm:$0xff]
        %v2854 = vld [vmem:[#allocation7 + $0x60] sm:$0xff]
        %v2855 = vld [vmem:[#allocation7 + $0x68] sm:$0xff]
        %v2856 = vld [vmem:[#allocation7 + $0x70] sm:$0xff]
        %v2857 = vld [vmem:[#allocation7 + $0x78] sm:$0xff]
        %v2858 = vld [vmem:[#allocation7 + $0x80] sm:$0xff]
        %v2859 = vld [vmem:[#allocation7 + $0x88] sm:$0xff]
        %v2860 = vld [vmem:[#allocation7 + $0x90] sm:$0xff]
        %v2861 = vld [vmem:[#allocation7 + $0x98] sm:$0xff]
        %v2862 = vld [vmem:[#allocation7 + $0xa0] sm:$0xff]
        %v2863 = vld [vmem:[#allocation7 + $0xa8] sm:$0xff]
        %v2864 = vld [vmem:[#allocation7 + $0xb0] sm:$0xff]
        %v2865 = vld [vmem:[#allocation7 + $0xb8] sm:$0xff]
        %v2866 = vld [vmem:[#allocation7 + $0xc0] sm:$0xff]
        %v2867 = vld [vmem:[#allocation7 + $0xc8] sm:$0xff]
        %v2868 = vld [vmem:[#allocation7 + $0xd0] sm:$0xff]
        %v2869 = vld [vmem:[#allocation7 + $0xd8] sm:$0xff]
        %v2870 = vld [vmem:[#allocation7 + $0xe0] sm:$0xff]
        %v2871 = vld [vmem:[#allocation7 + $0xe8] sm:$0xff]
        %v2872 = vld [vmem:[#allocation7 + $0xf0] sm:$0xff]
        %v2873 = vld [vmem:[#allocation7 + $0xf8] sm:$0xff]
        %v2874 = vld [vmem:[%s11] sm:$0x3]
        %v2876 = vperm.slane %v2874, 0
        %v2877 = vperm.slane %v2874, 1
        %v2912 = vunpack.c.l.b16 %v2842
        %v2913 = vunpack.c.h.b16 %v2842
        %v2914 = vunpack.c.l.b16 %v2843
        %v2915 = vunpack.c.h.b16 %v2843
        %v2916 = vunpack.c.l.b16 %v2844
        %v2917 = vunpack.c.h.b16 %v2844
        %v2918 = vunpack.c.l.b16 %v2845
        %v2919 = vunpack.c.h.b16 %v2845
        %v2920 = vunpack.c.l.b16 %v2846
        %v2921 = vunpack.c.h.b16 %v2846
        %v2922 = vunpack.c.l.b16 %v2847
        %v2923 = vunpack.c.h.b16 %v2847
        %v2924 = vunpack.c.l.b16 %v2848
        %v2925 = vunpack.c.h.b16 %v2848
        %v2926 = vunpack.c.l.b16 %v2849
        %v2927 = vunpack.c.h.b16 %v2849
        %v2928 = vunpack.c.l.b16 %v2850
        %v2929 = vunpack.c.h.b16 %v2850
        %v2930 = vunpack.c.l.b16 %v2851
        %v2931 = vunpack.c.h.b16 %v2851
        %v2932 = vunpack.c.l.b16 %v2852
        %v2933 = vunpack.c.h.b16 %v2852
        %v2934 = vunpack.c.l.b16 %v2853
        %v2935 = vunpack.c.h.b16 %v2853
        %v2936 = vunpack.c.l.b16 %v2854
        %v2937 = vunpack.c.h.b16 %v2854
        %v2938 = vunpack.c.l.b16 %v2855
        %v2939 = vunpack.c.h.b16 %v2855
        %v2940 = vunpack.c.l.b16 %v2856
        %v2941 = vunpack.c.h.b16 %v2856
        %v2942 = vunpack.c.l.b16 %v2857
        %v2943 = vunpack.c.h.b16 %v2857
        %v2944 = vunpack.c.l.b16 %v2858
        %v2945 = vunpack.c.h.b16 %v2858
        %v2946 = vunpack.c.l.b16 %v2859
        %v2947 = vunpack.c.h.b16 %v2859
        %v2948 = vunpack.c.l.b16 %v2860
        %v2949 = vunpack.c.h.b16 %v2860
        %v2950 = vunpack.c.l.b16 %v2861
        %v2951 = vunpack.c.h.b16 %v2861
        %v2952 = vunpack.c.l.b16 %v2862
        %v2953 = vunpack.c.h.b16 %v2862
        %v2954 = vunpack.c.l.b16 %v2863
        %v2955 = vunpack.c.h.b16 %v2863
        %v2956 = vunpack.c.l.b16 %v2864
        %v2957 = vunpack.c.h.b16 %v2864
        %v2958 = vunpack.c.l.b16 %v2865
        %v2959 = vunpack.c.h.b16 %v2865
        %v2960 = vunpack.c.l.b16 %v2866
        %v2961 = vunpack.c.h.b16 %v2866
        %v2962 = vunpack.c.l.b16 %v2867
        %v2963 = vunpack.c.h.b16 %v2867
        %v2964 = vunpack.c.l.b16 %v2868
        %v2965 = vunpack.c.h.b16 %v2868
        %v2966 = vunpack.c.l.b16 %v2869
        %v2967 = vunpack.c.h.b16 %v2869
        %v2968 = vunpack.c.l.b16 %v2870
        %v2969 = vunpack.c.h.b16 %v2870
        %v2970 = vunpack.c.l.b16 %v2871
        %v2971 = vunpack.c.h.b16 %v2871
        %v2972 = vunpack.c.l.b16 %v2872
        %v2973 = vunpack.c.h.b16 %v2872
        %v2974 = vunpack.c.l.b16 %v2873
        %v2975 = vunpack.c.h.b16 %v2873
        %v2976 = vpack.c.b16 %v2914, %v2912
        %v2977 = vpack.c.b16 %v2915, %v2913
        %v2978 = vpack.c.b16 %v2918, %v2916
        %v2979 = vpack.c.b16 %v2919, %v2917
        %v2980 = vpack.c.b16 %v2922, %v2920
        %v2981 = vpack.c.b16 %v2923, %v2921
        %v2982 = vpack.c.b16 %v2926, %v2924
        %v2983 = vpack.c.b16 %v2927, %v2925
        %v2984 = vpack.c.b16 %v2930, %v2928
        %v2985 = vpack.c.b16 %v2931, %v2929
        %v2986 = vpack.c.b16 %v2934, %v2932
        %v2987 = vpack.c.b16 %v2935, %v2933
        %v2988 = vpack.c.b16 %v2938, %v2936
        %v2989 = vpack.c.b16 %v2939, %v2937
        %v2990 = vpack.c.b16 %v2942, %v2940
        %v2991 = vpack.c.b16 %v2943, %v2941
        %v2992 = vpack.c.b16 %v2946, %v2944
        %v2993 = vpack.c.b16 %v2947, %v2945
        %v2994 = vpack.c.b16 %v2950, %v2948
        %v2995 = vpack.c.b16 %v2951, %v2949
        %v2996 = vpack.c.b16 %v2954, %v2952
        %v2997 = vpack.c.b16 %v2955, %v2953
        %v2998 = vpack.c.b16 %v2958, %v2956
        %v2999 = vpack.c.b16 %v2959, %v2957
        %v3000 = vpack.c.b16 %v2962, %v2960
        %v3001 = vpack.c.b16 %v2963, %v2961
        %v3002 = vpack.c.b16 %v2966, %v2964
        %v3003 = vpack.c.b16 %v2967, %v2965
        %v3004 = vpack.c.b16 %v2970, %v2968
        %v3005 = vpack.c.b16 %v2971, %v2969
        %v3006 = vpack.c.b16 %v2974, %v2972
        %v3007 = vpack.c.b16 %v2975, %v2973
        %3040 = vmatpush.bf16.msra.mxu0 %v2990
        %3041 = vmatpush.bf16.msra.mxu0 %v2988
        %3042 = vmatpush.bf16.msra.mxu0 %v2986
        %3043 = vmatpush.bf16.msra.mxu0 %v2984
        %3044 = vmatpush.bf16.msra.mxu0 %v2982
        %3045 = vmatpush.bf16.msra.mxu0 %v2980
        %3046 = vmatpush.bf16.msra.mxu0 %v2978
        %3047 = vmatpush.bf16.msra.mxu0 %v2976
        %3048 = vmatmul.bf16.gmra.mxu0 %v2840
        %v3049 = vpop.f32.mrf.mxu0
        %v3050 = vadd.f32 %v2876, %v3049
        %v3051 = vpop.f32.mrf.mxu0
        %3052 = vdwg.mxu0
        %3053 = vmatpush.bf16.msra.mxu0 %v3006
        %3054 = vmatpush.bf16.msra.mxu0 %v3004
        %3055 = vmatpush.bf16.msra.mxu0 %v3002
        %3056 = vmatpush.bf16.msra.mxu0 %v3000
        %3057 = vmatpush.bf16.msra.mxu0 %v2998
        %3058 = vmatpush.bf16.msra.mxu0 %v2996
        %3059 = vmatpush.bf16.msra.mxu0 %v2994
        %3060 = vmatpush.bf16.msra.mxu0 %v2992
        %3061 = vmatmul.bf16.gmra.mxu0 %v2841
        %v3062 = vpop.f32.mrf.mxu0
        %v3063 = vadd.f32 %v3050, %v3062
        %v3064 = vpop.f32.mrf.mxu0
        %3065 = vdwg.mxu0
        %3066 = vmatpush.bf16.msra.mxu0 %v2991
        %3067 = vmatpush.bf16.msra.mxu0 %v2989
        %3068 = vmatpush.bf16.msra.mxu0 %v2987
        %3069 = vmatpush.bf16.msra.mxu0 %v2985
        %3070 = vmatpush.bf16.msra.mxu0 %v2983
        %3071 = vmatpush.bf16.msra.mxu0 %v2981
        %3072 = vmatpush.bf16.msra.mxu0 %v2979
        %3073 = vmatpush.bf16.msra.mxu0 %v2977
        %3074 = vmatmul.bf16.gmra.mxu0 %v2840
        %v3075 = vpop.f32.mrf.mxu0
        %v3076 = vadd.f32 %v2877, %v3075
        %v3077 = vpop.f32.mrf.mxu0
        %3078 = vdwg.mxu0
        %3079 = vmatpush.bf16.msra.mxu0 %v3007
        %3080 = vmatpush.bf16.msra.mxu0 %v3005
        %3081 = vmatpush.bf16.msra.mxu0 %v3003
        %3082 = vmatpush.bf16.msra.mxu0 %v3001
        %3083 = vmatpush.bf16.msra.mxu0 %v2999
        %3084 = vmatpush.bf16.msra.mxu0 %v2997
        %3085 = vmatpush.bf16.msra.mxu0 %v2995
        %3086 = vmatpush.bf16.msra.mxu0 %v2993
        %3087 = vmatmul.bf16.gmra.mxu0 %v2841
        %v3088 = vpop.f32.mrf.mxu0
        %v3089 = vadd.f32 %v3076, %v3088
        %v3090 = vpop.f32.mrf.mxu0
        %3091 = vdwg.mxu0
        %v3092 = vunpack.c.l.bf16 %v2488
        %v3093 = vunpack.c.h.bf16 %v2488
        %v3094 = vadd.f32 %v3063, %v3092
        %v3095 = vadd.f32 %v3089, %v3093
        %v3096 = vadd.f32 %v3094, %v3095
        %3097 = vadd.xlane.f32.xlu0 %v3096
        %v3098 = vpop.xlane.xlu0 %3097
        %v3099 = vmul.f32 %v3098, %v2449
        %v3100 = vsub.f32 %v3094, %v3099
        %v3101 = vsub.f32 %v3095, %v3099
        %v3102 = vmul.f32 %v3100, %v3100
        %v3103 = vmul.f32 %v3101, %v3101
        %v3104 = vadd.f32 %v3102, %v3103
        %3105 = vadd.xlane.f32.xlu0 %v3104
        %v3106 = vpop.xlane.xlu0 %3105
        %v3107 = vmul.f32 %v3106, %v2449
        %v3108 = vld [vmem:[%s18] sm:$0x3]
        %v3109 = vadd.f32 %v3107, 1e-05
        %v3110 = vrsqrt.pop %v3109
        %v3111 = vmul.f32 %v3110, %v3109
        %v3112 = vmul.f32 %v3111, %v3110
        %v3113 = vmul.f32 0.5, %v3112
        %v3114 = vsub.f32 1.5, %v3113
        %v3115 = vmul.f32 %v3110, %v3114
        %vm3116 = vweird.f32 %v3109
        %vm3117 = vweird.f32 %v3110
        %vm3118 = vmor %vm3116, %vm3117
        %v3119 = vsel %vm3118, %v3110, %v3115
        %v3120 = vmul.f32 %v3100, %v3119
        %v3121 = vmul.f32 %v3101, %v3119
        %v3123 = vperm.slane %v3108, 0
        %v3124 = vperm.slane %v3108, 1
        %v3127 = vmul.f32 %v3123, %v3120
        %v3128 = vmul.f32 %v3124, %v3121
        %v3129 = vld [vmem:[%s19] sm:$0x3]
        %v3131 = vperm.slane %v3129, 0
        %v3132 = vperm.slane %v3129, 1
        %v3135 = vadd.f32 %v3127, %v3131
        %v3136 = vadd.f32 %v3128, %v3132
        %v3137 = vpack.c.bf16 %v3136, %v3135
        %v3138 = vld [vmem:[#allocation9] sm:$0xff]
        %v3139 = vld [vmem:[#allocation9 + $0x8] sm:$0xff]
        %v3140 = vld [vmem:[#allocation9 + $0x10] sm:$0xff]
        %v3141 = vld [vmem:[#allocation9 + $0x18] sm:$0xff]
        %v3142 = vld [vmem:[#allocation9 + $0x20] sm:$0xff]
        %v3143 = vld [vmem:[#allocation9 + $0x28] sm:$0xff]
        %v3144 = vld [vmem:[#allocation9 + $0x30] sm:$0xff]
        %v3145 = vld [vmem:[#allocation9 + $0x38] sm:$0xff]
        %v3146 = vld [vmem:[#allocation9 + $0x40] sm:$0xff]
        %v3147 = vld [vmem:[#allocation9 + $0x48] sm:$0xff]
        %v3148 = vld [vmem:[#allocation9 + $0x50] sm:$0xff]
        %v3149 = vld [vmem:[#allocation9 + $0x58] sm:$0xff]
        %v3150 = vld [vmem:[#allocation9 + $0x60] sm:$0xff]
        %v3151 = vld [vmem:[#allocation9 + $0x68] sm:$0xff]
        %v3152 = vld [vmem:[#allocation9 + $0x70] sm:$0xff]
        %v3153 = vld [vmem:[#allocation9 + $0x78] sm:$0xff]
        %v3154 = vld [vmem:[#allocation9 + $0x80] sm:$0xff]
        %v3155 = vld [vmem:[#allocation9 + $0x88] sm:$0xff]
        %v3156 = vld [vmem:[#allocation9 + $0x90] sm:$0xff]
        %v3157 = vld [vmem:[#allocation9 + $0x98] sm:$0xff]
        %v3158 = vld [vmem:[#allocation9 + $0xa0] sm:$0xff]
        %v3159 = vld [vmem:[#allocation9 + $0xa8] sm:$0xff]
        %v3160 = vld [vmem:[#allocation9 + $0xb0] sm:$0xff]
        %v3161 = vld [vmem:[#allocation9 + $0xb8] sm:$0xff]
        %v3162 = vld [vmem:[#allocation9 + $0xc0] sm:$0xff]
        %v3163 = vld [vmem:[#allocation9 + $0xc8] sm:$0xff]
        %v3164 = vld [vmem:[#allocation9 + $0xd0] sm:$0xff]
        %v3165 = vld [vmem:[#allocation9 + $0xd8] sm:$0xff]
        %v3166 = vld [vmem:[#allocation9 + $0xe0] sm:$0xff]
        %v3167 = vld [vmem:[#allocation9 + $0xe8] sm:$0xff]
        %v3168 = vld [vmem:[#allocation9 + $0xf0] sm:$0xff]
        %v3169 = vld [vmem:[#allocation9 + $0xf8] sm:$0xff]
        %v3170 = vld [vmem:[#allocation9 + $0x100] sm:$0xff]
        %v3171 = vld [vmem:[#allocation9 + $0x108] sm:$0xff]
        %v3172 = vld [vmem:[#allocation9 + $0x110] sm:$0xff]
        %v3173 = vld [vmem:[#allocation9 + $0x118] sm:$0xff]
        %v3174 = vld [vmem:[#allocation9 + $0x120] sm:$0xff]
        %v3175 = vld [vmem:[#allocation9 + $0x128] sm:$0xff]
        %v3176 = vld [vmem:[#allocation9 + $0x130] sm:$0xff]
        %v3177 = vld [vmem:[#allocation9 + $0x138] sm:$0xff]
        %v3178 = vld [vmem:[#allocation9 + $0x140] sm:$0xff]
        %v3179 = vld [vmem:[#allocation9 + $0x148] sm:$0xff]
        %v3180 = vld [vmem:[#allocation9 + $0x150] sm:$0xff]
        %v3181 = vld [vmem:[#allocation9 + $0x158] sm:$0xff]
        %v3182 = vld [vmem:[#allocation9 + $0x160] sm:$0xff]
        %v3183 = vld [vmem:[#allocation9 + $0x168] sm:$0xff]
        %v3184 = vld [vmem:[#allocation9 + $0x170] sm:$0xff]
        %v3185 = vld [vmem:[#allocation9 + $0x178] sm:$0xff]
        %v3186 = vld [vmem:[#allocation9 + $0x180] sm:$0xff]
        %v3187 = vld [vmem:[#allocation9 + $0x188] sm:$0xff]
        %v3188 = vld [vmem:[#allocation9 + $0x190] sm:$0xff]
        %v3189 = vld [vmem:[#allocation9 + $0x198] sm:$0xff]
        %v3190 = vld [vmem:[#allocation9 + $0x1a0] sm:$0xff]
        %v3191 = vld [vmem:[#allocation9 + $0x1a8] sm:$0xff]
        %v3192 = vld [vmem:[#allocation9 + $0x1b0] sm:$0xff]
        %v3193 = vld [vmem:[#allocation9 + $0x1b8] sm:$0xff]
        %v3194 = vld [vmem:[#allocation9 + $0x1c0] sm:$0xff]
        %v3195 = vld [vmem:[#allocation9 + $0x1c8] sm:$0xff]
        %v3196 = vld [vmem:[#allocation9 + $0x1d0] sm:$0xff]
        %v3197 = vld [vmem:[#allocation9 + $0x1d8] sm:$0xff]
        %v3198 = vld [vmem:[#allocation9 + $0x1e0] sm:$0xff]
        %v3199 = vld [vmem:[#allocation9 + $0x1e8] sm:$0xff]
        %v3200 = vld [vmem:[#allocation9 + $0x1f0] sm:$0xff]
        %v3201 = vld [vmem:[#allocation9 + $0x1f8] sm:$0xff]
        %v3202 = vld [vmem:[%s13] sm:$0xf]
        %v3204 = vperm.slane %v3202, 0
        %v3205 = vperm.slane %v3202, 1
        %v3206 = vperm.slane %v3202, 2
        %v3207 = vperm.slane %v3202, 3
        %v3213 = vunpack.c.l.b16 %v3137
        %v3214 = vunpack.c.h.b16 %v3137
        %v3215 = vpack.c.b16 %v3213, %v3213
        %v3216 = vpack.c.b16 %v3214, %v3214
        %v3283 = vunpack.c.l.b16 %v3138
        %v3284 = vunpack.c.h.b16 %v3138
        %v3285 = vunpack.c.l.b16 %v3139
        %v3286 = vunpack.c.h.b16 %v3139
        %v3287 = vunpack.c.l.b16 %v3140
        %v3288 = vunpack.c.h.b16 %v3140
        %v3289 = vunpack.c.l.b16 %v3141
        %v3290 = vunpack.c.h.b16 %v3141
        %v3291 = vunpack.c.l.b16 %v3142
        %v3292 = vunpack.c.h.b16 %v3142
        %v3293 = vunpack.c.l.b16 %v3143
        %v3294 = vunpack.c.h.b16 %v3143
        %v3295 = vunpack.c.l.b16 %v3144
        %v3296 = vunpack.c.h.b16 %v3144
        %v3297 = vunpack.c.l.b16 %v3145
        %v3298 = vunpack.c.h.b16 %v3145
        %v3299 = vunpack.c.l.b16 %v3146
        %v3300 = vunpack.c.h.b16 %v3146
        %v3301 = vunpack.c.l.b16 %v3147
        %v3302 = vunpack.c.h.b16 %v3147
        %v3303 = vunpack.c.l.b16 %v3148
        %v3304 = vunpack.c.h.b16 %v3148
        %v3305 = vunpack.c.l.b16 %v3149
        %v3306 = vunpack.c.h.b16 %v3149
        %v3307 = vunpack.c.l.b16 %v3150
        %v3308 = vunpack.c.h.b16 %v3150
        %v3309 = vunpack.c.l.b16 %v3151
        %v3310 = vunpack.c.h.b16 %v3151
        %v3311 = vunpack.c.l.b16 %v3152
        %v3312 = vunpack.c.h.b16 %v3152
        %v3313 = vunpack.c.l.b16 %v3153
        %v3314 = vunpack.c.h.b16 %v3153
        %v3315 = vunpack.c.l.b16 %v3154
        %v3316 = vunpack.c.h.b16 %v3154
        %v3317 = vunpack.c.l.b16 %v3155
        %v3318 = vunpack.c.h.b16 %v3155
        %v3319 = vunpack.c.l.b16 %v3156
        %v3320 = vunpack.c.h.b16 %v3156
        %v3321 = vunpack.c.l.b16 %v3157
        %v3322 = vunpack.c.h.b16 %v3157
        %v3323 = vunpack.c.l.b16 %v3158
        %v3324 = vunpack.c.h.b16 %v3158
        %v3325 = vunpack.c.l.b16 %v3159
        %v3326 = vunpack.c.h.b16 %v3159
        %v3327 = vunpack.c.l.b16 %v3160
        %v3328 = vunpack.c.h.b16 %v3160
        %v3329 = vunpack.c.l.b16 %v3161
        %v3330 = vunpack.c.h.b16 %v3161
        %v3331 = vunpack.c.l.b16 %v3162
        %v3332 = vunpack.c.h.b16 %v3162
        %v3333 = vunpack.c.l.b16 %v3163
        %v3334 = vunpack.c.h.b16 %v3163
        %v3335 = vunpack.c.l.b16 %v3164
        %v3336 = vunpack.c.h.b16 %v3164
        %v3337 = vunpack.c.l.b16 %v3165
        %v3338 = vunpack.c.h.b16 %v3165
        %v3339 = vunpack.c.l.b16 %v3166
        %v3340 = vunpack.c.h.b16 %v3166
        %v3341 = vunpack.c.l.b16 %v3167
        %v3342 = vunpack.c.h.b16 %v3167
        %v3343 = vunpack.c.l.b16 %v3168
        %v3344 = vunpack.c.h.b16 %v3168
        %v3345 = vunpack.c.l.b16 %v3169
        %v3346 = vunpack.c.h.b16 %v3169
        %v3347 = vunpack.c.l.b16 %v3170
        %v3348 = vunpack.c.h.b16 %v3170
        %v3349 = vunpack.c.l.b16 %v3171
        %v3350 = vunpack.c.h.b16 %v3171
        %v3351 = vunpack.c.l.b16 %v3172
        %v3352 = vunpack.c.h.b16 %v3172
        %v3353 = vunpack.c.l.b16 %v3173
        %v3354 = vunpack.c.h.b16 %v3173
        %v3355 = vunpack.c.l.b16 %v3174
        %v3356 = vunpack.c.h.b16 %v3174
        %v3357 = vunpack.c.l.b16 %v3175
        %v3358 = vunpack.c.h.b16 %v3175
        %v3359 = vunpack.c.l.b16 %v3176
        %v3360 = vunpack.c.h.b16 %v3176
        %v3361 = vunpack.c.l.b16 %v3177
        %v3362 = vunpack.c.h.b16 %v3177
        %v3363 = vunpack.c.l.b16 %v3178
        %v3364 = vunpack.c.h.b16 %v3178
        %v3365 = vunpack.c.l.b16 %v3179
        %v3366 = vunpack.c.h.b16 %v3179
        %v3367 = vunpack.c.l.b16 %v3180
        %v3368 = vunpack.c.h.b16 %v3180
        %v3369 = vunpack.c.l.b16 %v3181
        %v3370 = vunpack.c.h.b16 %v3181
        %v3371 = vunpack.c.l.b16 %v3182
        %v3372 = vunpack.c.h.b16 %v3182
        %v3373 = vunpack.c.l.b16 %v3183
        %v3374 = vunpack.c.h.b16 %v3183
        %v3375 = vunpack.c.l.b16 %v3184
        %v3376 = vunpack.c.h.b16 %v3184
        %v3377 = vunpack.c.l.b16 %v3185
        %v3378 = vunpack.c.h.b16 %v3185
        %v3379 = vunpack.c.l.b16 %v3186
        %v3380 = vunpack.c.h.b16 %v3186
        %v3381 = vunpack.c.l.b16 %v3187
        %v3382 = vunpack.c.h.b16 %v3187
        %v3383 = vunpack.c.l.b16 %v3188
        %v3384 = vunpack.c.h.b16 %v3188
        %v3385 = vunpack.c.l.b16 %v3189
        %v3386 = vunpack.c.h.b16 %v3189
        %v3387 = vunpack.c.l.b16 %v3190
        %v3388 = vunpack.c.h.b16 %v3190
        %v3389 = vunpack.c.l.b16 %v3191
        %v3390 = vunpack.c.h.b16 %v3191
        %v3391 = vunpack.c.l.b16 %v3192
        %v3392 = vunpack.c.h.b16 %v3192
        %v3393 = vunpack.c.l.b16 %v3193
        %v3394 = vunpack.c.h.b16 %v3193
        %v3395 = vunpack.c.l.b16 %v3194
        %v3396 = vunpack.c.h.b16 %v3194
        %v3397 = vunpack.c.l.b16 %v3195
        %v3398 = vunpack.c.h.b16 %v3195
        %v3399 = vunpack.c.l.b16 %v3196
        %v3400 = vunpack.c.h.b16 %v3196
        %v3401 = vunpack.c.l.b16 %v3197
        %v3402 = vunpack.c.h.b16 %v3197
        %v3403 = vunpack.c.l.b16 %v3198
        %v3404 = vunpack.c.h.b16 %v3198
        %v3405 = vunpack.c.l.b16 %v3199
        %v3406 = vunpack.c.h.b16 %v3199
        %v3407 = vunpack.c.l.b16 %v3200
        %v3408 = vunpack.c.h.b16 %v3200
        %v3409 = vunpack.c.l.b16 %v3201
        %v3410 = vunpack.c.h.b16 %v3201
        %v3411 = vpack.c.b16 %v3287, %v3283
        %v3412 = vpack.c.b16 %v3288, %v3284
        %v3413 = vpack.c.b16 %v3289, %v3285
        %v3414 = vpack.c.b16 %v3290, %v3286
        %v3415 = vpack.c.b16 %v3295, %v3291
        %v3416 = vpack.c.b16 %v3296, %v3292
        %v3417 = vpack.c.b16 %v3297, %v3293
        %v3418 = vpack.c.b16 %v3298, %v3294
        %v3419 = vpack.c.b16 %v3303, %v3299
        %v3420 = vpack.c.b16 %v3304, %v3300
        %v3421 = vpack.c.b16 %v3305, %v3301
        %v3422 = vpack.c.b16 %v3306, %v3302
        %v3423 = vpack.c.b16 %v3311, %v3307
        %v3424 = vpack.c.b16 %v3312, %v3308
        %v3425 = vpack.c.b16 %v3313, %v3309
        %v3426 = vpack.c.b16 %v3314, %v3310
        %v3427 = vpack.c.b16 %v3319, %v3315
        %v3428 = vpack.c.b16 %v3320, %v3316
        %v3429 = vpack.c.b16 %v3321, %v3317
        %v3430 = vpack.c.b16 %v3322, %v3318
        %v3431 = vpack.c.b16 %v3327, %v3323
        %v3432 = vpack.c.b16 %v3328, %v3324
        %v3433 = vpack.c.b16 %v3329, %v3325
        %v3434 = vpack.c.b16 %v3330, %v3326
        %v3435 = vpack.c.b16 %v3335, %v3331
        %v3436 = vpack.c.b16 %v3336, %v3332
        %v3437 = vpack.c.b16 %v3337, %v3333
        %v3438 = vpack.c.b16 %v3338, %v3334
        %v3439 = vpack.c.b16 %v3343, %v3339
        %v3440 = vpack.c.b16 %v3344, %v3340
        %v3441 = vpack.c.b16 %v3345, %v3341
        %v3442 = vpack.c.b16 %v3346, %v3342
        %v3443 = vpack.c.b16 %v3351, %v3347
        %v3444 = vpack.c.b16 %v3352, %v3348
        %v3445 = vpack.c.b16 %v3353, %v3349
        %v3446 = vpack.c.b16 %v3354, %v3350
        %v3447 = vpack.c.b16 %v3359, %v3355
        %v3448 = vpack.c.b16 %v3360, %v3356
        %v3449 = vpack.c.b16 %v3361, %v3357
        %v3450 = vpack.c.b16 %v3362, %v3358
        %v3451 = vpack.c.b16 %v3367, %v3363
        %v3452 = vpack.c.b16 %v3368, %v3364
        %v3453 = vpack.c.b16 %v3369, %v3365
        %v3454 = vpack.c.b16 %v3370, %v3366
        %v3455 = vpack.c.b16 %v3375, %v3371
        %v3456 = vpack.c.b16 %v3376, %v3372
        %v3457 = vpack.c.b16 %v3377, %v3373
        %v3458 = vpack.c.b16 %v3378, %v3374
        %v3459 = vpack.c.b16 %v3383, %v3379
        %v3460 = vpack.c.b16 %v3384, %v3380
        %v3461 = vpack.c.b16 %v3385, %v3381
        %v3462 = vpack.c.b16 %v3386, %v3382
        %v3463 = vpack.c.b16 %v3391, %v3387
        %v3464 = vpack.c.b16 %v3392, %v3388
        %v3465 = vpack.c.b16 %v3393, %v3389
        %v3466 = vpack.c.b16 %v3394, %v3390
        %v3467 = vpack.c.b16 %v3399, %v3395
        %v3468 = vpack.c.b16 %v3400, %v3396
        %v3469 = vpack.c.b16 %v3401, %v3397
        %v3470 = vpack.c.b16 %v3402, %v3398
        %v3471 = vpack.c.b16 %v3407, %v3403
        %v3472 = vpack.c.b16 %v3408, %v3404
        %v3473 = vpack.c.b16 %v3409, %v3405
        %v3474 = vpack.c.b16 %v3410, %v3406
        %3539 = vmatpush.bf16.msra.mxu0 %v3439
        %3540 = vmatpush.bf16.msra.mxu0 %v3435
        %3541 = vmatpush.bf16.msra.mxu0 %v3431
        %3542 = vmatpush.bf16.msra.mxu0 %v3427
        %3543 = vmatpush.bf16.msra.mxu0 %v3423
        %3544 = vmatpush.bf16.msra.mxu0 %v3419
        %3545 = vmatpush.bf16.msra.mxu0 %v3415
        %3546 = vmatpush.bf16.msra.mxu0 %v3411
        %3547 = vmatmul.bf16.gmra.mxu0 %v3215
        %v3548 = vpop.f32.mrf.mxu0
        %v3549 = vadd.f32 %v3204, %v3548
        %v3550 = vpop.f32.mrf.mxu0
        %3551 = vdwg.mxu0
        %3552 = vmatpush.bf16.msra.mxu0 %v3471
        %3553 = vmatpush.bf16.msra.mxu0 %v3467
        %3554 = vmatpush.bf16.msra.mxu0 %v3463
        %3555 = vmatpush.bf16.msra.mxu0 %v3459
        %3556 = vmatpush.bf16.msra.mxu0 %v3455
        %3557 = vmatpush.bf16.msra.mxu0 %v3451
        %3558 = vmatpush.bf16.msra.mxu0 %v3447
        %3559 = vmatpush.bf16.msra.mxu0 %v3443
        %3560 = vmatmul.bf16.gmra.mxu0 %v3216
        %v3561 = vpop.f32.mrf.mxu0
        %v3562 = vadd.f32 %v3549, %v3561
        %v3563 = vpop.f32.mrf.mxu0
        %3564 = vdwg.mxu0
        %3565 = vmatpush.bf16.msra.mxu0 %v3440
        %3566 = vmatpush.bf16.msra.mxu0 %v3436
        %3567 = vmatpush.bf16.msra.mxu0 %v3432
        %3568 = vmatpush.bf16.msra.mxu0 %v3428
        %3569 = vmatpush.bf16.msra.mxu0 %v3424
        %3570 = vmatpush.bf16.msra.mxu0 %v3420
        %3571 = vmatpush.bf16.msra.mxu0 %v3416
        %3572 = vmatpush.bf16.msra.mxu0 %v3412
        %3573 = vmatmul.bf16.gmra.mxu0 %v3215
        %v3574 = vpop.f32.mrf.mxu0
        %v3575 = vadd.f32 %v3205, %v3574
        %v3576 = vpop.f32.mrf.mxu0
        %3577 = vdwg.mxu0
        %3578 = vmatpush.bf16.msra.mxu0 %v3472
        %3579 = vmatpush.bf16.msra.mxu0 %v3468
        %3580 = vmatpush.bf16.msra.mxu0 %v3464
        %3581 = vmatpush.bf16.msra.mxu0 %v3460
        %3582 = vmatpush.bf16.msra.mxu0 %v3456
        %3583 = vmatpush.bf16.msra.mxu0 %v3452
        %3584 = vmatpush.bf16.msra.mxu0 %v3448
        %3585 = vmatpush.bf16.msra.mxu0 %v3444
        %3586 = vmatmul.bf16.gmra.mxu0 %v3216
        %v3587 = vpop.f32.mrf.mxu0
        %v3588 = vadd.f32 %v3575, %v3587
        %v3589 = vpop.f32.mrf.mxu0
        %3590 = vdwg.mxu0
        %3591 = vmatpush.bf16.msra.mxu0 %v3441
        %3592 = vmatpush.bf16.msra.mxu0 %v3437
        %3593 = vmatpush.bf16.msra.mxu0 %v3433
        %3594 = vmatpush.bf16.msra.mxu0 %v3429
        %3595 = vmatpush.bf16.msra.mxu0 %v3425
        %3596 = vmatpush.bf16.msra.mxu0 %v3421
        %3597 = vmatpush.bf16.msra.mxu0 %v3417
        %3598 = vmatpush.bf16.msra.mxu0 %v3413
        %3599 = vmatmul.bf16.gmra.mxu0 %v3215
        %v3600 = vpop.f32.mrf.mxu0
        %v3601 = vadd.f32 %v3206, %v3600
        %v3602 = vpop.f32.mrf.mxu0
        %3603 = vdwg.mxu0
        %3604 = vmatpush.bf16.msra.mxu0 %v3473
        %3605 = vmatpush.bf16.msra.mxu0 %v3469
        %3606 = vmatpush.bf16.msra.mxu0 %v3465
        %3607 = vmatpush.bf16.msra.mxu0 %v3461
        %3608 = vmatpush.bf16.msra.mxu0 %v3457
        %3609 = vmatpush.bf16.msra.mxu0 %v3453
        %3610 = vmatpush.bf16.msra.mxu0 %v3449
        %3611 = vmatpush.bf16.msra.mxu0 %v3445
        %3612 = vmatmul.bf16.gmra.mxu0 %v3216
        %v3613 = vpop.f32.mrf.mxu0
        %v3614 = vadd.f32 %v3601, %v3613
        %v3615 = vpop.f32.mrf.mxu0
        %3616 = vdwg.mxu0
        %3617 = vmatpush.bf16.msra.mxu0 %v3442
        %3618 = vmatpush.bf16.msra.mxu0 %v3438
        %3619 = vmatpush.bf16.msra.mxu0 %v3434
        %3620 = vmatpush.bf16.msra.mxu0 %v3430
        %3621 = vmatpush.bf16.msra.mxu0 %v3426
        %3622 = vmatpush.bf16.msra.mxu0 %v3422
        %3623 = vmatpush.bf16.msra.mxu0 %v3418
        %3624 = vmatpush.bf16.msra.mxu0 %v3414
        %3625 = vmatmul.bf16.gmra.mxu0 %v3215
        %v3626 = vpop.f32.mrf.mxu0
        %v3627 = vadd.f32 %v3207, %v3626
        %v3628 = vpop.f32.mrf.mxu0
        %3629 = vdwg.mxu0
        %3630 = vmatpush.bf16.msra.mxu0 %v3474
        %3631 = vmatpush.bf16.msra.mxu0 %v3470
        %3632 = vmatpush.bf16.msra.mxu0 %v3466
        %3633 = vmatpush.bf16.msra.mxu0 %v3462
        %3634 = vmatpush.bf16.msra.mxu0 %v3458
        %3635 = vmatpush.bf16.msra.mxu0 %v3454
        %3636 = vmatpush.bf16.msra.mxu0 %v3450
        %3637 = vmatpush.bf16.msra.mxu0 %v3446
        %3638 = vmatmul.bf16.gmra.mxu0 %v3216
        %v3639 = vpop.f32.mrf.mxu0
        %v3640 = vadd.f32 %v3627, %v3639
        %v3641 = vpop.f32.mrf.mxu0
        %3642 = vdwg.mxu0
        %v3643 = vpack.c.bf16 %v3588, %v3562
        %v3644 = vpack.c.bf16 %v3640, %v3614
        %v3645 = vunpack.c.l.bf16 %v3643
        %v3646 = vunpack.c.h.bf16 %v3643
        %v3647 = vunpack.c.l.bf16 %v3644
        %v3648 = vunpack.c.h.bf16 %v3644
        %v3649 = vmax.f32 %v3645, 0.0
        %v3650 = vmax.f32 %v3646, 0.0
        %v3651 = vmax.f32 %v3647, 0.0
        %v3652 = vmax.f32 %v3648, 0.0
        %v3653 = vpack.c.bf16 %v3649, %v3649
        %v3654 = vpack.c.bf16 %v3650, %v3650
        %v3655 = vpack.c.bf16 %v3651, %v3651
        %v3656 = vpack.c.bf16 %v3652, %v3652
        %v3657 = vld [vmem:[#allocation10] sm:$0xff]
        %v3658 = vld [vmem:[#allocation10 + $0x8] sm:$0xff]
        %v3659 = vld [vmem:[#allocation10 + $0x10] sm:$0xff]
        %v3660 = vld [vmem:[#allocation10 + $0x18] sm:$0xff]
        %v3661 = vld [vmem:[#allocation10 + $0x20] sm:$0xff]
        %v3662 = vld [vmem:[#allocation10 + $0x28] sm:$0xff]
        %v3663 = vld [vmem:[#allocation10 + $0x30] sm:$0xff]
        %v3664 = vld [vmem:[#allocation10 + $0x38] sm:$0xff]
        %v3665 = vld [vmem:[#allocation10 + $0x40] sm:$0xff]
        %v3666 = vld [vmem:[#allocation10 + $0x48] sm:$0xff]
        %v3667 = vld [vmem:[#allocation10 + $0x50] sm:$0xff]
        %v3668 = vld [vmem:[#allocation10 + $0x58] sm:$0xff]
        %v3669 = vld [vmem:[#allocation10 + $0x60] sm:$0xff]
        %v3670 = vld [vmem:[#allocation10 + $0x68] sm:$0xff]
        %v3671 = vld [vmem:[#allocation10 + $0x70] sm:$0xff]
        %v3672 = vld [vmem:[#allocation10 + $0x78] sm:$0xff]
        %v3673 = vld [vmem:[#allocation10 + $0x80] sm:$0xff]
        %v3674 = vld [vmem:[#allocation10 + $0x88] sm:$0xff]
        %v3675 = vld [vmem:[#allocation10 + $0x90] sm:$0xff]
        %v3676 = vld [vmem:[#allocation10 + $0x98] sm:$0xff]
        %v3677 = vld [vmem:[#allocation10 + $0xa0] sm:$0xff]
        %v3678 = vld [vmem:[#allocation10 + $0xa8] sm:$0xff]
        %v3679 = vld [vmem:[#allocation10 + $0xb0] sm:$0xff]
        %v3680 = vld [vmem:[#allocation10 + $0xb8] sm:$0xff]
        %v3681 = vld [vmem:[#allocation10 + $0xc0] sm:$0xff]
        %v3682 = vld [vmem:[#allocation10 + $0xc8] sm:$0xff]
        %v3683 = vld [vmem:[#allocation10 + $0xd0] sm:$0xff]
        %v3684 = vld [vmem:[#allocation10 + $0xd8] sm:$0xff]
        %v3685 = vld [vmem:[#allocation10 + $0xe0] sm:$0xff]
        %v3686 = vld [vmem:[#allocation10 + $0xe8] sm:$0xff]
        %v3687 = vld [vmem:[#allocation10 + $0xf0] sm:$0xff]
        %v3688 = vld [vmem:[#allocation10 + $0xf8] sm:$0xff]
        %v3689 = vld [vmem:[#allocation10 + $0x100] sm:$0xff]
        %v3690 = vld [vmem:[#allocation10 + $0x108] sm:$0xff]
        %v3691 = vld [vmem:[#allocation10 + $0x110] sm:$0xff]
        %v3692 = vld [vmem:[#allocation10 + $0x118] sm:$0xff]
        %v3693 = vld [vmem:[#allocation10 + $0x120] sm:$0xff]
        %v3694 = vld [vmem:[#allocation10 + $0x128] sm:$0xff]
        %v3695 = vld [vmem:[#allocation10 + $0x130] sm:$0xff]
        %v3696 = vld [vmem:[#allocation10 + $0x138] sm:$0xff]
        %v3697 = vld [vmem:[#allocation10 + $0x140] sm:$0xff]
        %v3698 = vld [vmem:[#allocation10 + $0x148] sm:$0xff]
        %v3699 = vld [vmem:[#allocation10 + $0x150] sm:$0xff]
        %v3700 = vld [vmem:[#allocation10 + $0x158] sm:$0xff]
        %v3701 = vld [vmem:[#allocation10 + $0x160] sm:$0xff]
        %v3702 = vld [vmem:[#allocation10 + $0x168] sm:$0xff]
        %v3703 = vld [vmem:[#allocation10 + $0x170] sm:$0xff]
        %v3704 = vld [vmem:[#allocation10 + $0x178] sm:$0xff]
        %v3705 = vld [vmem:[#allocation10 + $0x180] sm:$0xff]
        %v3706 = vld [vmem:[#allocation10 + $0x188] sm:$0xff]
        %v3707 = vld [vmem:[#allocation10 + $0x190] sm:$0xff]
        %v3708 = vld [vmem:[#allocation10 + $0x198] sm:$0xff]
        %v3709 = vld [vmem:[#allocation10 + $0x1a0] sm:$0xff]
        %v3710 = vld [vmem:[#allocation10 + $0x1a8] sm:$0xff]
        %v3711 = vld [vmem:[#allocation10 + $0x1b0] sm:$0xff]
        %v3712 = vld [vmem:[#allocation10 + $0x1b8] sm:$0xff]
        %v3713 = vld [vmem:[#allocation10 + $0x1c0] sm:$0xff]
        %v3714 = vld [vmem:[#allocation10 + $0x1c8] sm:$0xff]
        %v3715 = vld [vmem:[#allocation10 + $0x1d0] sm:$0xff]
        %v3716 = vld [vmem:[#allocation10 + $0x1d8] sm:$0xff]
        %v3717 = vld [vmem:[#allocation10 + $0x1e0] sm:$0xff]
        %v3718 = vld [vmem:[#allocation10 + $0x1e8] sm:$0xff]
        %v3719 = vld [vmem:[#allocation10 + $0x1f0] sm:$0xff]
        %v3720 = vld [vmem:[#allocation10 + $0x1f8] sm:$0xff]
        %v3721 = vld [vmem:[%s15] sm:$0x3]
        %v3723 = vperm.slane %v3721, 0
        %v3724 = vperm.slane %v3721, 1
        %v3791 = vunpack.c.l.b16 %v3657
        %v3792 = vunpack.c.h.b16 %v3657
        %v3793 = vunpack.c.l.b16 %v3658
        %v3794 = vunpack.c.h.b16 %v3658
        %v3795 = vunpack.c.l.b16 %v3659
        %v3796 = vunpack.c.h.b16 %v3659
        %v3797 = vunpack.c.l.b16 %v3660
        %v3798 = vunpack.c.h.b16 %v3660
        %v3799 = vunpack.c.l.b16 %v3661
        %v3800 = vunpack.c.h.b16 %v3661
        %v3801 = vunpack.c.l.b16 %v3662
        %v3802 = vunpack.c.h.b16 %v3662
        %v3803 = vunpack.c.l.b16 %v3663
        %v3804 = vunpack.c.h.b16 %v3663
        %v3805 = vunpack.c.l.b16 %v3664
        %v3806 = vunpack.c.h.b16 %v3664
        %v3807 = vunpack.c.l.b16 %v3665
        %v3808 = vunpack.c.h.b16 %v3665
        %v3809 = vunpack.c.l.b16 %v3666
        %v3810 = vunpack.c.h.b16 %v3666
        %v3811 = vunpack.c.l.b16 %v3667
        %v3812 = vunpack.c.h.b16 %v3667
        %v3813 = vunpack.c.l.b16 %v3668
        %v3814 = vunpack.c.h.b16 %v3668
        %v3815 = vunpack.c.l.b16 %v3669
        %v3816 = vunpack.c.h.b16 %v3669
        %v3817 = vunpack.c.l.b16 %v3670
        %v3818 = vunpack.c.h.b16 %v3670
        %v3819 = vunpack.c.l.b16 %v3671
        %v3820 = vunpack.c.h.b16 %v3671
        %v3821 = vunpack.c.l.b16 %v3672
        %v3822 = vunpack.c.h.b16 %v3672
        %v3823 = vunpack.c.l.b16 %v3673
        %v3824 = vunpack.c.h.b16 %v3673
        %v3825 = vunpack.c.l.b16 %v3674
        %v3826 = vunpack.c.h.b16 %v3674
        %v3827 = vunpack.c.l.b16 %v3675
        %v3828 = vunpack.c.h.b16 %v3675
        %v3829 = vunpack.c.l.b16 %v3676
        %v3830 = vunpack.c.h.b16 %v3676
        %v3831 = vunpack.c.l.b16 %v3677
        %v3832 = vunpack.c.h.b16 %v3677
        %v3833 = vunpack.c.l.b16 %v3678
        %v3834 = vunpack.c.h.b16 %v3678
        %v3835 = vunpack.c.l.b16 %v3679
        %v3836 = vunpack.c.h.b16 %v3679
        %v3837 = vunpack.c.l.b16 %v3680
        %v3838 = vunpack.c.h.b16 %v3680
        %v3839 = vunpack.c.l.b16 %v3681
        %v3840 = vunpack.c.h.b16 %v3681
        %v3841 = vunpack.c.l.b16 %v3682
        %v3842 = vunpack.c.h.b16 %v3682
        %v3843 = vunpack.c.l.b16 %v3683
        %v3844 = vunpack.c.h.b16 %v3683
        %v3845 = vunpack.c.l.b16 %v3684
        %v3846 = vunpack.c.h.b16 %v3684
        %v3847 = vunpack.c.l.b16 %v3685
        %v3848 = vunpack.c.h.b16 %v3685
        %v3849 = vunpack.c.l.b16 %v3686
        %v3850 = vunpack.c.h.b16 %v3686
        %v3851 = vunpack.c.l.b16 %v3687
        %v3852 = vunpack.c.h.b16 %v3687
        %v3853 = vunpack.c.l.b16 %v3688
        %v3854 = vunpack.c.h.b16 %v3688
        %v3855 = vunpack.c.l.b16 %v3689
        %v3856 = vunpack.c.h.b16 %v3689
        %v3857 = vunpack.c.l.b16 %v3690
        %v3858 = vunpack.c.h.b16 %v3690
        %v3859 = vunpack.c.l.b16 %v3691
        %v3860 = vunpack.c.h.b16 %v3691
        %v3861 = vunpack.c.l.b16 %v3692
        %v3862 = vunpack.c.h.b16 %v3692
        %v3863 = vunpack.c.l.b16 %v3693
        %v3864 = vunpack.c.h.b16 %v3693
        %v3865 = vunpack.c.l.b16 %v3694
        %v3866 = vunpack.c.h.b16 %v3694
        %v3867 = vunpack.c.l.b16 %v3695
        %v3868 = vunpack.c.h.b16 %v3695
        %v3869 = vunpack.c.l.b16 %v3696
        %v3870 = vunpack.c.h.b16 %v3696
        %v3871 = vunpack.c.l.b16 %v3697
        %v3872 = vunpack.c.h.b16 %v3697
        %v3873 = vunpack.c.l.b16 %v3698
        %v3874 = vunpack.c.h.b16 %v3698
        %v3875 = vunpack.c.l.b16 %v3699
        %v3876 = vunpack.c.h.b16 %v3699
        %v3877 = vunpack.c.l.b16 %v3700
        %v3878 = vunpack.c.h.b16 %v3700
        %v3879 = vunpack.c.l.b16 %v3701
        %v3880 = vunpack.c.h.b16 %v3701
        %v3881 = vunpack.c.l.b16 %v3702
        %v3882 = vunpack.c.h.b16 %v3702
        %v3883 = vunpack.c.l.b16 %v3703
        %v3884 = vunpack.c.h.b16 %v3703
        %v3885 = vunpack.c.l.b16 %v3704
        %v3886 = vunpack.c.h.b16 %v3704
        %v3887 = vunpack.c.l.b16 %v3705
        %v3888 = vunpack.c.h.b16 %v3705
        %v3889 = vunpack.c.l.b16 %v3706
        %v3890 = vunpack.c.h.b16 %v3706
        %v3891 = vunpack.c.l.b16 %v3707
        %v3892 = vunpack.c.h.b16 %v3707
        %v3893 = vunpack.c.l.b16 %v3708
        %v3894 = vunpack.c.h.b16 %v3708
        %v3895 = vunpack.c.l.b16 %v3709
        %v3896 = vunpack.c.h.b16 %v3709
        %v3897 = vunpack.c.l.b16 %v3710
        %v3898 = vunpack.c.h.b16 %v3710
        %v3899 = vunpack.c.l.b16 %v3711
        %v3900 = vunpack.c.h.b16 %v3711
        %v3901 = vunpack.c.l.b16 %v3712
        %v3902 = vunpack.c.h.b16 %v3712
        %v3903 = vunpack.c.l.b16 %v3713
        %v3904 = vunpack.c.h.b16 %v3713
        %v3905 = vunpack.c.l.b16 %v3714
        %v3906 = vunpack.c.h.b16 %v3714
        %v3907 = vunpack.c.l.b16 %v3715
        %v3908 = vunpack.c.h.b16 %v3715
        %v3909 = vunpack.c.l.b16 %v3716
        %v3910 = vunpack.c.h.b16 %v3716
        %v3911 = vunpack.c.l.b16 %v3717
        %v3912 = vunpack.c.h.b16 %v3717
        %v3913 = vunpack.c.l.b16 %v3718
        %v3914 = vunpack.c.h.b16 %v3718
        %v3915 = vunpack.c.l.b16 %v3719
        %v3916 = vunpack.c.h.b16 %v3719
        %v3917 = vunpack.c.l.b16 %v3720
        %v3918 = vunpack.c.h.b16 %v3720
        %v3919 = vpack.c.b16 %v3793, %v3791
        %v3920 = vpack.c.b16 %v3794, %v3792
        %v3921 = vpack.c.b16 %v3797, %v3795
        %v3922 = vpack.c.b16 %v3798, %v3796
        %v3923 = vpack.c.b16 %v3801, %v3799
        %v3924 = vpack.c.b16 %v3802, %v3800
        %v3925 = vpack.c.b16 %v3805, %v3803
        %v3926 = vpack.c.b16 %v3806, %v3804
        %v3927 = vpack.c.b16 %v3809, %v3807
        %v3928 = vpack.c.b16 %v3810, %v3808
        %v3929 = vpack.c.b16 %v3813, %v3811
        %v3930 = vpack.c.b16 %v3814, %v3812
        %v3931 = vpack.c.b16 %v3817, %v3815
        %v3932 = vpack.c.b16 %v3818, %v3816
        %v3933 = vpack.c.b16 %v3821, %v3819
        %v3934 = vpack.c.b16 %v3822, %v3820
        %v3935 = vpack.c.b16 %v3825, %v3823
        %v3936 = vpack.c.b16 %v3826, %v3824
        %v3937 = vpack.c.b16 %v3829, %v3827
        %v3938 = vpack.c.b16 %v3830, %v3828
        %v3939 = vpack.c.b16 %v3833, %v3831
        %v3940 = vpack.c.b16 %v3834, %v3832
        %v3941 = vpack.c.b16 %v3837, %v3835
        %v3942 = vpack.c.b16 %v3838, %v3836
        %v3943 = vpack.c.b16 %v3841, %v3839
        %v3944 = vpack.c.b16 %v3842, %v3840
        %v3945 = vpack.c.b16 %v3845, %v3843
        %v3946 = vpack.c.b16 %v3846, %v3844
        %v3947 = vpack.c.b16 %v3849, %v3847
        %v3948 = vpack.c.b16 %v3850, %v3848
        %v3949 = vpack.c.b16 %v3853, %v3851
        %v3950 = vpack.c.b16 %v3854, %v3852
        %v3951 = vpack.c.b16 %v3857, %v3855
        %v3952 = vpack.c.b16 %v3858, %v3856
        %v3953 = vpack.c.b16 %v3861, %v3859
        %v3954 = vpack.c.b16 %v3862, %v3860
        %v3955 = vpack.c.b16 %v3865, %v3863
        %v3956 = vpack.c.b16 %v3866, %v3864
        %v3957 = vpack.c.b16 %v3869, %v3867
        %v3958 = vpack.c.b16 %v3870, %v3868
        %v3959 = vpack.c.b16 %v3873, %v3871
        %v3960 = vpack.c.b16 %v3874, %v3872
        %v3961 = vpack.c.b16 %v3877, %v3875
        %v3962 = vpack.c.b16 %v3878, %v3876
        %v3963 = vpack.c.b16 %v3881, %v3879
        %v3964 = vpack.c.b16 %v3882, %v3880
        %v3965 = vpack.c.b16 %v3885, %v3883
        %v3966 = vpack.c.b16 %v3886, %v3884
        %v3967 = vpack.c.b16 %v3889, %v3887
        %v3968 = vpack.c.b16 %v3890, %v3888
        %v3969 = vpack.c.b16 %v3893, %v3891
        %v3970 = vpack.c.b16 %v3894, %v3892
        %v3971 = vpack.c.b16 %v3897, %v3895
        %v3972 = vpack.c.b16 %v3898, %v3896
        %v3973 = vpack.c.b16 %v3901, %v3899
        %v3974 = vpack.c.b16 %v3902, %v3900
        %v3975 = vpack.c.b16 %v3905, %v3903
        %v3976 = vpack.c.b16 %v3906, %v3904
        %v3977 = vpack.c.b16 %v3909, %v3907
        %v3978 = vpack.c.b16 %v3910, %v3908
        %v3979 = vpack.c.b16 %v3913, %v3911
        %v3980 = vpack.c.b16 %v3914, %v3912
        %v3981 = vpack.c.b16 %v3917, %v3915
        %v3982 = vpack.c.b16 %v3918, %v3916
        %4047 = vmatpush.bf16.msra.mxu0 %v3933
        %4048 = vmatpush.bf16.msra.mxu0 %v3931
        %4049 = vmatpush.bf16.msra.mxu0 %v3929
        %4050 = vmatpush.bf16.msra.mxu0 %v3927
        %4051 = vmatpush.bf16.msra.mxu0 %v3925
        %4052 = vmatpush.bf16.msra.mxu0 %v3923
        %4053 = vmatpush.bf16.msra.mxu0 %v3921
        %4054 = vmatpush.bf16.msra.mxu0 %v3919
        %4055 = vmatmul.bf16.gmra.mxu0 %v3653
        %v4056 = vpop.f32.mrf.mxu0
        %v4057 = vadd.f32 %v3723, %v4056
        %v4058 = vpop.f32.mrf.mxu0
        %4059 = vdwg.mxu0
        %4060 = vmatpush.bf16.msra.mxu0 %v3949
        %4061 = vmatpush.bf16.msra.mxu0 %v3947
        %4062 = vmatpush.bf16.msra.mxu0 %v3945
        %4063 = vmatpush.bf16.msra.mxu0 %v3943
        %4064 = vmatpush.bf16.msra.mxu0 %v3941
        %4065 = vmatpush.bf16.msra.mxu0 %v3939
        %4066 = vmatpush.bf16.msra.mxu0 %v3937
        %4067 = vmatpush.bf16.msra.mxu0 %v3935
        %4068 = vmatmul.bf16.gmra.mxu0 %v3654
        %v4069 = vpop.f32.mrf.mxu0
        %v4070 = vadd.f32 %v4057, %v4069
        %v4071 = vpop.f32.mrf.mxu0
        %4072 = vdwg.mxu0
        %4073 = vmatpush.bf16.msra.mxu0 %v3965
        %4074 = vmatpush.bf16.msra.mxu0 %v3963
        %4075 = vmatpush.bf16.msra.mxu0 %v3961
        %4076 = vmatpush.bf16.msra.mxu0 %v3959
        %4077 = vmatpush.bf16.msra.mxu0 %v3957
        %4078 = vmatpush.bf16.msra.mxu0 %v3955
        %4079 = vmatpush.bf16.msra.mxu0 %v3953
        %4080 = vmatpush.bf16.msra.mxu0 %v3951
        %4081 = vmatmul.bf16.gmra.mxu0 %v3655
        %v4082 = vpop.f32.mrf.mxu0
        %v4083 = vadd.f32 %v4070, %v4082
        %v4084 = vpop.f32.mrf.mxu0
        %4085 = vdwg.mxu0
        %4086 = vmatpush.bf16.msra.mxu0 %v3981
        %4087 = vmatpush.bf16.msra.mxu0 %v3979
        %4088 = vmatpush.bf16.msra.mxu0 %v3977
        %4089 = vmatpush.bf16.msra.mxu0 %v3975
        %4090 = vmatpush.bf16.msra.mxu0 %v3973
        %4091 = vmatpush.bf16.msra.mxu0 %v3971
        %4092 = vmatpush.bf16.msra.mxu0 %v3969
        %4093 = vmatpush.bf16.msra.mxu0 %v3967
        %4094 = vmatmul.bf16.gmra.mxu0 %v3656
        %v4095 = vpop.f32.mrf.mxu0
        %v4096 = vadd.f32 %v4083, %v4095
        %v4097 = vpop.f32.mrf.mxu0
        %4098 = vdwg.mxu0
        %4099 = vmatpush.bf16.msra.mxu0 %v3934
        %4100 = vmatpush.bf16.msra.mxu0 %v3932
        %4101 = vmatpush.bf16.msra.mxu0 %v3930
        %4102 = vmatpush.bf16.msra.mxu0 %v3928
        %4103 = vmatpush.bf16.msra.mxu0 %v3926
        %4104 = vmatpush.bf16.msra.mxu0 %v3924
        %4105 = vmatpush.bf16.msra.mxu0 %v3922
        %4106 = vmatpush.bf16.msra.mxu0 %v3920
        %4107 = vmatmul.bf16.gmra.mxu0 %v3653
        %v4108 = vpop.f32.mrf.mxu0
        %v4109 = vadd.f32 %v3724, %v4108
        %v4110 = vpop.f32.mrf.mxu0
        %4111 = vdwg.mxu0
        %4112 = vmatpush.bf16.msra.mxu0 %v3950
        %4113 = vmatpush.bf16.msra.mxu0 %v3948
        %4114 = vmatpush.bf16.msra.mxu0 %v3946
        %4115 = vmatpush.bf16.msra.mxu0 %v3944
        %4116 = vmatpush.bf16.msra.mxu0 %v3942
        %4117 = vmatpush.bf16.msra.mxu0 %v3940
        %4118 = vmatpush.bf16.msra.mxu0 %v3938
        %4119 = vmatpush.bf16.msra.mxu0 %v3936
        %4120 = vmatmul.bf16.gmra.mxu0 %v3654
        %v4121 = vpop.f32.mrf.mxu0
        %v4122 = vadd.f32 %v4109, %v4121
        %v4123 = vpop.f32.mrf.mxu0
        %4124 = vdwg.mxu0
        %4125 = vmatpush.bf16.msra.mxu0 %v3966
        %4126 = vmatpush.bf16.msra.mxu0 %v3964
        %4127 = vmatpush.bf16.msra.mxu0 %v3962
        %4128 = vmatpush.bf16.msra.mxu0 %v3960
        %4129 = vmatpush.bf16.msra.mxu0 %v3958
        %4130 = vmatpush.bf16.msra.mxu0 %v3956
        %4131 = vmatpush.bf16.msra.mxu0 %v3954
        %4132 = vmatpush.bf16.msra.mxu0 %v3952
        %4133 = vmatmul.bf16.gmra.mxu0 %v3655
        %v4134 = vpop.f32.mrf.mxu0
        %v4135 = vadd.f32 %v4122, %v4134
        %v4136 = vpop.f32.mrf.mxu0
        %4137 = vdwg.mxu0
        %4138 = vmatpush.bf16.msra.mxu0 %v3982
        %4139 = vmatpush.bf16.msra.mxu0 %v3980
        %4140 = vmatpush.bf16.msra.mxu0 %v3978
        %4141 = vmatpush.bf16.msra.mxu0 %v3976
        %4142 = vmatpush.bf16.msra.mxu0 %v3974
        %4143 = vmatpush.bf16.msra.mxu0 %v3972
        %4144 = vmatpush.bf16.msra.mxu0 %v3970
        %4145 = vmatpush.bf16.msra.mxu0 %v3968
        %4146 = vmatmul.bf16.gmra.mxu0 %v3656
        %v4147 = vpop.f32.mrf.mxu0
        %v4148 = vadd.f32 %v4135, %v4147
        %v4149 = vpop.f32.mrf.mxu0
        %4150 = vdwg.mxu0
        %v4151 = vunpack.c.l.bf16 %v3137
        %v4152 = vunpack.c.h.bf16 %v3137
        %v4153 = vadd.f32 %v4096, %v4151
        %v4154 = vadd.f32 %v4148, %v4152
        %v4155 = vadd.f32 %v4153, %v4154
        %4156 = vadd.xlane.f32.xlu0 %v4155
        %v4157 = vpop.xlane.xlu0 %4156
        %v4158 = vmul.f32 %v4157, %v2449
        %v4159 = vsub.f32 %v4153, %v4158
        %v4160 = vsub.f32 %v4154, %v4158
        %v4161 = vmul.f32 %v4159, %v4159
        %v4162 = vmul.f32 %v4160, %v4160
        %v4163 = vadd.f32 %v4161, %v4162
        %4164 = vadd.xlane.f32.xlu0 %v4163
        %v4165 = vpop.xlane.xlu0 %4164
        %v4166 = vmul.f32 %v4165, %v2449
        %v4167 = vld [vmem:[%s20] sm:$0x3]
        %v4168 = vadd.f32 %v4166, 1e-05
        %v4169 = vrsqrt.pop %v4168
        %v4170 = vmul.f32 %v4169, %v4168
        %v4171 = vmul.f32 %v4170, %v4169
        %v4172 = vmul.f32 0.5, %v4171
        %v4173 = vsub.f32 1.5, %v4172
        %v4174 = vmul.f32 %v4169, %v4173
        %vm4175 = vweird.f32 %v4168
        %vm4176 = vweird.f32 %v4169
        %vm4177 = vmor %vm4175, %vm4176
        %v4178 = vsel %vm4177, %v4169, %v4174
        %v4179 = vmul.f32 %v4159, %v4178
        %v4180 = vmul.f32 %v4160, %v4178
        %v4182 = vperm.slane %v4167, 0
        %v4183 = vperm.slane %v4167, 1
        %v4186 = vmul.f32 %v4182, %v4179
        %v4187 = vmul.f32 %v4183, %v4180
        %v4188 = vld [vmem:[%s21] sm:$0x3]
        %v4190 = vperm.slane %v4188, 0
        %v4191 = vperm.slane %v4188, 1
        %v4194 = vadd.f32 %v4186, %v4190
        %v4195 = vadd.f32 %v4187, %v4191
        %v4196 = vpack.c.bf16 %v4195, %v4194
        %4197 = vst [vmem:[%s803] sm:$0xff] %v4196
        %p4198 = scmp.lt.s32.totalorder %s37, 1
        %s4199 = scalar_select %p4198, %s37, 1
        %s4200 = smul.addr %s4199, 2
        %s4201 = smul.addr %s4200, 4
        %s4202 = scalar_lea.vmem %s22, %s4201
        // Predicated region
        $region133: #{decoder_forward.2} parent=107 // pred_check
          %p4203 = pneg %p527
        $region134: #{decoder_forward.2} parent=107 // pred_check_branch
          %4205 = sbr.rel (%p4203) target = $region136
        $region135: #{decoder_forward.2} parent=107 // pred_region
          _
        $region136: #{decoder_forward.2} parent=107 // pred_fallthru
          _
      $region108: #{decoder_forward.2} parent=5 // pred_fallthru
        _
      %p4206 = scmp.le.s32.totalorder 2, %s32
      // Predicated region
      $region137: #{decoder_forward.2} parent=5 // pred_check
        %p4207 = pneg %p4206
      $region138: #{decoder_forward.2} parent=5 // pred_check_branch
        %4209 = sbr.rel (%p4207) target = $region140
      $region139: #{decoder_forward.2} parent=5 // pred_region
        %s4210 = ssub.s32 %s32, 2
        // Predicated region
        $region141: #{decoder_forward.2} parent=139 // pred_check
          %p4211 = pneg %p533
        $region142: #{decoder_forward.2} parent=139 // pred_check_branch
          %4213 = sbr.rel (%p4211) target = $region144
        $region143: #{decoder_forward.2} parent=139 // pred_region
          %p4214 = scmp.lt.s32.totalorder %s38, 1
          %s4215 = scalar_select %p4214, %s38, 1
          %s4216 = smul.addr %s4215, 2
          %s4217 = smul.addr %s4216, 4
          %s4218 = scalar_lea.vmem %s22, %s4217
        $region144: #{decoder_forward.2} parent=139 // pred_fallthru
          _
      $region140: #{decoder_forward.2} parent=5 // pred_fallthru
        _
    $region6: #{decoder_forward.2} parent=1 // loop_footer
      %s36 = sadd.s32 1, %s32
    $region7: #{decoder_forward.2} parent=1 // loop_footer_branch
      %31 = sbr.rel target = $region3
    $region8: #{decoder_forward.2} parent=1 // loop_exit
      _
    %4219 = vsyncpa [#allocation3], 1
    %s4220 = scalar_lea.sflag [#allocation3], 1
    %4221 = vsyncpa %s4220, 1
    %4222 = vsyncpa [#allocation5], 1
    %4223 = vsyncpa [#allocation8], 1
    %4224 = vsyncpa [#allocation11], 1

// kernel: decoder_forward.3
$region0: #{decoder_forward.3}
  #allocation0 [shape = 'u32[]', space=smem, size = 0x4, offset = 0x4, fixed_abs, tag = 'smem constant byte address 0x4 - core index']
  #allocation1 [shape = 'u32[72,128]{1,0:T(1,128)}', space=vmem, size = 0x9000, scoped, tag = 'internal scratch']
  %s0 = inlined_call_operand.vmem [shape: bf16[2,8,256], index: 0, kind: input, shape index: {}]
  %s1 = inlined_call_operand.vmem [shape: bf16[2,8,256], index: 1, kind: input, shape index: {}]
  %s2 = inlined_call_operand.vmem [shape: bf16[256,768], index: 2, kind: input, shape index: {}]
  %s3 = inlined_call_operand.vmem [shape: f32[1,768], index: 3, kind: input, shape index: {}]
  %s4 = inlined_call_operand.vmem [shape: bf16[256,256], index: 4, kind: input, shape index: {}]
  %s5 = inlined_call_operand.vmem [shape: f32[1,256], index: 5, kind: input, shape index: {}]
  %s6 = inlined_call_operand.vmem [shape: bf16[256,512], index: 6, kind: input, shape index: {}]
  %s7 = inlined_call_operand.vmem [shape: f32[1,512], index: 7, kind: input, shape index: {}]
  %s8 = inlined_call_operand.vmem [shape: bf16[256,256], index: 8, kind: input, shape index: {}]
  %s9 = inlined_call_operand.vmem [shape: f32[1,256], index: 9, kind: input, shape index: {}]
  %s10 = inlined_call_operand.vmem [shape: bf16[256,256], index: 10, kind: input, shape index: {}]
  %s11 = inlined_call_operand.vmem [shape: f32[1,256], index: 11, kind: input, shape index: {}]
  %s12 = inlined_call_operand.vmem [shape: bf16[256,512], index: 12, kind: input, shape index: {}]
  %s13 = inlined_call_operand.vmem [shape: f32[1,512], index: 13, kind: input, shape index: {}]
  %s14 = inlined_call_operand.vmem [shape: bf16[512,256], index: 14, kind: input, shape index: {}]
  %s15 = inlined_call_operand.vmem [shape: f32[1,256], index: 15, kind: input, shape index: {}]
  %s16 = inlined_call_operand.vmem [shape: f32[1,256], index: 16, kind: input, shape index: {}]
  %s17 = inlined_call_operand.vmem [shape: f32[1,256], index: 17, kind: input, shape index: {}]
  %s18 = inlined_call_operand.vmem [shape: f32[1,256], index: 18, kind: input, shape index: {}]
  %s19 = inlined_call_operand.vmem [shape: f32[1,256], index: 19, kind: input, shape index: {}]
  %s20 = inlined_call_operand.vmem [shape: f32[1,256], index: 20, kind: input, shape index: {}]
  %s21 = inlined_call_operand.vmem [shape: f32[1,256], index: 21, kind: input, shape index: {}]
  %s22 = inlined_call_operand.hbm [shape: bf16[2,8,256], index: 22, kind: output, shape index: {}]
  %s23 = sld [smem:[#allocation0]]
  $region121: #{decoder_forward.3} parent=0
    _
  %s25 = ssub.s32 1, %s23
  %s26 = scalar_select 0, %s25, %s23
  $region1: #{decoder_forward.3} parent=0
    #allocation2 [shape = 'u8[8192]{0}', space=vmem, size = 0x2000, scoped, tag = 'output window, operand 0']
    #allocation3 [shape = 's32[2]{0}', space=sflag, size = 0x8, scoped, tag = 'scoped memory for decoder_forward.3']
    %27 = vsyncpa [#allocation3], 0
    %s28 = scalar_lea.sflag [#allocation3], 1
    %29 = vsyncpa %s28, 0
    loop: start=0, step=1, limit=4
    $region2: #{decoder_forward.3} parent=1 // loop_pre_header
      _
    $region3: #{decoder_forward.3} parent=1 // loop_header
      %s31 = sphi 0, %s35
      %p32 = scmp.ge.s32.totalorder %s31, 4
      %s41 = sphi 0, %s43
      %s44 = sphi 0, %s41
      %s45 = sphi 0, %s44
      %s61 = sphi 0, %s45
      %s67 = sphi 0, %s69
      %s70 = sphi 0, %s67
      %s71 = sphi 0, %s70
      %s87 = sphi 0, %s71
      %s91 = sphi 0, %s91
      %s93 = sphi 0, %s91
      %s94 = sphi 0, %s93
      %s108 = sphi 0, %s94
      %s112 = sphi 0, %s112
      %s114 = sphi 0, %s112
      %s115 = sphi 0, %s114
      %s129 = sphi 0, %s115
      %s133 = sphi 0, %s133
      %s135 = sphi 0, %s133
      %s136 = sphi 0, %s135
      %s150 = sphi 0, %s136
      %s154 = sphi 0, %s154
      %s156 = sphi 0, %s154
      %s157 = sphi 0, %s156
      %s171 = sphi 0, %s157
      %s175 = sphi 0, %s175
      %s177 = sphi 0, %s175
      %s178 = sphi 0, %s177
      %s192 = sphi 0, %s178
      %s196 = sphi 0, %s196
      %s198 = sphi 0, %s196
      %s199 = sphi 0, %s198
      %s213 = sphi 0, %s199
      %s217 = sphi 0, %s217
      %s219 = sphi 0, %s217
      %s220 = sphi 0, %s219
      %s234 = sphi 0, %s220
      %s238 = sphi 0, %s238
      %s240 = sphi 0, %s238
      %s241 = sphi 0, %s240
      %s255 = sphi 0, %s241
      %s259 = sphi 0, %s259
      %s261 = sphi 0, %s259
      %s262 = sphi 0, %s261
      %s276 = sphi 0, %s262
      %s280 = sphi 0, %s280
      %s282 = sphi 0, %s280
      %s283 = sphi 0, %s282
      %s297 = sphi 0, %s283
      %s301 = sphi 0, %s301
      %s303 = sphi 0, %s301
      %s304 = sphi 0, %s303
      %s318 = sphi 0, %s304
      %s322 = sphi 0, %s322
      %s324 = sphi 0, %s322
      %s325 = sphi 0, %s324
      %s339 = sphi 0, %s325
      %s343 = sphi 0, %s343
      %s345 = sphi 0, %s343
      %s346 = sphi 0, %s345
      %s360 = sphi 0, %s346
      %s364 = sphi 0, %s364
      %s366 = sphi 0, %s364
      %s367 = sphi 0, %s366
      %s381 = sphi 0, %s367
      %s385 = sphi 0, %s385
      %s387 = sphi 0, %s385
      %s388 = sphi 0, %s387
      %s402 = sphi 0, %s388
      %s406 = sphi 0, %s406
      %s408 = sphi 0, %s406
      %s409 = sphi 0, %s408
      %s423 = sphi 0, %s409
      %s427 = sphi 0, %s427
      %s429 = sphi 0, %s427
      %s430 = sphi 0, %s429
      %s444 = sphi 0, %s430
      %s448 = sphi 0, %s448
      %s450 = sphi 0, %s448
      %s451 = sphi 0, %s450
      %s465 = sphi 0, %s451
      %s469 = sphi 0, %s469
      %s471 = sphi 0, %s469
      %s472 = sphi 0, %s471
      %s486 = sphi 0, %s472
      %s490 = sphi 0, %s490
      %s492 = sphi 0, %s490
      %s493 = sphi 0, %s492
      %s507 = sphi 0, %s493
      %s513 = sphi 0, %s515
      %s516 = sphi 0, %s513
      %s517 = sphi 0, %s516
      %s533 = sphi 0, %s517
    $region4: #{decoder_forward.3} parent=1 // loop_header_branch
      %34 = sbr.rel (%p32) target = $region8
    $region5: #{decoder_forward.3} parent=1 // loop_body
      %s36 = ssub.s32 %s31, 1
      %s37 = ssub.s32 %s31, 2
      %s38 = sadd.s32 %s31, 1
      %s39 = ssub.s32 %s31, %s38
      %p40 = scmp.eq.s32.totalorder %s39, 0
      %s42 = sadd.s32 %s41, 1
      %s43 = scalar_select %p40, %s41, %s42
      %p46 = pneg %p40
      %p47 = scmp.eq.s32.totalorder %s31, 1
      %p48 = por %p46, %p47
      %p49 = scmp.ne.s32.totalorder %s41, %s44
      %p50 = scmp.eq.s32.totalorder %s31, 0
      %p51 = por %p49, %p50
      %p52 = scmp.ne.s32.totalorder %s41, %s44
      %p53 = scmp.eq.s32.totalorder %s36, 1
      %p54 = por %p52, %p53
      %p55 = scmp.ne.s32.totalorder %s44, %s45
      %p56 = scmp.eq.s32.totalorder %s36, 0
      %p57 = por %p55, %p56
      %p58 = scmp.ne.s32.totalorder %s44, %s45
      %p59 = scmp.eq.s32.totalorder %s37, 1
      %p60 = por %p58, %p59
      %p62 = scmp.ne.s32.totalorder %s45, %s61
      %p63 = scmp.eq.s32.totalorder %s37, 0
      %p64 = por %p62, %p63
      %s65 = ssub.s32 %s31, %s38
      %p66 = scmp.eq.s32.totalorder %s65, 0
      %s68 = sadd.s32 %s67, 1
      %s69 = scalar_select %p66, %s67, %s68
      %p72 = pneg %p66
      %p73 = scmp.eq.s32.totalorder %s31, 1
      %p74 = por %p72, %p73
      %p75 = scmp.ne.s32.totalorder %s67, %s70
      %p76 = scmp.eq.s32.totalorder %s31, 0
      %p77 = por %p75, %p76
      %p78 = scmp.ne.s32.totalorder %s67, %s70
      %p79 = scmp.eq.s32.totalorder %s36, 1
      %p80 = por %p78, %p79
      %p81 = scmp.ne.s32.totalorder %s70, %s71
      %p82 = scmp.eq.s32.totalorder %s36, 0
      %p83 = por %p81, %p82
      %p84 = scmp.ne.s32.totalorder %s70, %s71
      %p85 = scmp.eq.s32.totalorder %s37, 1
      %p86 = por %p84, %p85
      %p88 = scmp.ne.s32.totalorder %s71, %s87
      %p89 = scmp.eq.s32.totalorder %s37, 0
      %p90 = por %p88, %p89
      %s92 = sadd.s32 %s91, 1
      %p95 = scmp.eq.s32.totalorder %s31, 1
      %p96 = scmp.ne.s32.totalorder %s91, %s93
      %p97 = scmp.eq.s32.totalorder %s31, 0
      %p98 = por %p96, %p97
      %p99 = scmp.ne.s32.totalorder %s91, %s93
      %p100 = scmp.eq.s32.totalorder %s36, 1
      %p101 = por %p99, %p100
      %p102 = scmp.ne.s32.totalorder %s93, %s94
      %p103 = scmp.eq.s32.totalorder %s36, 0
      %p104 = por %p102, %p103
      %p105 = scmp.ne.s32.totalorder %s93, %s94
      %p106 = scmp.eq.s32.totalorder %s37, 1
      %p107 = por %p105, %p106
      %p109 = scmp.ne.s32.totalorder %s94, %s108
      %p110 = scmp.eq.s32.totalorder %s37, 0
      %p111 = por %p109, %p110
      %s113 = sadd.s32 %s112, 1
      %p116 = scmp.eq.s32.totalorder %s31, 1
      %p117 = scmp.ne.s32.totalorder %s112, %s114
      %p118 = scmp.eq.s32.totalorder %s31, 0
      %p119 = por %p117, %p118
      %p120 = scmp.ne.s32.totalorder %s112, %s114
      %p121 = scmp.eq.s32.totalorder %s36, 1
      %p122 = por %p120, %p121
      %p123 = scmp.ne.s32.totalorder %s114, %s115
      %p124 = scmp.eq.s32.totalorder %s36, 0
      %p125 = por %p123, %p124
      %p126 = scmp.ne.s32.totalorder %s114, %s115
      %p127 = scmp.eq.s32.totalorder %s37, 1
      %p128 = por %p126, %p127
      %p130 = scmp.ne.s32.totalorder %s115, %s129
      %p131 = scmp.eq.s32.totalorder %s37, 0
      %p132 = por %p130, %p131
      %s134 = sadd.s32 %s133, 1
      %p137 = scmp.eq.s32.totalorder %s31, 1
      %p138 = scmp.ne.s32.totalorder %s133, %s135
      %p139 = scmp.eq.s32.totalorder %s31, 0
      %p140 = por %p138, %p139
      %p141 = scmp.ne.s32.totalorder %s133, %s135
      %p142 = scmp.eq.s32.totalorder %s36, 1
      %p143 = por %p141, %p142
      %p144 = scmp.ne.s32.totalorder %s135, %s136
      %p145 = scmp.eq.s32.totalorder %s36, 0
      %p146 = por %p144, %p145
      %p147 = scmp.ne.s32.totalorder %s135, %s136
      %p148 = scmp.eq.s32.totalorder %s37, 1
      %p149 = por %p147, %p148
      %p151 = scmp.ne.s32.totalorder %s136, %s150
      %p152 = scmp.eq.s32.totalorder %s37, 0
      %p153 = por %p151, %p152
      %s155 = sadd.s32 %s154, 1
      %p158 = scmp.eq.s32.totalorder %s31, 1
      %p159 = scmp.ne.s32.totalorder %s154, %s156
      %p160 = scmp.eq.s32.totalorder %s31, 0
      %p161 = por %p159, %p160
      %p162 = scmp.ne.s32.totalorder %s154, %s156
      %p163 = scmp.eq.s32.totalorder %s36, 1
      %p164 = por %p162, %p163
      %p165 = scmp.ne.s32.totalorder %s156, %s157
      %p166 = scmp.eq.s32.totalorder %s36, 0
      %p167 = por %p165, %p166
      %p168 = scmp.ne.s32.totalorder %s156, %s157
      %p169 = scmp.eq.s32.totalorder %s37, 1
      %p170 = por %p168, %p169
      %p172 = scmp.ne.s32.totalorder %s157, %s171
      %p173 = scmp.eq.s32.totalorder %s37, 0
      %p174 = por %p172, %p173
      %s176 = sadd.s32 %s175, 1
      %p179 = scmp.eq.s32.totalorder %s31, 1
      %p180 = scmp.ne.s32.totalorder %s175, %s177
      %p181 = scmp.eq.s32.totalorder %s31, 0
      %p182 = por %p180, %p181
      %p183 = scmp.ne.s32.totalorder %s175, %s177
      %p184 = scmp.eq.s32.totalorder %s36, 1
      %p185 = por %p183, %p184
      %p186 = scmp.ne.s32.totalorder %s177, %s178
      %p187 = scmp.eq.s32.totalorder %s36, 0
      %p188 = por %p186, %p187
      %p189 = scmp.ne.s32.totalorder %s177, %s178
      %p190 = scmp.eq.s32.totalorder %s37, 1
      %p191 = por %p189, %p190
      %p193 = scmp.ne.s32.totalorder %s178, %s192
      %p194 = scmp.eq.s32.totalorder %s37, 0
      %p195 = por %p193, %p194
      %s197 = sadd.s32 %s196, 1
      %p200 = scmp.eq.s32.totalorder %s31, 1
      %p201 = scmp.ne.s32.totalorder %s196, %s198
      %p202 = scmp.eq.s32.totalorder %s31, 0
      %p203 = por %p201, %p202
      %p204 = scmp.ne.s32.totalorder %s196, %s198
      %p205 = scmp.eq.s32.totalorder %s36, 1
      %p206 = por %p204, %p205
      %p207 = scmp.ne.s32.totalorder %s198, %s199
      %p208 = scmp.eq.s32.totalorder %s36, 0
      %p209 = por %p207, %p208
      %p210 = scmp.ne.s32.totalorder %s198, %s199
      %p211 = scmp.eq.s32.totalorder %s37, 1
      %p212 = por %p210, %p211
      %p214 = scmp.ne.s32.totalorder %s199, %s213
      %p215 = scmp.eq.s32.totalorder %s37, 0
      %p216 = por %p214, %p215
      %s218 = sadd.s32 %s217, 1
      %p221 = scmp.eq.s32.totalorder %s31, 1
      %p222 = scmp.ne.s32.totalorder %s217, %s219
      %p223 = scmp.eq.s32.totalorder %s31, 0
      %p224 = por %p222, %p223
      %p225 = scmp.ne.s32.totalorder %s217, %s219
      %p226 = scmp.eq.s32.totalorder %s36, 1
      %p227 = por %p225, %p226
      %p228 = scmp.ne.s32.totalorder %s219, %s220
      %p229 = scmp.eq.s32.totalorder %s36, 0
      %p230 = por %p228, %p229
      %p231 = scmp.ne.s32.totalorder %s219, %s220
      %p232 = scmp.eq.s32.totalorder %s37, 1
      %p233 = por %p231, %p232
      %p235 = scmp.ne.s32.totalorder %s220, %s234
      %p236 = scmp.eq.s32.totalorder %s37, 0
      %p237 = por %p235, %p236
      %s239 = sadd.s32 %s238, 1
      %p242 = scmp.eq.s32.totalorder %s31, 1
      %p243 = scmp.ne.s32.totalorder %s238, %s240
      %p244 = scmp.eq.s32.totalorder %s31, 0
      %p245 = por %p243, %p244
      %p246 = scmp.ne.s32.totalorder %s238, %s240
      %p247 = scmp.eq.s32.totalorder %s36, 1
      %p248 = por %p246, %p247
      %p249 = scmp.ne.s32.totalorder %s240, %s241
      %p250 = scmp.eq.s32.totalorder %s36, 0
      %p251 = por %p249, %p250
      %p252 = scmp.ne.s32.totalorder %s240, %s241
      %p253 = scmp.eq.s32.totalorder %s37, 1
      %p254 = por %p252, %p253
      %p256 = scmp.ne.s32.totalorder %s241, %s255
      %p257 = scmp.eq.s32.totalorder %s37, 0
      %p258 = por %p256, %p257
      %s260 = sadd.s32 %s259, 1
      %p263 = scmp.eq.s32.totalorder %s31, 1
      %p264 = scmp.ne.s32.totalorder %s259, %s261
      %p265 = scmp.eq.s32.totalorder %s31, 0
      %p266 = por %p264, %p265
      %p267 = scmp.ne.s32.totalorder %s259, %s261
      %p268 = scmp.eq.s32.totalorder %s36, 1
      %p269 = por %p267, %p268
      %p270 = scmp.ne.s32.totalorder %s261, %s262
      %p271 = scmp.eq.s32.totalorder %s36, 0
      %p272 = por %p270, %p271
      %p273 = scmp.ne.s32.totalorder %s261, %s262
      %p274 = scmp.eq.s32.totalorder %s37, 1
      %p275 = por %p273, %p274
      %p277 = scmp.ne.s32.totalorder %s262, %s276
      %p278 = scmp.eq.s32.totalorder %s37, 0
      %p279 = por %p277, %p278
      %s281 = sadd.s32 %s280, 1
      %p284 = scmp.eq.s32.totalorder %s31, 1
      %p285 = scmp.ne.s32.totalorder %s280, %s282
      %p286 = scmp.eq.s32.totalorder %s31, 0
      %p287 = por %p285, %p286
      %p288 = scmp.ne.s32.totalorder %s280, %s282
      %p289 = scmp.eq.s32.totalorder %s36, 1
      %p290 = por %p288, %p289
      %p291 = scmp.ne.s32.totalorder %s282, %s283
      %p292 = scmp.eq.s32.totalorder %s36, 0
      %p293 = por %p291, %p292
      %p294 = scmp.ne.s32.totalorder %s282, %s283
      %p295 = scmp.eq.s32.totalorder %s37, 1
      %p296 = por %p294, %p295
      %p298 = scmp.ne.s32.totalorder %s283, %s297
      %p299 = scmp.eq.s32.totalorder %s37, 0
      %p300 = por %p298, %p299
      %s302 = sadd.s32 %s301, 1
      %p305 = scmp.eq.s32.totalorder %s31, 1
      %p306 = scmp.ne.s32.totalorder %s301, %s303
      %p307 = scmp.eq.s32.totalorder %s31, 0
      %p308 = por %p306, %p307
      %p309 = scmp.ne.s32.totalorder %s301, %s303
      %p310 = scmp.eq.s32.totalorder %s36, 1
      %p311 = por %p309, %p310
      %p312 = scmp.ne.s32.totalorder %s303, %s304
      %p313 = scmp.eq.s32.totalorder %s36, 0
      %p314 = por %p312, %p313
      %p315 = scmp.ne.s32.totalorder %s303, %s304
      %p316 = scmp.eq.s32.totalorder %s37, 1
      %p317 = por %p315, %p316
      %p319 = scmp.ne.s32.totalorder %s304, %s318
      %p320 = scmp.eq.s32.totalorder %s37, 0
      %p321 = por %p319, %p320
      %s323 = sadd.s32 %s322, 1
      %p326 = scmp.eq.s32.totalorder %s31, 1
      %p327 = scmp.ne.s32.totalorder %s322, %s324
      %p328 = scmp.eq.s32.totalorder %s31, 0
      %p329 = por %p327, %p328
      %p330 = scmp.ne.s32.totalorder %s322, %s324
      %p331 = scmp.eq.s32.totalorder %s36, 1
      %p332 = por %p330, %p331
      %p333 = scmp.ne.s32.totalorder %s324, %s325
      %p334 = scmp.eq.s32.totalorder %s36, 0
      %p335 = por %p333, %p334
      %p336 = scmp.ne.s32.totalorder %s324, %s325
      %p337 = scmp.eq.s32.totalorder %s37, 1
      %p338 = por %p336, %p337
      %p340 = scmp.ne.s32.totalorder %s325, %s339
      %p341 = scmp.eq.s32.totalorder %s37, 0
      %p342 = por %p340, %p341
      %s344 = sadd.s32 %s343, 1
      %p347 = scmp.eq.s32.totalorder %s31, 1
      %p348 = scmp.ne.s32.totalorder %s343, %s345
      %p349 = scmp.eq.s32.totalorder %s31, 0
      %p350 = por %p348, %p349
      %p351 = scmp.ne.s32.totalorder %s343, %s345
      %p352 = scmp.eq.s32.totalorder %s36, 1
      %p353 = por %p351, %p352
      %p354 = scmp.ne.s32.totalorder %s345, %s346
      %p355 = scmp.eq.s32.totalorder %s36, 0
      %p356 = por %p354, %p355
      %p357 = scmp.ne.s32.totalorder %s345, %s346
      %p358 = scmp.eq.s32.totalorder %s37, 1
      %p359 = por %p357, %p358
      %p361 = scmp.ne.s32.totalorder %s346, %s360
      %p362 = scmp.eq.s32.totalorder %s37, 0
      %p363 = por %p361, %p362
      %s365 = sadd.s32 %s364, 1
      %p368 = scmp.eq.s32.totalorder %s31, 1
      %p369 = scmp.ne.s32.totalorder %s364, %s366
      %p370 = scmp.eq.s32.totalorder %s31, 0
      %p371 = por %p369, %p370
      %p372 = scmp.ne.s32.totalorder %s364, %s366
      %p373 = scmp.eq.s32.totalorder %s36, 1
      %p374 = por %p372, %p373
      %p375 = scmp.ne.s32.totalorder %s366, %s367
      %p376 = scmp.eq.s32.totalorder %s36, 0
      %p377 = por %p375, %p376
      %p378 = scmp.ne.s32.totalorder %s366, %s367
      %p379 = scmp.eq.s32.totalorder %s37, 1
      %p380 = por %p378, %p379
      %p382 = scmp.ne.s32.totalorder %s367, %s381
      %p383 = scmp.eq.s32.totalorder %s37, 0
      %p384 = por %p382, %p383
      %s386 = sadd.s32 %s385, 1
      %p389 = scmp.eq.s32.totalorder %s31, 1
      %p390 = scmp.ne.s32.totalorder %s385, %s387
      %p391 = scmp.eq.s32.totalorder %s31, 0
      %p392 = por %p390, %p391
      %p393 = scmp.ne.s32.totalorder %s385, %s387
      %p394 = scmp.eq.s32.totalorder %s36, 1
      %p395 = por %p393, %p394
      %p396 = scmp.ne.s32.totalorder %s387, %s388
      %p397 = scmp.eq.s32.totalorder %s36, 0
      %p398 = por %p396, %p397
      %p399 = scmp.ne.s32.totalorder %s387, %s388
      %p400 = scmp.eq.s32.totalorder %s37, 1
      %p401 = por %p399, %p400
      %p403 = scmp.ne.s32.totalorder %s388, %s402
      %p404 = scmp.eq.s32.totalorder %s37, 0
      %p405 = por %p403, %p404
      %s407 = sadd.s32 %s406, 1
      %p410 = scmp.eq.s32.totalorder %s31, 1
      %p411 = scmp.ne.s32.totalorder %s406, %s408
      %p412 = scmp.eq.s32.totalorder %s31, 0
      %p413 = por %p411, %p412
      %p414 = scmp.ne.s32.totalorder %s406, %s408
      %p415 = scmp.eq.s32.totalorder %s36, 1
      %p416 = por %p414, %p415
      %p417 = scmp.ne.s32.totalorder %s408, %s409
      %p418 = scmp.eq.s32.totalorder %s36, 0
      %p419 = por %p417, %p418
      %p420 = scmp.ne.s32.totalorder %s408, %s409
      %p421 = scmp.eq.s32.totalorder %s37, 1
      %p422 = por %p420, %p421
      %p424 = scmp.ne.s32.totalorder %s409, %s423
      %p425 = scmp.eq.s32.totalorder %s37, 0
      %p426 = por %p424, %p425
      %s428 = sadd.s32 %s427, 1
      %p431 = scmp.eq.s32.totalorder %s31, 1
      %p432 = scmp.ne.s32.totalorder %s427, %s429
      %p433 = scmp.eq.s32.totalorder %s31, 0
      %p434 = por %p432, %p433
      %p435 = scmp.ne.s32.totalorder %s427, %s429
      %p436 = scmp.eq.s32.totalorder %s36, 1
      %p437 = por %p435, %p436
      %p438 = scmp.ne.s32.totalorder %s429, %s430
      %p439 = scmp.eq.s32.totalorder %s36, 0
      %p440 = por %p438, %p439
      %p441 = scmp.ne.s32.totalorder %s429, %s430
      %p442 = scmp.eq.s32.totalorder %s37, 1
      %p443 = por %p441, %p442
      %p445 = scmp.ne.s32.totalorder %s430, %s444
      %p446 = scmp.eq.s32.totalorder %s37, 0
      %p447 = por %p445, %p446
      %s449 = sadd.s32 %s448, 1
      %p452 = scmp.eq.s32.totalorder %s31, 1
      %p453 = scmp.ne.s32.totalorder %s448, %s450
      %p454 = scmp.eq.s32.totalorder %s31, 0
      %p455 = por %p453, %p454
      %p456 = scmp.ne.s32.totalorder %s448, %s450
      %p457 = scmp.eq.s32.totalorder %s36, 1
      %p458 = por %p456, %p457
      %p459 = scmp.ne.s32.totalorder %s450, %s451
      %p460 = scmp.eq.s32.totalorder %s36, 0
      %p461 = por %p459, %p460
      %p462 = scmp.ne.s32.totalorder %s450, %s451
      %p463 = scmp.eq.s32.totalorder %s37, 1
      %p464 = por %p462, %p463
      %p466 = scmp.ne.s32.totalorder %s451, %s465
      %p467 = scmp.eq.s32.totalorder %s37, 0
      %p468 = por %p466, %p467
      %s470 = sadd.s32 %s469, 1
      %p473 = scmp.eq.s32.totalorder %s31, 1
      %p474 = scmp.ne.s32.totalorder %s469, %s471
      %p475 = scmp.eq.s32.totalorder %s31, 0
      %p476 = por %p474, %p475
      %p477 = scmp.ne.s32.totalorder %s469, %s471
      %p478 = scmp.eq.s32.totalorder %s36, 1
      %p479 = por %p477, %p478
      %p480 = scmp.ne.s32.totalorder %s471, %s472
      %p481 = scmp.eq.s32.totalorder %s36, 0
      %p482 = por %p480, %p481
      %p483 = scmp.ne.s32.totalorder %s471, %s472
      %p484 = scmp.eq.s32.totalorder %s37, 1
      %p485 = por %p483, %p484
      %p487 = scmp.ne.s32.totalorder %s472, %s486
      %p488 = scmp.eq.s32.totalorder %s37, 0
      %p489 = por %p487, %p488
      %s491 = sadd.s32 %s490, 1
      %p494 = scmp.eq.s32.totalorder %s31, 1
      %p495 = scmp.ne.s32.totalorder %s490, %s492
      %p496 = scmp.eq.s32.totalorder %s31, 0
      %p497 = por %p495, %p496
      %p498 = scmp.ne.s32.totalorder %s490, %s492
      %p499 = scmp.eq.s32.totalorder %s36, 1
      %p500 = por %p498, %p499
      %p501 = scmp.ne.s32.totalorder %s492, %s493
      %p502 = scmp.eq.s32.totalorder %s36, 0
      %p503 = por %p501, %p502
      %p504 = scmp.ne.s32.totalorder %s492, %s493
      %p505 = scmp.eq.s32.totalorder %s37, 1
      %p506 = por %p504, %p505
      %p508 = scmp.ne.s32.totalorder %s493, %s507
      %p509 = scmp.eq.s32.totalorder %s37, 0
      %p510 = por %p508, %p509
      %s511 = ssub.s32 %s31, %s38
      %p512 = scmp.eq.s32.totalorder %s511, 0
      %s514 = sadd.s32 %s513, 1
      %s515 = scalar_select %p512, %s513, %s514
      %p518 = pneg %p512
      %p519 = scmp.eq.s32.totalorder %s31, 1
      %p520 = por %p518, %p519
      %p521 = scmp.ne.s32.totalorder %s513, %s516
      %p522 = scmp.eq.s32.totalorder %s31, 0
      %p523 = por %p521, %p522
      %p524 = scmp.ne.s32.totalorder %s513, %s516
      %p525 = scmp.eq.s32.totalorder %s36, 1
      %p526 = por %p524, %p525
      %p527 = scmp.ne.s32.totalorder %s516, %s517
      %p528 = scmp.eq.s32.totalorder %s36, 0
      %p529 = por %p527, %p528
      %p530 = scmp.ne.s32.totalorder %s516, %s517
      %p531 = scmp.eq.s32.totalorder %s37, 1
      %p532 = por %p530, %p531
      %p534 = scmp.ne.s32.totalorder %s517, %s533
      %p535 = scmp.eq.s32.totalorder %s37, 0
      %p536 = por %p534, %p535
      %p537 = scmp.le.s32.totalorder 1, %s31
      %p538 = scmp.lt.s32.totalorder %s31, 3
      %p539 = pnand %p537, %p538
      %p540 = pneg %p539
      // Predicated region
      $region9: #{decoder_forward.3} parent=5 // pred_check
        _
      $region10: #{decoder_forward.3} parent=5 // pred_check_branch
        %542 = sbr.rel (%p539) target = $region12
      $region11: #{decoder_forward.3} parent=5 // pred_region
        %s543 = ssub.s32 %s31, 1
        // Predicated region
        $region13: #{decoder_forward.3} parent=11 // pred_check
          %p544 = pneg %p104
        $region14: #{decoder_forward.3} parent=11 // pred_check_branch
          %546 = sbr.rel (%p544) target = $region16
        $region15: #{decoder_forward.3} parent=11 // pred_region
          _
        $region16: #{decoder_forward.3} parent=11 // pred_fallthru
          _
        // Predicated region
        $region17: #{decoder_forward.3} parent=11 // pred_check
          %p547 = pneg %p125
        $region18: #{decoder_forward.3} parent=11 // pred_check_branch
          %549 = sbr.rel (%p547) target = $region20
        $region19: #{decoder_forward.3} parent=11 // pred_region
          _
        $region20: #{decoder_forward.3} parent=11 // pred_fallthru
          _
        // Predicated region
        $region21: #{decoder_forward.3} parent=11 // pred_check
          %p550 = pneg %p146
        $region22: #{decoder_forward.3} parent=11 // pred_check_branch
          %552 = sbr.rel (%p550) target = $region24
        $region23: #{decoder_forward.3} parent=11 // pred_region
          _
        $region24: #{decoder_forward.3} parent=11 // pred_fallthru
          _
        // Predicated region
        $region25: #{decoder_forward.3} parent=11 // pred_check
          %p553 = pneg %p167
        $region26: #{decoder_forward.3} parent=11 // pred_check_branch
          %555 = sbr.rel (%p553) target = $region28
        $region27: #{decoder_forward.3} parent=11 // pred_region
          _
        $region28: #{decoder_forward.3} parent=11 // pred_fallthru
          _
        // Predicated region
        $region29: #{decoder_forward.3} parent=11 // pred_check
          %p556 = pneg %p188
        $region30: #{decoder_forward.3} parent=11 // pred_check_branch
          %558 = sbr.rel (%p556) target = $region32
        $region31: #{decoder_forward.3} parent=11 // pred_region
          _
        $region32: #{decoder_forward.3} parent=11 // pred_fallthru
          _
        // Predicated region
        $region33: #{decoder_forward.3} parent=11 // pred_check
          %p559 = pneg %p209
        $region34: #{decoder_forward.3} parent=11 // pred_check_branch
          %561 = sbr.rel (%p559) target = $region36
        $region35: #{decoder_forward.3} parent=11 // pred_region
          _
        $region36: #{decoder_forward.3} parent=11 // pred_fallthru
          _
        // Predicated region
        $region37: #{decoder_forward.3} parent=11 // pred_check
          %p562 = pneg %p230
        $region38: #{decoder_forward.3} parent=11 // pred_check_branch
          %564 = sbr.rel (%p562) target = $region40
        $region39: #{decoder_forward.3} parent=11 // pred_region
          _
        $region40: #{decoder_forward.3} parent=11 // pred_fallthru
          _
        // Predicated region
        $region41: #{decoder_forward.3} parent=11 // pred_check
          %p565 = pneg %p251
        $region42: #{decoder_forward.3} parent=11 // pred_check_branch
          %567 = sbr.rel (%p565) target = $region44
        $region43: #{decoder_forward.3} parent=11 // pred_region
          _
        $region44: #{decoder_forward.3} parent=11 // pred_fallthru
          _
        // Predicated region
        $region45: #{decoder_forward.3} parent=11 // pred_check
          %p568 = pneg %p272
        $region46: #{decoder_forward.3} parent=11 // pred_check_branch
          %570 = sbr.rel (%p568) target = $region48
        $region47: #{decoder_forward.3} parent=11 // pred_region
          _
        $region48: #{decoder_forward.3} parent=11 // pred_fallthru
          _
        // Predicated region
        $region49: #{decoder_forward.3} parent=11 // pred_check
          %p571 = pneg %p293
        $region50: #{decoder_forward.3} parent=11 // pred_check_branch
          %573 = sbr.rel (%p571) target = $region52
        $region51: #{decoder_forward.3} parent=11 // pred_region
          _
        $region52: #{decoder_forward.3} parent=11 // pred_fallthru
          _
        // Predicated region
        $region53: #{decoder_forward.3} parent=11 // pred_check
          %p574 = pneg %p314
        $region54: #{decoder_forward.3} parent=11 // pred_check_branch
          %576 = sbr.rel (%p574) target = $region56
        $region55: #{decoder_forward.3} parent=11 // pred_region
          _
        $region56: #{decoder_forward.3} parent=11 // pred_fallthru
          _
        // Predicated region
        $region57: #{decoder_forward.3} parent=11 // pred_check
          %p577 = pneg %p335
        $region58: #{decoder_forward.3} parent=11 // pred_check_branch
          %579 = sbr.rel (%p577) target = $region60
        $region59: #{decoder_forward.3} parent=11 // pred_region
          _
        $region60: #{decoder_forward.3} parent=11 // pred_fallthru
          _
        // Predicated region
        $region61: #{decoder_forward.3} parent=11 // pred_check
          %p580 = pneg %p356
        $region62: #{decoder_forward.3} parent=11 // pred_check_branch
          %582 = sbr.rel (%p580) target = $region64
        $region63: #{decoder_forward.3} parent=11 // pred_region
          _
        $region64: #{decoder_forward.3} parent=11 // pred_fallthru
          _
        // Predicated region
        $region65: #{decoder_forward.3} parent=11 // pred_check
          %p583 = pneg %p377
        $region66: #{decoder_forward.3} parent=11 // pred_check_branch
          %585 = sbr.rel (%p583) target = $region68
        $region67: #{decoder_forward.3} parent=11 // pred_region
          _
        $region68: #{decoder_forward.3} parent=11 // pred_fallthru
          _
        // Predicated region
        $region69: #{decoder_forward.3} parent=11 // pred_check
          %p586 = pneg %p398
        $region70: #{decoder_forward.3} parent=11 // pred_check_branch
          %588 = sbr.rel (%p586) target = $region72
        $region71: #{decoder_forward.3} parent=11 // pred_region
          _
        $region72: #{decoder_forward.3} parent=11 // pred_fallthru
          _
        // Predicated region
        $region73: #{decoder_forward.3} parent=11 // pred_check
          %p589 = pneg %p419
        $region74: #{decoder_forward.3} parent=11 // pred_check_branch
          %591 = sbr.rel (%p589) target = $region76
        $region75: #{decoder_forward.3} parent=11 // pred_region
          _
        $region76: #{decoder_forward.3} parent=11 // pred_fallthru
          _
        // Predicated region
        $region77: #{decoder_forward.3} parent=11 // pred_check
          %p592 = pneg %p440
        $region78: #{decoder_forward.3} parent=11 // pred_check_branch
          %594 = sbr.rel (%p592) target = $region80
        $region79: #{decoder_forward.3} parent=11 // pred_region
          _
        $region80: #{decoder_forward.3} parent=11 // pred_fallthru
          _
        // Predicated region
        $region81: #{decoder_forward.3} parent=11 // pred_check
          %p595 = pneg %p461
        $region82: #{decoder_forward.3} parent=11 // pred_check_branch
          %597 = sbr.rel (%p595) target = $region84
        $region83: #{decoder_forward.3} parent=11 // pred_region
          _
        $region84: #{decoder_forward.3} parent=11 // pred_fallthru
          _
        // Predicated region
        $region85: #{decoder_forward.3} parent=11 // pred_check
          %p598 = pneg %p482
        $region86: #{decoder_forward.3} parent=11 // pred_check_branch
          %600 = sbr.rel (%p598) target = $region88
        $region87: #{decoder_forward.3} parent=11 // pred_region
          _
        $region88: #{decoder_forward.3} parent=11 // pred_fallthru
          _
        // Predicated region
        $region89: #{decoder_forward.3} parent=11 // pred_check
          %p601 = pneg %p503
        $region90: #{decoder_forward.3} parent=11 // pred_check_branch
          %603 = sbr.rel (%p601) target = $region92
        $region91: #{decoder_forward.3} parent=11 // pred_region
          _
        $region92: #{decoder_forward.3} parent=11 // pred_fallthru
          _
      $region12: #{decoder_forward.3} parent=5 // pred_fallthru
        _
      %p604 = scmp.lt.s32.totalorder %s31, 2
      // Predicated region
      $region93: #{decoder_forward.3} parent=5 // pred_check
        %p605 = pneg %p604
      $region94: #{decoder_forward.3} parent=5 // pred_check_branch
        %607 = sbr.rel (%p605) target = $region96
      $region95: #{decoder_forward.3} parent=5 // pred_region
        // Predicated region
        $region97: #{decoder_forward.3} parent=95 // pred_check
          %p608 = pneg %p51
        $region98: #{decoder_forward.3} parent=95 // pred_check_branch
          %610 = sbr.rel (%p608) target = $region100
        $region99: #{decoder_forward.3} parent=95 // pred_region
          %p611 = scmp.lt.s32.totalorder %s31, 1
          %s612 = scalar_select %p611, %s31, 1
          %s613 = smul.addr %s612, 2
          %s614 = smul.addr %s613, 4
          %s615 = scalar_lea.vmem %s0, %s614
        $region100: #{decoder_forward.3} parent=95 // pred_fallthru
          _
        // Predicated region
        $region101: #{decoder_forward.3} parent=95 // pred_check
          %p616 = pneg %p77
        $region102: #{decoder_forward.3} parent=95 // pred_check_branch
          %618 = sbr.rel (%p616) target = $region104
        $region103: #{decoder_forward.3} parent=95 // pred_region
          %p619 = scmp.lt.s32.totalorder %s31, 1
          %s620 = scalar_select %p619, %s31, 1
          %s621 = smul.addr %s620, 2
          %s622 = smul.addr %s621, 4
          %s623 = scalar_lea.vmem %s1, %s622
        $region104: #{decoder_forward.3} parent=95 // pred_fallthru
          _
      $region96: #{decoder_forward.3} parent=5 // pred_fallthru
        _
      %p624 = scmp.le.s32.totalorder 1, %s31
      %p625 = scmp.lt.s32.totalorder %s31, 3
      %p626 = pnand %p624, %p625
      %p627 = pneg %p626
      // Predicated region
      $region105: #{decoder_forward.3} parent=5 // pred_check
        _
      $region106: #{decoder_forward.3} parent=5 // pred_check_branch
        %629 = sbr.rel (%p626) target = $region108
      $region107: #{decoder_forward.3} parent=5 // pred_region
        %s630 = ssub.s32 %s31, 1
        %p631 = scmp.lt.s32.totalorder %s36, 1
        %s632 = scalar_select %p631, %s36, 1
        %s633 = smul.addr %s632, 2
        %s634 = smul.addr %s633, 4
        %s635 = scalar_lea.vmem %s0, %s634
        %p636 = pneg %p57
        %p637 = pneg %p54
        %p638 = scmp.lt.s32.totalorder %s36, 1
        %s639 = scalar_select %p638, %s36, 1
        %s640 = smul.addr %s639, 2
        %s641 = smul.addr %s640, 4
        %s642 = scalar_lea.vmem %s1, %s641
        %p643 = pneg %p83
        %p644 = pneg %p80
        %p645 = pneg %p104
        %p646 = pneg %p101
        %p647 = pneg %p125
        %p648 = pneg %p122
        %p649 = pneg %p146
        %p650 = pneg %p143
        %p651 = pneg %p167
        %p652 = pneg %p164
        %p653 = pneg %p188
        %p654 = pneg %p185
        %p655 = pneg %p209
        %p656 = pneg %p206
        %p657 = pneg %p230
        %p658 = pneg %p227
        %p659 = pneg %p251
        %p660 = pneg %p248
        %p661 = pneg %p272
        %p662 = pneg %p269
        %p663 = pneg %p293
        %p664 = pneg %p290
        %p665 = pneg %p314
        %p666 = pneg %p311
        %p667 = pneg %p335
        %p668 = pneg %p332
        %p669 = pneg %p356
        %p670 = pneg %p353
        %p671 = pneg %p377
        %p672 = pneg %p374
        %p673 = pneg %p398
        %p674 = pneg %p395
        %p675 = pneg %p419
        %p676 = pneg %p416
        %p677 = pneg %p440
        %p678 = pneg %p437
        %p679 = pneg %p461
        %p680 = pneg %p458
        %p681 = pneg %p482
        %p682 = pneg %p479
        %p683 = pneg %p503
        %p684 = pneg %p500
        %p685 = pneg %p529
        %p686 = pneg %p526
        %s687 = sand.u32 %s516, 1
        %s688 = scalar_lea.sflag [#allocation3], %s687
        %s689 = sand.u32 %s516, 1
        %s690 = smul.addr %s689, 8
        %s691 = scalar_lea.vmem [#allocation2], %s690
        %p692 = scmp.lt.s32.totalorder %s36, 1
        %s693 = scalar_select %p692, %s36, 1
        %s694 = smul.addr %s693, 2
        %s695 = smul.addr %s694, 4
        %s696 = scalar_lea.vmem %s0, %s695
        %p697 = scmp.lt.s32.totalorder %s36, 1
        %s698 = scalar_select %p697, %s36, 1
        %s699 = smul.addr %s698, 2
        %s700 = smul.addr %s699, 4
        %s701 = scalar_lea.vmem %s1, %s700
        %v703 = vld [vmem:[%s696] sm:$0xff]
        %v704 = vld [vmem:[%s701] sm:$0xff]
        %v705 = vld [vmem:[%s2] sm:$0xff]
        %v706 = vld [vmem:[%s2 + $0x8] sm:$0xff]
        %v707 = vld [vmem:[%s2 + $0x10] sm:$0xff]
        %v708 = vld [vmem:[%s2 + $0x18] sm:$0xff]
        %v709 = vld [vmem:[%s2 + $0x20] sm:$0xff]
        %v710 = vld [vmem:[%s2 + $0x28] sm:$0xff]
        %v711 = vld [vmem:[%s2 + $0x30] sm:$0xff]
        %v712 = vld [vmem:[%s2 + $0x38] sm:$0xff]
        %v713 = vld [vmem:[%s2 + $0x40] sm:$0xff]
        %v714 = vld [vmem:[%s2 + $0x48] sm:$0xff]
        %v715 = vld [vmem:[%s2 + $0x50] sm:$0xff]
        %v716 = vld [vmem:[%s2 + $0x58] sm:$0xff]
        %v717 = vld [vmem:[%s2 + $0x60] sm:$0xff]
        %v718 = vld [vmem:[%s2 + $0x68] sm:$0xff]
        %v719 = vld [vmem:[%s2 + $0x70] sm:$0xff]
        %v720 = vld [vmem:[%s2 + $0x78] sm:$0xff]
        %v721 = vld [vmem:[%s2 + $0x80] sm:$0xff]
        %v722 = vld [vmem:[%s2 + $0x88] sm:$0xff]
        %v723 = vld [vmem:[%s2 + $0x90] sm:$0xff]
        %v724 = vld [vmem:[%s2 + $0x98] sm:$0xff]
        %v725 = vld [vmem:[%s2 + $0xa0] sm:$0xff]
        %v726 = vld [vmem:[%s2 + $0xa8] sm:$0xff]
        %v727 = vld [vmem:[%s2 + $0xb0] sm:$0xff]
        %v728 = vld [vmem:[%s2 + $0xb8] sm:$0xff]
        %v729 = vld [vmem:[%s2 + $0xc0] sm:$0xff]
        %v730 = vld [vmem:[%s2 + $0xc8] sm:$0xff]
        %v731 = vld [vmem:[%s2 + $0xd0] sm:$0xff]
        %v732 = vld [vmem:[%s2 + $0xd8] sm:$0xff]
        %v733 = vld [vmem:[%s2 + $0xe0] sm:$0xff]
        %v734 = vld [vmem:[%s2 + $0xe8] sm:$0xff]
        %v735 = vld [vmem:[%s2 + $0xf0] sm:$0xff]
        %v736 = vld [vmem:[%s2 + $0xf8] sm:$0xff]
        %v737 = vld [vmem:[%s2 + $0x100] sm:$0xff]
        %v738 = vld [vmem:[%s2 + $0x108] sm:$0xff]
        %v739 = vld [vmem:[%s2 + $0x110] sm:$0xff]
        %v740 = vld [vmem:[%s2 + $0x118] sm:$0xff]
        %v741 = vld [vmem:[%s2 + $0x120] sm:$0xff]
        %v742 = vld [vmem:[%s2 + $0x128] sm:$0xff]
        %v743 = vld [vmem:[%s2 + $0x130] sm:$0xff]
        %v744 = vld [vmem:[%s2 + $0x138] sm:$0xff]
        %v745 = vld [vmem:[%s2 + $0x140] sm:$0xff]
        %v746 = vld [vmem:[%s2 + $0x148] sm:$0xff]
        %v747 = vld [vmem:[%s2 + $0x150] sm:$0xff]
        %v748 = vld [vmem:[%s2 + $0x158] sm:$0xff]
        %v749 = vld [vmem:[%s2 + $0x160] sm:$0xff]
        %v750 = vld [vmem:[%s2 + $0x168] sm:$0xff]
        %v751 = vld [vmem:[%s2 + $0x170] sm:$0xff]
        %v752 = vld [vmem:[%s2 + $0x178] sm:$0xff]
        %v753 = vld [vmem:[%s2 + $0x180] sm:$0xff]
        %v754 = vld [vmem:[%s2 + $0x188] sm:$0xff]
        %v755 = vld [vmem:[%s2 + $0x190] sm:$0xff]
        %v756 = vld [vmem:[%s2 + $0x198] sm:$0xff]
        %v757 = vld [vmem:[%s2 + $0x1a0] sm:$0xff]
        %v758 = vld [vmem:[%s2 + $0x1a8] sm:$0xff]
        %v759 = vld [vmem:[%s2 + $0x1b0] sm:$0xff]
        %v760 = vld [vmem:[%s2 + $0x1b8] sm:$0xff]
        %v761 = vld [vmem:[%s2 + $0x1c0] sm:$0xff]
        %v762 = vld [vmem:[%s2 + $0x1c8] sm:$0xff]
        %v763 = vld [vmem:[%s2 + $0x1d0] sm:$0xff]
        %v764 = vld [vmem:[%s2 + $0x1d8] sm:$0xff]
        %v765 = vld [vmem:[%s2 + $0x1e0] sm:$0xff]
        %v766 = vld [vmem:[%s2 + $0x1e8] sm:$0xff]
        %v767 = vld [vmem:[%s2 + $0x1f0] sm:$0xff]
        %v768 = vld [vmem:[%s2 + $0x1f8] sm:$0xff]
        %v769 = vld [vmem:[%s2 + $0x200] sm:$0xff]
        %v770 = vld [vmem:[%s2 + $0x208] sm:$0xff]
        %v771 = vld [vmem:[%s2 + $0x210] sm:$0xff]
        %v772 = vld [vmem:[%s2 + $0x218] sm:$0xff]
        %v773 = vld [vmem:[%s2 + $0x220] sm:$0xff]
        %v774 = vld [vmem:[%s2 + $0x228] sm:$0xff]
        %v775 = vld [vmem:[%s2 + $0x230] sm:$0xff]
        %v776 = vld [vmem:[%s2 + $0x238] sm:$0xff]
        %v777 = vld [vmem:[%s2 + $0x240] sm:$0xff]
        %v778 = vld [vmem:[%s2 + $0x248] sm:$0xff]
        %v779 = vld [vmem:[%s2 + $0x250] sm:$0xff]
        %v780 = vld [vmem:[%s2 + $0x258] sm:$0xff]
        %v781 = vld [vmem:[%s2 + $0x260] sm:$0xff]
        %v782 = vld [vmem:[%s2 + $0x268] sm:$0xff]
        %v783 = vld [vmem:[%s2 + $0x270] sm:$0xff]
        %v784 = vld [vmem:[%s2 + $0x278] sm:$0xff]
        %v785 = vld [vmem:[%s2 + $0x280] sm:$0xff]
        %v786 = vld [vmem:[%s2 + $0x288] sm:$0xff]
        %v787 = vld [vmem:[%s2 + $0x290] sm:$0xff]
        %v788 = vld [vmem:[%s2 + $0x298] sm:$0xff]
        %v789 = vld [vmem:[%s2 + $0x2a0] sm:$0xff]
        %v790 = vld [vmem:[%s2 + $0x2a8] sm:$0xff]
        %v791 = vld [vmem:[%s2 + $0x2b0] sm:$0xff]
        %v792 = vld [vmem:[%s2 + $0x2b8] sm:$0xff]
        %v793 = vld [vmem:[%s2 + $0x2c0] sm:$0xff]
        %v794 = vld [vmem:[%s2 + $0x2c8] sm:$0xff]
        %v795 = vld [vmem:[%s2 + $0x2d0] sm:$0xff]
        %v796 = vld [vmem:[%s2 + $0x2d8] sm:$0xff]
        %v797 = vld [vmem:[%s2 + $0x2e0] sm:$0xff]
        %v798 = vld [vmem:[%s2 + $0x2e8] sm:$0xff]
        %v799 = vld [vmem:[%s2 + $0x2f0] sm:$0xff]
        %v800 = vld [vmem:[%s2 + $0x2f8] sm:$0xff]
        %v801 = vld [vmem:[%s3] sm:$0x3f]
        %v803 = vperm.slane %v801, 0
        %v804 = vperm.slane %v801, 1
        %v805 = vperm.slane %v801, 2
        %v806 = vperm.slane %v801, 3
        %v807 = vperm.slane %v801, 4
        %v808 = vperm.slane %v801, 5
        %v816 = vunpack.c.l.b16 %v704
        %v817 = vunpack.c.h.b16 %v704
        %v818 = vpack.c.b16 %v816, %v816
        %v819 = vpack.c.b16 %v817, %v817
        %v918 = vunpack.c.l.b16 %v705
        %v919 = vunpack.c.h.b16 %v705
        %v920 = vunpack.c.l.b16 %v706
        %v921 = vunpack.c.h.b16 %v706
        %v922 = vunpack.c.l.b16 %v707
        %v923 = vunpack.c.h.b16 %v707
        %v924 = vunpack.c.l.b16 %v708
        %v925 = vunpack.c.h.b16 %v708
        %v926 = vunpack.c.l.b16 %v709
        %v927 = vunpack.c.h.b16 %v709
        %v928 = vunpack.c.l.b16 %v710
        %v929 = vunpack.c.h.b16 %v710
        %v930 = vunpack.c.l.b16 %v711
        %v931 = vunpack.c.h.b16 %v711
        %v932 = vunpack.c.l.b16 %v712
        %v933 = vunpack.c.h.b16 %v712
        %v934 = vunpack.c.l.b16 %v713
        %v935 = vunpack.c.h.b16 %v713
        %v936 = vunpack.c.l.b16 %v714
        %v937 = vunpack.c.h.b16 %v714
        %v938 = vunpack.c.l.b16 %v715
        %v939 = vunpack.c.h.b16 %v715
        %v940 = vunpack.c.l.b16 %v716
        %v941 = vunpack.c.h.b16 %v716
        %v942 = vunpack.c.l.b16 %v717
        %v943 = vunpack.c.h.b16 %v717
        %v944 = vunpack.c.l.b16 %v718
        %v945 = vunpack.c.h.b16 %v718
        %v946 = vunpack.c.l.b16 %v719
        %v947 = vunpack.c.h.b16 %v719
        %v948 = vunpack.c.l.b16 %v720
        %v949 = vunpack.c.h.b16 %v720
        %v950 = vunpack.c.l.b16 %v721
        %v951 = vunpack.c.h.b16 %v721
        %v952 = vunpack.c.l.b16 %v722
        %v953 = vunpack.c.h.b16 %v722
        %v954 = vunpack.c.l.b16 %v723
        %v955 = vunpack.c.h.b16 %v723
        %v956 = vunpack.c.l.b16 %v724
        %v957 = vunpack.c.h.b16 %v724
        %v958 = vunpack.c.l.b16 %v725
        %v959 = vunpack.c.h.b16 %v725
        %v960 = vunpack.c.l.b16 %v726
        %v961 = vunpack.c.h.b16 %v726
        %v962 = vunpack.c.l.b16 %v727
        %v963 = vunpack.c.h.b16 %v727
        %v964 = vunpack.c.l.b16 %v728
        %v965 = vunpack.c.h.b16 %v728
        %v966 = vunpack.c.l.b16 %v729
        %v967 = vunpack.c.h.b16 %v729
        %v968 = vunpack.c.l.b16 %v730
        %v969 = vunpack.c.h.b16 %v730
        %v970 = vunpack.c.l.b16 %v731
        %v971 = vunpack.c.h.b16 %v731
        %v972 = vunpack.c.l.b16 %v732
        %v973 = vunpack.c.h.b16 %v732
        %v974 = vunpack.c.l.b16 %v733
        %v975 = vunpack.c.h.b16 %v733
        %v976 = vunpack.c.l.b16 %v734
        %v977 = vunpack.c.h.b16 %v734
        %v978 = vunpack.c.l.b16 %v735
        %v979 = vunpack.c.h.b16 %v735
        %v980 = vunpack.c.l.b16 %v736
        %v981 = vunpack.c.h.b16 %v736
        %v982 = vunpack.c.l.b16 %v737
        %v983 = vunpack.c.h.b16 %v737
        %v984 = vunpack.c.l.b16 %v738
        %v985 = vunpack.c.h.b16 %v738
        %v986 = vunpack.c.l.b16 %v739
        %v987 = vunpack.c.h.b16 %v739
        %v988 = vunpack.c.l.b16 %v740
        %v989 = vunpack.c.h.b16 %v740
        %v990 = vunpack.c.l.b16 %v741
        %v991 = vunpack.c.h.b16 %v741
        %v992 = vunpack.c.l.b16 %v742
        %v993 = vunpack.c.h.b16 %v742
        %v994 = vunpack.c.l.b16 %v743
        %v995 = vunpack.c.h.b16 %v743
        %v996 = vunpack.c.l.b16 %v744
        %v997 = vunpack.c.h.b16 %v744
        %v998 = vunpack.c.l.b16 %v745
        %v999 = vunpack.c.h.b16 %v745
        %v1000 = vunpack.c.l.b16 %v746
        %v1001 = vunpack.c.h.b16 %v746
        %v1002 = vunpack.c.l.b16 %v747
        %v1003 = vunpack.c.h.b16 %v747
        %v1004 = vunpack.c.l.b16 %v748
        %v1005 = vunpack.c.h.b16 %v748
        %v1006 = vunpack.c.l.b16 %v749
        %v1007 = vunpack.c.h.b16 %v749
        %v1008 = vunpack.c.l.b16 %v750
        %v1009 = vunpack.c.h.b16 %v750
        %v1010 = vunpack.c.l.b16 %v751
        %v1011 = vunpack.c.h.b16 %v751
        %v1012 = vunpack.c.l.b16 %v752
        %v1013 = vunpack.c.h.b16 %v752
        %v1014 = vunpack.c.l.b16 %v753
        %v1015 = vunpack.c.h.b16 %v753
        %v1016 = vunpack.c.l.b16 %v754
        %v1017 = vunpack.c.h.b16 %v754
        %v1018 = vunpack.c.l.b16 %v755
        %v1019 = vunpack.c.h.b16 %v755
        %v1020 = vunpack.c.l.b16 %v756
        %v1021 = vunpack.c.h.b16 %v756
        %v1022 = vunpack.c.l.b16 %v757
        %v1023 = vunpack.c.h.b16 %v757
        %v1024 = vunpack.c.l.b16 %v758
        %v1025 = vunpack.c.h.b16 %v758
        %v1026 = vunpack.c.l.b16 %v759
        %v1027 = vunpack.c.h.b16 %v759
        %v1028 = vunpack.c.l.b16 %v760
        %v1029 = vunpack.c.h.b16 %v760
        %v1030 = vunpack.c.l.b16 %v761
        %v1031 = vunpack.c.h.b16 %v761
        %v1032 = vunpack.c.l.b16 %v762
        %v1033 = vunpack.c.h.b16 %v762
        %v1034 = vunpack.c.l.b16 %v763
        %v1035 = vunpack.c.h.b16 %v763
        %v1036 = vunpack.c.l.b16 %v764
        %v1037 = vunpack.c.h.b16 %v764
        %v1038 = vunpack.c.l.b16 %v765
        %v1039 = vunpack.c.h.b16 %v765
        %v1040 = vunpack.c.l.b16 %v766
        %v1041 = vunpack.c.h.b16 %v766
        %v1042 = vunpack.c.l.b16 %v767
        %v1043 = vunpack.c.h.b16 %v767
        %v1044 = vunpack.c.l.b16 %v768
        %v1045 = vunpack.c.h.b16 %v768
        %v1046 = vunpack.c.l.b16 %v769
        %v1047 = vunpack.c.h.b16 %v769
        %v1048 = vunpack.c.l.b16 %v770
        %v1049 = vunpack.c.h.b16 %v770
        %v1050 = vunpack.c.l.b16 %v771
        %v1051 = vunpack.c.h.b16 %v771
        %v1052 = vunpack.c.l.b16 %v772
        %v1053 = vunpack.c.h.b16 %v772
        %v1054 = vunpack.c.l.b16 %v773
        %v1055 = vunpack.c.h.b16 %v773
        %v1056 = vunpack.c.l.b16 %v774
        %v1057 = vunpack.c.h.b16 %v774
        %v1058 = vunpack.c.l.b16 %v775
        %v1059 = vunpack.c.h.b16 %v775
        %v1060 = vunpack.c.l.b16 %v776
        %v1061 = vunpack.c.h.b16 %v776
        %v1062 = vunpack.c.l.b16 %v777
        %v1063 = vunpack.c.h.b16 %v777
        %v1064 = vunpack.c.l.b16 %v778
        %v1065 = vunpack.c.h.b16 %v778
        %v1066 = vunpack.c.l.b16 %v779
        %v1067 = vunpack.c.h.b16 %v779
        %v1068 = vunpack.c.l.b16 %v780
        %v1069 = vunpack.c.h.b16 %v780
        %v1070 = vunpack.c.l.b16 %v781
        %v1071 = vunpack.c.h.b16 %v781
        %v1072 = vunpack.c.l.b16 %v782
        %v1073 = vunpack.c.h.b16 %v782
        %v1074 = vunpack.c.l.b16 %v783
        %v1075 = vunpack.c.h.b16 %v783
        %v1076 = vunpack.c.l.b16 %v784
        %v1077 = vunpack.c.h.b16 %v784
        %v1078 = vunpack.c.l.b16 %v785
        %v1079 = vunpack.c.h.b16 %v785
        %v1080 = vunpack.c.l.b16 %v786
        %v1081 = vunpack.c.h.b16 %v786
        %v1082 = vunpack.c.l.b16 %v787
        %v1083 = vunpack.c.h.b16 %v787
        %v1084 = vunpack.c.l.b16 %v788
        %v1085 = vunpack.c.h.b16 %v788
        %v1086 = vunpack.c.l.b16 %v789
        %v1087 = vunpack.c.h.b16 %v789
        %v1088 = vunpack.c.l.b16 %v790
        %v1089 = vunpack.c.h.b16 %v790
        %v1090 = vunpack.c.l.b16 %v791
        %v1091 = vunpack.c.h.b16 %v791
        %v1092 = vunpack.c.l.b16 %v792
        %v1093 = vunpack.c.h.b16 %v792
        %v1094 = vunpack.c.l.b16 %v793
        %v1095 = vunpack.c.h.b16 %v793
        %v1096 = vunpack.c.l.b16 %v794
        %v1097 = vunpack.c.h.b16 %v794
        %v1098 = vunpack.c.l.b16 %v795
        %v1099 = vunpack.c.h.b16 %v795
        %v1100 = vunpack.c.l.b16 %v796
        %v1101 = vunpack.c.h.b16 %v796
        %v1102 = vunpack.c.l.b16 %v797
        %v1103 = vunpack.c.h.b16 %v797
        %v1104 = vunpack.c.l.b16 %v798
        %v1105 = vunpack.c.h.b16 %v798
        %v1106 = vunpack.c.l.b16 %v799
        %v1107 = vunpack.c.h.b16 %v799
        %v1108 = vunpack.c.l.b16 %v800
        %v1109 = vunpack.c.h.b16 %v800
        %v1110 = vpack.c.b16 %v924, %v918
        %v1111 = vpack.c.b16 %v925, %v919
        %v1112 = vpack.c.b16 %v926, %v920
        %v1113 = vpack.c.b16 %v927, %v921
        %v1114 = vpack.c.b16 %v928, %v922
        %v1115 = vpack.c.b16 %v929, %v923
        %v1116 = vpack.c.b16 %v936, %v930
        %v1117 = vpack.c.b16 %v937, %v931
        %v1118 = vpack.c.b16 %v938, %v932
        %v1119 = vpack.c.b16 %v939, %v933
        %v1120 = vpack.c.b16 %v940, %v934
        %v1121 = vpack.c.b16 %v941, %v935
        %v1122 = vpack.c.b16 %v948, %v942
        %v1123 = vpack.c.b16 %v949, %v943
        %v1124 = vpack.c.b16 %v950, %v944
        %v1125 = vpack.c.b16 %v951, %v945
        %v1126 = vpack.c.b16 %v952, %v946
        %v1127 = vpack.c.b16 %v953, %v947
        %v1128 = vpack.c.b16 %v960, %v954
        %v1129 = vpack.c.b16 %v961, %v955
        %v1130 = vpack.c.b16 %v962, %v956
        %v1131 = vpack.c.b16 %v963, %v957
        %v1132 = vpack.c.b16 %v964, %v958
        %v1133 = vpack.c.b16 %v965, %v959
        %v1134 = vpack.c.b16 %v972, %v966
        %v1135 = vpack.c.b16 %v973, %v967
        %v1136 = vpack.c.b16 %v974, %v968
        %v1137 = vpack.c.b16 %v975, %v969
        %v1138 = vpack.c.b16 %v976, %v970
        %v1139 = vpack.c.b16 %v977, %v971
        %v1140 = vpack.c.b16 %v984, %v978
        %v1141 = vpack.c.b16 %v985, %v979
        %v1142 = vpack.c.b16 %v986, %v980
        %v1143 = vpack.c.b16 %v987, %v981
        %v1144 = vpack.c.b16 %v988, %v982
        %v1145 = vpack.c.b16 %v989, %v983
        %v1146 = vpack.c.b16 %v996, %v990
        %v1147 = vpack.c.b16 %v997, %v991
        %v1148 = vpack.c.b16 %v998, %v992
        %v1149 = vpack.c.b16 %v999, %v993
        %v1150 = vpack.c.b16 %v1000, %v994
        %v1151 = vpack.c.b16 %v1001, %v995
        %v1152 = vpack.c.b16 %v1008, %v1002
        %v1153 = vpack.c.b16 %v1009, %v1003
        %v1154 = vpack.c.b16 %v1010, %v1004
        %v1155 = vpack.c.b16 %v1011, %v1005
        %v1156 = vpack.c.b16 %v1012, %v1006
        %v1157 = vpack.c.b16 %v1013, %v1007
        %v1158 = vpack.c.b16 %v1020, %v1014
        %v1159 = vpack.c.b16 %v1021, %v1015
        %v1160 = vpack.c.b16 %v1022, %v1016
        %v1161 = vpack.c.b16 %v1023, %v1017
        %v1162 = vpack.c.b16 %v1024, %v1018
        %v1163 = vpack.c.b16 %v1025, %v1019
        %v1164 = vpack.c.b16 %v1032, %v1026
        %v1165 = vpack.c.b16 %v1033, %v1027
        %v1166 = vpack.c.b16 %v1034, %v1028
        %v1167 = vpack.c.b16 %v1035, %v1029
        %v1168 = vpack.c.b16 %v1036, %v1030
        %v1169 = vpack.c.b16 %v1037, %v1031
        %v1170 = vpack.c.b16 %v1044, %v1038
        %v1171 = vpack.c.b16 %v1045, %v1039
        %v1172 = vpack.c.b16 %v1046, %v1040
        %v1173 = vpack.c.b16 %v1047, %v1041
        %v1174 = vpack.c.b16 %v1048, %v1042
        %v1175 = vpack.c.b16 %v1049, %v1043
        %v1176 = vpack.c.b16 %v1056, %v1050
        %v1177 = vpack.c.b16 %v1057, %v1051
        %v1178 = vpack.c.b16 %v1058, %v1052
        %v1179 = vpack.c.b16 %v1059, %v1053
        %v1180 = vpack.c.b16 %v1060, %v1054
        %v1181 = vpack.c.b16 %v1061, %v1055
        %v1182 = vpack.c.b16 %v1068, %v1062
        %v1183 = vpack.c.b16 %v1069, %v1063
        %v1184 = vpack.c.b16 %v1070, %v1064
        %v1185 = vpack.c.b16 %v1071, %v1065
        %v1186 = vpack.c.b16 %v1072, %v1066
        %v1187 = vpack.c.b16 %v1073, %v1067
        %v1188 = vpack.c.b16 %v1080, %v1074
        %v1189 = vpack.c.b16 %v1081, %v1075
        %v1190 = vpack.c.b16 %v1082, %v1076
        %v1191 = vpack.c.b16 %v1083, %v1077
        %v1192 = vpack.c.b16 %v1084, %v1078
        %v1193 = vpack.c.b16 %v1085, %v1079
        %v1194 = vpack.c.b16 %v1092, %v1086
        %v1195 = vpack.c.b16 %v1093, %v1087
        %v1196 = vpack.c.b16 %v1094, %v1088
        %v1197 = vpack.c.b16 %v1095, %v1089
        %v1198 = vpack.c.b16 %v1096, %v1090
        %v1199 = vpack.c.b16 %v1097, %v1091
        %v1200 = vpack.c.b16 %v1104, %v1098
        %v1201 = vpack.c.b16 %v1105, %v1099
        %v1202 = vpack.c.b16 %v1106, %v1100
        %v1203 = vpack.c.b16 %v1107, %v1101
        %v1204 = vpack.c.b16 %v1108, %v1102
        %v1205 = vpack.c.b16 %v1109, %v1103
        %1302 = vmatpush.bf16.msra.mxu0 %v1152
        %1303 = vmatpush.bf16.msra.mxu0 %v1146
        %1304 = vmatpush.bf16.msra.mxu0 %v1140
        %1305 = vmatpush.bf16.msra.mxu0 %v1134
        %1306 = vmatpush.bf16.msra.mxu0 %v1128
        %1307 = vmatpush.bf16.msra.mxu0 %v1122
        %1308 = vmatpush.bf16.msra.mxu0 %v1116
        %1309 = vmatpush.bf16.msra.mxu0 %v1110
        %1310 = vmatmul.bf16.gmra.mxu0 %v818
        %v1311 = vpop.f32.mrf.mxu0
        %v1312 = vadd.f32 %v803, %v1311
        %v1313 = vpop.f32.mrf.mxu0
        %1314 = vdwg.mxu0
        %1315 = vmatpush.bf16.msra.mxu0 %v1200
        %1316 = vmatpush.bf16.msra.mxu0 %v1194
        %1317 = vmatpush.bf16.msra.mxu0 %v1188
        %1318 = vmatpush.bf16.msra.mxu0 %v1182
        %1319 = vmatpush.bf16.msra.mxu0 %v1176
        %1320 = vmatpush.bf16.msra.mxu0 %v1170
        %1321 = vmatpush.bf16.msra.mxu0 %v1164
        %1322 = vmatpush.bf16.msra.mxu0 %v1158
        %1323 = vmatmul.bf16.gmra.mxu0 %v819
        %v1324 = vpop.f32.mrf.mxu0
        %v1325 = vadd.f32 %v1312, %v1324
        %v1326 = vpop.f32.mrf.mxu0
        %1327 = vdwg.mxu0
        %1328 = vmatpush.bf16.msra.mxu0 %v1153
        %1329 = vmatpush.bf16.msra.mxu0 %v1147
        %1330 = vmatpush.bf16.msra.mxu0 %v1141
        %1331 = vmatpush.bf16.msra.mxu0 %v1135
        %1332 = vmatpush.bf16.msra.mxu0 %v1129
        %1333 = vmatpush.bf16.msra.mxu0 %v1123
        %1334 = vmatpush.bf16.msra.mxu0 %v1117
        %1335 = vmatpush.bf16.msra.mxu0 %v1111
        %1336 = vmatmul.bf16.gmra.mxu0 %v818
        %v1337 = vpop.f32.mrf.mxu0
        %v1338 = vadd.f32 %v804, %v1337
        %v1339 = vpop.f32.mrf.mxu0
        %1340 = vdwg.mxu0
        %1341 = vmatpush.bf16.msra.mxu0 %v1201
        %1342 = vmatpush.bf16.msra.mxu0 %v1195
        %1343 = vmatpush.bf16.msra.mxu0 %v1189
        %1344 = vmatpush.bf16.msra.mxu0 %v1183
        %1345 = vmatpush.bf16.msra.mxu0 %v1177
        %1346 = vmatpush.bf16.msra.mxu0 %v1171
        %1347 = vmatpush.bf16.msra.mxu0 %v1165
        %1348 = vmatpush.bf16.msra.mxu0 %v1159
        %1349 = vmatmul.bf16.gmra.mxu0 %v819
        %v1350 = vpop.f32.mrf.mxu0
        %v1351 = vadd.f32 %v1338, %v1350
        %v1352 = vpop.f32.mrf.mxu0
        %1353 = vdwg.mxu0
        %1354 = vmatpush.bf16.msra.mxu0 %v1154
        %1355 = vmatpush.bf16.msra.mxu0 %v1148
        %1356 = vmatpush.bf16.msra.mxu0 %v1142
        %1357 = vmatpush.bf16.msra.mxu0 %v1136
        %1358 = vmatpush.bf16.msra.mxu0 %v1130
        %1359 = vmatpush.bf16.msra.mxu0 %v1124
        %1360 = vmatpush.bf16.msra.mxu0 %v1118
        %1361 = vmatpush.bf16.msra.mxu0 %v1112
        %1362 = vmatmul.bf16.gmra.mxu0 %v818
        %v1363 = vpop.f32.mrf.mxu0
        %v1364 = vadd.f32 %v805, %v1363
        %v1365 = vpop.f32.mrf.mxu0
        %1366 = vdwg.mxu0
        %1367 = vmatpush.bf16.msra.mxu0 %v1202
        %1368 = vmatpush.bf16.msra.mxu0 %v1196
        %1369 = vmatpush.bf16.msra.mxu0 %v1190
        %1370 = vmatpush.bf16.msra.mxu0 %v1184
        %1371 = vmatpush.bf16.msra.mxu0 %v1178
        %1372 = vmatpush.bf16.msra.mxu0 %v1172
        %1373 = vmatpush.bf16.msra.mxu0 %v1166
        %1374 = vmatpush.bf16.msra.mxu0 %v1160
        %1375 = vmatmul.bf16.gmra.mxu0 %v819
        %v1376 = vpop.f32.mrf.mxu0
        %v1377 = vadd.f32 %v1364, %v1376
        %v1378 = vpop.f32.mrf.mxu0
        %1379 = vdwg.mxu0
        %1380 = vmatpush.bf16.msra.mxu0 %v1155
        %1381 = vmatpush.bf16.msra.mxu0 %v1149
        %1382 = vmatpush.bf16.msra.mxu0 %v1143
        %1383 = vmatpush.bf16.msra.mxu0 %v1137
        %1384 = vmatpush.bf16.msra.mxu0 %v1131
        %1385 = vmatpush.bf16.msra.mxu0 %v1125
        %1386 = vmatpush.bf16.msra.mxu0 %v1119
        %1387 = vmatpush.bf16.msra.mxu0 %v1113
        %1388 = vmatmul.bf16.gmra.mxu0 %v818
        %v1389 = vpop.f32.mrf.mxu0
        %v1390 = vadd.f32 %v806, %v1389
        %v1391 = vpop.f32.mrf.mxu0
        %1392 = vdwg.mxu0
        %1393 = vmatpush.bf16.msra.mxu0 %v1203
        %1394 = vmatpush.bf16.msra.mxu0 %v1197
        %1395 = vmatpush.bf16.msra.mxu0 %v1191
        %1396 = vmatpush.bf16.msra.mxu0 %v1185
        %1397 = vmatpush.bf16.msra.mxu0 %v1179
        %1398 = vmatpush.bf16.msra.mxu0 %v1173
        %1399 = vmatpush.bf16.msra.mxu0 %v1167
        %1400 = vmatpush.bf16.msra.mxu0 %v1161
        %1401 = vmatmul.bf16.gmra.mxu0 %v819
        %v1402 = vpop.f32.mrf.mxu0
        %v1403 = vadd.f32 %v1390, %v1402
        %v1404 = vpop.f32.mrf.mxu0
        %1405 = vdwg.mxu0
        %1406 = vmatpush.bf16.msra.mxu0 %v1156
        %1407 = vmatpush.bf16.msra.mxu0 %v1150
        %1408 = vmatpush.bf16.msra.mxu0 %v1144
        %1409 = vmatpush.bf16.msra.mxu0 %v1138
        %1410 = vmatpush.bf16.msra.mxu0 %v1132
        %1411 = vmatpush.bf16.msra.mxu0 %v1126
        %1412 = vmatpush.bf16.msra.mxu0 %v1120
        %1413 = vmatpush.bf16.msra.mxu0 %v1114
        %1414 = vmatmul.bf16.gmra.mxu0 %v818
        %v1415 = vpop.f32.mrf.mxu0
        %v1416 = vadd.f32 %v807, %v1415
        %v1417 = vpop.f32.mrf.mxu0
        %1418 = vdwg.mxu0
        %1419 = vmatpush.bf16.msra.mxu0 %v1204
        %1420 = vmatpush.bf16.msra.mxu0 %v1198
        %1421 = vmatpush.bf16.msra.mxu0 %v1192
        %1422 = vmatpush.bf16.msra.mxu0 %v1186
        %1423 = vmatpush.bf16.msra.mxu0 %v1180
        %1424 = vmatpush.bf16.msra.mxu0 %v1174
        %1425 = vmatpush.bf16.msra.mxu0 %v1168
        %1426 = vmatpush.bf16.msra.mxu0 %v1162
        %1427 = vmatmul.bf16.gmra.mxu0 %v819
        %v1428 = vpop.f32.mrf.mxu0
        %v1429 = vadd.f32 %v1416, %v1428
        %v1430 = vpop.f32.mrf.mxu0
        %1431 = vdwg.mxu0
        %1432 = vmatpush.bf16.msra.mxu0 %v1157
        %1433 = vmatpush.bf16.msra.mxu0 %v1151
        %1434 = vmatpush.bf16.msra.mxu0 %v1145
        %1435 = vmatpush.bf16.msra.mxu0 %v1139
        %1436 = vmatpush.bf16.msra.mxu0 %v1133
        %1437 = vmatpush.bf16.msra.mxu0 %v1127
        %1438 = vmatpush.bf16.msra.mxu0 %v1121
        %1439 = vmatpush.bf16.msra.mxu0 %v1115
        %1440 = vmatmul.bf16.gmra.mxu0 %v818
        %v1441 = vpop.f32.mrf.mxu0
        %v1442 = vadd.f32 %v808, %v1441
        %v1443 = vpop.f32.mrf.mxu0
        %1444 = vdwg.mxu0
        %1445 = vmatpush.bf16.msra.mxu0 %v1205
        %1446 = vmatpush.bf16.msra.mxu0 %v1199
        %1447 = vmatpush.bf16.msra.mxu0 %v1193
        %1448 = vmatpush.bf16.msra.mxu0 %v1187
        %1449 = vmatpush.bf16.msra.mxu0 %v1181
        %1450 = vmatpush.bf16.msra.mxu0 %v1175
        %1451 = vmatpush.bf16.msra.mxu0 %v1169
        %1452 = vmatpush.bf16.msra.mxu0 %v1163
        %1453 = vmatmul.bf16.gmra.mxu0 %v819
        %v1454 = vpop.f32.mrf.mxu0
        %v1455 = vadd.f32 %v1442, %v1454
        %v1456 = vpop.f32.mrf.mxu0
        %1457 = vdwg.mxu0
        %v1458 = vpack.c.bf16 %v1351, %v1325
        %v1459 = vpack.c.bf16 %v1403, %v1377
        %v1460 = vpack.c.bf16 %v1455, %v1429
        %v1462 = vrot.slane %v1459, 4
        %v1465 = vrot.slane %v1460, 4
        %v1466 = vld [vmem:[%s6] sm:$0xff]
        %v1467 = vld [vmem:[%s6 + $0x8] sm:$0xff]
        %v1468 = vld [vmem:[%s6 + $0x10] sm:$0xff]
        %v1469 = vld [vmem:[%s6 + $0x18] sm:$0xff]
        %v1470 = vld [vmem:[%s6 + $0x20] sm:$0xff]
        %v1471 = vld [vmem:[%s6 + $0x28] sm:$0xff]
        %v1472 = vld [vmem:[%s6 + $0x30] sm:$0xff]
        %v1473 = vld [vmem:[%s6 + $0x38] sm:$0xff]
        %v1474 = vld [vmem:[%s6 + $0x40] sm:$0xff]
        %v1475 = vld [vmem:[%s6 + $0x48] sm:$0xff]
        %v1476 = vld [vmem:[%s6 + $0x50] sm:$0xff]
        %v1477 = vld [vmem:[%s6 + $0x58] sm:$0xff]
        %v1478 = vld [vmem:[%s6 + $0x60] sm:$0xff]
        %v1479 = vld [vmem:[%s6 + $0x68] sm:$0xff]
        %v1480 = vld [vmem:[%s6 + $0x70] sm:$0xff]
        %v1481 = vld [vmem:[%s6 + $0x78] sm:$0xff]
        %v1482 = vld [vmem:[%s6 + $0x80] sm:$0xff]
        %v1483 = vld [vmem:[%s6 + $0x88] sm:$0xff]
        %v1484 = vld [vmem:[%s6 + $0x90] sm:$0xff]
        %v1485 = vld [vmem:[%s6 + $0x98] sm:$0xff]
        %v1486 = vld [vmem:[%s6 + $0xa0] sm:$0xff]
        %v1487 = vld [vmem:[%s6 + $0xa8] sm:$0xff]
        %v1488 = vld [vmem:[%s6 + $0xb0] sm:$0xff]
        %v1489 = vld [vmem:[%s6 + $0xb8] sm:$0xff]
        %v1490 = vld [vmem:[%s6 + $0xc0] sm:$0xff]
        %v1491 = vld [vmem:[%s6 + $0xc8] sm:$0xff]
        %v1492 = vld [vmem:[%s6 + $0xd0] sm:$0xff]
        %v1493 = vld [vmem:[%s6 + $0xd8] sm:$0xff]
        %v1494 = vld [vmem:[%s6 + $0xe0] sm:$0xff]
        %v1495 = vld [vmem:[%s6 + $0xe8] sm:$0xff]
        %v1496 = vld [vmem:[%s6 + $0xf0] sm:$0xff]
        %v1497 = vld [vmem:[%s6 + $0xf8] sm:$0xff]
        %v1498 = vld [vmem:[%s6 + $0x100] sm:$0xff]
        %v1499 = vld [vmem:[%s6 + $0x108] sm:$0xff]
        %v1500 = vld [vmem:[%s6 + $0x110] sm:$0xff]
        %v1501 = vld [vmem:[%s6 + $0x118] sm:$0xff]
        %v1502 = vld [vmem:[%s6 + $0x120] sm:$0xff]
        %v1503 = vld [vmem:[%s6 + $0x128] sm:$0xff]
        %v1504 = vld [vmem:[%s6 + $0x130] sm:$0xff]
        %v1505 = vld [vmem:[%s6 + $0x138] sm:$0xff]
        %v1506 = vld [vmem:[%s6 + $0x140] sm:$0xff]
        %v1507 = vld [vmem:[%s6 + $0x148] sm:$0xff]
        %v1508 = vld [vmem:[%s6 + $0x150] sm:$0xff]
        %v1509 = vld [vmem:[%s6 + $0x158] sm:$0xff]
        %v1510 = vld [vmem:[%s6 + $0x160] sm:$0xff]
        %v1511 = vld [vmem:[%s6 + $0x168] sm:$0xff]
        %v1512 = vld [vmem:[%s6 + $0x170] sm:$0xff]
        %v1513 = vld [vmem:[%s6 + $0x178] sm:$0xff]
        %v1514 = vld [vmem:[%s6 + $0x180] sm:$0xff]
        %v1515 = vld [vmem:[%s6 + $0x188] sm:$0xff]
        %v1516 = vld [vmem:[%s6 + $0x190] sm:$0xff]
        %v1517 = vld [vmem:[%s6 + $0x198] sm:$0xff]
        %v1518 = vld [vmem:[%s6 + $0x1a0] sm:$0xff]
        %v1519 = vld [vmem:[%s6 + $0x1a8] sm:$0xff]
        %v1520 = vld [vmem:[%s6 + $0x1b0] sm:$0xff]
        %v1521 = vld [vmem:[%s6 + $0x1b8] sm:$0xff]
        %v1522 = vld [vmem:[%s6 + $0x1c0] sm:$0xff]
        %v1523 = vld [vmem:[%s6 + $0x1c8] sm:$0xff]
        %v1524 = vld [vmem:[%s6 + $0x1d0] sm:$0xff]
        %v1525 = vld [vmem:[%s6 + $0x1d8] sm:$0xff]
        %v1526 = vld [vmem:[%s6 + $0x1e0] sm:$0xff]
        %v1527 = vld [vmem:[%s6 + $0x1e8] sm:$0xff]
        %v1528 = vld [vmem:[%s6 + $0x1f0] sm:$0xff]
        %v1529 = vld [vmem:[%s6 + $0x1f8] sm:$0xff]
        %v1530 = vld [vmem:[%s7] sm:$0xf]
        %v1532 = vperm.slane %v1530, 0
        %v1533 = vperm.slane %v1530, 1
        %v1534 = vperm.slane %v1530, 2
        %v1535 = vperm.slane %v1530, 3
        %v1541 = vunpack.c.l.b16 %v703
        %v1542 = vunpack.c.h.b16 %v703
        %v1543 = vpack.c.b16 %v1541, %v1541
        %v1544 = vpack.c.b16 %v1542, %v1542
        %v1611 = vunpack.c.l.b16 %v1466
        %v1612 = vunpack.c.h.b16 %v1466
        %v1613 = vunpack.c.l.b16 %v1467
        %v1614 = vunpack.c.h.b16 %v1467
        %v1615 = vunpack.c.l.b16 %v1468
        %v1616 = vunpack.c.h.b16 %v1468
        %v1617 = vunpack.c.l.b16 %v1469
        %v1618 = vunpack.c.h.b16 %v1469
        %v1619 = vunpack.c.l.b16 %v1470
        %v1620 = vunpack.c.h.b16 %v1470
        %v1621 = vunpack.c.l.b16 %v1471
        %v1622 = vunpack.c.h.b16 %v1471
        %v1623 = vunpack.c.l.b16 %v1472
        %v1624 = vunpack.c.h.b16 %v1472
        %v1625 = vunpack.c.l.b16 %v1473
        %v1626 = vunpack.c.h.b16 %v1473
        %v1627 = vunpack.c.l.b16 %v1474
        %v1628 = vunpack.c.h.b16 %v1474
        %v1629 = vunpack.c.l.b16 %v1475
        %v1630 = vunpack.c.h.b16 %v1475
        %v1631 = vunpack.c.l.b16 %v1476
        %v1632 = vunpack.c.h.b16 %v1476
        %v1633 = vunpack.c.l.b16 %v1477
        %v1634 = vunpack.c.h.b16 %v1477
        %v1635 = vunpack.c.l.b16 %v1478
        %v1636 = vunpack.c.h.b16 %v1478
        %v1637 = vunpack.c.l.b16 %v1479
        %v1638 = vunpack.c.h.b16 %v1479
        %v1639 = vunpack.c.l.b16 %v1480
        %v1640 = vunpack.c.h.b16 %v1480
        %v1641 = vunpack.c.l.b16 %v1481
        %v1642 = vunpack.c.h.b16 %v1481
        %v1643 = vunpack.c.l.b16 %v1482
        %v1644 = vunpack.c.h.b16 %v1482
        %v1645 = vunpack.c.l.b16 %v1483
        %v1646 = vunpack.c.h.b16 %v1483
        %v1647 = vunpack.c.l.b16 %v1484
        %v1648 = vunpack.c.h.b16 %v1484
        %v1649 = vunpack.c.l.b16 %v1485
        %v1650 = vunpack.c.h.b16 %v1485
        %v1651 = vunpack.c.l.b16 %v1486
        %v1652 = vunpack.c.h.b16 %v1486
        %v1653 = vunpack.c.l.b16 %v1487
        %v1654 = vunpack.c.h.b16 %v1487
        %v1655 = vunpack.c.l.b16 %v1488
        %v1656 = vunpack.c.h.b16 %v1488
        %v1657 = vunpack.c.l.b16 %v1489
        %v1658 = vunpack.c.h.b16 %v1489
        %v1659 = vunpack.c.l.b16 %v1490
        %v1660 = vunpack.c.h.b16 %v1490
        %v1661 = vunpack.c.l.b16 %v1491
        %v1662 = vunpack.c.h.b16 %v1491
        %v1663 = vunpack.c.l.b16 %v1492
        %v1664 = vunpack.c.h.b16 %v1492
        %v1665 = vunpack.c.l.b16 %v1493
        %v1666 = vunpack.c.h.b16 %v1493
        %v1667 = vunpack.c.l.b16 %v1494
        %v1668 = vunpack.c.h.b16 %v1494
        %v1669 = vunpack.c.l.b16 %v1495
        %v1670 = vunpack.c.h.b16 %v1495
        %v1671 = vunpack.c.l.b16 %v1496
        %v1672 = vunpack.c.h.b16 %v1496
        %v1673 = vunpack.c.l.b16 %v1497
        %v1674 = vunpack.c.h.b16 %v1497
        %v1675 = vunpack.c.l.b16 %v1498
        %v1676 = vunpack.c.h.b16 %v1498
        %v1677 = vunpack.c.l.b16 %v1499
        %v1678 = vunpack.c.h.b16 %v1499
        %v1679 = vunpack.c.l.b16 %v1500
        %v1680 = vunpack.c.h.b16 %v1500
        %v1681 = vunpack.c.l.b16 %v1501
        %v1682 = vunpack.c.h.b16 %v1501
        %v1683 = vunpack.c.l.b16 %v1502
        %v1684 = vunpack.c.h.b16 %v1502
        %v1685 = vunpack.c.l.b16 %v1503
        %v1686 = vunpack.c.h.b16 %v1503
        %v1687 = vunpack.c.l.b16 %v1504
        %v1688 = vunpack.c.h.b16 %v1504
        %v1689 = vunpack.c.l.b16 %v1505
        %v1690 = vunpack.c.h.b16 %v1505
        %v1691 = vunpack.c.l.b16 %v1506
        %v1692 = vunpack.c.h.b16 %v1506
        %v1693 = vunpack.c.l.b16 %v1507
        %v1694 = vunpack.c.h.b16 %v1507
        %v1695 = vunpack.c.l.b16 %v1508
        %v1696 = vunpack.c.h.b16 %v1508
        %v1697 = vunpack.c.l.b16 %v1509
        %v1698 = vunpack.c.h.b16 %v1509
        %v1699 = vunpack.c.l.b16 %v1510
        %v1700 = vunpack.c.h.b16 %v1510
        %v1701 = vunpack.c.l.b16 %v1511
        %v1702 = vunpack.c.h.b16 %v1511
        %v1703 = vunpack.c.l.b16 %v1512
        %v1704 = vunpack.c.h.b16 %v1512
        %v1705 = vunpack.c.l.b16 %v1513
        %v1706 = vunpack.c.h.b16 %v1513
        %v1707 = vunpack.c.l.b16 %v1514
        %v1708 = vunpack.c.h.b16 %v1514
        %v1709 = vunpack.c.l.b16 %v1515
        %v1710 = vunpack.c.h.b16 %v1515
        %v1711 = vunpack.c.l.b16 %v1516
        %v1712 = vunpack.c.h.b16 %v1516
        %v1713 = vunpack.c.l.b16 %v1517
        %v1714 = vunpack.c.h.b16 %v1517
        %v1715 = vunpack.c.l.b16 %v1518
        %v1716 = vunpack.c.h.b16 %v1518
        %v1717 = vunpack.c.l.b16 %v1519
        %v1718 = vunpack.c.h.b16 %v1519
        %v1719 = vunpack.c.l.b16 %v1520
        %v1720 = vunpack.c.h.b16 %v1520
        %v1721 = vunpack.c.l.b16 %v1521
        %v1722 = vunpack.c.h.b16 %v1521
        %v1723 = vunpack.c.l.b16 %v1522
        %v1724 = vunpack.c.h.b16 %v1522
        %v1725 = vunpack.c.l.b16 %v1523
        %v1726 = vunpack.c.h.b16 %v1523
        %v1727 = vunpack.c.l.b16 %v1524
        %v1728 = vunpack.c.h.b16 %v1524
        %v1729 = vunpack.c.l.b16 %v1525
        %v1730 = vunpack.c.h.b16 %v1525
        %v1731 = vunpack.c.l.b16 %v1526
        %v1732 = vunpack.c.h.b16 %v1526
        %v1733 = vunpack.c.l.b16 %v1527
        %v1734 = vunpack.c.h.b16 %v1527
        %v1735 = vunpack.c.l.b16 %v1528
        %v1736 = vunpack.c.h.b16 %v1528
        %v1737 = vunpack.c.l.b16 %v1529
        %v1738 = vunpack.c.h.b16 %v1529
        %v1739 = vpack.c.b16 %v1615, %v1611
        %v1740 = vpack.c.b16 %v1616, %v1612
        %v1741 = vpack.c.b16 %v1617, %v1613
        %v1742 = vpack.c.b16 %v1618, %v1614
        %v1743 = vpack.c.b16 %v1623, %v1619
        %v1744 = vpack.c.b16 %v1624, %v1620
        %v1745 = vpack.c.b16 %v1625, %v1621
        %v1746 = vpack.c.b16 %v1626, %v1622
        %v1747 = vpack.c.b16 %v1631, %v1627
        %v1748 = vpack.c.b16 %v1632, %v1628
        %v1749 = vpack.c.b16 %v1633, %v1629
        %v1750 = vpack.c.b16 %v1634, %v1630
        %v1751 = vpack.c.b16 %v1639, %v1635
        %v1752 = vpack.c.b16 %v1640, %v1636
        %v1753 = vpack.c.b16 %v1641, %v1637
        %v1754 = vpack.c.b16 %v1642, %v1638
        %v1755 = vpack.c.b16 %v1647, %v1643
        %v1756 = vpack.c.b16 %v1648, %v1644
        %v1757 = vpack.c.b16 %v1649, %v1645
        %v1758 = vpack.c.b16 %v1650, %v1646
        %v1759 = vpack.c.b16 %v1655, %v1651
        %v1760 = vpack.c.b16 %v1656, %v1652
        %v1761 = vpack.c.b16 %v1657, %v1653
        %v1762 = vpack.c.b16 %v1658, %v1654
        %v1763 = vpack.c.b16 %v1663, %v1659
        %v1764 = vpack.c.b16 %v1664, %v1660
        %v1765 = vpack.c.b16 %v1665, %v1661
        %v1766 = vpack.c.b16 %v1666, %v1662
        %v1767 = vpack.c.b16 %v1671, %v1667
        %v1768 = vpack.c.b16 %v1672, %v1668
        %v1769 = vpack.c.b16 %v1673, %v1669
        %v1770 = vpack.c.b16 %v1674, %v1670
        %v1771 = vpack.c.b16 %v1679, %v1675
        %v1772 = vpack.c.b16 %v1680, %v1676
        %v1773 = vpack.c.b16 %v1681, %v1677
        %v1774 = vpack.c.b16 %v1682, %v1678
        %v1775 = vpack.c.b16 %v1687, %v1683
        %v1776 = vpack.c.b16 %v1688, %v1684
        %v1777 = vpack.c.b16 %v1689, %v1685
        %v1778 = vpack.c.b16 %v1690, %v1686
        %v1779 = vpack.c.b16 %v1695, %v1691
        %v1780 = vpack.c.b16 %v1696, %v1692
        %v1781 = vpack.c.b16 %v1697, %v1693
        %v1782 = vpack.c.b16 %v1698, %v1694
        %v1783 = vpack.c.b16 %v1703, %v1699
        %v1784 = vpack.c.b16 %v1704, %v1700
        %v1785 = vpack.c.b16 %v1705, %v1701
        %v1786 = vpack.c.b16 %v1706, %v1702
        %v1787 = vpack.c.b16 %v1711, %v1707
        %v1788 = vpack.c.b16 %v1712, %v1708
        %v1789 = vpack.c.b16 %v1713, %v1709
        %v1790 = vpack.c.b16 %v1714, %v1710
        %v1791 = vpack.c.b16 %v1719, %v1715
        %v1792 = vpack.c.b16 %v1720, %v1716
        %v1793 = vpack.c.b16 %v1721, %v1717
        %v1794 = vpack.c.b16 %v1722, %v1718
        %v1795 = vpack.c.b16 %v1727, %v1723
        %v1796 = vpack.c.b16 %v1728, %v1724
        %v1797 = vpack.c.b16 %v1729, %v1725
        %v1798 = vpack.c.b16 %v1730, %v1726
        %v1799 = vpack.c.b16 %v1735, %v1731
        %v1800 = vpack.c.b16 %v1736, %v1732
        %v1801 = vpack.c.b16 %v1737, %v1733
        %v1802 = vpack.c.b16 %v1738, %v1734
        %1867 = vmatpush.bf16.msra.mxu0 %v1767
        %1868 = vmatpush.bf16.msra.mxu0 %v1763
        %1869 = vmatpush.bf16.msra.mxu0 %v1759
        %1870 = vmatpush.bf16.msra.mxu0 %v1755
        %1871 = vmatpush.bf16.msra.mxu0 %v1751
        %1872 = vmatpush.bf16.msra.mxu0 %v1747
        %1873 = vmatpush.bf16.msra.mxu0 %v1743
        %1874 = vmatpush.bf16.msra.mxu0 %v1739
        %1875 = vmatmul.bf16.gmra.mxu0 %v1543
        %v1876 = vpop.f32.mrf.mxu0
        %v1877 = vadd.f32 %v1532, %v1876
        %v1878 = vpop.f32.mrf.mxu0
        %1879 = vdwg.mxu0
        %1880 = vmatpush.bf16.msra.mxu0 %v1799
        %1881 = vmatpush.bf16.msra.mxu0 %v1795
        %1882 = vmatpush.bf16.msra.mxu0 %v1791
        %1883 = vmatpush.bf16.msra.mxu0 %v1787
        %1884 = vmatpush.bf16.msra.mxu0 %v1783
        %1885 = vmatpush.bf16.msra.mxu0 %v1779
        %1886 = vmatpush.bf16.msra.mxu0 %v1775
        %1887 = vmatpush.bf16.msra.mxu0 %v1771
        %1888 = vmatmul.bf16.gmra.mxu0 %v1544
        %v1889 = vpop.f32.mrf.mxu0
        %v1890 = vadd.f32 %v1877, %v1889
        %v1891 = vpop.f32.mrf.mxu0
        %1892 = vdwg.mxu0
        %1893 = vmatpush.bf16.msra.mxu0 %v1768
        %1894 = vmatpush.bf16.msra.mxu0 %v1764
        %1895 = vmatpush.bf16.msra.mxu0 %v1760
        %1896 = vmatpush.bf16.msra.mxu0 %v1756
        %1897 = vmatpush.bf16.msra.mxu0 %v1752
        %1898 = vmatpush.bf16.msra.mxu0 %v1748
        %1899 = vmatpush.bf16.msra.mxu0 %v1744
        %1900 = vmatpush.bf16.msra.mxu0 %v1740
        %1901 = vmatmul.bf16.gmra.mxu0 %v1543
        %v1902 = vpop.f32.mrf.mxu0
        %v1903 = vadd.f32 %v1533, %v1902
        %v1904 = vpop.f32.mrf.mxu0
        %1905 = vdwg.mxu0
        %1906 = vmatpush.bf16.msra.mxu0 %v1800
        %1907 = vmatpush.bf16.msra.mxu0 %v1796
        %1908 = vmatpush.bf16.msra.mxu0 %v1792
        %1909 = vmatpush.bf16.msra.mxu0 %v1788
        %1910 = vmatpush.bf16.msra.mxu0 %v1784
        %1911 = vmatpush.bf16.msra.mxu0 %v1780
        %1912 = vmatpush.bf16.msra.mxu0 %v1776
        %1913 = vmatpush.bf16.msra.mxu0 %v1772
        %1914 = vmatmul.bf16.gmra.mxu0 %v1544
        %v1915 = vpop.f32.mrf.mxu0
        %v1916 = vadd.f32 %v1903, %v1915
        %v1917 = vpop.f32.mrf.mxu0
        %1918 = vdwg.mxu0
        %1919 = vmatpush.bf16.msra.mxu0 %v1769
        %1920 = vmatpush.bf16.msra.mxu0 %v1765
        %1921 = vmatpush.bf16.msra.mxu0 %v1761
        %1922 = vmatpush.bf16.msra.mxu0 %v1757
        %1923 = vmatpush.bf16.msra.mxu0 %v1753
        %1924 = vmatpush.bf16.msra.mxu0 %v1749
        %1925 = vmatpush.bf16.msra.mxu0 %v1745
        %1926 = vmatpush.bf16.msra.mxu0 %v1741
        %1927 = vmatmul.bf16.gmra.mxu0 %v1543
        %v1928 = vpop.f32.mrf.mxu0
        %v1929 = vadd.f32 %v1534, %v1928
        %v1930 = vpop.f32.mrf.mxu0
        %1931 = vdwg.mxu0
        %1932 = vmatpush.bf16.msra.mxu0 %v1801
        %1933 = vmatpush.bf16.msra.mxu0 %v1797
        %1934 = vmatpush.bf16.msra.mxu0 %v1793
        %1935 = vmatpush.bf16.msra.mxu0 %v1789
        %1936 = vmatpush.bf16.msra.mxu0 %v1785
        %1937 = vmatpush.bf16.msra.mxu0 %v1781
        %1938 = vmatpush.bf16.msra.mxu0 %v1777
        %1939 = vmatpush.bf16.msra.mxu0 %v1773
        %1940 = vmatmul.bf16.gmra.mxu0 %v1544
        %v1941 = vpop.f32.mrf.mxu0
        %v1942 = vadd.f32 %v1929, %v1941
        %v1943 = vpop.f32.mrf.mxu0
        %1944 = vdwg.mxu0
        %1945 = vmatpush.bf16.msra.mxu0 %v1770
        %1946 = vmatpush.bf16.msra.mxu0 %v1766
        %1947 = vmatpush.bf16.msra.mxu0 %v1762
        %1948 = vmatpush.bf16.msra.mxu0 %v1758
        %1949 = vmatpush.bf16.msra.mxu0 %v1754
        %1950 = vmatpush.bf16.msra.mxu0 %v1750
        %1951 = vmatpush.bf16.msra.mxu0 %v1746
        %1952 = vmatpush.bf16.msra.mxu0 %v1742
        %1953 = vmatmul.bf16.gmra.mxu0 %v1543
        %v1954 = vpop.f32.mrf.mxu0
        %v1955 = vadd.f32 %v1535, %v1954
        %v1956 = vpop.f32.mrf.mxu0
        %1957 = vdwg.mxu0
        %1958 = vmatpush.bf16.msra.mxu0 %v1802
        %1959 = vmatpush.bf16.msra.mxu0 %v1798
        %1960 = vmatpush.bf16.msra.mxu0 %v1794
        %1961 = vmatpush.bf16.msra.mxu0 %v1790
        %1962 = vmatpush.bf16.msra.mxu0 %v1786
        %1963 = vmatpush.bf16.msra.mxu0 %v1782
        %1964 = vmatpush.bf16.msra.mxu0 %v1778
        %1965 = vmatpush.bf16.msra.mxu0 %v1774
        %1966 = vmatmul.bf16.gmra.mxu0 %v1544
        %v1967 = vpop.f32.mrf.mxu0
        %v1968 = vadd.f32 %v1955, %v1967
        %v1969 = vpop.f32.mrf.mxu0
        %1970 = vdwg.mxu0
        %v1971 = vpack.c.bf16 %v1916, %v1890
        %v1972 = vpack.c.bf16 %v1968, %v1942
        %v1974 = vrot.slane %v1971, 4
        %v1977 = vrot.slane %v1972, 4
        %v1979 = vrot.slane %v1458, 4
        %v1981 = vlaneseq
        %v1982 = vshrl.u32 %v1981, 7
        %v1983 = vlaneseq
        %v1984 = vand.u32 %v1983, 127
        %vm1985 = vcmp.gt.s32.totalorder %v1984, %v1982
        %1986 = vmatpush.bf16.xpose.msra.mxu0 0
        %1987 = vmatpush.bf16.xpose.msra.mxu0 0
        %1988 = vmatpush.bf16.xpose.msra.mxu0 0
        %1989 = vmatpush.bf16.xpose.msra.mxu0 0
        %1990 = vmatpush.bf16.xpose.msra.mxu0 0
        %1991 = vmatpush.bf16.xpose.msra.mxu0 0
        %1992 = vmatpush.bf16.xpose.msra.mxu0 0
        %1993 = vmatpush.bf16.xpose.msra.mxu0 %v1459
        %1994 = vmatmul.bf16.gmra.mxu0 %v1458
        %v1995 = vpop.f32.mrf.mxu0
        %v1996 = vadd.f32 0.0, %v1995
        %v1997 = vpop.f32.mrf.mxu0
        %1998 = vdwg.mxu0
        %1999 = vmatpush.bf16.xpose.msra.mxu0 0
        %2000 = vmatpush.bf16.xpose.msra.mxu0 0
        %2001 = vmatpush.bf16.xpose.msra.mxu0 0
        %2002 = vmatpush.bf16.xpose.msra.mxu0 0
        %2003 = vmatpush.bf16.xpose.msra.mxu0 0
        %2004 = vmatpush.bf16.xpose.msra.mxu0 0
        %2005 = vmatpush.bf16.xpose.msra.mxu0 0
        %2006 = vmatpush.bf16.xpose.msra.mxu0 %v1462
        %2007 = vmatmul.bf16.gmra.mxu0 %v1979
        %v2008 = vpop.f32.mrf.mxu0
        %v2009 = vadd.f32 0.0, %v2008
        %v2010 = vpop.f32.mrf.mxu0
        %2011 = vdwg.mxu0
        %v2012 = vmul.f32 %v1996, 0.088388346
        %v2013 = vmul.f32 %v2009, 0.088388346
        %v2014 = vsel %vm1985, 1, 0
        %vm2015 = vcmp.eq.s32.totalorder %v2014, 1
        %v2016 = vsel %vm2015, -1e+09, %v2012
        %v2017 = vsel %vm2015, -1e+09, %v2013
        %vm2018 = vcmask 64512
        %v2019 = vsel %vm2018, %v2016, -inf
        %2020 = vmax.xlane.f32.xlu0 %v2019
        %v2021 = vpop.xlane.xlu0 %2020
        %v2022 = vsel %vm2018, %v2017, -inf
        %2023 = vmax.xlane.f32.xlu0 %v2022
        %v2024 = vpop.xlane.xlu0 %2023
        %v2025 = vsub.f32 %v2016, %v2021
        %v2026 = vsub.f32 %v2017, %v2024
        %v2027 = vmul.f32 %v2025, 1.442695
        %v2028 = vpow.pop %v2027
        %v2029 = vmul.f32 %v2026, 1.442695
        %v2030 = vpow.pop %v2029
        %v2031 = vsel %vm2018, %v2028, 0.0
        %2032 = vadd.xlane.f32.xlu0 %v2031
        %v2033 = vpop.xlane.xlu0 %2032
        %v2034 = vsel %vm2018, %v2030, 0.0
        %2035 = vadd.xlane.f32.xlu0 %v2034
        %v2036 = vpop.xlane.xlu0 %2035
        %v2037 = vrcp.pop %v2033
        %v2038 = vrcp.pop %v2036
        %v2039 = vmul.f32 %v2028, %v2037
        %v2040 = vmul.f32 %v2030, %v2038
        %v2041 = vpack.c.bf16 %v2039, %v2039
        %v2042 = vpack.c.bf16 %v2040, %v2040
        %v2044 = vsel %vm2018, %v2041, 0
        %vm2046 = vcmask 1043456
        %v2048 = vsel %vm2046, %v1460, 0
        %2050 = vmatpush.bf16.msra.mxu0 0
        %2051 = vmatpush.bf16.msra.mxu0 0
        %2052 = vmatpush.bf16.msra.mxu0 0
        %2053 = vmatpush.bf16.msra.mxu0 0
        %2054 = vmatpush.bf16.msra.mxu0 0
        %2055 = vmatpush.bf16.msra.mxu0 0
        %2056 = vmatpush.bf16.msra.mxu0 0
        %2057 = vmatpush.bf16.msra.mxu0 %v2048
        %2058 = vmatmul.bf16.gmra.mxu0 %v2044
        %v2059 = vpop.f32.mrf.mxu0
        %v2060 = vadd.f32 0.0, %v2059
        %v2061 = vpop.f32.mrf.mxu0
        %2062 = vdwg.mxu0
        %v2064 = vsel %vm2018, %v2042, 0
        %v2067 = vsel %vm2046, %v1465, 0
        %2069 = vmatpush.bf16.msra.mxu0 0
        %2070 = vmatpush.bf16.msra.mxu0 0
        %2071 = vmatpush.bf16.msra.mxu0 0
        %2072 = vmatpush.bf16.msra.mxu0 0
        %2073 = vmatpush.bf16.msra.mxu0 0
        %2074 = vmatpush.bf16.msra.mxu0 0
        %2075 = vmatpush.bf16.msra.mxu0 0
        %2076 = vmatpush.bf16.msra.mxu0 %v2067
        %2077 = vmatmul.bf16.gmra.mxu0 %v2064
        %v2078 = vpop.f32.mrf.mxu0
        %v2079 = vadd.f32 0.0, %v2078
        %v2080 = vpop.f32.mrf.mxu0
        %2081 = vdwg.mxu0
        %v2082 = vpack.c.bf16 %v2060, %v2060
        %v2083 = vpack.c.bf16 %v2079, %v2079
        %v2084 = vld [vmem:[%s4] sm:$0xff]
        %v2085 = vld [vmem:[%s4 + $0x8] sm:$0xff]
        %v2086 = vld [vmem:[%s4 + $0x10] sm:$0xff]
        %v2087 = vld [vmem:[%s4 + $0x18] sm:$0xff]
        %v2088 = vld [vmem:[%s4 + $0x20] sm:$0xff]
        %v2089 = vld [vmem:[%s4 + $0x28] sm:$0xff]
        %v2090 = vld [vmem:[%s4 + $0x30] sm:$0xff]
        %v2091 = vld [vmem:[%s4 + $0x38] sm:$0xff]
        %v2092 = vld [vmem:[%s4 + $0x40] sm:$0xff]
        %v2093 = vld [vmem:[%s4 + $0x48] sm:$0xff]
        %v2094 = vld [vmem:[%s4 + $0x50] sm:$0xff]
        %v2095 = vld [vmem:[%s4 + $0x58] sm:$0xff]
        %v2096 = vld [vmem:[%s4 + $0x60] sm:$0xff]
        %v2097 = vld [vmem:[%s4 + $0x68] sm:$0xff]
        %v2098 = vld [vmem:[%s4 + $0x70] sm:$0xff]
        %v2099 = vld [vmem:[%s4 + $0x78] sm:$0xff]
        %v2100 = vld [vmem:[%s4 + $0x80] sm:$0xff]
        %v2101 = vld [vmem:[%s4 + $0x88] sm:$0xff]
        %v2102 = vld [vmem:[%s4 + $0x90] sm:$0xff]
        %v2103 = vld [vmem:[%s4 + $0x98] sm:$0xff]
        %v2104 = vld [vmem:[%s4 + $0xa0] sm:$0xff]
        %v2105 = vld [vmem:[%s4 + $0xa8] sm:$0xff]
        %v2106 = vld [vmem:[%s4 + $0xb0] sm:$0xff]
        %v2107 = vld [vmem:[%s4 + $0xb8] sm:$0xff]
        %v2108 = vld [vmem:[%s4 + $0xc0] sm:$0xff]
        %v2109 = vld [vmem:[%s4 + $0xc8] sm:$0xff]
        %v2110 = vld [vmem:[%s4 + $0xd0] sm:$0xff]
        %v2111 = vld [vmem:[%s4 + $0xd8] sm:$0xff]
        %v2112 = vld [vmem:[%s4 + $0xe0] sm:$0xff]
        %v2113 = vld [vmem:[%s4 + $0xe8] sm:$0xff]
        %v2114 = vld [vmem:[%s4 + $0xf0] sm:$0xff]
        %v2115 = vld [vmem:[%s4 + $0xf8] sm:$0xff]
        %v2116 = vld [vmem:[%s5] sm:$0x3]
        %v2118 = vperm.slane %v2116, 0
        %v2119 = vperm.slane %v2116, 1
        %v2154 = vunpack.c.l.b16 %v2084
        %v2155 = vunpack.c.h.b16 %v2084
        %v2156 = vunpack.c.l.b16 %v2085
        %v2157 = vunpack.c.h.b16 %v2085
        %v2158 = vunpack.c.l.b16 %v2086
        %v2159 = vunpack.c.h.b16 %v2086
        %v2160 = vunpack.c.l.b16 %v2087
        %v2161 = vunpack.c.h.b16 %v2087
        %v2162 = vunpack.c.l.b16 %v2088
        %v2163 = vunpack.c.h.b16 %v2088
        %v2164 = vunpack.c.l.b16 %v2089
        %v2165 = vunpack.c.h.b16 %v2089
        %v2166 = vunpack.c.l.b16 %v2090
        %v2167 = vunpack.c.h.b16 %v2090
        %v2168 = vunpack.c.l.b16 %v2091
        %v2169 = vunpack.c.h.b16 %v2091
        %v2170 = vunpack.c.l.b16 %v2092
        %v2171 = vunpack.c.h.b16 %v2092
        %v2172 = vunpack.c.l.b16 %v2093
        %v2173 = vunpack.c.h.b16 %v2093
        %v2174 = vunpack.c.l.b16 %v2094
        %v2175 = vunpack.c.h.b16 %v2094
        %v2176 = vunpack.c.l.b16 %v2095
        %v2177 = vunpack.c.h.b16 %v2095
        %v2178 = vunpack.c.l.b16 %v2096
        %v2179 = vunpack.c.h.b16 %v2096
        %v2180 = vunpack.c.l.b16 %v2097
        %v2181 = vunpack.c.h.b16 %v2097
        %v2182 = vunpack.c.l.b16 %v2098
        %v2183 = vunpack.c.h.b16 %v2098
        %v2184 = vunpack.c.l.b16 %v2099
        %v2185 = vunpack.c.h.b16 %v2099
        %v2186 = vunpack.c.l.b16 %v2100
        %v2187 = vunpack.c.h.b16 %v2100
        %v2188 = vunpack.c.l.b16 %v2101
        %v2189 = vunpack.c.h.b16 %v2101
        %v2190 = vunpack.c.l.b16 %v2102
        %v2191 = vunpack.c.h.b16 %v2102
        %v2192 = vunpack.c.l.b16 %v2103
        %v2193 = vunpack.c.h.b16 %v2103
        %v2194 = vunpack.c.l.b16 %v2104
        %v2195 = vunpack.c.h.b16 %v2104
        %v2196 = vunpack.c.l.b16 %v2105
        %v2197 = vunpack.c.h.b16 %v2105
        %v2198 = vunpack.c.l.b16 %v2106
        %v2199 = vunpack.c.h.b16 %v2106
        %v2200 = vunpack.c.l.b16 %v2107
        %v2201 = vunpack.c.h.b16 %v2107
        %v2202 = vunpack.c.l.b16 %v2108
        %v2203 = vunpack.c.h.b16 %v2108
        %v2204 = vunpack.c.l.b16 %v2109
        %v2205 = vunpack.c.h.b16 %v2109
        %v2206 = vunpack.c.l.b16 %v2110
        %v2207 = vunpack.c.h.b16 %v2110
        %v2208 = vunpack.c.l.b16 %v2111
        %v2209 = vunpack.c.h.b16 %v2111
        %v2210 = vunpack.c.l.b16 %v2112
        %v2211 = vunpack.c.h.b16 %v2112
        %v2212 = vunpack.c.l.b16 %v2113
        %v2213 = vunpack.c.h.b16 %v2113
        %v2214 = vunpack.c.l.b16 %v2114
        %v2215 = vunpack.c.h.b16 %v2114
        %v2216 = vunpack.c.l.b16 %v2115
        %v2217 = vunpack.c.h.b16 %v2115
        %v2218 = vpack.c.b16 %v2156, %v2154
        %v2219 = vpack.c.b16 %v2157, %v2155
        %v2220 = vpack.c.b16 %v2160, %v2158
        %v2221 = vpack.c.b16 %v2161, %v2159
        %v2222 = vpack.c.b16 %v2164, %v2162
        %v2223 = vpack.c.b16 %v2165, %v2163
        %v2224 = vpack.c.b16 %v2168, %v2166
        %v2225 = vpack.c.b16 %v2169, %v2167
        %v2226 = vpack.c.b16 %v2172, %v2170
        %v2227 = vpack.c.b16 %v2173, %v2171
        %v2228 = vpack.c.b16 %v2176, %v2174
        %v2229 = vpack.c.b16 %v2177, %v2175
        %v2230 = vpack.c.b16 %v2180, %v2178
        %v2231 = vpack.c.b16 %v2181, %v2179
        %v2232 = vpack.c.b16 %v2184, %v2182
        %v2233 = vpack.c.b16 %v2185, %v2183
        %v2234 = vpack.c.b16 %v2188, %v2186
        %v2235 = vpack.c.b16 %v2189, %v2187
        %v2236 = vpack.c.b16 %v2192, %v2190
        %v2237 = vpack.c.b16 %v2193, %v2191
        %v2238 = vpack.c.b16 %v2196, %v2194
        %v2239 = vpack.c.b16 %v2197, %v2195
        %v2240 = vpack.c.b16 %v2200, %v2198
        %v2241 = vpack.c.b16 %v2201, %v2199
        %v2242 = vpack.c.b16 %v2204, %v2202
        %v2243 = vpack.c.b16 %v2205, %v2203
        %v2244 = vpack.c.b16 %v2208, %v2206
        %v2245 = vpack.c.b16 %v2209, %v2207
        %v2246 = vpack.c.b16 %v2212, %v2210
        %v2247 = vpack.c.b16 %v2213, %v2211
        %v2248 = vpack.c.b16 %v2216, %v2214
        %v2249 = vpack.c.b16 %v2217, %v2215
        %2282 = vmatpush.bf16.msra.mxu0 %v2232
        %2283 = vmatpush.bf16.msra.mxu0 %v2230
        %2284 = vmatpush.bf16.msra.mxu0 %v2228
        %2285 = vmatpush.bf16.msra.mxu0 %v2226
        %2286 = vmatpush.bf16.msra.mxu0 %v2224
        %2287 = vmatpush.bf16.msra.mxu0 %v2222
        %2288 = vmatpush.bf16.msra.mxu0 %v2220
        %2289 = vmatpush.bf16.msra.mxu0 %v2218
        %2290 = vmatmul.bf16.gmra.mxu0 %v2082
        %v2291 = vpop.f32.mrf.mxu0
        %v2292 = vadd.f32 %v2118, %v2291
        %v2293 = vpop.f32.mrf.mxu0
        %2294 = vdwg.mxu0
        %2295 = vmatpush.bf16.msra.mxu0 %v2248
        %2296 = vmatpush.bf16.msra.mxu0 %v2246
        %2297 = vmatpush.bf16.msra.mxu0 %v2244
        %2298 = vmatpush.bf16.msra.mxu0 %v2242
        %2299 = vmatpush.bf16.msra.mxu0 %v2240
        %2300 = vmatpush.bf16.msra.mxu0 %v2238
        %2301 = vmatpush.bf16.msra.mxu0 %v2236
        %2302 = vmatpush.bf16.msra.mxu0 %v2234
        %2303 = vmatmul.bf16.gmra.mxu0 %v2083
        %v2304 = vpop.f32.mrf.mxu0
        %v2305 = vadd.f32 %v2292, %v2304
        %v2306 = vpop.f32.mrf.mxu0
        %2307 = vdwg.mxu0
        %2308 = vmatpush.bf16.msra.mxu0 %v2233
        %2309 = vmatpush.bf16.msra.mxu0 %v2231
        %2310 = vmatpush.bf16.msra.mxu0 %v2229
        %2311 = vmatpush.bf16.msra.mxu0 %v2227
        %2312 = vmatpush.bf16.msra.mxu0 %v2225
        %2313 = vmatpush.bf16.msra.mxu0 %v2223
        %2314 = vmatpush.bf16.msra.mxu0 %v2221
        %2315 = vmatpush.bf16.msra.mxu0 %v2219
        %2316 = vmatmul.bf16.gmra.mxu0 %v2082
        %v2317 = vpop.f32.mrf.mxu0
        %v2318 = vadd.f32 %v2119, %v2317
        %v2319 = vpop.f32.mrf.mxu0
        %2320 = vdwg.mxu0
        %2321 = vmatpush.bf16.msra.mxu0 %v2249
        %2322 = vmatpush.bf16.msra.mxu0 %v2247
        %2323 = vmatpush.bf16.msra.mxu0 %v2245
        %2324 = vmatpush.bf16.msra.mxu0 %v2243
        %2325 = vmatpush.bf16.msra.mxu0 %v2241
        %2326 = vmatpush.bf16.msra.mxu0 %v2239
        %2327 = vmatpush.bf16.msra.mxu0 %v2237
        %2328 = vmatpush.bf16.msra.mxu0 %v2235
        %2329 = vmatmul.bf16.gmra.mxu0 %v2083
        %v2330 = vpop.f32.mrf.mxu0
        %v2331 = vadd.f32 %v2318, %v2330
        %v2332 = vpop.f32.mrf.mxu0
        %2333 = vdwg.mxu0
        %v2334 = vunpack.c.l.bf16 %v704
        %v2335 = vunpack.c.h.bf16 %v704
        %v2336 = vadd.f32 %v2305, %v2334
        %v2337 = vadd.f32 %v2331, %v2335
        %v2338 = vadd.f32 %v2336, %v2337
        %2339 = vadd.xlane.f32.xlu0 %v2338
        %v2340 = vpop.xlane.xlu0 %2339
        %v2341 = vrcp.pop 256.0
        %v2342 = vmul.f32 256.0, %v2341
        %v2343 = vsub.f32 1.0, %v2342
        %v2344 = vmul.f32 %v2341, %v2343
        %v2345 = vadd.f32 %v2341, %v2344
        %vm2346 = vweird.f32 %v2341
        %v2347 = vsel %vm2346, %v2341, %v2345
        %v2348 = vmul.f32 %v2340, %v2347
        %v2349 = vsub.f32 %v2336, %v2348
        %v2350 = vsub.f32 %v2337, %v2348
        %v2351 = vmul.f32 %v2349, %v2349
        %v2352 = vmul.f32 %v2350, %v2350
        %v2353 = vadd.f32 %v2351, %v2352
        %2354 = vadd.xlane.f32.xlu0 %v2353
        %v2355 = vpop.xlane.xlu0 %2354
        %v2356 = vmul.f32 %v2355, %v2347
        %v2357 = vld [vmem:[%s16] sm:$0x3]
        %v2358 = vadd.f32 %v2356, 1e-05
        %v2359 = vrsqrt.pop %v2358
        %v2360 = vmul.f32 %v2359, %v2358
        %v2361 = vmul.f32 %v2360, %v2359
        %v2362 = vmul.f32 0.5, %v2361
        %v2363 = vsub.f32 1.5, %v2362
        %v2364 = vmul.f32 %v2359, %v2363
        %vm2365 = vweird.f32 %v2358
        %vm2366 = vweird.f32 %v2359
        %vm2367 = vmor %vm2365, %vm2366
        %v2368 = vsel %vm2367, %v2359, %v2364
        %v2369 = vmul.f32 %v2349, %v2368
        %v2370 = vmul.f32 %v2350, %v2368
        %v2372 = vperm.slane %v2357, 0
        %v2373 = vperm.slane %v2357, 1
        %v2376 = vmul.f32 %v2372, %v2369
        %v2377 = vmul.f32 %v2373, %v2370
        %v2378 = vld [vmem:[%s17] sm:$0x3]
        %v2380 = vperm.slane %v2378, 0
        %v2381 = vperm.slane %v2378, 1
        %v2384 = vadd.f32 %v2376, %v2380
        %v2385 = vadd.f32 %v2377, %v2381
        %v2386 = vpack.c.bf16 %v2385, %v2384
        %v2387 = vld [vmem:[%s8] sm:$0xff]
        %v2388 = vld [vmem:[%s8 + $0x8] sm:$0xff]
        %v2389 = vld [vmem:[%s8 + $0x10] sm:$0xff]
        %v2390 = vld [vmem:[%s8 + $0x18] sm:$0xff]
        %v2391 = vld [vmem:[%s8 + $0x20] sm:$0xff]
        %v2392 = vld [vmem:[%s8 + $0x28] sm:$0xff]
        %v2393 = vld [vmem:[%s8 + $0x30] sm:$0xff]
        %v2394 = vld [vmem:[%s8 + $0x38] sm:$0xff]
        %v2395 = vld [vmem:[%s8 + $0x40] sm:$0xff]
        %v2396 = vld [vmem:[%s8 + $0x48] sm:$0xff]
        %v2397 = vld [vmem:[%s8 + $0x50] sm:$0xff]
        %v2398 = vld [vmem:[%s8 + $0x58] sm:$0xff]
        %v2399 = vld [vmem:[%s8 + $0x60] sm:$0xff]
        %v2400 = vld [vmem:[%s8 + $0x68] sm:$0xff]
        %v2401 = vld [vmem:[%s8 + $0x70] sm:$0xff]
        %v2402 = vld [vmem:[%s8 + $0x78] sm:$0xff]
        %v2403 = vld [vmem:[%s8 + $0x80] sm:$0xff]
        %v2404 = vld [vmem:[%s8 + $0x88] sm:$0xff]
        %v2405 = vld [vmem:[%s8 + $0x90] sm:$0xff]
        %v2406 = vld [vmem:[%s8 + $0x98] sm:$0xff]
        %v2407 = vld [vmem:[%s8 + $0xa0] sm:$0xff]
        %v2408 = vld [vmem:[%s8 + $0xa8] sm:$0xff]
        %v2409 = vld [vmem:[%s8 + $0xb0] sm:$0xff]
        %v2410 = vld [vmem:[%s8 + $0xb8] sm:$0xff]
        %v2411 = vld [vmem:[%s8 + $0xc0] sm:$0xff]
        %v2412 = vld [vmem:[%s8 + $0xc8] sm:$0xff]
        %v2413 = vld [vmem:[%s8 + $0xd0] sm:$0xff]
        %v2414 = vld [vmem:[%s8 + $0xd8] sm:$0xff]
        %v2415 = vld [vmem:[%s8 + $0xe0] sm:$0xff]
        %v2416 = vld [vmem:[%s8 + $0xe8] sm:$0xff]
        %v2417 = vld [vmem:[%s8 + $0xf0] sm:$0xff]
        %v2418 = vld [vmem:[%s8 + $0xf8] sm:$0xff]
        %v2419 = vld [vmem:[%s9] sm:$0x3]
        %v2421 = vperm.slane %v2419, 0
        %v2422 = vperm.slane %v2419, 1
        %v2426 = vunpack.c.l.b16 %v2386
        %v2427 = vunpack.c.h.b16 %v2386
        %v2428 = vpack.c.b16 %v2426, %v2426
        %v2429 = vpack.c.b16 %v2427, %v2427
        %v2464 = vunpack.c.l.b16 %v2387
        %v2465 = vunpack.c.h.b16 %v2387
        %v2466 = vunpack.c.l.b16 %v2388
        %v2467 = vunpack.c.h.b16 %v2388
        %v2468 = vunpack.c.l.b16 %v2389
        %v2469 = vunpack.c.h.b16 %v2389
        %v2470 = vunpack.c.l.b16 %v2390
        %v2471 = vunpack.c.h.b16 %v2390
        %v2472 = vunpack.c.l.b16 %v2391
        %v2473 = vunpack.c.h.b16 %v2391
        %v2474 = vunpack.c.l.b16 %v2392
        %v2475 = vunpack.c.h.b16 %v2392
        %v2476 = vunpack.c.l.b16 %v2393
        %v2477 = vunpack.c.h.b16 %v2393
        %v2478 = vunpack.c.l.b16 %v2394
        %v2479 = vunpack.c.h.b16 %v2394
        %v2480 = vunpack.c.l.b16 %v2395
        %v2481 = vunpack.c.h.b16 %v2395
        %v2482 = vunpack.c.l.b16 %v2396
        %v2483 = vunpack.c.h.b16 %v2396
        %v2484 = vunpack.c.l.b16 %v2397
        %v2485 = vunpack.c.h.b16 %v2397
        %v2486 = vunpack.c.l.b16 %v2398
        %v2487 = vunpack.c.h.b16 %v2398
        %v2488 = vunpack.c.l.b16 %v2399
        %v2489 = vunpack.c.h.b16 %v2399
        %v2490 = vunpack.c.l.b16 %v2400
        %v2491 = vunpack.c.h.b16 %v2400
        %v2492 = vunpack.c.l.b16 %v2401
        %v2493 = vunpack.c.h.b16 %v2401
        %v2494 = vunpack.c.l.b16 %v2402
        %v2495 = vunpack.c.h.b16 %v2402
        %v2496 = vunpack.c.l.b16 %v2403
        %v2497 = vunpack.c.h.b16 %v2403
        %v2498 = vunpack.c.l.b16 %v2404
        %v2499 = vunpack.c.h.b16 %v2404
        %v2500 = vunpack.c.l.b16 %v2405
        %v2501 = vunpack.c.h.b16 %v2405
        %v2502 = vunpack.c.l.b16 %v2406
        %v2503 = vunpack.c.h.b16 %v2406
        %v2504 = vunpack.c.l.b16 %v2407
        %v2505 = vunpack.c.h.b16 %v2407
        %v2506 = vunpack.c.l.b16 %v2408
        %v2507 = vunpack.c.h.b16 %v2408
        %v2508 = vunpack.c.l.b16 %v2409
        %v2509 = vunpack.c.h.b16 %v2409
        %v2510 = vunpack.c.l.b16 %v2410
        %v2511 = vunpack.c.h.b16 %v2410
        %v2512 = vunpack.c.l.b16 %v2411
        %v2513 = vunpack.c.h.b16 %v2411
        %v2514 = vunpack.c.l.b16 %v2412
        %v2515 = vunpack.c.h.b16 %v2412
        %v2516 = vunpack.c.l.b16 %v2413
        %v2517 = vunpack.c.h.b16 %v2413
        %v2518 = vunpack.c.l.b16 %v2414
        %v2519 = vunpack.c.h.b16 %v2414
        %v2520 = vunpack.c.l.b16 %v2415
        %v2521 = vunpack.c.h.b16 %v2415
        %v2522 = vunpack.c.l.b16 %v2416
        %v2523 = vunpack.c.h.b16 %v2416
        %v2524 = vunpack.c.l.b16 %v2417
        %v2525 = vunpack.c.h.b16 %v2417
        %v2526 = vunpack.c.l.b16 %v2418
        %v2527 = vunpack.c.h.b16 %v2418
        %v2528 = vpack.c.b16 %v2466, %v2464
        %v2529 = vpack.c.b16 %v2467, %v2465
        %v2530 = vpack.c.b16 %v2470, %v2468
        %v2531 = vpack.c.b16 %v2471, %v2469
        %v2532 = vpack.c.b16 %v2474, %v2472
        %v2533 = vpack.c.b16 %v2475, %v2473
        %v2534 = vpack.c.b16 %v2478, %v2476
        %v2535 = vpack.c.b16 %v2479, %v2477
        %v2536 = vpack.c.b16 %v2482, %v2480
        %v2537 = vpack.c.b16 %v2483, %v2481
        %v2538 = vpack.c.b16 %v2486, %v2484
        %v2539 = vpack.c.b16 %v2487, %v2485
        %v2540 = vpack.c.b16 %v2490, %v2488
        %v2541 = vpack.c.b16 %v2491, %v2489
        %v2542 = vpack.c.b16 %v2494, %v2492
        %v2543 = vpack.c.b16 %v2495, %v2493
        %v2544 = vpack.c.b16 %v2498, %v2496
        %v2545 = vpack.c.b16 %v2499, %v2497
        %v2546 = vpack.c.b16 %v2502, %v2500
        %v2547 = vpack.c.b16 %v2503, %v2501
        %v2548 = vpack.c.b16 %v2506, %v2504
        %v2549 = vpack.c.b16 %v2507, %v2505
        %v2550 = vpack.c.b16 %v2510, %v2508
        %v2551 = vpack.c.b16 %v2511, %v2509
        %v2552 = vpack.c.b16 %v2514, %v2512
        %v2553 = vpack.c.b16 %v2515, %v2513
        %v2554 = vpack.c.b16 %v2518, %v2516
        %v2555 = vpack.c.b16 %v2519, %v2517
        %v2556 = vpack.c.b16 %v2522, %v2520
        %v2557 = vpack.c.b16 %v2523, %v2521
        %v2558 = vpack.c.b16 %v2526, %v2524
        %v2559 = vpack.c.b16 %v2527, %v2525
        %2592 = vmatpush.bf16.msra.mxu0 %v2542
        %2593 = vmatpush.bf16.msra.mxu0 %v2540
        %2594 = vmatpush.bf16.msra.mxu0 %v2538
        %2595 = vmatpush.bf16.msra.mxu0 %v2536
        %2596 = vmatpush.bf16.msra.mxu0 %v2534
        %2597 = vmatpush.bf16.msra.mxu0 %v2532
        %2598 = vmatpush.bf16.msra.mxu0 %v2530
        %2599 = vmatpush.bf16.msra.mxu0 %v2528
        %2600 = vmatmul.bf16.gmra.mxu0 %v2428
        %v2601 = vpop.f32.mrf.mxu0
        %v2602 = vadd.f32 %v2421, %v2601
        %v2603 = vpop.f32.mrf.mxu0
        %2604 = vdwg.mxu0
        %2605 = vmatpush.bf16.msra.mxu0 %v2558
        %2606 = vmatpush.bf16.msra.mxu0 %v2556
        %2607 = vmatpush.bf16.msra.mxu0 %v2554
        %2608 = vmatpush.bf16.msra.mxu0 %v2552
        %2609 = vmatpush.bf16.msra.mxu0 %v2550
        %2610 = vmatpush.bf16.msra.mxu0 %v2548
        %2611 = vmatpush.bf16.msra.mxu0 %v2546
        %2612 = vmatpush.bf16.msra.mxu0 %v2544
        %2613 = vmatmul.bf16.gmra.mxu0 %v2429
        %v2614 = vpop.f32.mrf.mxu0
        %v2615 = vadd.f32 %v2602, %v2614
        %v2616 = vpop.f32.mrf.mxu0
        %2617 = vdwg.mxu0
        %2618 = vmatpush.bf16.msra.mxu0 %v2543
        %2619 = vmatpush.bf16.msra.mxu0 %v2541
        %2620 = vmatpush.bf16.msra.mxu0 %v2539
        %2621 = vmatpush.bf16.msra.mxu0 %v2537
        %2622 = vmatpush.bf16.msra.mxu0 %v2535
        %2623 = vmatpush.bf16.msra.mxu0 %v2533
        %2624 = vmatpush.bf16.msra.mxu0 %v2531
        %2625 = vmatpush.bf16.msra.mxu0 %v2529
        %2626 = vmatmul.bf16.gmra.mxu0 %v2428
        %v2627 = vpop.f32.mrf.mxu0
        %v2628 = vadd.f32 %v2422, %v2627
        %v2629 = vpop.f32.mrf.mxu0
        %2630 = vdwg.mxu0
        %2631 = vmatpush.bf16.msra.mxu0 %v2559
        %2632 = vmatpush.bf16.msra.mxu0 %v2557
        %2633 = vmatpush.bf16.msra.mxu0 %v2555
        %2634 = vmatpush.bf16.msra.mxu0 %v2553
        %2635 = vmatpush.bf16.msra.mxu0 %v2551
        %2636 = vmatpush.bf16.msra.mxu0 %v2549
        %2637 = vmatpush.bf16.msra.mxu0 %v2547
        %2638 = vmatpush.bf16.msra.mxu0 %v2545
        %2639 = vmatmul.bf16.gmra.mxu0 %v2429
        %v2640 = vpop.f32.mrf.mxu0
        %v2641 = vadd.f32 %v2628, %v2640
        %v2642 = vpop.f32.mrf.mxu0
        %2643 = vdwg.mxu0
        %v2644 = vpack.c.bf16 %v2641, %v2615
        %v2646 = vrot.slane %v2644, 4
        %2648 = vmatpush.bf16.xpose.msra.mxu0 0
        %2649 = vmatpush.bf16.xpose.msra.mxu0 0
        %2650 = vmatpush.bf16.xpose.msra.mxu0 0
        %2651 = vmatpush.bf16.xpose.msra.mxu0 0
        %2652 = vmatpush.bf16.xpose.msra.mxu0 0
        %2653 = vmatpush.bf16.xpose.msra.mxu0 0
        %2654 = vmatpush.bf16.xpose.msra.mxu0 0
        %2655 = vmatpush.bf16.xpose.msra.mxu0 %v1971
        %2656 = vmatmul.bf16.gmra.mxu0 %v2644
        %v2657 = vpop.f32.mrf.mxu0
        %v2658 = vadd.f32 0.0, %v2657
        %v2659 = vpop.f32.mrf.mxu0
        %2660 = vdwg.mxu0
        %2661 = vmatpush.bf16.xpose.msra.mxu0 0
        %2662 = vmatpush.bf16.xpose.msra.mxu0 0
        %2663 = vmatpush.bf16.xpose.msra.mxu0 0
        %2664 = vmatpush.bf16.xpose.msra.mxu0 0
        %2665 = vmatpush.bf16.xpose.msra.mxu0 0
        %2666 = vmatpush.bf16.xpose.msra.mxu0 0
        %2667 = vmatpush.bf16.xpose.msra.mxu0 0
        %2668 = vmatpush.bf16.xpose.msra.mxu0 %v1974
        %2669 = vmatmul.bf16.gmra.mxu0 %v2646
        %v2670 = vpop.f32.mrf.mxu0
        %v2671 = vadd.f32 0.0, %v2670
        %v2672 = vpop.f32.mrf.mxu0
        %2673 = vdwg.mxu0
        %v2674 = vmul.f32 %v2658, 0.088388346
        %v2675 = vmul.f32 %v2671, 0.088388346
        %v2676 = vsel %vm2018, %v2674, -inf
        %2677 = vmax.xlane.f32.xlu0 %v2676
        %v2678 = vpop.xlane.xlu0 %2677
        %v2679 = vsel %vm2018, %v2675, -inf
        %2680 = vmax.xlane.f32.xlu0 %v2679
        %v2681 = vpop.xlane.xlu0 %2680
        %v2682 = vsub.f32 %v2674, %v2678
        %v2683 = vsub.f32 %v2675, %v2681
        %v2684 = vmul.f32 %v2682, 1.442695
        %v2685 = vpow.pop %v2684
        %v2686 = vmul.f32 %v2683, 1.442695
        %v2687 = vpow.pop %v2686
        %v2688 = vsel %vm2018, %v2685, 0.0
        %2689 = vadd.xlane.f32.xlu0 %v2688
        %v2690 = vpop.xlane.xlu0 %2689
        %v2691 = vsel %vm2018, %v2687, 0.0
        %2692 = vadd.xlane.f32.xlu0 %v2691
        %v2693 = vpop.xlane.xlu0 %2692
        %v2694 = vrcp.pop %v2690
        %v2695 = vrcp.pop %v2693
        %v2696 = vmul.f32 %v2685, %v2694
        %v2697 = vmul.f32 %v2687, %v2695
        %v2698 = vpack.c.bf16 %v2696, %v2696
        %v2699 = vpack.c.bf16 %v2697, %v2697
        %v2701 = vsel %vm2018, %v2698, 0
        %v2704 = vsel %vm2046, %v1972, 0
        %2706 = vmatpush.bf16.msra.mxu0 0
        %2707 = vmatpush.bf16.msra.mxu0 0
        %2708 = vmatpush.bf16.msra.mxu0 0
        %2709 = vmatpush.bf16.msra.mxu0 0
        %2710 = vmatpush.bf16.msra.mxu0 0
        %2711 = vmatpush.bf16.msra.mxu0 0
        %2712 = vmatpush.bf16.msra.mxu0 0
        %2713 = vmatpush.bf16.msra.mxu0 %v2704
        %2714 = vmatmul.bf16.gmra.mxu0 %v2701
        %v2715 = vpop.f32.mrf.mxu0
        %v2716 = vadd.f32 0.0, %v2715
        %v2717 = vpop.f32.mrf.mxu0
        %2718 = vdwg.mxu0
        %v2720 = vsel %vm2018, %v2699, 0
        %v2723 = vsel %vm2046, %v1977, 0
        %2725 = vmatpush.bf16.msra.mxu0 0
        %2726 = vmatpush.bf16.msra.mxu0 0
        %2727 = vmatpush.bf16.msra.mxu0 0
        %2728 = vmatpush.bf16.msra.mxu0 0
        %2729 = vmatpush.bf16.msra.mxu0 0
        %2730 = vmatpush.bf16.msra.mxu0 0
        %2731 = vmatpush.bf16.msra.mxu0 0
        %2732 = vmatpush.bf16.msra.mxu0 %v2723
        %2733 = vmatmul.bf16.gmra.mxu0 %v2720
        %v2734 = vpop.f32.mrf.mxu0
        %v2735 = vadd.f32 0.0, %v2734
        %v2736 = vpop.f32.mrf.mxu0
        %2737 = vdwg.mxu0
        %v2738 = vpack.c.bf16 %v2716, %v2716
        %v2739 = vpack.c.bf16 %v2735, %v2735
        %v2740 = vld [vmem:[%s10] sm:$0xff]
        %v2741 = vld [vmem:[%s10 + $0x8] sm:$0xff]
        %v2742 = vld [vmem:[%s10 + $0x10] sm:$0xff]
        %v2743 = vld [vmem:[%s10 + $0x18] sm:$0xff]
        %v2744 = vld [vmem:[%s10 + $0x20] sm:$0xff]
        %v2745 = vld [vmem:[%s10 + $0x28] sm:$0xff]
        %v2746 = vld [vmem:[%s10 + $0x30] sm:$0xff]
        %v2747 = vld [vmem:[%s10 + $0x38] sm:$0xff]
        %v2748 = vld [vmem:[%s10 + $0x40] sm:$0xff]
        %v2749 = vld [vmem:[%s10 + $0x48] sm:$0xff]
        %v2750 = vld [vmem:[%s10 + $0x50] sm:$0xff]
        %v2751 = vld [vmem:[%s10 + $0x58] sm:$0xff]
        %v2752 = vld [vmem:[%s10 + $0x60] sm:$0xff]
        %v2753 = vld [vmem:[%s10 + $0x68] sm:$0xff]
        %v2754 = vld [vmem:[%s10 + $0x70] sm:$0xff]
        %v2755 = vld [vmem:[%s10 + $0x78] sm:$0xff]
        %v2756 = vld [vmem:[%s10 + $0x80] sm:$0xff]
        %v2757 = vld [vmem:[%s10 + $0x88] sm:$0xff]
        %v2758 = vld [vmem:[%s10 + $0x90] sm:$0xff]
        %v2759 = vld [vmem:[%s10 + $0x98] sm:$0xff]
        %v2760 = vld [vmem:[%s10 + $0xa0] sm:$0xff]
        %v2761 = vld [vmem:[%s10 + $0xa8] sm:$0xff]
        %v2762 = vld [vmem:[%s10 + $0xb0] sm:$0xff]
        %v2763 = vld [vmem:[%s10 + $0xb8] sm:$0xff]
        %v2764 = vld [vmem:[%s10 + $0xc0] sm:$0xff]
        %v2765 = vld [vmem:[%s10 + $0xc8] sm:$0xff]
        %v2766 = vld [vmem:[%s10 + $0xd0] sm:$0xff]
        %v2767 = vld [vmem:[%s10 + $0xd8] sm:$0xff]
        %v2768 = vld [vmem:[%s10 + $0xe0] sm:$0xff]
        %v2769 = vld [vmem:[%s10 + $0xe8] sm:$0xff]
        %v2770 = vld [vmem:[%s10 + $0xf0] sm:$0xff]
        %v2771 = vld [vmem:[%s10 + $0xf8] sm:$0xff]
        %v2772 = vld [vmem:[%s11] sm:$0x3]
        %v2774 = vperm.slane %v2772, 0
        %v2775 = vperm.slane %v2772, 1
        %v2810 = vunpack.c.l.b16 %v2740
        %v2811 = vunpack.c.h.b16 %v2740
        %v2812 = vunpack.c.l.b16 %v2741
        %v2813 = vunpack.c.h.b16 %v2741
        %v2814 = vunpack.c.l.b16 %v2742
        %v2815 = vunpack.c.h.b16 %v2742
        %v2816 = vunpack.c.l.b16 %v2743
        %v2817 = vunpack.c.h.b16 %v2743
        %v2818 = vunpack.c.l.b16 %v2744
        %v2819 = vunpack.c.h.b16 %v2744
        %v2820 = vunpack.c.l.b16 %v2745
        %v2821 = vunpack.c.h.b16 %v2745
        %v2822 = vunpack.c.l.b16 %v2746
        %v2823 = vunpack.c.h.b16 %v2746
        %v2824 = vunpack.c.l.b16 %v2747
        %v2825 = vunpack.c.h.b16 %v2747
        %v2826 = vunpack.c.l.b16 %v2748
        %v2827 = vunpack.c.h.b16 %v2748
        %v2828 = vunpack.c.l.b16 %v2749
        %v2829 = vunpack.c.h.b16 %v2749
        %v2830 = vunpack.c.l.b16 %v2750
        %v2831 = vunpack.c.h.b16 %v2750
        %v2832 = vunpack.c.l.b16 %v2751
        %v2833 = vunpack.c.h.b16 %v2751
        %v2834 = vunpack.c.l.b16 %v2752
        %v2835 = vunpack.c.h.b16 %v2752
        %v2836 = vunpack.c.l.b16 %v2753
        %v2837 = vunpack.c.h.b16 %v2753
        %v2838 = vunpack.c.l.b16 %v2754
        %v2839 = vunpack.c.h.b16 %v2754
        %v2840 = vunpack.c.l.b16 %v2755
        %v2841 = vunpack.c.h.b16 %v2755
        %v2842 = vunpack.c.l.b16 %v2756
        %v2843 = vunpack.c.h.b16 %v2756
        %v2844 = vunpack.c.l.b16 %v2757
        %v2845 = vunpack.c.h.b16 %v2757
        %v2846 = vunpack.c.l.b16 %v2758
        %v2847 = vunpack.c.h.b16 %v2758
        %v2848 = vunpack.c.l.b16 %v2759
        %v2849 = vunpack.c.h.b16 %v2759
        %v2850 = vunpack.c.l.b16 %v2760
        %v2851 = vunpack.c.h.b16 %v2760
        %v2852 = vunpack.c.l.b16 %v2761
        %v2853 = vunpack.c.h.b16 %v2761
        %v2854 = vunpack.c.l.b16 %v2762
        %v2855 = vunpack.c.h.b16 %v2762
        %v2856 = vunpack.c.l.b16 %v2763
        %v2857 = vunpack.c.h.b16 %v2763
        %v2858 = vunpack.c.l.b16 %v2764
        %v2859 = vunpack.c.h.b16 %v2764
        %v2860 = vunpack.c.l.b16 %v2765
        %v2861 = vunpack.c.h.b16 %v2765
        %v2862 = vunpack.c.l.b16 %v2766
        %v2863 = vunpack.c.h.b16 %v2766
        %v2864 = vunpack.c.l.b16 %v2767
        %v2865 = vunpack.c.h.b16 %v2767
        %v2866 = vunpack.c.l.b16 %v2768
        %v2867 = vunpack.c.h.b16 %v2768
        %v2868 = vunpack.c.l.b16 %v2769
        %v2869 = vunpack.c.h.b16 %v2769
        %v2870 = vunpack.c.l.b16 %v2770
        %v2871 = vunpack.c.h.b16 %v2770
        %v2872 = vunpack.c.l.b16 %v2771
        %v2873 = vunpack.c.h.b16 %v2771
        %v2874 = vpack.c.b16 %v2812, %v2810
        %v2875 = vpack.c.b16 %v2813, %v2811
        %v2876 = vpack.c.b16 %v2816, %v2814
        %v2877 = vpack.c.b16 %v2817, %v2815
        %v2878 = vpack.c.b16 %v2820, %v2818
        %v2879 = vpack.c.b16 %v2821, %v2819
        %v2880 = vpack.c.b16 %v2824, %v2822
        %v2881 = vpack.c.b16 %v2825, %v2823
        %v2882 = vpack.c.b16 %v2828, %v2826
        %v2883 = vpack.c.b16 %v2829, %v2827
        %v2884 = vpack.c.b16 %v2832, %v2830
        %v2885 = vpack.c.b16 %v2833, %v2831
        %v2886 = vpack.c.b16 %v2836, %v2834
        %v2887 = vpack.c.b16 %v2837, %v2835
        %v2888 = vpack.c.b16 %v2840, %v2838
        %v2889 = vpack.c.b16 %v2841, %v2839
        %v2890 = vpack.c.b16 %v2844, %v2842
        %v2891 = vpack.c.b16 %v2845, %v2843
        %v2892 = vpack.c.b16 %v2848, %v2846
        %v2893 = vpack.c.b16 %v2849, %v2847
        %v2894 = vpack.c.b16 %v2852, %v2850
        %v2895 = vpack.c.b16 %v2853, %v2851
        %v2896 = vpack.c.b16 %v2856, %v2854
        %v2897 = vpack.c.b16 %v2857, %v2855
        %v2898 = vpack.c.b16 %v2860, %v2858
        %v2899 = vpack.c.b16 %v2861, %v2859
        %v2900 = vpack.c.b16 %v2864, %v2862
        %v2901 = vpack.c.b16 %v2865, %v2863
        %v2902 = vpack.c.b16 %v2868, %v2866
        %v2903 = vpack.c.b16 %v2869, %v2867
        %v2904 = vpack.c.b16 %v2872, %v2870
        %v2905 = vpack.c.b16 %v2873, %v2871
        %2938 = vmatpush.bf16.msra.mxu0 %v2888
        %2939 = vmatpush.bf16.msra.mxu0 %v2886
        %2940 = vmatpush.bf16.msra.mxu0 %v2884
        %2941 = vmatpush.bf16.msra.mxu0 %v2882
        %2942 = vmatpush.bf16.msra.mxu0 %v2880
        %2943 = vmatpush.bf16.msra.mxu0 %v2878
        %2944 = vmatpush.bf16.msra.mxu0 %v2876
        %2945 = vmatpush.bf16.msra.mxu0 %v2874
        %2946 = vmatmul.bf16.gmra.mxu0 %v2738
        %v2947 = vpop.f32.mrf.mxu0
        %v2948 = vadd.f32 %v2774, %v2947
        %v2949 = vpop.f32.mrf.mxu0
        %2950 = vdwg.mxu0
        %2951 = vmatpush.bf16.msra.mxu0 %v2904
        %2952 = vmatpush.bf16.msra.mxu0 %v2902
        %2953 = vmatpush.bf16.msra.mxu0 %v2900
        %2954 = vmatpush.bf16.msra.mxu0 %v2898
        %2955 = vmatpush.bf16.msra.mxu0 %v2896
        %2956 = vmatpush.bf16.msra.mxu0 %v2894
        %2957 = vmatpush.bf16.msra.mxu0 %v2892
        %2958 = vmatpush.bf16.msra.mxu0 %v2890
        %2959 = vmatmul.bf16.gmra.mxu0 %v2739
        %v2960 = vpop.f32.mrf.mxu0
        %v2961 = vadd.f32 %v2948, %v2960
        %v2962 = vpop.f32.mrf.mxu0
        %2963 = vdwg.mxu0
        %2964 = vmatpush.bf16.msra.mxu0 %v2889
        %2965 = vmatpush.bf16.msra.mxu0 %v2887
        %2966 = vmatpush.bf16.msra.mxu0 %v2885
        %2967 = vmatpush.bf16.msra.mxu0 %v2883
        %2968 = vmatpush.bf16.msra.mxu0 %v2881
        %2969 = vmatpush.bf16.msra.mxu0 %v2879
        %2970 = vmatpush.bf16.msra.mxu0 %v2877
        %2971 = vmatpush.bf16.msra.mxu0 %v2875
        %2972 = vmatmul.bf16.gmra.mxu0 %v2738
        %v2973 = vpop.f32.mrf.mxu0
        %v2974 = vadd.f32 %v2775, %v2973
        %v2975 = vpop.f32.mrf.mxu0
        %2976 = vdwg.mxu0
        %2977 = vmatpush.bf16.msra.mxu0 %v2905
        %2978 = vmatpush.bf16.msra.mxu0 %v2903
        %2979 = vmatpush.bf16.msra.mxu0 %v2901
        %2980 = vmatpush.bf16.msra.mxu0 %v2899
        %2981 = vmatpush.bf16.msra.mxu0 %v2897
        %2982 = vmatpush.bf16.msra.mxu0 %v2895
        %2983 = vmatpush.bf16.msra.mxu0 %v2893
        %2984 = vmatpush.bf16.msra.mxu0 %v2891
        %2985 = vmatmul.bf16.gmra.mxu0 %v2739
        %v2986 = vpop.f32.mrf.mxu0
        %v2987 = vadd.f32 %v2974, %v2986
        %v2988 = vpop.f32.mrf.mxu0
        %2989 = vdwg.mxu0
        %v2990 = vunpack.c.l.bf16 %v2386
        %v2991 = vunpack.c.h.bf16 %v2386
        %v2992 = vadd.f32 %v2961, %v2990
        %v2993 = vadd.f32 %v2987, %v2991
        %v2994 = vadd.f32 %v2992, %v2993
        %2995 = vadd.xlane.f32.xlu0 %v2994
        %v2996 = vpop.xlane.xlu0 %2995
        %v2997 = vmul.f32 %v2996, %v2347
        %v2998 = vsub.f32 %v2992, %v2997
        %v2999 = vsub.f32 %v2993, %v2997
        %v3000 = vmul.f32 %v2998, %v2998
        %v3001 = vmul.f32 %v2999, %v2999
        %v3002 = vadd.f32 %v3000, %v3001
        %3003 = vadd.xlane.f32.xlu0 %v3002
        %v3004 = vpop.xlane.xlu0 %3003
        %v3005 = vmul.f32 %v3004, %v2347
        %v3006 = vld [vmem:[%s18] sm:$0x3]
        %v3007 = vadd.f32 %v3005, 1e-05
        %v3008 = vrsqrt.pop %v3007
        %v3009 = vmul.f32 %v3008, %v3007
        %v3010 = vmul.f32 %v3009, %v3008
        %v3011 = vmul.f32 0.5, %v3010
        %v3012 = vsub.f32 1.5, %v3011
        %v3013 = vmul.f32 %v3008, %v3012
        %vm3014 = vweird.f32 %v3007
        %vm3015 = vweird.f32 %v3008
        %vm3016 = vmor %vm3014, %vm3015
        %v3017 = vsel %vm3016, %v3008, %v3013
        %v3018 = vmul.f32 %v2998, %v3017
        %v3019 = vmul.f32 %v2999, %v3017
        %v3021 = vperm.slane %v3006, 0
        %v3022 = vperm.slane %v3006, 1
        %v3025 = vmul.f32 %v3021, %v3018
        %v3026 = vmul.f32 %v3022, %v3019
        %v3027 = vld [vmem:[%s19] sm:$0x3]
        %v3029 = vperm.slane %v3027, 0
        %v3030 = vperm.slane %v3027, 1
        %v3033 = vadd.f32 %v3025, %v3029
        %v3034 = vadd.f32 %v3026, %v3030
        %v3035 = vpack.c.bf16 %v3034, %v3033
        %v3036 = vld [vmem:[%s12] sm:$0xff]
        %v3037 = vld [vmem:[%s12 + $0x8] sm:$0xff]
        %v3038 = vld [vmem:[%s12 + $0x10] sm:$0xff]
        %v3039 = vld [vmem:[%s12 + $0x18] sm:$0xff]
        %v3040 = vld [vmem:[%s12 + $0x20] sm:$0xff]
        %v3041 = vld [vmem:[%s12 + $0x28] sm:$0xff]
        %v3042 = vld [vmem:[%s12 + $0x30] sm:$0xff]
        %v3043 = vld [vmem:[%s12 + $0x38] sm:$0xff]
        %v3044 = vld [vmem:[%s12 + $0x40] sm:$0xff]
        %v3045 = vld [vmem:[%s12 + $0x48] sm:$0xff]
        %v3046 = vld [vmem:[%s12 + $0x50] sm:$0xff]
        %v3047 = vld [vmem:[%s12 + $0x58] sm:$0xff]
        %v3048 = vld [vmem:[%s12 + $0x60] sm:$0xff]
        %v3049 = vld [vmem:[%s12 + $0x68] sm:$0xff]
        %v3050 = vld [vmem:[%s12 + $0x70] sm:$0xff]
        %v3051 = vld [vmem:[%s12 + $0x78] sm:$0xff]
        %v3052 = vld [vmem:[%s12 + $0x80] sm:$0xff]
        %v3053 = vld [vmem:[%s12 + $0x88] sm:$0xff]
        %v3054 = vld [vmem:[%s12 + $0x90] sm:$0xff]
        %v3055 = vld [vmem:[%s12 + $0x98] sm:$0xff]
        %v3056 = vld [vmem:[%s12 + $0xa0] sm:$0xff]
        %v3057 = vld [vmem:[%s12 + $0xa8] sm:$0xff]
        %v3058 = vld [vmem:[%s12 + $0xb0] sm:$0xff]
        %v3059 = vld [vmem:[%s12 + $0xb8] sm:$0xff]
        %v3060 = vld [vmem:[%s12 + $0xc0] sm:$0xff]
        %v3061 = vld [vmem:[%s12 + $0xc8] sm:$0xff]
        %v3062 = vld [vmem:[%s12 + $0xd0] sm:$0xff]
        %v3063 = vld [vmem:[%s12 + $0xd8] sm:$0xff]
        %v3064 = vld [vmem:[%s12 + $0xe0] sm:$0xff]
        %v3065 = vld [vmem:[%s12 + $0xe8] sm:$0xff]
        %v3066 = vld [vmem:[%s12 + $0xf0] sm:$0xff]
        %v3067 = vld [vmem:[%s12 + $0xf8] sm:$0xff]
        %v3068 = vld [vmem:[%s12 + $0x100] sm:$0xff]
        %v3069 = vld [vmem:[%s12 + $0x108] sm:$0xff]
        %v3070 = vld [vmem:[%s12 + $0x110] sm:$0xff]
        %v3071 = vld [vmem:[%s12 + $0x118] sm:$0xff]
        %v3072 = vld [vmem:[%s12 + $0x120] sm:$0xff]
        %v3073 = vld [vmem:[%s12 + $0x128] sm:$0xff]
        %v3074 = vld [vmem:[%s12 + $0x130] sm:$0xff]
        %v3075 = vld [vmem:[%s12 + $0x138] sm:$0xff]
        %v3076 = vld [vmem:[%s12 + $0x140] sm:$0xff]
        %v3077 = vld [vmem:[%s12 + $0x148] sm:$0xff]
        %v3078 = vld [vmem:[%s12 + $0x150] sm:$0xff]
        %v3079 = vld [vmem:[%s12 + $0x158] sm:$0xff]
        %v3080 = vld [vmem:[%s12 + $0x160] sm:$0xff]
        %v3081 = vld [vmem:[%s12 + $0x168] sm:$0xff]
        %v3082 = vld [vmem:[%s12 + $0x170] sm:$0xff]
        %v3083 = vld [vmem:[%s12 + $0x178] sm:$0xff]
        %v3084 = vld [vmem:[%s12 + $0x180] sm:$0xff]
        %v3085 = vld [vmem:[%s12 + $0x188] sm:$0xff]
        %v3086 = vld [vmem:[%s12 + $0x190] sm:$0xff]
        %v3087 = vld [vmem:[%s12 + $0x198] sm:$0xff]
        %v3088 = vld [vmem:[%s12 + $0x1a0] sm:$0xff]
        %v3089 = vld [vmem:[%s12 + $0x1a8] sm:$0xff]
        %v3090 = vld [vmem:[%s12 + $0x1b0] sm:$0xff]
        %v3091 = vld [vmem:[%s12 + $0x1b8] sm:$0xff]
        %v3092 = vld [vmem:[%s12 + $0x1c0] sm:$0xff]
        %v3093 = vld [vmem:[%s12 + $0x1c8] sm:$0xff]
        %v3094 = vld [vmem:[%s12 + $0x1d0] sm:$0xff]
        %v3095 = vld [vmem:[%s12 + $0x1d8] sm:$0xff]
        %v3096 = vld [vmem:[%s12 + $0x1e0] sm:$0xff]
        %v3097 = vld [vmem:[%s12 + $0x1e8] sm:$0xff]
        %v3098 = vld [vmem:[%s12 + $0x1f0] sm:$0xff]
        %v3099 = vld [vmem:[%s12 + $0x1f8] sm:$0xff]
        %v3100 = vld [vmem:[%s13] sm:$0xf]
        %v3102 = vperm.slane %v3100, 0
        %v3103 = vperm.slane %v3100, 1
        %v3104 = vperm.slane %v3100, 2
        %v3105 = vperm.slane %v3100, 3
        %v3111 = vunpack.c.l.b16 %v3035
        %v3112 = vunpack.c.h.b16 %v3035
        %v3113 = vpack.c.b16 %v3111, %v3111
        %v3114 = vpack.c.b16 %v3112, %v3112
        %v3181 = vunpack.c.l.b16 %v3036
        %v3182 = vunpack.c.h.b16 %v3036
        %v3183 = vunpack.c.l.b16 %v3037
        %v3184 = vunpack.c.h.b16 %v3037
        %v3185 = vunpack.c.l.b16 %v3038
        %v3186 = vunpack.c.h.b16 %v3038
        %v3187 = vunpack.c.l.b16 %v3039
        %v3188 = vunpack.c.h.b16 %v3039
        %v3189 = vunpack.c.l.b16 %v3040
        %v3190 = vunpack.c.h.b16 %v3040
        %v3191 = vunpack.c.l.b16 %v3041
        %v3192 = vunpack.c.h.b16 %v3041
        %v3193 = vunpack.c.l.b16 %v3042
        %v3194 = vunpack.c.h.b16 %v3042
        %v3195 = vunpack.c.l.b16 %v3043
        %v3196 = vunpack.c.h.b16 %v3043
        %v3197 = vunpack.c.l.b16 %v3044
        %v3198 = vunpack.c.h.b16 %v3044
        %v3199 = vunpack.c.l.b16 %v3045
        %v3200 = vunpack.c.h.b16 %v3045
        %v3201 = vunpack.c.l.b16 %v3046
        %v3202 = vunpack.c.h.b16 %v3046
        %v3203 = vunpack.c.l.b16 %v3047
        %v3204 = vunpack.c.h.b16 %v3047
        %v3205 = vunpack.c.l.b16 %v3048
        %v3206 = vunpack.c.h.b16 %v3048
        %v3207 = vunpack.c.l.b16 %v3049
        %v3208 = vunpack.c.h.b16 %v3049
        %v3209 = vunpack.c.l.b16 %v3050
        %v3210 = vunpack.c.h.b16 %v3050
        %v3211 = vunpack.c.l.b16 %v3051
        %v3212 = vunpack.c.h.b16 %v3051
        %v3213 = vunpack.c.l.b16 %v3052
        %v3214 = vunpack.c.h.b16 %v3052
        %v3215 = vunpack.c.l.b16 %v3053
        %v3216 = vunpack.c.h.b16 %v3053
        %v3217 = vunpack.c.l.b16 %v3054
        %v3218 = vunpack.c.h.b16 %v3054
        %v3219 = vunpack.c.l.b16 %v3055
        %v3220 = vunpack.c.h.b16 %v3055
        %v3221 = vunpack.c.l.b16 %v3056
        %v3222 = vunpack.c.h.b16 %v3056
        %v3223 = vunpack.c.l.b16 %v3057
        %v3224 = vunpack.c.h.b16 %v3057
        %v3225 = vunpack.c.l.b16 %v3058
        %v3226 = vunpack.c.h.b16 %v3058
        %v3227 = vunpack.c.l.b16 %v3059
        %v3228 = vunpack.c.h.b16 %v3059
        %v3229 = vunpack.c.l.b16 %v3060
        %v3230 = vunpack.c.h.b16 %v3060
        %v3231 = vunpack.c.l.b16 %v3061
        %v3232 = vunpack.c.h.b16 %v3061
        %v3233 = vunpack.c.l.b16 %v3062
        %v3234 = vunpack.c.h.b16 %v3062
        %v3235 = vunpack.c.l.b16 %v3063
        %v3236 = vunpack.c.h.b16 %v3063
        %v3237 = vunpack.c.l.b16 %v3064
        %v3238 = vunpack.c.h.b16 %v3064
        %v3239 = vunpack.c.l.b16 %v3065
        %v3240 = vunpack.c.h.b16 %v3065
        %v3241 = vunpack.c.l.b16 %v3066
        %v3242 = vunpack.c.h.b16 %v3066
        %v3243 = vunpack.c.l.b16 %v3067
        %v3244 = vunpack.c.h.b16 %v3067
        %v3245 = vunpack.c.l.b16 %v3068
        %v3246 = vunpack.c.h.b16 %v3068
        %v3247 = vunpack.c.l.b16 %v3069
        %v3248 = vunpack.c.h.b16 %v3069
        %v3249 = vunpack.c.l.b16 %v3070
        %v3250 = vunpack.c.h.b16 %v3070
        %v3251 = vunpack.c.l.b16 %v3071
        %v3252 = vunpack.c.h.b16 %v3071
        %v3253 = vunpack.c.l.b16 %v3072
        %v3254 = vunpack.c.h.b16 %v3072
        %v3255 = vunpack.c.l.b16 %v3073
        %v3256 = vunpack.c.h.b16 %v3073
        %v3257 = vunpack.c.l.b16 %v3074
        %v3258 = vunpack.c.h.b16 %v3074
        %v3259 = vunpack.c.l.b16 %v3075
        %v3260 = vunpack.c.h.b16 %v3075
        %v3261 = vunpack.c.l.b16 %v3076
        %v3262 = vunpack.c.h.b16 %v3076
        %v3263 = vunpack.c.l.b16 %v3077
        %v3264 = vunpack.c.h.b16 %v3077
        %v3265 = vunpack.c.l.b16 %v3078
        %v3266 = vunpack.c.h.b16 %v3078
        %v3267 = vunpack.c.l.b16 %v3079
        %v3268 = vunpack.c.h.b16 %v3079
        %v3269 = vunpack.c.l.b16 %v3080
        %v3270 = vunpack.c.h.b16 %v3080
        %v3271 = vunpack.c.l.b16 %v3081
        %v3272 = vunpack.c.h.b16 %v3081
        %v3273 = vunpack.c.l.b16 %v3082
        %v3274 = vunpack.c.h.b16 %v3082
        %v3275 = vunpack.c.l.b16 %v3083
        %v3276 = vunpack.c.h.b16 %v3083
        %v3277 = vunpack.c.l.b16 %v3084
        %v3278 = vunpack.c.h.b16 %v3084
        %v3279 = vunpack.c.l.b16 %v3085
        %v3280 = vunpack.c.h.b16 %v3085
        %v3281 = vunpack.c.l.b16 %v3086
        %v3282 = vunpack.c.h.b16 %v3086
        %v3283 = vunpack.c.l.b16 %v3087
        %v3284 = vunpack.c.h.b16 %v3087
        %v3285 = vunpack.c.l.b16 %v3088
        %v3286 = vunpack.c.h.b16 %v3088
        %v3287 = vunpack.c.l.b16 %v3089
        %v3288 = vunpack.c.h.b16 %v3089
        %v3289 = vunpack.c.l.b16 %v3090
        %v3290 = vunpack.c.h.b16 %v3090
        %v3291 = vunpack.c.l.b16 %v3091
        %v3292 = vunpack.c.h.b16 %v3091
        %v3293 = vunpack.c.l.b16 %v3092
        %v3294 = vunpack.c.h.b16 %v3092
        %v3295 = vunpack.c.l.b16 %v3093
        %v3296 = vunpack.c.h.b16 %v3093
        %v3297 = vunpack.c.l.b16 %v3094
        %v3298 = vunpack.c.h.b16 %v3094
        %v3299 = vunpack.c.l.b16 %v3095
        %v3300 = vunpack.c.h.b16 %v3095
        %v3301 = vunpack.c.l.b16 %v3096
        %v3302 = vunpack.c.h.b16 %v3096
        %v3303 = vunpack.c.l.b16 %v3097
        %v3304 = vunpack.c.h.b16 %v3097
        %v3305 = vunpack.c.l.b16 %v3098
        %v3306 = vunpack.c.h.b16 %v3098
        %v3307 = vunpack.c.l.b16 %v3099
        %v3308 = vunpack.c.h.b16 %v3099
        %v3309 = vpack.c.b16 %v3185, %v3181
        %v3310 = vpack.c.b16 %v3186, %v3182
        %v3311 = vpack.c.b16 %v3187, %v3183
        %v3312 = vpack.c.b16 %v3188, %v3184
        %v3313 = vpack.c.b16 %v3193, %v3189
        %v3314 = vpack.c.b16 %v3194, %v3190
        %v3315 = vpack.c.b16 %v3195, %v3191
        %v3316 = vpack.c.b16 %v3196, %v3192
        %v3317 = vpack.c.b16 %v3201, %v3197
        %v3318 = vpack.c.b16 %v3202, %v3198
        %v3319 = vpack.c.b16 %v3203, %v3199
        %v3320 = vpack.c.b16 %v3204, %v3200
        %v3321 = vpack.c.b16 %v3209, %v3205
        %v3322 = vpack.c.b16 %v3210, %v3206
        %v3323 = vpack.c.b16 %v3211, %v3207
        %v3324 = vpack.c.b16 %v3212, %v3208
        %v3325 = vpack.c.b16 %v3217, %v3213
        %v3326 = vpack.c.b16 %v3218, %v3214
        %v3327 = vpack.c.b16 %v3219, %v3215
        %v3328 = vpack.c.b16 %v3220, %v3216
        %v3329 = vpack.c.b16 %v3225, %v3221
        %v3330 = vpack.c.b16 %v3226, %v3222
        %v3331 = vpack.c.b16 %v3227, %v3223
        %v3332 = vpack.c.b16 %v3228, %v3224
        %v3333 = vpack.c.b16 %v3233, %v3229
        %v3334 = vpack.c.b16 %v3234, %v3230
        %v3335 = vpack.c.b16 %v3235, %v3231
        %v3336 = vpack.c.b16 %v3236, %v3232
        %v3337 = vpack.c.b16 %v3241, %v3237
        %v3338 = vpack.c.b16 %v3242, %v3238
        %v3339 = vpack.c.b16 %v3243, %v3239
        %v3340 = vpack.c.b16 %v3244, %v3240
        %v3341 = vpack.c.b16 %v3249, %v3245
        %v3342 = vpack.c.b16 %v3250, %v3246
        %v3343 = vpack.c.b16 %v3251, %v3247
        %v3344 = vpack.c.b16 %v3252, %v3248
        %v3345 = vpack.c.b16 %v3257, %v3253
        %v3346 = vpack.c.b16 %v3258, %v3254
        %v3347 = vpack.c.b16 %v3259, %v3255
        %v3348 = vpack.c.b16 %v3260, %v3256
        %v3349 = vpack.c.b16 %v3265, %v3261
        %v3350 = vpack.c.b16 %v3266, %v3262
        %v3351 = vpack.c.b16 %v3267, %v3263
        %v3352 = vpack.c.b16 %v3268, %v3264
        %v3353 = vpack.c.b16 %v3273, %v3269
        %v3354 = vpack.c.b16 %v3274, %v3270
        %v3355 = vpack.c.b16 %v3275, %v3271
        %v3356 = vpack.c.b16 %v3276, %v3272
        %v3357 = vpack.c.b16 %v3281, %v3277
        %v3358 = vpack.c.b16 %v3282, %v3278
        %v3359 = vpack.c.b16 %v3283, %v3279
        %v3360 = vpack.c.b16 %v3284, %v3280
        %v3361 = vpack.c.b16 %v3289, %v3285
        %v3362 = vpack.c.b16 %v3290, %v3286
        %v3363 = vpack.c.b16 %v3291, %v3287
        %v3364 = vpack.c.b16 %v3292, %v3288
        %v3365 = vpack.c.b16 %v3297, %v3293
        %v3366 = vpack.c.b16 %v3298, %v3294
        %v3367 = vpack.c.b16 %v3299, %v3295
        %v3368 = vpack.c.b16 %v3300, %v3296
        %v3369 = vpack.c.b16 %v3305, %v3301
        %v3370 = vpack.c.b16 %v3306, %v3302
        %v3371 = vpack.c.b16 %v3307, %v3303
        %v3372 = vpack.c.b16 %v3308, %v3304
        %3437 = vmatpush.bf16.msra.mxu0 %v3337
        %3438 = vmatpush.bf16.msra.mxu0 %v3333
        %3439 = vmatpush.bf16.msra.mxu0 %v3329
        %3440 = vmatpush.bf16.msra.mxu0 %v3325
        %3441 = vmatpush.bf16.msra.mxu0 %v3321
        %3442 = vmatpush.bf16.msra.mxu0 %v3317
        %3443 = vmatpush.bf16.msra.mxu0 %v3313
        %3444 = vmatpush.bf16.msra.mxu0 %v3309
        %3445 = vmatmul.bf16.gmra.mxu0 %v3113
        %v3446 = vpop.f32.mrf.mxu0
        %v3447 = vadd.f32 %v3102, %v3446
        %v3448 = vpop.f32.mrf.mxu0
        %3449 = vdwg.mxu0
        %3450 = vmatpush.bf16.msra.mxu0 %v3369
        %3451 = vmatpush.bf16.msra.mxu0 %v3365
        %3452 = vmatpush.bf16.msra.mxu0 %v3361
        %3453 = vmatpush.bf16.msra.mxu0 %v3357
        %3454 = vmatpush.bf16.msra.mxu0 %v3353
        %3455 = vmatpush.bf16.msra.mxu0 %v3349
        %3456 = vmatpush.bf16.msra.mxu0 %v3345
        %3457 = vmatpush.bf16.msra.mxu0 %v3341
        %3458 = vmatmul.bf16.gmra.mxu0 %v3114
        %v3459 = vpop.f32.mrf.mxu0
        %v3460 = vadd.f32 %v3447, %v3459
        %v3461 = vpop.f32.mrf.mxu0
        %3462 = vdwg.mxu0
        %3463 = vmatpush.bf16.msra.mxu0 %v3338
        %3464 = vmatpush.bf16.msra.mxu0 %v3334
        %3465 = vmatpush.bf16.msra.mxu0 %v3330
        %3466 = vmatpush.bf16.msra.mxu0 %v3326
        %3467 = vmatpush.bf16.msra.mxu0 %v3322
        %3468 = vmatpush.bf16.msra.mxu0 %v3318
        %3469 = vmatpush.bf16.msra.mxu0 %v3314
        %3470 = vmatpush.bf16.msra.mxu0 %v3310
        %3471 = vmatmul.bf16.gmra.mxu0 %v3113
        %v3472 = vpop.f32.mrf.mxu0
        %v3473 = vadd.f32 %v3103, %v3472
        %v3474 = vpop.f32.mrf.mxu0
        %3475 = vdwg.mxu0
        %3476 = vmatpush.bf16.msra.mxu0 %v3370
        %3477 = vmatpush.bf16.msra.mxu0 %v3366
        %3478 = vmatpush.bf16.msra.mxu0 %v3362
        %3479 = vmatpush.bf16.msra.mxu0 %v3358
        %3480 = vmatpush.bf16.msra.mxu0 %v3354
        %3481 = vmatpush.bf16.msra.mxu0 %v3350
        %3482 = vmatpush.bf16.msra.mxu0 %v3346
        %3483 = vmatpush.bf16.msra.mxu0 %v3342
        %3484 = vmatmul.bf16.gmra.mxu0 %v3114
        %v3485 = vpop.f32.mrf.mxu0
        %v3486 = vadd.f32 %v3473, %v3485
        %v3487 = vpop.f32.mrf.mxu0
        %3488 = vdwg.mxu0
        %3489 = vmatpush.bf16.msra.mxu0 %v3339
        %3490 = vmatpush.bf16.msra.mxu0 %v3335
        %3491 = vmatpush.bf16.msra.mxu0 %v3331
        %3492 = vmatpush.bf16.msra.mxu0 %v3327
        %3493 = vmatpush.bf16.msra.mxu0 %v3323
        %3494 = vmatpush.bf16.msra.mxu0 %v3319
        %3495 = vmatpush.bf16.msra.mxu0 %v3315
        %3496 = vmatpush.bf16.msra.mxu0 %v3311
        %3497 = vmatmul.bf16.gmra.mxu0 %v3113
        %v3498 = vpop.f32.mrf.mxu0
        %v3499 = vadd.f32 %v3104, %v3498
        %v3500 = vpop.f32.mrf.mxu0
        %3501 = vdwg.mxu0
        %3502 = vmatpush.bf16.msra.mxu0 %v3371
        %3503 = vmatpush.bf16.msra.mxu0 %v3367
        %3504 = vmatpush.bf16.msra.mxu0 %v3363
        %3505 = vmatpush.bf16.msra.mxu0 %v3359
        %3506 = vmatpush.bf16.msra.mxu0 %v3355
        %3507 = vmatpush.bf16.msra.mxu0 %v3351
        %3508 = vmatpush.bf16.msra.mxu0 %v3347
        %3509 = vmatpush.bf16.msra.mxu0 %v3343
        %3510 = vmatmul.bf16.gmra.mxu0 %v3114
        %v3511 = vpop.f32.mrf.mxu0
        %v3512 = vadd.f32 %v3499, %v3511
        %v3513 = vpop.f32.mrf.mxu0
        %3514 = vdwg.mxu0
        %3515 = vmatpush.bf16.msra.mxu0 %v3340
        %3516 = vmatpush.bf16.msra.mxu0 %v3336
        %3517 = vmatpush.bf16.msra.mxu0 %v3332
        %3518 = vmatpush.bf16.msra.mxu0 %v3328
        %3519 = vmatpush.bf16.msra.mxu0 %v3324
        %3520 = vmatpush.bf16.msra.mxu0 %v3320
        %3521 = vmatpush.bf16.msra.mxu0 %v3316
        %3522 = vmatpush.bf16.msra.mxu0 %v3312
        %3523 = vmatmul.bf16.gmra.mxu0 %v3113
        %v3524 = vpop.f32.mrf.mxu0
        %v3525 = vadd.f32 %v3105, %v3524
        %v3526 = vpop.f32.mrf.mxu0
        %3527 = vdwg.mxu0
        %3528 = vmatpush.bf16.msra.mxu0 %v3372
        %3529 = vmatpush.bf16.msra.mxu0 %v3368
        %3530 = vmatpush.bf16.msra.mxu0 %v3364
        %3531 = vmatpush.bf16.msra.mxu0 %v3360
        %3532 = vmatpush.bf16.msra.mxu0 %v3356
        %3533 = vmatpush.bf16.msra.mxu0 %v3352
        %3534 = vmatpush.bf16.msra.mxu0 %v3348
        %3535 = vmatpush.bf16.msra.mxu0 %v3344
        %3536 = vmatmul.bf16.gmra.mxu0 %v3114
        %v3537 = vpop.f32.mrf.mxu0
        %v3538 = vadd.f32 %v3525, %v3537
        %v3539 = vpop.f32.mrf.mxu0
        %3540 = vdwg.mxu0
        %v3541 = vpack.c.bf16 %v3486, %v3460
        %v3542 = vpack.c.bf16 %v3538, %v3512
        %v3543 = vunpack.c.l.bf16 %v3541
        %v3544 = vunpack.c.h.bf16 %v3541
        %v3545 = vunpack.c.l.bf16 %v3542
        %v3546 = vunpack.c.h.bf16 %v3542
        %v3547 = vmax.f32 %v3543, 0.0
        %v3548 = vmax.f32 %v3544, 0.0
        %v3549 = vmax.f32 %v3545, 0.0
        %v3550 = vmax.f32 %v3546, 0.0
        %v3551 = vpack.c.bf16 %v3547, %v3547
        %v3552 = vpack.c.bf16 %v3548, %v3548
        %v3553 = vpack.c.bf16 %v3549, %v3549
        %v3554 = vpack.c.bf16 %v3550, %v3550
        %v3555 = vld [vmem:[%s14] sm:$0xff]
        %v3556 = vld [vmem:[%s14 + $0x8] sm:$0xff]
        %v3557 = vld [vmem:[%s14 + $0x10] sm:$0xff]
        %v3558 = vld [vmem:[%s14 + $0x18] sm:$0xff]
        %v3559 = vld [vmem:[%s14 + $0x20] sm:$0xff]
        %v3560 = vld [vmem:[%s14 + $0x28] sm:$0xff]
        %v3561 = vld [vmem:[%s14 + $0x30] sm:$0xff]
        %v3562 = vld [vmem:[%s14 + $0x38] sm:$0xff]
        %v3563 = vld [vmem:[%s14 + $0x40] sm:$0xff]
        %v3564 = vld [vmem:[%s14 + $0x48] sm:$0xff]
        %v3565 = vld [vmem:[%s14 + $0x50] sm:$0xff]
        %v3566 = vld [vmem:[%s14 + $0x58] sm:$0xff]
        %v3567 = vld [vmem:[%s14 + $0x60] sm:$0xff]
        %v3568 = vld [vmem:[%s14 + $0x68] sm:$0xff]
        %v3569 = vld [vmem:[%s14 + $0x70] sm:$0xff]
        %v3570 = vld [vmem:[%s14 + $0x78] sm:$0xff]
        %v3571 = vld [vmem:[%s14 + $0x80] sm:$0xff]
        %v3572 = vld [vmem:[%s14 + $0x88] sm:$0xff]
        %v3573 = vld [vmem:[%s14 + $0x90] sm:$0xff]
        %v3574 = vld [vmem:[%s14 + $0x98] sm:$0xff]
        %v3575 = vld [vmem:[%s14 + $0xa0] sm:$0xff]
        %v3576 = vld [vmem:[%s14 + $0xa8] sm:$0xff]
        %v3577 = vld [vmem:[%s14 + $0xb0] sm:$0xff]
        %v3578 = vld [vmem:[%s14 + $0xb8] sm:$0xff]
        %v3579 = vld [vmem:[%s14 + $0xc0] sm:$0xff]
        %v3580 = vld [vmem:[%s14 + $0xc8] sm:$0xff]
        %v3581 = vld [vmem:[%s14 + $0xd0] sm:$0xff]
        %v3582 = vld [vmem:[%s14 + $0xd8] sm:$0xff]
        %v3583 = vld [vmem:[%s14 + $0xe0] sm:$0xff]
        %v3584 = vld [vmem:[%s14 + $0xe8] sm:$0xff]
        %v3585 = vld [vmem:[%s14 + $0xf0] sm:$0xff]
        %v3586 = vld [vmem:[%s14 + $0xf8] sm:$0xff]
        %v3587 = vld [vmem:[%s14 + $0x100] sm:$0xff]
        %v3588 = vld [vmem:[%s14 + $0x108] sm:$0xff]
        %v3589 = vld [vmem:[%s14 + $0x110] sm:$0xff]
        %v3590 = vld [vmem:[%s14 + $0x118] sm:$0xff]
        %v3591 = vld [vmem:[%s14 + $0x120] sm:$0xff]
        %v3592 = vld [vmem:[%s14 + $0x128] sm:$0xff]
        %v3593 = vld [vmem:[%s14 + $0x130] sm:$0xff]
        %v3594 = vld [vmem:[%s14 + $0x138] sm:$0xff]
        %v3595 = vld [vmem:[%s14 + $0x140] sm:$0xff]
        %v3596 = vld [vmem:[%s14 + $0x148] sm:$0xff]
        %v3597 = vld [vmem:[%s14 + $0x150] sm:$0xff]
        %v3598 = vld [vmem:[%s14 + $0x158] sm:$0xff]
        %v3599 = vld [vmem:[%s14 + $0x160] sm:$0xff]
        %v3600 = vld [vmem:[%s14 + $0x168] sm:$0xff]
        %v3601 = vld [vmem:[%s14 + $0x170] sm:$0xff]
        %v3602 = vld [vmem:[%s14 + $0x178] sm:$0xff]
        %v3603 = vld [vmem:[%s14 + $0x180] sm:$0xff]
        %v3604 = vld [vmem:[%s14 + $0x188] sm:$0xff]
        %v3605 = vld [vmem:[%s14 + $0x190] sm:$0xff]
        %v3606 = vld [vmem:[%s14 + $0x198] sm:$0xff]
        %v3607 = vld [vmem:[%s14 + $0x1a0] sm:$0xff]
        %v3608 = vld [vmem:[%s14 + $0x1a8] sm:$0xff]
        %v3609 = vld [vmem:[%s14 + $0x1b0] sm:$0xff]
        %v3610 = vld [vmem:[%s14 + $0x1b8] sm:$0xff]
        %v3611 = vld [vmem:[%s14 + $0x1c0] sm:$0xff]
        %v3612 = vld [vmem:[%s14 + $0x1c8] sm:$0xff]
        %v3613 = vld [vmem:[%s14 + $0x1d0] sm:$0xff]
        %v3614 = vld [vmem:[%s14 + $0x1d8] sm:$0xff]
        %v3615 = vld [vmem:[%s14 + $0x1e0] sm:$0xff]
        %v3616 = vld [vmem:[%s14 + $0x1e8] sm:$0xff]
        %v3617 = vld [vmem:[%s14 + $0x1f0] sm:$0xff]
        %v3618 = vld [vmem:[%s14 + $0x1f8] sm:$0xff]
        %v3619 = vld [vmem:[%s15] sm:$0x3]
        %v3621 = vperm.slane %v3619, 0
        %v3622 = vperm.slane %v3619, 1
        %v3689 = vunpack.c.l.b16 %v3555
        %v3690 = vunpack.c.h.b16 %v3555
        %v3691 = vunpack.c.l.b16 %v3556
        %v3692 = vunpack.c.h.b16 %v3556
        %v3693 = vunpack.c.l.b16 %v3557
        %v3694 = vunpack.c.h.b16 %v3557
        %v3695 = vunpack.c.l.b16 %v3558
        %v3696 = vunpack.c.h.b16 %v3558
        %v3697 = vunpack.c.l.b16 %v3559
        %v3698 = vunpack.c.h.b16 %v3559
        %v3699 = vunpack.c.l.b16 %v3560
        %v3700 = vunpack.c.h.b16 %v3560
        %v3701 = vunpack.c.l.b16 %v3561
        %v3702 = vunpack.c.h.b16 %v3561
        %v3703 = vunpack.c.l.b16 %v3562
        %v3704 = vunpack.c.h.b16 %v3562
        %v3705 = vunpack.c.l.b16 %v3563
        %v3706 = vunpack.c.h.b16 %v3563
        %v3707 = vunpack.c.l.b16 %v3564
        %v3708 = vunpack.c.h.b16 %v3564
        %v3709 = vunpack.c.l.b16 %v3565
        %v3710 = vunpack.c.h.b16 %v3565
        %v3711 = vunpack.c.l.b16 %v3566
        %v3712 = vunpack.c.h.b16 %v3566
        %v3713 = vunpack.c.l.b16 %v3567
        %v3714 = vunpack.c.h.b16 %v3567
        %v3715 = vunpack.c.l.b16 %v3568
        %v3716 = vunpack.c.h.b16 %v3568
        %v3717 = vunpack.c.l.b16 %v3569
        %v3718 = vunpack.c.h.b16 %v3569
        %v3719 = vunpack.c.l.b16 %v3570
        %v3720 = vunpack.c.h.b16 %v3570
        %v3721 = vunpack.c.l.b16 %v3571
        %v3722 = vunpack.c.h.b16 %v3571
        %v3723 = vunpack.c.l.b16 %v3572
        %v3724 = vunpack.c.h.b16 %v3572
        %v3725 = vunpack.c.l.b16 %v3573
        %v3726 = vunpack.c.h.b16 %v3573
        %v3727 = vunpack.c.l.b16 %v3574
        %v3728 = vunpack.c.h.b16 %v3574
        %v3729 = vunpack.c.l.b16 %v3575
        %v3730 = vunpack.c.h.b16 %v3575
        %v3731 = vunpack.c.l.b16 %v3576
        %v3732 = vunpack.c.h.b16 %v3576
        %v3733 = vunpack.c.l.b16 %v3577
        %v3734 = vunpack.c.h.b16 %v3577
        %v3735 = vunpack.c.l.b16 %v3578
        %v3736 = vunpack.c.h.b16 %v3578
        %v3737 = vunpack.c.l.b16 %v3579
        %v3738 = vunpack.c.h.b16 %v3579
        %v3739 = vunpack.c.l.b16 %v3580
        %v3740 = vunpack.c.h.b16 %v3580
        %v3741 = vunpack.c.l.b16 %v3581
        %v3742 = vunpack.c.h.b16 %v3581
        %v3743 = vunpack.c.l.b16 %v3582
        %v3744 = vunpack.c.h.b16 %v3582
        %v3745 = vunpack.c.l.b16 %v3583
        %v3746 = vunpack.c.h.b16 %v3583
        %v3747 = vunpack.c.l.b16 %v3584
        %v3748 = vunpack.c.h.b16 %v3584
        %v3749 = vunpack.c.l.b16 %v3585
        %v3750 = vunpack.c.h.b16 %v3585
        %v3751 = vunpack.c.l.b16 %v3586
        %v3752 = vunpack.c.h.b16 %v3586
        %v3753 = vunpack.c.l.b16 %v3587
        %v3754 = vunpack.c.h.b16 %v3587
        %v3755 = vunpack.c.l.b16 %v3588
        %v3756 = vunpack.c.h.b16 %v3588
        %v3757 = vunpack.c.l.b16 %v3589
        %v3758 = vunpack.c.h.b16 %v3589
        %v3759 = vunpack.c.l.b16 %v3590
        %v3760 = vunpack.c.h.b16 %v3590
        %v3761 = vunpack.c.l.b16 %v3591
        %v3762 = vunpack.c.h.b16 %v3591
        %v3763 = vunpack.c.l.b16 %v3592
        %v3764 = vunpack.c.h.b16 %v3592
        %v3765 = vunpack.c.l.b16 %v3593
        %v3766 = vunpack.c.h.b16 %v3593
        %v3767 = vunpack.c.l.b16 %v3594
        %v3768 = vunpack.c.h.b16 %v3594
        %v3769 = vunpack.c.l.b16 %v3595
        %v3770 = vunpack.c.h.b16 %v3595
        %v3771 = vunpack.c.l.b16 %v3596
        %v3772 = vunpack.c.h.b16 %v3596
        %v3773 = vunpack.c.l.b16 %v3597
        %v3774 = vunpack.c.h.b16 %v3597
        %v3775 = vunpack.c.l.b16 %v3598
        %v3776 = vunpack.c.h.b16 %v3598
        %v3777 = vunpack.c.l.b16 %v3599
        %v3778 = vunpack.c.h.b16 %v3599
        %v3779 = vunpack.c.l.b16 %v3600
        %v3780 = vunpack.c.h.b16 %v3600
        %v3781 = vunpack.c.l.b16 %v3601
        %v3782 = vunpack.c.h.b16 %v3601
        %v3783 = vunpack.c.l.b16 %v3602
        %v3784 = vunpack.c.h.b16 %v3602
        %v3785 = vunpack.c.l.b16 %v3603
        %v3786 = vunpack.c.h.b16 %v3603
        %v3787 = vunpack.c.l.b16 %v3604
        %v3788 = vunpack.c.h.b16 %v3604
        %v3789 = vunpack.c.l.b16 %v3605
        %v3790 = vunpack.c.h.b16 %v3605
        %v3791 = vunpack.c.l.b16 %v3606
        %v3792 = vunpack.c.h.b16 %v3606
        %v3793 = vunpack.c.l.b16 %v3607
        %v3794 = vunpack.c.h.b16 %v3607
        %v3795 = vunpack.c.l.b16 %v3608
        %v3796 = vunpack.c.h.b16 %v3608
        %v3797 = vunpack.c.l.b16 %v3609
        %v3798 = vunpack.c.h.b16 %v3609
        %v3799 = vunpack.c.l.b16 %v3610
        %v3800 = vunpack.c.h.b16 %v3610
        %v3801 = vunpack.c.l.b16 %v3611
        %v3802 = vunpack.c.h.b16 %v3611
        %v3803 = vunpack.c.l.b16 %v3612
        %v3804 = vunpack.c.h.b16 %v3612
        %v3805 = vunpack.c.l.b16 %v3613
        %v3806 = vunpack.c.h.b16 %v3613
        %v3807 = vunpack.c.l.b16 %v3614
        %v3808 = vunpack.c.h.b16 %v3614
        %v3809 = vunpack.c.l.b16 %v3615
        %v3810 = vunpack.c.h.b16 %v3615
        %v3811 = vunpack.c.l.b16 %v3616
        %v3812 = vunpack.c.h.b16 %v3616
        %v3813 = vunpack.c.l.b16 %v3617
        %v3814 = vunpack.c.h.b16 %v3617
        %v3815 = vunpack.c.l.b16 %v3618
        %v3816 = vunpack.c.h.b16 %v3618
        %v3817 = vpack.c.b16 %v3691, %v3689
        %v3818 = vpack.c.b16 %v3692, %v3690
        %v3819 = vpack.c.b16 %v3695, %v3693
        %v3820 = vpack.c.b16 %v3696, %v3694
        %v3821 = vpack.c.b16 %v3699, %v3697
        %v3822 = vpack.c.b16 %v3700, %v3698
        %v3823 = vpack.c.b16 %v3703, %v3701
        %v3824 = vpack.c.b16 %v3704, %v3702
        %v3825 = vpack.c.b16 %v3707, %v3705
        %v3826 = vpack.c.b16 %v3708, %v3706
        %v3827 = vpack.c.b16 %v3711, %v3709
        %v3828 = vpack.c.b16 %v3712, %v3710
        %v3829 = vpack.c.b16 %v3715, %v3713
        %v3830 = vpack.c.b16 %v3716, %v3714
        %v3831 = vpack.c.b16 %v3719, %v3717
        %v3832 = vpack.c.b16 %v3720, %v3718
        %v3833 = vpack.c.b16 %v3723, %v3721
        %v3834 = vpack.c.b16 %v3724, %v3722
        %v3835 = vpack.c.b16 %v3727, %v3725
        %v3836 = vpack.c.b16 %v3728, %v3726
        %v3837 = vpack.c.b16 %v3731, %v3729
        %v3838 = vpack.c.b16 %v3732, %v3730
        %v3839 = vpack.c.b16 %v3735, %v3733
        %v3840 = vpack.c.b16 %v3736, %v3734
        %v3841 = vpack.c.b16 %v3739, %v3737
        %v3842 = vpack.c.b16 %v3740, %v3738
        %v3843 = vpack.c.b16 %v3743, %v3741
        %v3844 = vpack.c.b16 %v3744, %v3742
        %v3845 = vpack.c.b16 %v3747, %v3745
        %v3846 = vpack.c.b16 %v3748, %v3746
        %v3847 = vpack.c.b16 %v3751, %v3749
        %v3848 = vpack.c.b16 %v3752, %v3750
        %v3849 = vpack.c.b16 %v3755, %v3753
        %v3850 = vpack.c.b16 %v3756, %v3754
        %v3851 = vpack.c.b16 %v3759, %v3757
        %v3852 = vpack.c.b16 %v3760, %v3758
        %v3853 = vpack.c.b16 %v3763, %v3761
        %v3854 = vpack.c.b16 %v3764, %v3762
        %v3855 = vpack.c.b16 %v3767, %v3765
        %v3856 = vpack.c.b16 %v3768, %v3766
        %v3857 = vpack.c.b16 %v3771, %v3769
        %v3858 = vpack.c.b16 %v3772, %v3770
        %v3859 = vpack.c.b16 %v3775, %v3773
        %v3860 = vpack.c.b16 %v3776, %v3774
        %v3861 = vpack.c.b16 %v3779, %v3777
        %v3862 = vpack.c.b16 %v3780, %v3778
        %v3863 = vpack.c.b16 %v3783, %v3781
        %v3864 = vpack.c.b16 %v3784, %v3782
        %v3865 = vpack.c.b16 %v3787, %v3785
        %v3866 = vpack.c.b16 %v3788, %v3786
        %v3867 = vpack.c.b16 %v3791, %v3789
        %v3868 = vpack.c.b16 %v3792, %v3790
        %v3869 = vpack.c.b16 %v3795, %v3793
        %v3870 = vpack.c.b16 %v3796, %v3794
        %v3871 = vpack.c.b16 %v3799, %v3797
        %v3872 = vpack.c.b16 %v3800, %v3798
        %v3873 = vpack.c.b16 %v3803, %v3801
        %v3874 = vpack.c.b16 %v3804, %v3802
        %v3875 = vpack.c.b16 %v3807, %v3805
        %v3876 = vpack.c.b16 %v3808, %v3806
        %v3877 = vpack.c.b16 %v3811, %v3809
        %v3878 = vpack.c.b16 %v3812, %v3810
        %v3879 = vpack.c.b16 %v3815, %v3813
        %v3880 = vpack.c.b16 %v3816, %v3814
        %3945 = vmatpush.bf16.msra.mxu0 %v3831
        %3946 = vmatpush.bf16.msra.mxu0 %v3829
        %3947 = vmatpush.bf16.msra.mxu0 %v3827
        %3948 = vmatpush.bf16.msra.mxu0 %v3825
        %3949 = vmatpush.bf16.msra.mxu0 %v3823
        %3950 = vmatpush.bf16.msra.mxu0 %v3821
        %3951 = vmatpush.bf16.msra.mxu0 %v3819
        %3952 = vmatpush.bf16.msra.mxu0 %v3817
        %3953 = vmatmul.bf16.gmra.mxu0 %v3551
        %v3954 = vpop.f32.mrf.mxu0
        %v3955 = vadd.f32 %v3621, %v3954
        %v3956 = vpop.f32.mrf.mxu0
        %3957 = vdwg.mxu0
        %3958 = vmatpush.bf16.msra.mxu0 %v3847
        %3959 = vmatpush.bf16.msra.mxu0 %v3845
        %3960 = vmatpush.bf16.msra.mxu0 %v3843
        %3961 = vmatpush.bf16.msra.mxu0 %v3841
        %3962 = vmatpush.bf16.msra.mxu0 %v3839
        %3963 = vmatpush.bf16.msra.mxu0 %v3837
        %3964 = vmatpush.bf16.msra.mxu0 %v3835
        %3965 = vmatpush.bf16.msra.mxu0 %v3833
        %3966 = vmatmul.bf16.gmra.mxu0 %v3552
        %v3967 = vpop.f32.mrf.mxu0
        %v3968 = vadd.f32 %v3955, %v3967
        %v3969 = vpop.f32.mrf.mxu0
        %3970 = vdwg.mxu0
        %3971 = vmatpush.bf16.msra.mxu0 %v3863
        %3972 = vmatpush.bf16.msra.mxu0 %v3861
        %3973 = vmatpush.bf16.msra.mxu0 %v3859
        %3974 = vmatpush.bf16.msra.mxu0 %v3857
        %3975 = vmatpush.bf16.msra.mxu0 %v3855
        %3976 = vmatpush.bf16.msra.mxu0 %v3853
        %3977 = vmatpush.bf16.msra.mxu0 %v3851
        %3978 = vmatpush.bf16.msra.mxu0 %v3849
        %3979 = vmatmul.bf16.gmra.mxu0 %v3553
        %v3980 = vpop.f32.mrf.mxu0
        %v3981 = vadd.f32 %v3968, %v3980
        %v3982 = vpop.f32.mrf.mxu0
        %3983 = vdwg.mxu0
        %3984 = vmatpush.bf16.msra.mxu0 %v3879
        %3985 = vmatpush.bf16.msra.mxu0 %v3877
        %3986 = vmatpush.bf16.msra.mxu0 %v3875
        %3987 = vmatpush.bf16.msra.mxu0 %v3873
        %3988 = vmatpush.bf16.msra.mxu0 %v3871
        %3989 = vmatpush.bf16.msra.mxu0 %v3869
        %3990 = vmatpush.bf16.msra.mxu0 %v3867
        %3991 = vmatpush.bf16.msra.mxu0 %v3865
        %3992 = vmatmul.bf16.gmra.mxu0 %v3554
        %v3993 = vpop.f32.mrf.mxu0
        %v3994 = vadd.f32 %v3981, %v3993
        %v3995 = vpop.f32.mrf.mxu0
        %3996 = vdwg.mxu0
        %3997 = vmatpush.bf16.msra.mxu0 %v3832
        %3998 = vmatpush.bf16.msra.mxu0 %v3830
        %3999 = vmatpush.bf16.msra.mxu0 %v3828
        %4000 = vmatpush.bf16.msra.mxu0 %v3826
        %4001 = vmatpush.bf16.msra.mxu0 %v3824
        %4002 = vmatpush.bf16.msra.mxu0 %v3822
        %4003 = vmatpush.bf16.msra.mxu0 %v3820
        %4004 = vmatpush.bf16.msra.mxu0 %v3818
        %4005 = vmatmul.bf16.gmra.mxu0 %v3551
        %v4006 = vpop.f32.mrf.mxu0
        %v4007 = vadd.f32 %v3622, %v4006
        %v4008 = vpop.f32.mrf.mxu0
        %4009 = vdwg.mxu0
        %4010 = vmatpush.bf16.msra.mxu0 %v3848
        %4011 = vmatpush.bf16.msra.mxu0 %v3846
        %4012 = vmatpush.bf16.msra.mxu0 %v3844
        %4013 = vmatpush.bf16.msra.mxu0 %v3842
        %4014 = vmatpush.bf16.msra.mxu0 %v3840
        %4015 = vmatpush.bf16.msra.mxu0 %v3838
        %4016 = vmatpush.bf16.msra.mxu0 %v3836
        %4017 = vmatpush.bf16.msra.mxu0 %v3834
        %4018 = vmatmul.bf16.gmra.mxu0 %v3552
        %v4019 = vpop.f32.mrf.mxu0
        %v4020 = vadd.f32 %v4007, %v4019
        %v4021 = vpop.f32.mrf.mxu0
        %4022 = vdwg.mxu0
        %4023 = vmatpush.bf16.msra.mxu0 %v3864
        %4024 = vmatpush.bf16.msra.mxu0 %v3862
        %4025 = vmatpush.bf16.msra.mxu0 %v3860
        %4026 = vmatpush.bf16.msra.mxu0 %v3858
        %4027 = vmatpush.bf16.msra.mxu0 %v3856
        %4028 = vmatpush.bf16.msra.mxu0 %v3854
        %4029 = vmatpush.bf16.msra.mxu0 %v3852
        %4030 = vmatpush.bf16.msra.mxu0 %v3850
        %4031 = vmatmul.bf16.gmra.mxu0 %v3553
        %v4032 = vpop.f32.mrf.mxu0
        %v4033 = vadd.f32 %v4020, %v4032
        %v4034 = vpop.f32.mrf.mxu0
        %4035 = vdwg.mxu0
        %4036 = vmatpush.bf16.msra.mxu0 %v3880
        %4037 = vmatpush.bf16.msra.mxu0 %v3878
        %4038 = vmatpush.bf16.msra.mxu0 %v3876
        %4039 = vmatpush.bf16.msra.mxu0 %v3874
        %4040 = vmatpush.bf16.msra.mxu0 %v3872
        %4041 = vmatpush.bf16.msra.mxu0 %v3870
        %4042 = vmatpush.bf16.msra.mxu0 %v3868
        %4043 = vmatpush.bf16.msra.mxu0 %v3866
        %4044 = vmatmul.bf16.gmra.mxu0 %v3554
        %v4045 = vpop.f32.mrf.mxu0
        %v4046 = vadd.f32 %v4033, %v4045
        %v4047 = vpop.f32.mrf.mxu0
        %4048 = vdwg.mxu0
        %v4049 = vunpack.c.l.bf16 %v3035
        %v4050 = vunpack.c.h.bf16 %v3035
        %v4051 = vadd.f32 %v3994, %v4049
        %v4052 = vadd.f32 %v4046, %v4050
        %v4053 = vadd.f32 %v4051, %v4052
        %4054 = vadd.xlane.f32.xlu0 %v4053
        %v4055 = vpop.xlane.xlu0 %4054
        %v4056 = vmul.f32 %v4055, %v2347
        %v4057 = vsub.f32 %v4051, %v4056
        %v4058 = vsub.f32 %v4052, %v4056
        %v4059 = vmul.f32 %v4057, %v4057
        %v4060 = vmul.f32 %v4058, %v4058
        %v4061 = vadd.f32 %v4059, %v4060
        %4062 = vadd.xlane.f32.xlu0 %v4061
        %v4063 = vpop.xlane.xlu0 %4062
        %v4064 = vmul.f32 %v4063, %v2347
        %v4065 = vld [vmem:[%s20] sm:$0x3]
        %v4066 = vadd.f32 %v4064, 1e-05
        %v4067 = vrsqrt.pop %v4066
        %v4068 = vmul.f32 %v4067, %v4066
        %v4069 = vmul.f32 %v4068, %v4067
        %v4070 = vmul.f32 0.5, %v4069
        %v4071 = vsub.f32 1.5, %v4070
        %v4072 = vmul.f32 %v4067, %v4071
        %vm4073 = vweird.f32 %v4066
        %vm4074 = vweird.f32 %v4067
        %vm4075 = vmor %vm4073, %vm4074
        %v4076 = vsel %vm4075, %v4067, %v4072
        %v4077 = vmul.f32 %v4057, %v4076
        %v4078 = vmul.f32 %v4058, %v4076
        %v4080 = vperm.slane %v4065, 0
        %v4081 = vperm.slane %v4065, 1
        %v4084 = vmul.f32 %v4080, %v4077
        %v4085 = vmul.f32 %v4081, %v4078
        %v4086 = vld [vmem:[%s21] sm:$0x3]
        %v4088 = vperm.slane %v4086, 0
        %v4089 = vperm.slane %v4086, 1
        %v4092 = vadd.f32 %v4084, %v4088
        %v4093 = vadd.f32 %v4085, %v4089
        %v4094 = vpack.c.bf16 %v4093, %v4092
        %4095 = vst [vmem:[%s691] sm:$0xff] %v4094
        %s4096 = sand.u32 %s516, 1
        %s4097 = scalar_lea.sflag [#allocation3], %s4096
        %s4098 = sand.u32 %s516, 1
        %s4099 = smul.addr %s4098, 8
        %s4100 = scalar_lea.vmem [#allocation2], %s4099
        // Predicated region
        $region109: #{decoder_forward.3} parent=107 // pred_check
          %p4101 = pneg %p526
        $region110: #{decoder_forward.3} parent=107 // pred_check_branch
          %4103 = sbr.rel (%p4101) target = $region112
        $region111: #{decoder_forward.3} parent=107 // pred_region
          %4105 = vsyncadd %s4097, 0
          %s4106 = smul.addr %s36, 2
          %s4107 = smul.addr %s4106, 4
          %s4108 = scalar_lea.hbm %s22, %s4107
          %s4110 = sshll.u32 %s4100, 4
          %s4111 = int_to_ptr.vmem [resolvable:$true] %s4110
          %s4112 = sshll.u32 %s4108, 4
          %s4113 = int_to_ptr.hbm [resolvable:$true] %s4112
          %4115 = dma.vmem_to_hbm [thread:$0]  %s4111, 128, %s4113, %s4097
        $region112: #{decoder_forward.3} parent=107 // pred_fallthru
          _
      $region108: #{decoder_forward.3} parent=5 // pred_fallthru
        _
      %p4116 = scmp.le.s32.totalorder 2, %s31
      // Predicated region
      $region113: #{decoder_forward.3} parent=5 // pred_check
        %p4117 = pneg %p4116
      $region114: #{decoder_forward.3} parent=5 // pred_check_branch
        %4119 = sbr.rel (%p4117) target = $region116
      $region115: #{decoder_forward.3} parent=5 // pred_region
        %s4120 = ssub.s32 %s31, 2
        // Predicated region
        $region117: #{decoder_forward.3} parent=115 // pred_check
          %p4121 = pneg %p532
        $region118: #{decoder_forward.3} parent=115 // pred_check_branch
          %4123 = sbr.rel (%p4121) target = $region120
        $region119: #{decoder_forward.3} parent=115 // pred_region
          %s4124 = sand.u32 %s517, 1
          %s4125 = scalar_lea.sflag [#allocation3], %s4124
          %s4126 = sand.u32 %s517, 1
          %s4127 = smul.addr %s4126, 8
          %s4128 = scalar_lea.vmem [#allocation2], %s4127
          %4130 = dma.done %s4125, 128
        $region120: #{decoder_forward.3} parent=115 // pred_fallthru
          _
      $region116: #{decoder_forward.3} parent=5 // pred_fallthru
        _
    $region6: #{decoder_forward.3} parent=1 // loop_footer
      %s35 = sadd.s32 1, %s31
    $region7: #{decoder_forward.3} parent=1 // loop_footer_branch
      %30 = sbr.rel target = $region3
    $region8: #{decoder_forward.3} parent=1 // loop_exit
      _
    %4131 = vsyncpa [#allocation3], 1
    %s4132 = scalar_lea.sflag [#allocation3], 1
    %4133 = vsyncpa %s4132, 1

</llo_original>
